<compile_context>
chip_gen: v7x
topology: tpu7x:2x2x1
jax: 0.10.0
libtpu: 0.0.40
codegen_flags: <defaults>
</compile_context>

<pallas_src>
import math
import functools

import jax
import jax.numpy as jnp
from jax.experimental import pallas as pl
from jax.experimental.pallas import tpu as pltpu

HIDDEN_DIM = 128
CONTEXT_DIM = 128
MAX_OFFSET = 192
UP_RATE = 4


def _round_up(x, m):
    return ((x + m - 1) // m) * m


def _pick_hw_tile(hw, pref):
    """Pick a lane-axis (HW) tile: full extent if small, else a 128-aligned divisor."""
    if hw <= pref:
        return hw
    for t in (pref, 2048, 1024, 512, 256, 128):
        if t <= pref and hw % t == 0:
            return t
    return hw


# ----------------------------------------------------------------------------
# Pallas kernels
# ----------------------------------------------------------------------------
def _mm_bias_act_kernel(a_ref, b_ref, bias_ref, o_ref, acc_ref, *, act):
    """Tiled matmul with f32 accumulator and fused bias + activation epilogue."""
    @pl.when(pl.program_id(2) == 0)
    def _():
        acc_ref[...] = jnp.zeros_like(acc_ref)

    acc_ref[...] += jnp.dot(a_ref[...], b_ref[...],
                            preferred_element_type=jnp.float32)

    @pl.when(pl.program_id(2) == pl.num_programs(2) - 1)
    def _():
        y = acc_ref[...] + bias_ref[...]
        if act == 'relu':
            y = jnp.maximum(y, 0.0)
        elif act == 'sigmoid':
            y = jax.nn.sigmoid(y)
        elif act == 'tanh':
            y = jnp.tanh(y)
        o_ref[...] = y


def matmul_bias_act(a, b, bias=None, act='none', tm=256, tn=256, tk=512):
    """a: (M, K) f32, b: (K, N) f32, bias: (N,) f32 -> act(a @ b + bias) f32.

    Operands are cast to bf16 (MXU-native), accumulation stays f32.
    Inputs are zero-padded to tile multiples; padding along K contributes zero.
    """
    M, K = a.shape
    K2, N = b.shape
    assert K == K2
    if bias is None:
        bias = jnp.zeros((N,), jnp.float32)

    tm = min(tm, _round_up(M, 16))
    tn = min(tn, _round_up(N, 128))
    tk = min(tk, _round_up(K, 128))
    Mp, Np, Kp = _round_up(M, tm), _round_up(N, tn), _round_up(K, tk)

    a_p = jnp.pad(a.astype(jnp.bfloat16), ((0, Mp - M), (0, Kp - K)))
    b_p = jnp.pad(b.astype(jnp.bfloat16), ((0, Kp - K), (0, Np - N)))
    bias_p = jnp.pad(bias.astype(jnp.float32), (0, Np - N)).reshape(1, Np)

    grid = (Mp // tm, Np // tn, Kp // tk)
    out = pl.pallas_call(
        functools.partial(_mm_bias_act_kernel, act=act),
        out_shape=jax.ShapeDtypeStruct((Mp, Np), jnp.float32),
        grid=grid,
        in_specs=[
            pl.BlockSpec((tm, tk), lambda i, j, k: (i, k)),
            pl.BlockSpec((tk, tn), lambda i, j, k: (k, j)),
            pl.BlockSpec((1, tn), lambda i, j, k: (0, j)),
        ],
        out_specs=pl.BlockSpec((tm, tn), lambda i, j, k: (i, j)),
        scratch_shapes=[pltpu.VMEM((tm, tn), jnp.float32)],
        compiler_params=pltpu.CompilerParams(
            dimension_semantics=("parallel", "parallel", "arbitrary")),
    )(a_p, b_p, bias_p)
    return out[:M, :N]


def _corr_kernel(f1_ref, f2_ref, o_ref, *, scale):
    # f1_ref: (C, thw), f2_ref: (9, C, thw), o_ref: (9, thw)
    f1 = f1_ref[...] * scale                    # fold 1/sqrt(C) once, before the loop
    for k in range(9):                          # static unroll
        o_ref[pl.ds(k, 1), :] = jnp.sum(f2_ref[k] * f1, axis=0, keepdims=True)


def pallas_local_corr(f1_flat, warped_flat):
    """f1_flat: (N, C, HW), warped_flat: (N, 9, C, HW) -> (N, 9, HW)."""
    N, C, HW = f1_flat.shape
    thw = _pick_hw_tile(HW, pref=1024)
    scale = 1.0 / math.sqrt(float(C))
    return pl.pallas_call(
        functools.partial(_corr_kernel, scale=scale),
        out_shape=jax.ShapeDtypeStruct((N, 9, HW), jnp.float32),
        grid=(N, HW // thw),
        in_specs=[
            pl.BlockSpec((None, C, thw), lambda n, t: (n, 0, t)),
            pl.BlockSpec((None, 9, C, thw), lambda n, t: (n, 0, 0, t)),
        ],
        out_specs=pl.BlockSpec((None, 9, thw), lambda n, t: (n, 0, t)),
        compiler_params=pltpu.CompilerParams(
            dimension_semantics=("parallel", "parallel")),
    )(f1_flat, warped_flat)


def _convex_upsample_kernel(mask_ref, uf_ref, o_ref):
    # mask_ref: (9, R2, thw), uf_ref: (2, 9, thw), o_ref: (2, R2, thw)
    m = mask_ref[...]
    mmax = m[0]
    for k in range(1, 9):
        mmax = jnp.maximum(mmax, m[k])
    exps = [jnp.exp(m[k] - mmax) for k in range(9)]
    denom = exps[0]
    for k in range(1, 9):
        denom = denom + exps[k]
    inv = pl.reciprocal(denom, approx=True)      # EUP slot; effectively free
    uf = uf_ref[...]
    acc = jnp.zeros(o_ref.shape, jnp.float32)
    for k in range(9):
        w = exps[k] * inv                                    # (R2, thw)
        acc = acc + w[None, :, :] * uf[:, k, :][:, None, :]  # (2, R2, thw)
    o_ref[...] = acc


def pallas_convex_upsample(mask_r, uf):
    """mask_r: (N, 9, r*r, HW), uf: (N, 2, 9, HW) -> (N, 2, r*r, HW)."""
    N, _, R2, HW = mask_r.shape
    thw = _pick_hw_tile(HW, pref=2048)
    return pl.pallas_call(
        _convex_upsample_kernel,
        out_shape=jax.ShapeDtypeStruct((N, 2, R2, HW), jnp.float32),
        grid=(N, HW // thw),
        in_specs=[
            pl.BlockSpec((None, 9, R2, thw), lambda n, t: (n, 0, 0, t)),
            pl.BlockSpec((None, 2, 9, thw), lambda n, t: (n, 0, 0, t)),
        ],
        out_specs=pl.BlockSpec((None, 2, R2, thw), lambda n, t: (n, 0, 0, t)),
        compiler_params=pltpu.CompilerParams(
            dimension_semantics=("parallel", "parallel")),
    )(mask_r, uf)


# ----------------------------------------------------------------------------
# Layout helpers and conv glue (im2col in JAX, tiled matmul in Pallas)
# ----------------------------------------------------------------------------
def nchw_to_rows(x):
    N, C, H, W = x.shape
    return x.transpose(0, 2, 3, 1).reshape(N * H * W, C)


def rows_to_nchw(x, N, H, W):
    C = x.shape[1]
    return x.reshape(N, H, W, C).transpose(0, 3, 1, 2)


def conv2d(x, w, b, stride=1, padding=0, act='none'):
    """x: (N, Cin, H, W), w: (Cout, Cin, kh, kw), b: (Cout,)."""
    # TODO(synk): im2col is materialized in HBM; a windowed Pallas conv (manual DMA of
    #             overlapping tiles) would cut encoder HBM traffic by ~kh*kw.
    N, Cin, H, W = x.shape
    Cout, _, kh, kw = w.shape
    xp = jnp.pad(x, ((0, 0), (0, 0), (padding, padding), (padding, padding)))
    Hp, Wp = xp.shape[2], xp.shape[3]
    Ho = (Hp - kh) // stride + 1
    Wo = (Wp - kw) // stride + 1
    patches = []
    for i in range(kh):
        for j in range(kw):
            patches.append(xp[:, :, i:i + stride * Ho:stride, j:j + stride * Wo:stride])
    col = jnp.stack(patches, axis=2)                      # (N, Cin, kh*kw, Ho, Wo)
    col = col.transpose(0, 3, 4, 1, 2).reshape(N * Ho * Wo, Cin * kh * kw)
    wmat = w.reshape(Cout, Cin * kh * kw).T               # (Cin*kh*kw, Cout)
    out = matmul_bias_act(col, wmat, b, act=act)
    return out.reshape(N, Ho, Wo, Cout).transpose(0, 3, 1, 2)


def instance_norm(x, eps=1e-5):
    mean = jnp.mean(x, axis=(2, 3), keepdims=True)
    var = jnp.var(x, axis=(2, 3), keepdims=True)
    return (x - mean) * jax.lax.rsqrt(var + eps)


def avg_pool(x, k):
    N, C, H, W = x.shape
    return x.reshape(N, C, H // k, k, W // k, k).mean(axis=(3, 5))


# ----------------------------------------------------------------------------
# fnet: quarter-resolution feature encoder
# TODO(synk): exact BasicEncoderQuarter (residual blocks + instance norm) source
#             not provided; deterministic quarter-res conv encoder stand-in.
# ----------------------------------------------------------------------------
def encoder(p, x):
    x = jax.nn.relu(instance_norm(conv2d(x, p['w1'], p['b1'], stride=2, padding=3)))
    x = jax.nn.relu(instance_norm(conv2d(x, p['w2'], p['b2'], stride=2, padding=1)))
    x = conv2d(x, p['w3'], p['b3'], stride=1, padding=0)
    return x


# ----------------------------------------------------------------------------
# PathMatch stand-in: local patch correlation at flow-displaced positions.
# TODO(synk): PathMatch propagation / random-search internals not provided;
#             3x3 local correlation (dilation 1 / 2 for is_search False / True).
# ----------------------------------------------------------------------------
def patch_warp(fmap2, cx, cy, dil):
    """Bilinear-sample fmap2 at the 9 integer-shifted positions around (cx, cy).

    The 9 offsets share the same fractional weights, so corner gathers are done
    once per distinct integer offset (union set: 16 gathers for dil=1 vs 36 naive).
    Returns (N, 9, C, H*W). Zero padding outside the image.
    """
    N, C, H, W = fmap2.shape
    x0 = jnp.floor(cx)
    y0 = jnp.floor(cy)
    fx = cx - x0
    fy = cy - y0
    fm = fmap2.reshape(N, C, H * W)

    def gather(ox, oy):
        xi = x0 + ox
        yi = y0 + oy
        xc = jnp.clip(xi, 0, W - 1).astype(jnp.int32)
        yc = jnp.clip(yi, 0, H - 1).astype(jnp.int32)
        valid = ((xi >= 0) & (xi <= W - 1) & (yi >= 0) & (yi <= H - 1)).astype(fmap2.dtype)
        idx = jnp.broadcast_to((yc * W + xc).reshape(N, 1, H * W), (N, C, H * W))
        g = jnp.take_along_axis(fm, idx, axis=2)
        return g * valid.reshape(N, 1, H * W)

    offs = sorted({d + i for d in (-dil, 0, dil) for i in (0, 1)})
    g = {(oy, ox): gather(ox, oy) for oy in offs for ox in offs}

    wx1 = fx.reshape(N, 1, H * W)
    wx0 = 1.0 - wx1
    wy1 = fy.reshape(N, 1, H * W)
    wy0 = 1.0 - wy1
    warped = []
    for dy in (-dil, 0, dil):
        for dx in (-dil, 0, dil):
            warped.append(g[(dy, dx)] * (wx0 * wy0)
                          + g[(dy, dx + 1)] * (wx1 * wy0)
                          + g[(dy + 1, dx)] * (wx0 * wy1)
                          + g[(dy + 1, dx + 1)] * (wx1 * wy1))
    return jnp.stack(warped, axis=1)   # (N, 9, C, H*W)


class PatchCorr:
    def __init__(self, fmap1, fmap2):
        self.fmap1 = fmap1
        self.fmap2 = fmap2
        N, C, H, W = fmap1.shape
        ys, xs = jnp.meshgrid(jnp.arange(H, dtype=jnp.float32),
                              jnp.arange(W, dtype=jnp.float32), indexing='ij')
        self.base_x = xs[None]
        self.base_y = ys[None]
        self.f1_flat = fmap1.reshape(N, C, H * W)

    def __call__(self, flow, is_search=False):
        # TODO(synk): warp+correlation could be fused in one Pallas kernel with a
        #             manual DMA gather to avoid the (N, 9, C, HW) HBM intermediate.
        N, C, H, W = self.fmap1.shape
        dil = 2 if is_search else 1
        cx = self.base_x + flow[:, 0]
        cy = self.base_y + flow[:, 1]
        warped = patch_warp(self.fmap2, cx, cy, dil)           # (N, 9, C, HW)
        corr = pallas_local_corr(self.f1_flat, warped)         # (N, 9, HW)
        return corr.reshape(N, 9, H, W)


# ----------------------------------------------------------------------------
# Update blocks (conv-GRU with flow / mask heads) in (rows, channels) layout.
# TODO(synk): SmallUpdateBlock / BasicUpdateBlock exact internals not provided;
#             RAFT-style stand-ins with independent parameter sets are used.
# ----------------------------------------------------------------------------
def update_block(p, net, inp, corr, flow):
    """All args (rows, channels). Fused lane-dense matmuls with bias+act epilogues."""
    cf = jnp.concatenate([corr, flow], axis=1)                          # (R, 11)
    cor_flo = matmul_bias_act(cf, p['w_me'], p['b_me'], act='relu')     # (R, 96) block-diag
    mot = matmul_bias_act(cor_flo, p['w_cf'], p['b_cf'], act='relu')    # (R, 80)
    x = jnp.concatenate([inp, mot, flow], axis=1)                       # (R, 210)

    # conv-GRU: z and r share input hx -> one fused (hx_dim, 256) matmul.
    hx = jnp.concatenate([net, x], axis=1)                              # (R, 338)
    zr = matmul_bias_act(hx, p['w_zr'], p['b_zr'], act='sigmoid')       # (R, 256)
    z = zr[:, :HIDDEN_DIM]
    r = zr[:, HIDDEN_DIM:]
    q = matmul_bias_act(jnp.concatenate([r * net, x], axis=1),
                        p['w_q'], p['b_q'], act='tanh')                 # (R, 128)
    net = (1.0 - z) * net + z * q

    # flow/mask head hidden layers share `net` -> one fused (128, 192) matmul,
    # then a block-diagonal (192, 146) matmul for both outputs.
    hid = matmul_bias_act(net, p['w_h1'], p['b_h1'], act='relu')        # (R, 192)
    out = matmul_bias_act(hid, p['w_h2'], p['b_h2'])                    # (R, 146)
    delta_flow = out[:, :2]
    up_mask = 0.25 * out[:, 2:]
    return net, up_mask, delta_flow


def run_update(p, net_rows, inp_rows, corr_nchw, flow_nchw):
    """Layout conversion only at the update-block boundary."""
    N, _, H, W = flow_nchw.shape
    corr_rows = nchw_to_rows(corr_nchw)
    flow_rows = nchw_to_rows(flow_nchw)
    net_rows, up_mask_rows, dflow_rows = update_block(
        p, net_rows, inp_rows, corr_rows, flow_rows)
    delta_flow = rows_to_nchw(dflow_rows, N, H, W)
    mask_r = (up_mask_rows.reshape(N, H, W, 9, UP_RATE * UP_RATE)
              .transpose(0, 3, 4, 1, 2).reshape(N, 9, UP_RATE * UP_RATE, H * W))
    return net_rows, mask_r, delta_flow


# ----------------------------------------------------------------------------
# Convex flow upsampling (exact DIP.upsample_flow semantics) + bilinear upflow4
# ----------------------------------------------------------------------------
def upsample_flow(flow, mask_r, rate=4):
    N, _, H, W = flow.shape
    fp = jnp.pad(rate * flow, ((0, 0), (0, 0), (1, 1), (1, 1)))
    patches = []
    for i in range(3):
        for j in range(3):
            patches.append(fp[:, :, i:i + H, j:j + W])
    uf = jnp.stack(patches, axis=2).reshape(N, 2, 9, H * W)   # unfold(rate*flow, 3, pad=1)
    out = pallas_convex_upsample(mask_r, uf)                  # (N, 2, r*r, H*W)
    out = out.reshape(N, 2, rate, rate, H, W)
    out = out.transpose(0, 1, 4, 2, 5, 3)                     # permute(0,1,4,2,5,3)
    return out.reshape(N, 2, rate * H, rate * W)


def resize_bilinear_align_corners(x, Ho, Wo):
    N, C, H, W = x.shape
    ys = jnp.linspace(0.0, H - 1.0, Ho) if Ho > 1 else jnp.zeros((Ho,))
    xs = jnp.linspace(0.0, W - 1.0, Wo) if Wo > 1 else jnp.zeros((Wo,))
    y0 = jnp.clip(jnp.floor(ys).astype(jnp.int32), 0, H - 1)
    y1 = jnp.clip(y0 + 1, 0, H - 1)
    wy = (ys - y0.astype(ys.dtype))
    x0 = jnp.clip(jnp.floor(xs).astype(jnp.int32), 0, W - 1)
    x1 = jnp.clip(x0 + 1, 0, W - 1)
    wx = (xs - x0.astype(xs.dtype))
    top = (x[:, :, y0, :] * (1 - wy)[None, None, :, None]
           + x[:, :, y1, :] * wy[None, None, :, None])
    out = (top[:, :, :, x0] * (1 - wx)[None, None, None, :]
           + top[:, :, :, x1] * wx[None, None, None, :])
    return out


def upflow4(flow):
    N, C, H, W = flow.shape
    return 4.0 * resize_bilinear_align_corners(flow, 4 * H, 4 * W)


def random_init_flow(key, shape, max_offset):
    N, _, H, W = shape
    return (jax.random.uniform(key, (N, 2, H, W), jnp.float32) - 0.5) * 2.0 * max_offset


# ----------------------------------------------------------------------------
# Parameter initialization (deterministic); heads pre-fused at init time.
# ----------------------------------------------------------------------------
def _dense(key, cout, cin):
    k1, _ = jax.random.split(key)
    w = jax.random.normal(k1, (cout, cin), jnp.float32) * (0.5 / math.sqrt(cin))
    b = jnp.zeros((cout,), jnp.float32)
    return w, b


def _conv(key, cout, cin, kh, kw):
    k1, _ = jax.random.split(key)
    fan = cin * kh * kw
    w = jax.random.normal(k1, (cout, cin, kh, kw), jnp.float32) * (0.5 / math.sqrt(fan))
    b = jnp.zeros((cout,), jnp.float32)
    return w, b


def init_update_block(key):
    keys = jax.random.split(key, 10)
    p = {}
    # motion encoder: block-diagonal (9+2) -> (64+32)
    wc1, bc1 = _dense(keys[0], 64, 9)
    wf1, bf1 = _dense(keys[1], 32, 2)
    w_me = jnp.zeros((11, 96), jnp.float32)
    w_me = w_me.at[:9, :64].set(wc1.T)
    w_me = w_me.at[9:, 64:].set(wf1.T)
    p['w_me'], p['b_me'] = w_me, jnp.concatenate([bc1, bf1])
    wcf, bcf = _dense(keys[2], 80, 96)
    p['w_cf'], p['b_cf'] = wcf.T, bcf
    # GRU: z/r fused, q separate
    x_dim = CONTEXT_DIM + 80 + 2
    hx_dim = HIDDEN_DIM + x_dim
    wz, bz = _dense(keys[3], HIDDEN_DIM, hx_dim)
    wr, br = _dense(keys[4], HIDDEN_DIM, hx_dim)
    wq, bq = _dense(keys[5], HIDDEN_DIM, hx_dim)
    p['w_zr'] = jnp.concatenate([wz.T, wr.T], axis=1)
    p['b_zr'] = jnp.concatenate([bz, br])
    p['w_q'], p['b_q'] = wq.T, bq
    # flow/mask heads: shared-input hidden layers fused, outputs block-diagonal
    wfh1, bfh1 = _dense(keys[6], 64, HIDDEN_DIM)
    wmh1, bmh1 = _dense(keys[7], HIDDEN_DIM, HIDDEN_DIM)
    p['w_h1'] = jnp.concatenate([wfh1.T, wmh1.T], axis=1)      # (128, 192)
    p['b_h1'] = jnp.concatenate([bfh1, bmh1])
    wfh2, bfh2 = _dense(keys[8], 2, 64)
    wmh2, bmh2 = _dense(keys[9], 9 * UP_RATE * UP_RATE, HIDDEN_DIM)
    w_h2 = jnp.zeros((64 + HIDDEN_DIM, 2 + 9 * UP_RATE * UP_RATE), jnp.float32)
    w_h2 = w_h2.at[:64, :2].set(wfh2.T)
    w_h2 = w_h2.at[64:, 2:].set(wmh2.T)
    p['w_h2'], p['b_h2'] = w_h2, jnp.concatenate([bfh2, bmh2])
    return p


def init_params(key):
    k_enc, k_s, k_b = jax.random.split(key, 3)
    ke = jax.random.split(k_enc, 3)
    fnet = {}
    fnet['w1'], fnet['b1'] = _conv(ke[0], 64, 3, 7, 7)
    fnet['w2'], fnet['b2'] = _conv(ke[1], 96, 64, 3, 3)
    fnet['w3'], fnet['b3'] = _conv(ke[2], 256, 96, 1, 1)
    return {'fnet': fnet,
            'update_block_s': init_update_block(k_s),
            'update_block': init_update_block(k_b)}


# ----------------------------------------------------------------------------
# DIP.forward
# ----------------------------------------------------------------------------
@functools.partial(jax.jit, static_argnames=('iters',))
def dip_forward(params, image1, image2, iters=6):
    image1 = 2.0 * (image1 / 255.0) - 1.0
    image2 = 2.0 * (image2 / 255.0) - 1.0

    fmap1 = encoder(params['fnet'], image1).astype(jnp.float32)
    fmap2 = encoder(params['fnet'], image2).astype(jnp.float32)

    net = jnp.tanh(fmap1[:, :HIDDEN_DIM])
    inp = jax.nn.relu(fmap1[:, HIDDEN_DIM:HIDDEN_DIM + CONTEXT_DIM])

    s_fmap1 = avg_pool(fmap1, 4)
    s_fmap2 = avg_pool(fmap2, 4)
    s_net = avg_pool(net, 4)
    s_inp = avg_pool(inp, 4)

    # hidden / context state kept in rows layout for all update iterations
    s_net_rows = nchw_to_rows(s_net)
    s_inp_rows = nchw_to_rows(s_inp)
    net_rows = nchw_to_rows(net)
    inp_rows = nchw_to_rows(inp)

    s_patch_fn = PatchCorr(s_fmap1, s_fmap2)
    # TODO(synk): torch.rand-based random_init_flow replaced by deterministic jax.random.
    s_flow = random_init_flow(jax.random.PRNGKey(20), s_fmap1.shape,
                              max_offset=MAX_OFFSET // 16)

    flow = None
    flow_predictions = []
    for _ in range(iters):
        for p_name, is_search in (('update_block_s', False), ('update_block', True)):
            out_corrs = s_patch_fn(s_flow, is_search=is_search)
            s_net_rows, mask_r, delta_flow = run_update(
                params[p_name], s_net_rows, s_inp_rows, out_corrs, s_flow)
            s_flow = s_flow + delta_flow
            flow = upsample_flow(s_flow, mask_r, rate=UP_RATE)
            flow_predictions.append(upflow4(flow))

    patch_fn = PatchCorr(fmap1, fmap2)
    for _ in range(iters):
        for p_name, is_search in (('update_block_s', False), ('update_block', True)):
            out_corrs = patch_fn(flow, is_search=is_search)
            net_rows, mask_r, delta_flow = run_update(
                params[p_name], net_rows, inp_rows, out_corrs, flow)
            flow = flow + delta_flow
            flow_predictions.append(upsample_flow(flow, mask_r, rate=UP_RATE))

    return flow_predictions


# ----------------------------------------------------------------------------
if __name__ == "__main__":
    key = jax.random.PRNGKey(0)
    k1, k2, kp = jax.random.split(key, 3)
    image1 = jax.random.uniform(k1, (1, 3, 32, 32), jnp.float32, 0.0, 255.0)
    image2 = jax.random.uniform(k2, (1, 3, 32, 32), jnp.float32, 0.0, 255.0)
    params = init_params(kp)

    preds = dip_forward(params, image1, image2, iters=2)
    preds = jax.block_until_ready(preds)

    assert preds[-1].shape == (1, 2, 32, 32), preds[-1].shape
    assert all(bool(jnp.all(jnp.isfinite(p))) for p in preds)
    print("KERNEL_OK")
</pallas_src>

<mosaic_0001>
module attributes {stable_mosaic.version = 11 : i64} {
  func.func private @main(%arg0: i32) attributes {dimension_semantics = [#tpu.dimension_semantics<core_parallel>], iteration_bounds = array<i64: 2>, tpu.core_type = #tpu.core_type<sc_scalar_subcore>, window_params = []} {
    return
  }
}

module attributes {stable_mosaic.version = 11 : i64} {
  func.func private @main(%arg0: i32) attributes {dimension_semantics = [#tpu.dimension_semantics<core_parallel>], iteration_bounds = array<i64: 2>, tpu.core_type = #tpu.core_type<sc_scalar_subcore>, window_params = []} {
    return
  }
}

module attributes {stable_mosaic.version = 11 : i64} {
  func.func @_mm_bias_act_kernel(%arg0: i32, %arg1: i32, %arg2: i32, %arg3: memref<256x256xbf16, #tpu.memory_space<vmem>>, %arg4: memref<256x128xbf16, #tpu.memory_space<vmem>>, %arg5: memref<1x128xf32, #tpu.memory_space<vmem>>, %arg6: memref<256x128xf32, #tpu.memory_space<vmem>>, %arg7: memref<256x128xf32, #tpu.memory_space<vmem>>) attributes {dimension_semantics = [#tpu.dimension_semantics<parallel>, #tpu.dimension_semantics<parallel>, #tpu.dimension_semantics<arbitrary>], iteration_bounds = array<i64: 1, 1, 1>, scalar_prefetch = 0 : i64, scratch_operands = 1 : i64, tpu.core_type = #tpu.core_type<tc>, window_params = [{transform_indices = @transform_0, window_bounds = array<i64: 256, 256>}, {transform_indices = @transform_1, window_bounds = array<i64: 256, 128>}, {transform_indices = @transform_2, window_bounds = array<i64: 1, 128>}, {transform_indices = @transform_3, window_bounds = array<i64: 256, 128>}]} {
    %c0_i32 = arith.constant 0 : i32
    %0 = arith.cmpi eq, %arg2, %c0_i32 : i32
    %1 = arith.extui %0 : i1 to i32
    %c0_i32_0 = arith.constant 0 : i32
    %2 = arith.cmpi ne, %1, %c0_i32_0 : i32
    scf.if %2 {
      %cst_10 = arith.constant 0.000000e+00 : f32
      %12 = vector.broadcast %cst_10 : f32 to vector<256x128xf32>
      %c0_11 = arith.constant 0 : index
      %c0_12 = arith.constant 0 : index
      %13 = vector.load %arg7[%c0_11, %c0_12] : memref<256x128xf32, #tpu.memory_space<vmem>>, vector<256x128xf32>
      tpu.vector_store %arg7[%c0_11, %c0_12], %12 {strides = array<i32>} : memref<256x128xf32, #tpu.memory_space<vmem>>, vector<256x128xf32>,
    } else {
    }
    %c0 = arith.constant 0 : index
    %c0_1 = arith.constant 0 : index
    %3 = vector.load %arg7[%c0, %c0_1] : memref<256x128xf32, #tpu.memory_space<vmem>>, vector<256x128xf32>
    %c0_2 = arith.constant 0 : index
    %c0_3 = arith.constant 0 : index
    %4 = vector.load %arg3[%c0_2, %c0_3] : memref<256x256xbf16, #tpu.memory_space<vmem>>, vector<256x256xbf16>
    %c0_4 = arith.constant 0 : index
    %c0_5 = arith.constant 0 : index
    %5 = vector.load %arg4[%c0_4, %c0_5] : memref<256x128xbf16, #tpu.memory_space<vmem>>, vector<256x128xbf16>
    %cst = arith.constant dense<0.000000e+00> : vector<256x128xf32>
    %6 = tpu.matmul %4, %5, %cst {dimension_numbers = #tpu.dot_dimension_numbers<[1], [0], [0], [1], [0, 0, 1, 1], [], []>} : vector<256x256xbf16>, vector<256x128xbf16>, vector<256x128xf32> -> vector<256x128xf32>
    %7 = arith.addf %3, %6 : vector<256x128xf32>
    %c0_6 = arith.constant 0 : index
    %c0_7 = arith.constant 0 : index
    %8 = vector.load %arg7[%c0_6, %c0_7] : memref<256x128xf32, #tpu.memory_space<vmem>>, vector<256x128xf32>
    tpu.vector_store %arg7[%c0_6, %c0_7], %7 {strides = array<i32>} : memref<256x128xf32, #tpu.memory_space<vmem>>, vector<256x128xf32>,
    %c0_i32_8 = arith.constant 0 : i32
    %9 = arith.cmpi eq, %arg2, %c0_i32_8 : i32
    %10 = arith.extui %9 : i1 to i32
    %c0_i32_9 = arith.constant 0 : i32
    %11 = arith.cmpi ne, %10, %c0_i32_9 : i32
    scf.if %11 {
      %c0_10 = arith.constant 0 : index
      %c0_11 = arith.constant 0 : index
      %12 = vector.load %arg7[%c0_10, %c0_11] : memref<256x128xf32, #tpu.memory_space<vmem>>, vector<256x128xf32>
      %c0_12 = arith.constant 0 : index
      %c0_13 = arith.constant 0 : index
      %13 = vector.load %arg5[%c0_12, %c0_13] : memref<1x128xf32, #tpu.memory_space<vmem>>, vector<1x128xf32>
      %14 = vector.broadcast %13 : vector<1x128xf32> to vector<256x128xf32>
      %15 = arith.addf %12, %14 : vector<256x128xf32>
      %c0_14 = arith.constant 0 : index
      %c0_15 = arith.constant 0 : index
      %16 = vector.load %arg6[%c0_14, %c0_15] : memref<256x128xf32, #tpu.memory_space<vmem>>, vector<256x128xf32>
      tpu.vector_store %arg6[%c0_14, %c0_15], %15 {strides = array<i32>} : memref<256x128xf32, #tpu.memory_space<vmem>>, vector<256x128xf32>,
    } else {
    }
    return
  }
  func.func @transform_0(%arg0: i32, %arg1: i32, %arg2: i32) -> (i32, i32) {
    %c0_i32 = arith.constant 0 : i32
    return %arg0, %arg2 : i32, i32
  }
  func.func @transform_1(%arg0: i32, %arg1: i32, %arg2: i32) -> (i32, i32) {
    %c0_i32 = arith.constant 0 : i32
    return %arg2, %arg1 : i32, i32
  }
  func.func @transform_2(%arg0: i32, %arg1: i32, %arg2: i32) -> (i32, i32) {
    %c0_i32 = arith.constant 0 : i32
    %c0_i32_0 = arith.constant 0 : i32
    return %c0_i32, %arg1 : i32, i32
  }
  func.func @transform_3(%arg0: i32, %arg1: i32, %arg2: i32) -> (i32, i32) {
    %c0_i32 = arith.constant 0 : i32
    return %arg0, %arg1 : i32, i32
  }
}

module attributes {stable_mosaic.version = 11 : i64} {
  func.func @_mm_bias_act_kernel(%arg0: i32, %arg1: i32, %arg2: i32, %arg3: memref<64x512xbf16, #tpu.memory_space<vmem>>, %arg4: memref<512x128xbf16, #tpu.memory_space<vmem>>, %arg5: memref<1x128xf32, #tpu.memory_space<vmem>>, %arg6: memref<64x128xf32, #tpu.memory_space<vmem>>, %arg7: memref<64x128xf32, #tpu.memory_space<vmem>>) attributes {dimension_semantics = [#tpu.dimension_semantics<parallel>, #tpu.dimension_semantics<parallel>, #tpu.dimension_semantics<arbitrary>], iteration_bounds = array<i64: 1, 1, 2>, scalar_prefetch = 0 : i64, scratch_operands = 1 : i64, tpu.core_type = #tpu.core_type<tc>, window_params = [{transform_indices = @transform_0, window_bounds = array<i64: 64, 512>}, {transform_indices = @transform_1, window_bounds = array<i64: 512, 128>}, {transform_indices = @transform_2, window_bounds = array<i64: 1, 128>}, {transform_indices = @transform_3, window_bounds = array<i64: 64, 128>}]} {
    %c0_i32 = arith.constant 0 : i32
    %0 = arith.cmpi eq, %arg2, %c0_i32 : i32
    %1 = arith.extui %0 : i1 to i32
    %c0_i32_0 = arith.constant 0 : i32
    %2 = arith.cmpi ne, %1, %c0_i32_0 : i32
    scf.if %2 {
      %cst_9 = arith.constant 0.000000e+00 : f32
      %12 = vector.broadcast %cst_9 : f32 to vector<64x128xf32>
      %c0_10 = arith.constant 0 : index
      %c0_11 = arith.constant 0 : index
      %13 = vector.load %arg7[%c0_10, %c0_11] : memref<64x128xf32, #tpu.memory_space<vmem>>, vector<64x128xf32>
      tpu.vector_store %arg7[%c0_10, %c0_11], %12 {strides = array<i32>} : memref<64x128xf32, #tpu.memory_space<vmem>>, vector<64x128xf32>,
    } else {
    }
    %c0 = arith.constant 0 : index
    %c0_1 = arith.constant 0 : index
    %3 = vector.load %arg7[%c0, %c0_1] : memref<64x128xf32, #tpu.memory_space<vmem>>, vector<64x128xf32>
    %c0_2 = arith.constant 0 : index
    %c0_3 = arith.constant 0 : index
    %4 = vector.load %arg3[%c0_2, %c0_3] : memref<64x512xbf16, #tpu.memory_space<vmem>>, vector<64x512xbf16>
    %c0_4 = arith.constant 0 : index
    %c0_5 = arith.constant 0 : index
    %5 = vector.load %arg4[%c0_4, %c0_5] : memref<512x128xbf16, #tpu.memory_space<vmem>>, vector<512x128xbf16>
    %cst = arith.constant dense<0.000000e+00> : vector<64x128xf32>
    %6 = tpu.matmul %4, %5, %cst {dimension_numbers = #tpu.dot_dimension_numbers<[1], [0], [0], [1], [0, 0, 1, 1], [], []>} : vector<64x512xbf16>, vector<512x128xbf16>, vector<64x128xf32> -> vector<64x128xf32>
    %7 = arith.addf %3, %6 : vector<64x128xf32>
    %c0_6 = arith.constant 0 : index
    %c0_7 = arith.constant 0 : index
    %8 = vector.load %arg7[%c0_6, %c0_7] : memref<64x128xf32, #tpu.memory_space<vmem>>, vector<64x128xf32>
    tpu.vector_store %arg7[%c0_6, %c0_7], %7 {strides = array<i32>} : memref<64x128xf32, #tpu.memory_space<vmem>>, vector<64x128xf32>,
    %c1_i32 = arith.constant 1 : i32
    %9 = arith.cmpi eq, %arg2, %c1_i32 : i32
    %10 = arith.extui %9 : i1 to i32
    %c0_i32_8 = arith.constant 0 : i32
    %11 = arith.cmpi ne, %10, %c0_i32_8 : i32
    scf.if %11 {
      %c0_9 = arith.constant 0 : index
      %c0_10 = arith.constant 0 : index
      %12 = vector.load %arg7[%c0_9, %c0_10] : memref<64x128xf32, #tpu.memory_space<vmem>>, vector<64x128xf32>
      %c0_11 = arith.constant 0 : index
      %c0_12 = arith.constant 0 : index
      %13 = vector.load %arg5[%c0_11, %c0_12] : memref<1x128xf32, #tpu.memory_space<vmem>>, vector<1x128xf32>
      %14 = vector.broadcast %13 : vector<1x128xf32> to vector<64x128xf32>
      %15 = arith.addf %12, %14 : vector<64x128xf32>
      %c0_13 = arith.constant 0 : index
      %c0_14 = arith.constant 0 : index
      %16 = vector.load %arg6[%c0_13, %c0_14] : memref<64x128xf32, #tpu.memory_space<vmem>>, vector<64x128xf32>
      tpu.vector_store %arg6[%c0_13, %c0_14], %15 {strides = array<i32>} : memref<64x128xf32, #tpu.memory_space<vmem>>, vector<64x128xf32>,
    } else {
    }
    return
  }
  func.func @transform_0(%arg0: i32, %arg1: i32, %arg2: i32) -> (i32, i32) {
    %c0_i32 = arith.constant 0 : i32
    return %arg0, %arg2 : i32, i32
  }
  func.func @transform_1(%arg0: i32, %arg1: i32, %arg2: i32) -> (i32, i32) {
    %c0_i32 = arith.constant 0 : i32
    return %arg2, %arg1 : i32, i32
  }
  func.func @transform_2(%arg0: i32, %arg1: i32, %arg2: i32) -> (i32, i32) {
    %c0_i32 = arith.constant 0 : i32
    %c0_i32_0 = arith.constant 0 : i32
    return %c0_i32, %arg1 : i32, i32
  }
  func.func @transform_3(%arg0: i32, %arg1: i32, %arg2: i32) -> (i32, i32) {
    %c0_i32 = arith.constant 0 : i32
    return %arg0, %arg1 : i32, i32
  }
}

module attributes {stable_mosaic.version = 11 : i64} {
  func.func @_mm_bias_act_kernel(%arg0: i32, %arg1: i32, %arg2: i32, %arg3: memref<64x128xbf16, #tpu.memory_space<vmem>>, %arg4: memref<128x256xbf16, #tpu.memory_space<vmem>>, %arg5: memref<1x256xf32, #tpu.memory_space<vmem>>, %arg6: memref<64x256xf32, #tpu.memory_space<vmem>>, %arg7: memref<64x256xf32, #tpu.memory_space<vmem>>) attributes {dimension_semantics = [#tpu.dimension_semantics<parallel>, #tpu.dimension_semantics<parallel>, #tpu.dimension_semantics<arbitrary>], iteration_bounds = array<i64: 1, 1, 1>, scalar_prefetch = 0 : i64, scratch_operands = 1 : i64, tpu.core_type = #tpu.core_type<tc>, window_params = [{transform_indices = @transform_0, window_bounds = array<i64: 64, 128>}, {transform_indices = @transform_1, window_bounds = array<i64: 128, 256>}, {transform_indices = @transform_2, window_bounds = array<i64: 1, 256>}, {transform_indices = @transform_3, window_bounds = array<i64: 64, 256>}]} {
    %c0_i32 = arith.constant 0 : i32
    %0 = arith.cmpi eq, %arg2, %c0_i32 : i32
    %1 = arith.extui %0 : i1 to i32
    %c0_i32_0 = arith.constant 0 : i32
    %2 = arith.cmpi ne, %1, %c0_i32_0 : i32
    scf.if %2 {
      %cst_10 = arith.constant 0.000000e+00 : f32
      %12 = vector.broadcast %cst_10 : f32 to vector<64x256xf32>
      %c0_11 = arith.constant 0 : index
      %c0_12 = arith.constant 0 : index
      %13 = vector.load %arg7[%c0_11, %c0_12] : memref<64x256xf32, #tpu.memory_space<vmem>>, vector<64x256xf32>
      tpu.vector_store %arg7[%c0_11, %c0_12], %12 {strides = array<i32>} : memref<64x256xf32, #tpu.memory_space<vmem>>, vector<64x256xf32>,
    } else {
    }
    %c0 = arith.constant 0 : index
    %c0_1 = arith.constant 0 : index
    %3 = vector.load %arg7[%c0, %c0_1] : memref<64x256xf32, #tpu.memory_space<vmem>>, vector<64x256xf32>
    %c0_2 = arith.constant 0 : index
    %c0_3 = arith.constant 0 : index
    %4 = vector.load %arg3[%c0_2, %c0_3] : memref<64x128xbf16, #tpu.memory_space<vmem>>, vector<64x128xbf16>
    %c0_4 = arith.constant 0 : index
    %c0_5 = arith.constant 0 : index
    %5 = vector.load %arg4[%c0_4, %c0_5] : memref<128x256xbf16, #tpu.memory_space<vmem>>, vector<128x256xbf16>
    %cst = arith.constant dense<0.000000e+00> : vector<64x256xf32>
    %6 = tpu.matmul %4, %5, %cst {dimension_numbers = #tpu.dot_dimension_numbers<[1], [0], [0], [1], [0, 0, 1, 1], [], []>} : vector<64x128xbf16>, vector<128x256xbf16>, vector<64x256xf32> -> vector<64x256xf32>
    %7 = arith.addf %3, %6 : vector<64x256xf32>
    %c0_6 = arith.constant 0 : index
    %c0_7 = arith.constant 0 : index
    %8 = vector.load %arg7[%c0_6, %c0_7] : memref<64x256xf32, #tpu.memory_space<vmem>>, vector<64x256xf32>
    tpu.vector_store %arg7[%c0_6, %c0_7], %7 {strides = array<i32>} : memref<64x256xf32, #tpu.memory_space<vmem>>, vector<64x256xf32>,
    %c0_i32_8 = arith.constant 0 : i32
    %9 = arith.cmpi eq, %arg2, %c0_i32_8 : i32
    %10 = arith.extui %9 : i1 to i32
    %c0_i32_9 = arith.constant 0 : i32
    %11 = arith.cmpi ne, %10, %c0_i32_9 : i32
    scf.if %11 {
      %c0_10 = arith.constant 0 : index
      %c0_11 = arith.constant 0 : index
      %12 = vector.load %arg7[%c0_10, %c0_11] : memref<64x256xf32, #tpu.memory_space<vmem>>, vector<64x256xf32>
      %c0_12 = arith.constant 0 : index
      %c0_13 = arith.constant 0 : index
      %13 = vector.load %arg5[%c0_12, %c0_13] : memref<1x256xf32, #tpu.memory_space<vmem>>, vector<1x256xf32>
      %14 = vector.broadcast %13 : vector<1x256xf32> to vector<64x256xf32>
      %15 = arith.addf %12, %14 : vector<64x256xf32>
      %c0_14 = arith.constant 0 : index
      %c0_15 = arith.constant 0 : index
      %16 = vector.load %arg6[%c0_14, %c0_15] : memref<64x256xf32, #tpu.memory_space<vmem>>, vector<64x256xf32>
      tpu.vector_store %arg6[%c0_14, %c0_15], %15 {strides = array<i32>} : memref<64x256xf32, #tpu.memory_space<vmem>>, vector<64x256xf32>,
    } else {
    }
    return
  }
  func.func @transform_0(%arg0: i32, %arg1: i32, %arg2: i32) -> (i32, i32) {
    %c0_i32 = arith.constant 0 : i32
    return %arg0, %arg2 : i32, i32
  }
  func.func @transform_1(%arg0: i32, %arg1: i32, %arg2: i32) -> (i32, i32) {
    %c0_i32 = arith.constant 0 : i32
    return %arg2, %arg1 : i32, i32
  }
  func.func @transform_2(%arg0: i32, %arg1: i32, %arg2: i32) -> (i32, i32) {
    %c0_i32 = arith.constant 0 : i32
    %c0_i32_0 = arith.constant 0 : i32
    return %c0_i32, %arg1 : i32, i32
  }
  func.func @transform_3(%arg0: i32, %arg1: i32, %arg2: i32) -> (i32, i32) {
    %c0_i32 = arith.constant 0 : i32
    return %arg0, %arg1 : i32, i32
  }
}

module attributes {stable_mosaic.version = 11 : i64} {
  func.func @_corr_kernel(%arg0: i32, %arg1: i32, %arg2: memref<1x256x4xf32, #tpu.memory_space<vmem>>, %arg3: memref<1x9x256x4xf32, #tpu.memory_space<vmem>>, %arg4: memref<1x9x4xf32, #tpu.memory_space<vmem>>) attributes {dimension_semantics = [#tpu.dimension_semantics<parallel>, #tpu.dimension_semantics<parallel>], iteration_bounds = array<i64: 1, 1>, scalar_prefetch = 0 : i64, scratch_operands = 0 : i64, tpu.core_type = #tpu.core_type<tc>, window_params = [{transform_indices = @transform_0, window_bounds = array<i64: 1, 256, 4>}, {transform_indices = @transform_1, window_bounds = array<i64: 1, 9, 256, 4>}, {transform_indices = @transform_2, window_bounds = array<i64: 1, 9, 4>}]} {
    %c0 = arith.constant 0 : index
    %c0_0 = arith.constant 0 : index
    %c0_1 = arith.constant 0 : index
    %0 = vector.load %arg2[%c0, %c0_0, %c0_1] : memref<1x256x4xf32, #tpu.memory_space<vmem>>, vector<1x256x4xf32>
    %1 = vector.shape_cast %0 : vector<1x256x4xf32> to vector<256x4xf32>
    %cst = arith.constant 6.250000e-02 : f32
    %2 = vector.broadcast %cst : f32 to vector<256x4xf32>
    %3 = arith.mulf %1, %2 : vector<256x4xf32>
    %c0_2 = arith.constant 0 : index
    %c0_3 = arith.constant 0 : index
    %c0_4 = arith.constant 0 : index
    %c0_5 = arith.constant 0 : index
    %4 = vector.load %arg3[%c0_2, %c0_3, %c0_4, %c0_5] : memref<1x9x256x4xf32, #tpu.memory_space<vmem>>, vector<1x1x256x4xf32>
    %5 = vector.shape_cast %4 : vector<1x1x256x4xf32> to vector<256x4xf32>
    %6 = arith.mulf %5, %3 : vector<256x4xf32>
    %cst_6 = arith.constant dense<0.000000e+00> : vector<4xf32>
    %7 = vector.multi_reduction <add>, %6, %cst_6 [0] : vector<256x4xf32> to vector<4xf32>
    %8 = vector.shape_cast %7 : vector<4xf32> to vector<1x4xf32>
    %c0_7 = arith.constant 0 : index
    %c0_8 = arith.constant 0 : index
    %c0_9 = arith.constant 0 : index
    %9 = vector.load %arg4[%c0_7, %c0_8, %c0_9] : memref<1x9x4xf32, #tpu.memory_space<vmem>>, vector<1x1x4xf32>
    %10 = vector.shape_cast %9 : vector<1x1x4xf32> to vector<1x4xf32>
    %11 = vector.shape_cast %8 : vector<1x4xf32> to vector<1x1x4xf32>
    tpu.vector_store %arg4[%c0_7, %c0_8, %c0_9], %11 {strides = array<i32>} : memref<1x9x4xf32, #tpu.memory_space<vmem>>, vector<1x1x4xf32>,
    %c0_10 = arith.constant 0 : index
    %c1 = arith.constant 1 : index
    %c0_11 = arith.constant 0 : index
    %c0_12 = arith.constant 0 : index
    %12 = vector.load %arg3[%c0_10, %c1, %c0_11, %c0_12] : memref<1x9x256x4xf32, #tpu.memory_space<vmem>>, vector<1x1x256x4xf32>
    %13 = vector.shape_cast %12 : vector<1x1x256x4xf32> to vector<256x4xf32>
    %14 = arith.mulf %13, %3 : vector<256x4xf32>
    %cst_13 = arith.constant dense<0.000000e+00> : vector<4xf32>
    %15 = vector.multi_reduction <add>, %14, %cst_13 [0] : vector<256x4xf32> to vector<4xf32>
    %16 = vector.shape_cast %15 : vector<4xf32> to vector<1x4xf32>
    %c0_14 = arith.constant 0 : index
    %c1_15 = arith.constant 1 : index
    %c0_16 = arith.constant 0 : index
    %17 = vector.load %arg4[%c0_14, %c1_15, %c0_16] : memref<1x9x4xf32, #tpu.memory_space<vmem>>, vector<1x1x4xf32>
    %18 = vector.shape_cast %17 : vector<1x1x4xf32> to vector<1x4xf32>
    %19 = vector.shape_cast %16 : vector<1x4xf32> to vector<1x1x4xf32>
    tpu.vector_store %arg4[%c0_14, %c1_15, %c0_16], %19 {strides = array<i32>} : memref<1x9x4xf32, #tpu.memory_space<vmem>>, vector<1x1x4xf32>,
    %c0_17 = arith.constant 0 : index
    %c2 = arith.constant 2 : index
    %c0_18 = arith.constant 0 : index
    %c0_19 = arith.constant 0 : index
    %20 = vector.load %arg3[%c0_17, %c2, %c0_18, %c0_19] : memref<1x9x256x4xf32, #tpu.memory_space<vmem>>, vector<1x1x256x4xf32>
    %21 = vector.shape_cast %20 : vector<1x1x256x4xf32> to vector<256x4xf32>
    %22 = arith.mulf %21, %3 : vector<256x4xf32>
    %cst_20 = arith.constant dense<0.000000e+00> : vector<4xf32>
    %23 = vector.multi_reduction <add>, %22, %cst_20 [0] : vector<256x4xf32> to vector<4xf32>
    %24 = vector.shape_cast %23 : vector<4xf32> to vector<1x4xf32>
    %c0_21 = arith.constant 0 : index
    %c2_22 = arith.constant 2 : index
    %c0_23 = arith.constant 0 : index
    %25 = vector.load %arg4[%c0_21, %c2_22, %c0_23] : memref<1x9x4xf32, #tpu.memory_space<vmem>>, vector<1x1x4xf32>
    %26 = vector.shape_cast %25 : vector<1x1x4xf32> to vector<1x4xf32>
    %27 = vector.shape_cast %24 : vector<1x4xf32> to vector<1x1x4xf32>
    tpu.vector_store %arg4[%c0_21, %c2_22, %c0_23], %27 {strides = array<i32>} : memref<1x9x4xf32, #tpu.memory_space<vmem>>, vector<1x1x4xf32>,
    %c0_24 = arith.constant 0 : index
    %c3 = arith.constant 3 : index
    %c0_25 = arith.constant 0 : index
    %c0_26 = arith.constant 0 : index
    %28 = vector.load %arg3[%c0_24, %c3, %c0_25, %c0_26] : memref<1x9x256x4xf32, #tpu.memory_space<vmem>>, vector<1x1x256x4xf32>
    %29 = vector.shape_cast %28 : vector<1x1x256x4xf32> to vector<256x4xf32>
    %30 = arith.mulf %29, %3 : vector<256x4xf32>
    %cst_27 = arith.constant dense<0.000000e+00> : vector<4xf32>
    %31 = vector.multi_reduction <add>, %30, %cst_27 [0] : vector<256x4xf32> to vector<4xf32>
    %32 = vector.shape_cast %31 : vector<4xf32> to vector<1x4xf32>
    %c0_28 = arith.constant 0 : index
    %c3_29 = arith.constant 3 : index
    %c0_30 = arith.constant 0 : index
    %33 = vector.load %arg4[%c0_28, %c3_29, %c0_30] : memref<1x9x4xf32, #tpu.memory_space<vmem>>, vector<1x1x4xf32>
    %34 = vector.shape_cast %33 : vector<1x1x4xf32> to vector<1x4xf32>
    %35 = vector.shape_cast %32 : vector<1x4xf32> to vector<1x1x4xf32>
    tpu.vector_store %arg4[%c0_28, %c3_29, %c0_30], %35 {strides = array<i32>} : memref<1x9x4xf32, #tpu.memory_space<vmem>>, vector<1x1x4xf32>,
    %c0_31 = arith.constant 0 : index
    %c4 = arith.constant 4 : index
    %c0_32 = arith.constant 0 : index
    %c0_33 = arith.constant 0 : index
    %36 = vector.load %arg3[%c0_31, %c4, %c0_32, %c0_33] : memref<1x9x256x4xf32, #tpu.memory_space<vmem>>, vector<1x1x256x4xf32>
    %37 = vector.shape_cast %36 : vector<1x1x256x4xf32> to vector<256x4xf32>
    %38 = arith.mulf %37, %3 : vector<256x4xf32>
    %cst_34 = arith.constant dense<0.000000e+00> : vector<4xf32>
    %39 = vector.multi_reduction <add>, %38, %cst_34 [0] : vector<256x4xf32> to vector<4xf32>
    %40 = vector.shape_cast %39 : vector<4xf32> to vector<1x4xf32>
    %c0_35 = arith.constant 0 : index
    %c4_36 = arith.constant 4 : index
    %c0_37 = arith.constant 0 : index
    %41 = vector.load %arg4[%c0_35, %c4_36, %c0_37] : memref<1x9x4xf32, #tpu.memory_space<vmem>>, vector<1x1x4xf32>
    %42 = vector.shape_cast %41 : vector<1x1x4xf32> to vector<1x4xf32>
    %43 = vector.shape_cast %40 : vector<1x4xf32> to vector<1x1x4xf32>
    tpu.vector_store %arg4[%c0_35, %c4_36, %c0_37], %43 {strides = array<i32>} : memref<1x9x4xf32, #tpu.memory_space<vmem>>, vector<1x1x4xf32>,
    %c0_38 = arith.constant 0 : index
    %c5 = arith.constant 5 : index
    %c0_39 = arith.constant 0 : index
    %c0_40 = arith.constant 0 : index
    %44 = vector.load %arg3[%c0_38, %c5, %c0_39, %c0_40] : memref<1x9x256x4xf32, #tpu.memory_space<vmem>>, vector<1x1x256x4xf32>
    %45 = vector.shape_cast %44 : vector<1x1x256x4xf32> to vector<256x4xf32>
    %46 = arith.mulf %45, %3 : vector<256x4xf32>
    %cst_41 = arith.constant dense<0.000000e+00> : vector<4xf32>
    %47 = vector.multi_reduction <add>, %46, %cst_41 [0] : vector<256x4xf32> to vector<4xf32>
    %48 = vector.shape_cast %47 : vector<4xf32> to vector<1x4xf32>
    %c0_42 = arith.constant 0 : index
    %c5_43 = arith.constant 5 : index
    %c0_44 = arith.constant 0 : index
    %49 = vector.load %arg4[%c0_42, %c5_43, %c0_44] : memref<1x9x4xf32, #tpu.memory_space<vmem>>, vector<1x1x4xf32>
    %50 = vector.shape_cast %49 : vector<1x1x4xf32> to vector<1x4xf32>
    %51 = vector.shape_cast %48 : vector<1x4xf32> to vector<1x1x4xf32>
    tpu.vector_store %arg4[%c0_42, %c5_43, %c0_44], %51 {strides = array<i32>} : memref<1x9x4xf32, #tpu.memory_space<vmem>>, vector<1x1x4xf32>,
    %c0_45 = arith.constant 0 : index
    %c6 = arith.constant 6 : index
    %c0_46 = arith.constant 0 : index
    %c0_47 = arith.constant 0 : index
    %52 = vector.load %arg3[%c0_45, %c6, %c0_46, %c0_47] : memref<1x9x256x4xf32, #tpu.memory_space<vmem>>, vector<1x1x256x4xf32>
    %53 = vector.shape_cast %52 : vector<1x1x256x4xf32> to vector<256x4xf32>
    %54 = arith.mulf %53, %3 : vector<256x4xf32>
    %cst_48 = arith.constant dense<0.000000e+00> : vector<4xf32>
    %55 = vector.multi_reduction <add>, %54, %cst_48 [0] : vector<256x4xf32> to vector<4xf32>
    %56 = vector.shape_cast %55 : vector<4xf32> to vector<1x4xf32>
    %c0_49 = arith.constant 0 : index
    %c6_50 = arith.constant 6 : index
    %c0_51 = arith.constant 0 : index
    %57 = vector.load %arg4[%c0_49, %c6_50, %c0_51] : memref<1x9x4xf32, #tpu.memory_space<vmem>>, vector<1x1x4xf32>
    %58 = vector.shape_cast %57 : vector<1x1x4xf32> to vector<1x4xf32>
    %59 = vector.shape_cast %56 : vector<1x4xf32> to vector<1x1x4xf32>
    tpu.vector_store %arg4[%c0_49, %c6_50, %c0_51], %59 {strides = array<i32>} : memref<1x9x4xf32, #tpu.memory_space<vmem>>, vector<1x1x4xf32>,
    %c0_52 = arith.constant 0 : index
    %c7 = arith.constant 7 : index
    %c0_53 = arith.constant 0 : index
    %c0_54 = arith.constant 0 : index
    %60 = vector.load %arg3[%c0_52, %c7, %c0_53, %c0_54] : memref<1x9x256x4xf32, #tpu.memory_space<vmem>>, vector<1x1x256x4xf32>
    %61 = vector.shape_cast %60 : vector<1x1x256x4xf32> to vector<256x4xf32>
    %62 = arith.mulf %61, %3 : vector<256x4xf32>
    %cst_55 = arith.constant dense<0.000000e+00> : vector<4xf32>
    %63 = vector.multi_reduction <add>, %62, %cst_55 [0] : vector<256x4xf32> to vector<4xf32>
    %64 = vector.shape_cast %63 : vector<4xf32> to vector<1x4xf32>
    %c0_56 = arith.constant 0 : index
    %c7_57 = arith.constant 7 : index
    %c0_58 = arith.constant 0 : index
    %65 = vector.load %arg4[%c0_56, %c7_57, %c0_58] : memref<1x9x4xf32, #tpu.memory_space<vmem>>, vector<1x1x4xf32>
    %66 = vector.shape_cast %65 : vector<1x1x4xf32> to vector<1x4xf32>
    %67 = vector.shape_cast %64 : vector<1x4xf32> to vector<1x1x4xf32>
    tpu.vector_store %arg4[%c0_56, %c7_57, %c0_58], %67 {strides = array<i32>} : memref<1x9x4xf32, #tpu.memory_space<vmem>>, vector<1x1x4xf32>,
    %c0_59 = arith.constant 0 : index
    %c8 = arith.constant 8 : index
    %c0_60 = arith.constant 0 : index
    %c0_61 = arith.constant 0 : index
    %68 = vector.load %arg3[%c0_59, %c8, %c0_60, %c0_61] : memref<1x9x256x4xf32, #tpu.memory_space<vmem>>, vector<1x1x256x4xf32>
    %69 = vector.shape_cast %68 : vector<1x1x256x4xf32> to vector<256x4xf32>
    %70 = arith.mulf %69, %3 : vector<256x4xf32>
    %cst_62 = arith.constant dense<0.000000e+00> : vector<4xf32>
    %71 = vector.multi_reduction <add>, %70, %cst_62 [0] : vector<256x4xf32> to vector<4xf32>
    %72 = vector.shape_cast %71 : vector<4xf32> to vector<1x4xf32>
    %c0_63 = arith.constant 0 : index
    %c8_64 = arith.constant 8 : index
    %c0_65 = arith.constant 0 : index
    %73 = vector.load %arg4[%c0_63, %c8_64, %c0_65] : memref<1x9x4xf32, #tpu.memory_space<vmem>>, vector<1x1x4xf32>
    %74 = vector.shape_cast %73 : vector<1x1x4xf32> to vector<1x4xf32>
    %75 = vector.shape_cast %72 : vector<1x4xf32> to vector<1x1x4xf32>
    tpu.vector_store %arg4[%c0_63, %c8_64, %c0_65], %75 {strides = array<i32>} : memref<1x9x4xf32, #tpu.memory_space<vmem>>, vector<1x1x4xf32>,
    return
  }
  func.func @transform_0(%arg0: i32, %arg1: i32) -> (i32, i32, i32) {
    %c0_i32 = arith.constant 0 : i32
    %c0_i32_0 = arith.constant 0 : i32
    return %arg0, %c0_i32, %arg1 : i32, i32, i32
  }
  func.func @transform_1(%arg0: i32, %arg1: i32) -> (i32, i32, i32, i32) {
    %c0_i32 = arith.constant 0 : i32
    %c0_i32_0 = arith.constant 0 : i32
    %c0_i32_1 = arith.constant 0 : i32
    return %arg0, %c0_i32, %c0_i32_0, %arg1 : i32, i32, i32, i32
  }
  func.func @transform_2(%arg0: i32, %arg1: i32) -> (i32, i32, i32) {
    %c0_i32 = arith.constant 0 : i32
    %c0_i32_0 = arith.constant 0 : i32
    return %arg0, %c0_i32, %arg1 : i32, i32, i32
  }
}

module attributes {stable_mosaic.version = 11 : i64} {
  func.func @_mm_bias_act_kernel(%arg0: i32, %arg1: i32, %arg2: i32, %arg3: memref<16x128xbf16, #tpu.memory_space<vmem>>, %arg4: memref<128x128xbf16, #tpu.memory_space<vmem>>, %arg5: memref<1x128xf32, #tpu.memory_space<vmem>>, %arg6: memref<16x128xf32, #tpu.memory_space<vmem>>, %arg7: memref<16x128xf32, #tpu.memory_space<vmem>>) attributes {dimension_semantics = [#tpu.dimension_semantics<parallel>, #tpu.dimension_semantics<parallel>, #tpu.dimension_semantics<arbitrary>], iteration_bounds = array<i64: 1, 1, 1>, scalar_prefetch = 0 : i64, scratch_operands = 1 : i64, tpu.core_type = #tpu.core_type<tc>, window_params = [{transform_indices = @transform_0, window_bounds = array<i64: 16, 128>}, {transform_indices = @transform_1, window_bounds = array<i64: 128, 128>}, {transform_indices = @transform_2, window_bounds = array<i64: 1, 128>}, {transform_indices = @transform_3, window_bounds = array<i64: 16, 128>}]} {
    %c0_i32 = arith.constant 0 : i32
    %0 = arith.cmpi eq, %arg2, %c0_i32 : i32
    %1 = arith.extui %0 : i1 to i32
    %c0_i32_0 = arith.constant 0 : i32
    %2 = arith.cmpi ne, %1, %c0_i32_0 : i32
    scf.if %2 {
      %cst_10 = arith.constant 0.000000e+00 : f32
      %12 = vector.broadcast %cst_10 : f32 to vector<16x128xf32>
      %c0_11 = arith.constant 0 : index
      %c0_12 = arith.constant 0 : index
      %13 = vector.load %arg7[%c0_11, %c0_12] : memref<16x128xf32, #tpu.memory_space<vmem>>, vector<16x128xf32>
      tpu.vector_store %arg7[%c0_11, %c0_12], %12 {strides = array<i32>} : memref<16x128xf32, #tpu.memory_space<vmem>>, vector<16x128xf32>,
    } else {
    }
    %c0 = arith.constant 0 : index
    %c0_1 = arith.constant 0 : index
    %3 = vector.load %arg7[%c0, %c0_1] : memref<16x128xf32, #tpu.memory_space<vmem>>, vector<16x128xf32>
    %c0_2 = arith.constant 0 : index
    %c0_3 = arith.constant 0 : index
    %4 = vector.load %arg3[%c0_2, %c0_3] : memref<16x128xbf16, #tpu.memory_space<vmem>>, vector<16x128xbf16>
    %c0_4 = arith.constant 0 : index
    %c0_5 = arith.constant 0 : index
    %5 = vector.load %arg4[%c0_4, %c0_5] : memref<128x128xbf16, #tpu.memory_space<vmem>>, vector<128x128xbf16>
    %cst = arith.constant dense<0.000000e+00> : vector<16x128xf32>
    %6 = tpu.matmul %4, %5, %cst {dimension_numbers = #tpu.dot_dimension_numbers<[1], [0], [0], [1], [0, 0, 1, 1], [], []>} : vector<16x128xbf16>, vector<128x128xbf16>, vector<16x128xf32> -> vector<16x128xf32>
    %7 = arith.addf %3, %6 : vector<16x128xf32>
    %c0_6 = arith.constant 0 : index
    %c0_7 = arith.constant 0 : index
    %8 = vector.load %arg7[%c0_6, %c0_7] : memref<16x128xf32, #tpu.memory_space<vmem>>, vector<16x128xf32>
    tpu.vector_store %arg7[%c0_6, %c0_7], %7 {strides = array<i32>} : memref<16x128xf32, #tpu.memory_space<vmem>>, vector<16x128xf32>,
    %c0_i32_8 = arith.constant 0 : i32
    %9 = arith.cmpi eq, %arg2, %c0_i32_8 : i32
    %10 = arith.extui %9 : i1 to i32
    %c0_i32_9 = arith.constant 0 : i32
    %11 = arith.cmpi ne, %10, %c0_i32_9 : i32
    scf.if %11 {
      %c0_10 = arith.constant 0 : index
      %c0_11 = arith.constant 0 : index
      %12 = vector.load %arg7[%c0_10, %c0_11] : memref<16x128xf32, #tpu.memory_space<vmem>>, vector<16x128xf32>
      %c0_12 = arith.constant 0 : index
      %c0_13 = arith.constant 0 : index
      %13 = vector.load %arg5[%c0_12, %c0_13] : memref<1x128xf32, #tpu.memory_space<vmem>>, vector<1x128xf32>
      %14 = vector.broadcast %13 : vector<1x128xf32> to vector<16x128xf32>
      %15 = arith.addf %12, %14 : vector<16x128xf32>
      %cst_14 = arith.constant 0.000000e+00 : f32
      %16 = vector.broadcast %cst_14 : f32 to vector<16x128xf32>
      %17 = arith.maximumf %15, %16 : vector<16x128xf32>
      %c0_15 = arith.constant 0 : index
      %c0_16 = arith.constant 0 : index
      %18 = vector.load %arg6[%c0_15, %c0_16] : memref<16x128xf32, #tpu.memory_space<vmem>>, vector<16x128xf32>
      tpu.vector_store %arg6[%c0_15, %c0_16], %17 {strides = array<i32>} : memref<16x128xf32, #tpu.memory_space<vmem>>, vector<16x128xf32>,
    } else {
    }
    return
  }
  func.func @transform_0(%arg0: i32, %arg1: i32, %arg2: i32) -> (i32, i32) {
    %c0_i32 = arith.constant 0 : i32
    return %arg0, %arg2 : i32, i32
  }
  func.func @transform_1(%arg0: i32, %arg1: i32, %arg2: i32) -> (i32, i32) {
    %c0_i32 = arith.constant 0 : i32
    return %arg2, %arg1 : i32, i32
  }
  func.func @transform_2(%arg0: i32, %arg1: i32, %arg2: i32) -> (i32, i32) {
    %c0_i32 = arith.constant 0 : i32
    %c0_i32_0 = arith.constant 0 : i32
    return %c0_i32, %arg1 : i32, i32
  }
  func.func @transform_3(%arg0: i32, %arg1: i32, %arg2: i32) -> (i32, i32) {
    %c0_i32 = arith.constant 0 : i32
    return %arg0, %arg1 : i32, i32
  }
}

module attributes {stable_mosaic.version = 11 : i64} {
  func.func @_mm_bias_act_kernel(%arg0: i32, %arg1: i32, %arg2: i32, %arg3: memref<16x384xbf16, #tpu.memory_space<vmem>>, %arg4: memref<384x256xbf16, #tpu.memory_space<vmem>>, %arg5: memref<1x256xf32, #tpu.memory_space<vmem>>, %arg6: memref<16x256xf32, #tpu.memory_space<vmem>>, %arg7: memref<16x256xf32, #tpu.memory_space<vmem>>) attributes {dimension_semantics = [#tpu.dimension_semantics<parallel>, #tpu.dimension_semantics<parallel>, #tpu.dimension_semantics<arbitrary>], iteration_bounds = array<i64: 1, 1, 1>, scalar_prefetch = 0 : i64, scratch_operands = 1 : i64, tpu.core_type = #tpu.core_type<tc>, window_params = [{transform_indices = @transform_0, window_bounds = array<i64: 16, 384>}, {transform_indices = @transform_1, window_bounds = array<i64: 384, 256>}, {transform_indices = @transform_2, window_bounds = array<i64: 1, 256>}, {transform_indices = @transform_3, window_bounds = array<i64: 16, 256>}]} {
    %c0_i32 = arith.constant 0 : i32
    %0 = arith.cmpi eq, %arg2, %c0_i32 : i32
    %1 = arith.extui %0 : i1 to i32
    %c0_i32_0 = arith.constant 0 : i32
    %2 = arith.cmpi ne, %1, %c0_i32_0 : i32
    scf.if %2 {
      %cst_10 = arith.constant 0.000000e+00 : f32
      %12 = vector.broadcast %cst_10 : f32 to vector<16x256xf32>
      %c0_11 = arith.constant 0 : index
      %c0_12 = arith.constant 0 : index
      %13 = vector.load %arg7[%c0_11, %c0_12] : memref<16x256xf32, #tpu.memory_space<vmem>>, vector<16x256xf32>
      tpu.vector_store %arg7[%c0_11, %c0_12], %12 {strides = array<i32>} : memref<16x256xf32, #tpu.memory_space<vmem>>, vector<16x256xf32>,
    } else {
    }
    %c0 = arith.constant 0 : index
    %c0_1 = arith.constant 0 : index
    %3 = vector.load %arg7[%c0, %c0_1] : memref<16x256xf32, #tpu.memory_space<vmem>>, vector<16x256xf32>
    %c0_2 = arith.constant 0 : index
    %c0_3 = arith.constant 0 : index
    %4 = vector.load %arg3[%c0_2, %c0_3] : memref<16x384xbf16, #tpu.memory_space<vmem>>, vector<16x384xbf16>
    %c0_4 = arith.constant 0 : index
    %c0_5 = arith.constant 0 : index
    %5 = vector.load %arg4[%c0_4, %c0_5] : memref<384x256xbf16, #tpu.memory_space<vmem>>, vector<384x256xbf16>
    %cst = arith.constant dense<0.000000e+00> : vector<16x256xf32>
    %6 = tpu.matmul %4, %5, %cst {dimension_numbers = #tpu.dot_dimension_numbers<[1], [0], [0], [1], [0, 0, 1, 1], [], []>} : vector<16x384xbf16>, vector<384x256xbf16>, vector<16x256xf32> -> vector<16x256xf32>
    %7 = arith.addf %3, %6 : vector<16x256xf32>
    %c0_6 = arith.constant 0 : index
    %c0_7 = arith.constant 0 : index
    %8 = vector.load %arg7[%c0_6, %c0_7] : memref<16x256xf32, #tpu.memory_space<vmem>>, vector<16x256xf32>
    tpu.vector_store %arg7[%c0_6, %c0_7], %7 {strides = array<i32>} : memref<16x256xf32, #tpu.memory_space<vmem>>, vector<16x256xf32>,
    %c0_i32_8 = arith.constant 0 : i32
    %9 = arith.cmpi eq, %arg2, %c0_i32_8 : i32
    %10 = arith.extui %9 : i1 to i32
    %c0_i32_9 = arith.constant 0 : i32
    %11 = arith.cmpi ne, %10, %c0_i32_9 : i32
    scf.if %11 {
      %c0_10 = arith.constant 0 : index
      %c0_11 = arith.constant 0 : index
      %12 = vector.load %arg7[%c0_10, %c0_11] : memref<16x256xf32, #tpu.memory_space<vmem>>, vector<16x256xf32>
      %c0_12 = arith.constant 0 : index
      %c0_13 = arith.constant 0 : index
      %13 = vector.load %arg5[%c0_12, %c0_13] : memref<1x256xf32, #tpu.memory_space<vmem>>, vector<1x256xf32>
      %14 = vector.broadcast %13 : vector<1x256xf32> to vector<16x256xf32>
      %15 = arith.addf %12, %14 : vector<16x256xf32>
      %16 = arith.negf %15 : vector<16x256xf32>
      %17 = math.exp %16 : vector<16x256xf32>
      %cst_14 = arith.constant 1.000000e+00 : f32
      %18 = vector.broadcast %cst_14 : f32 to vector<16x256xf32>
      %19 = arith.addf %18, %17 : vector<16x256xf32>
      %20 = arith.divf %18, %19 : vector<16x256xf32>
      %c0_15 = arith.constant 0 : index
      %c0_16 = arith.constant 0 : index
      %21 = vector.load %arg6[%c0_15, %c0_16] : memref<16x256xf32, #tpu.memory_space<vmem>>, vector<16x256xf32>
      tpu.vector_store %arg6[%c0_15, %c0_16], %20 {strides = array<i32>} : memref<16x256xf32, #tpu.memory_space<vmem>>, vector<16x256xf32>,
    } else {
    }
    return
  }
  func.func @transform_0(%arg0: i32, %arg1: i32, %arg2: i32) -> (i32, i32) {
    %c0_i32 = arith.constant 0 : i32
    return %arg0, %arg2 : i32, i32
  }
  func.func @transform_1(%arg0: i32, %arg1: i32, %arg2: i32) -> (i32, i32) {
    %c0_i32 = arith.constant 0 : i32
    return %arg2, %arg1 : i32, i32
  }
  func.func @transform_2(%arg0: i32, %arg1: i32, %arg2: i32) -> (i32, i32) {
    %c0_i32 = arith.constant 0 : i32
    %c0_i32_0 = arith.constant 0 : i32
    return %c0_i32, %arg1 : i32, i32
  }
  func.func @transform_3(%arg0: i32, %arg1: i32, %arg2: i32) -> (i32, i32) {
    %c0_i32 = arith.constant 0 : i32
    return %arg0, %arg1 : i32, i32
  }
}

module attributes {stable_mosaic.version = 11 : i64} {
  func.func @_mm_bias_act_kernel(%arg0: i32, %arg1: i32, %arg2: i32, %arg3: memref<16x384xbf16, #tpu.memory_space<vmem>>, %arg4: memref<384x128xbf16, #tpu.memory_space<vmem>>, %arg5: memref<1x128xf32, #tpu.memory_space<vmem>>, %arg6: memref<16x128xf32, #tpu.memory_space<vmem>>, %arg7: memref<16x128xf32, #tpu.memory_space<vmem>>) attributes {dimension_semantics = [#tpu.dimension_semantics<parallel>, #tpu.dimension_semantics<parallel>, #tpu.dimension_semantics<arbitrary>], iteration_bounds = array<i64: 1, 1, 1>, scalar_prefetch = 0 : i64, scratch_operands = 1 : i64, tpu.core_type = #tpu.core_type<tc>, window_params = [{transform_indices = @transform_0, window_bounds = array<i64: 16, 384>}, {transform_indices = @transform_1, window_bounds = array<i64: 384, 128>}, {transform_indices = @transform_2, window_bounds = array<i64: 1, 128>}, {transform_indices = @transform_3, window_bounds = array<i64: 16, 128>}]} {
    %c0_i32 = arith.constant 0 : i32
    %0 = arith.cmpi eq, %arg2, %c0_i32 : i32
    %1 = arith.extui %0 : i1 to i32
    %c0_i32_0 = arith.constant 0 : i32
    %2 = arith.cmpi ne, %1, %c0_i32_0 : i32
    scf.if %2 {
      %cst_10 = arith.constant 0.000000e+00 : f32
      %12 = vector.broadcast %cst_10 : f32 to vector<16x128xf32>
      %c0_11 = arith.constant 0 : index
      %c0_12 = arith.constant 0 : index
      %13 = vector.load %arg7[%c0_11, %c0_12] : memref<16x128xf32, #tpu.memory_space<vmem>>, vector<16x128xf32>
      tpu.vector_store %arg7[%c0_11, %c0_12], %12 {strides = array<i32>} : memref<16x128xf32, #tpu.memory_space<vmem>>, vector<16x128xf32>,
    } else {
    }
    %c0 = arith.constant 0 : index
    %c0_1 = arith.constant 0 : index
    %3 = vector.load %arg7[%c0, %c0_1] : memref<16x128xf32, #tpu.memory_space<vmem>>, vector<16x128xf32>
    %c0_2 = arith.constant 0 : index
    %c0_3 = arith.constant 0 : index
    %4 = vector.load %arg3[%c0_2, %c0_3] : memref<16x384xbf16, #tpu.memory_space<vmem>>, vector<16x384xbf16>
    %c0_4 = arith.constant 0 : index
    %c0_5 = arith.constant 0 : index
    %5 = vector.load %arg4[%c0_4, %c0_5] : memref<384x128xbf16, #tpu.memory_space<vmem>>, vector<384x128xbf16>
    %cst = arith.constant dense<0.000000e+00> : vector<16x128xf32>
    %6 = tpu.matmul %4, %5, %cst {dimension_numbers = #tpu.dot_dimension_numbers<[1], [0], [0], [1], [0, 0, 1, 1], [], []>} : vector<16x384xbf16>, vector<384x128xbf16>, vector<16x128xf32> -> vector<16x128xf32>
    %7 = arith.addf %3, %6 : vector<16x128xf32>
    %c0_6 = arith.constant 0 : index
    %c0_7 = arith.constant 0 : index
    %8 = vector.load %arg7[%c0_6, %c0_7] : memref<16x128xf32, #tpu.memory_space<vmem>>, vector<16x128xf32>
    tpu.vector_store %arg7[%c0_6, %c0_7], %7 {strides = array<i32>} : memref<16x128xf32, #tpu.memory_space<vmem>>, vector<16x128xf32>,
    %c0_i32_8 = arith.constant 0 : i32
    %9 = arith.cmpi eq, %arg2, %c0_i32_8 : i32
    %10 = arith.extui %9 : i1 to i32
    %c0_i32_9 = arith.constant 0 : i32
    %11 = arith.cmpi ne, %10, %c0_i32_9 : i32
    scf.if %11 {
      %c0_10 = arith.constant 0 : index
      %c0_11 = arith.constant 0 : index
      %12 = vector.load %arg7[%c0_10, %c0_11] : memref<16x128xf32, #tpu.memory_space<vmem>>, vector<16x128xf32>
      %c0_12 = arith.constant 0 : index
      %c0_13 = arith.constant 0 : index
      %13 = vector.load %arg5[%c0_12, %c0_13] : memref<1x128xf32, #tpu.memory_space<vmem>>, vector<1x128xf32>
      %14 = vector.broadcast %13 : vector<1x128xf32> to vector<16x128xf32>
      %15 = arith.addf %12, %14 : vector<16x128xf32>
      %16 = math.tanh %15 : vector<16x128xf32>
      %c0_14 = arith.constant 0 : index
      %c0_15 = arith.constant 0 : index
      %17 = vector.load %arg6[%c0_14, %c0_15] : memref<16x128xf32, #tpu.memory_space<vmem>>, vector<16x128xf32>
      tpu.vector_store %arg6[%c0_14, %c0_15], %16 {strides = array<i32>} : memref<16x128xf32, #tpu.memory_space<vmem>>, vector<16x128xf32>,
    } else {
    }
    return
  }
  func.func @transform_0(%arg0: i32, %arg1: i32, %arg2: i32) -> (i32, i32) {
    %c0_i32 = arith.constant 0 : i32
    return %arg0, %arg2 : i32, i32
  }
  func.func @transform_1(%arg0: i32, %arg1: i32, %arg2: i32) -> (i32, i32) {
    %c0_i32 = arith.constant 0 : i32
    return %arg2, %arg1 : i32, i32
  }
  func.func @transform_2(%arg0: i32, %arg1: i32, %arg2: i32) -> (i32, i32) {
    %c0_i32 = arith.constant 0 : i32
    %c0_i32_0 = arith.constant 0 : i32
    return %c0_i32, %arg1 : i32, i32
  }
  func.func @transform_3(%arg0: i32, %arg1: i32, %arg2: i32) -> (i32, i32) {
    %c0_i32 = arith.constant 0 : i32
    return %arg0, %arg1 : i32, i32
  }
}

module attributes {stable_mosaic.version = 11 : i64} {
  func.func @_mm_bias_act_kernel(%arg0: i32, %arg1: i32, %arg2: i32, %arg3: memref<16x128xbf16, #tpu.memory_space<vmem>>, %arg4: memref<128x256xbf16, #tpu.memory_space<vmem>>, %arg5: memref<1x256xf32, #tpu.memory_space<vmem>>, %arg6: memref<16x256xf32, #tpu.memory_space<vmem>>, %arg7: memref<16x256xf32, #tpu.memory_space<vmem>>) attributes {dimension_semantics = [#tpu.dimension_semantics<parallel>, #tpu.dimension_semantics<parallel>, #tpu.dimension_semantics<arbitrary>], iteration_bounds = array<i64: 1, 1, 1>, scalar_prefetch = 0 : i64, scratch_operands = 1 : i64, tpu.core_type = #tpu.core_type<tc>, window_params = [{transform_indices = @transform_0, window_bounds = array<i64: 16, 128>}, {transform_indices = @transform_1, window_bounds = array<i64: 128, 256>}, {transform_indices = @transform_2, window_bounds = array<i64: 1, 256>}, {transform_indices = @transform_3, window_bounds = array<i64: 16, 256>}]} {
    %c0_i32 = arith.constant 0 : i32
    %0 = arith.cmpi eq, %arg2, %c0_i32 : i32
    %1 = arith.extui %0 : i1 to i32
    %c0_i32_0 = arith.constant 0 : i32
    %2 = arith.cmpi ne, %1, %c0_i32_0 : i32
    scf.if %2 {
      %cst_10 = arith.constant 0.000000e+00 : f32
      %12 = vector.broadcast %cst_10 : f32 to vector<16x256xf32>
      %c0_11 = arith.constant 0 : index
      %c0_12 = arith.constant 0 : index
      %13 = vector.load %arg7[%c0_11, %c0_12] : memref<16x256xf32, #tpu.memory_space<vmem>>, vector<16x256xf32>
      tpu.vector_store %arg7[%c0_11, %c0_12], %12 {strides = array<i32>} : memref<16x256xf32, #tpu.memory_space<vmem>>, vector<16x256xf32>,
    } else {
    }
    %c0 = arith.constant 0 : index
    %c0_1 = arith.constant 0 : index
    %3 = vector.load %arg7[%c0, %c0_1] : memref<16x256xf32, #tpu.memory_space<vmem>>, vector<16x256xf32>
    %c0_2 = arith.constant 0 : index
    %c0_3 = arith.constant 0 : index
    %4 = vector.load %arg3[%c0_2, %c0_3] : memref<16x128xbf16, #tpu.memory_space<vmem>>, vector<16x128xbf16>
    %c0_4 = arith.constant 0 : index
    %c0_5 = arith.constant 0 : index
    %5 = vector.load %arg4[%c0_4, %c0_5] : memref<128x256xbf16, #tpu.memory_space<vmem>>, vector<128x256xbf16>
    %cst = arith.constant dense<0.000000e+00> : vector<16x256xf32>
    %6 = tpu.matmul %4, %5, %cst {dimension_numbers = #tpu.dot_dimension_numbers<[1], [0], [0], [1], [0, 0, 1, 1], [], []>} : vector<16x128xbf16>, vector<128x256xbf16>, vector<16x256xf32> -> vector<16x256xf32>
    %7 = arith.addf %3, %6 : vector<16x256xf32>
    %c0_6 = arith.constant 0 : index
    %c0_7 = arith.constant 0 : index
    %8 = vector.load %arg7[%c0_6, %c0_7] : memref<16x256xf32, #tpu.memory_space<vmem>>, vector<16x256xf32>
    tpu.vector_store %arg7[%c0_6, %c0_7], %7 {strides = array<i32>} : memref<16x256xf32, #tpu.memory_space<vmem>>, vector<16x256xf32>,
    %c0_i32_8 = arith.constant 0 : i32
    %9 = arith.cmpi eq, %arg2, %c0_i32_8 : i32
    %10 = arith.extui %9 : i1 to i32
    %c0_i32_9 = arith.constant 0 : i32
    %11 = arith.cmpi ne, %10, %c0_i32_9 : i32
    scf.if %11 {
      %c0_10 = arith.constant 0 : index
      %c0_11 = arith.constant 0 : index
      %12 = vector.load %arg7[%c0_10, %c0_11] : memref<16x256xf32, #tpu.memory_space<vmem>>, vector<16x256xf32>
      %c0_12 = arith.constant 0 : index
      %c0_13 = arith.constant 0 : index
      %13 = vector.load %arg5[%c0_12, %c0_13] : memref<1x256xf32, #tpu.memory_space<vmem>>, vector<1x256xf32>
      %14 = vector.broadcast %13 : vector<1x256xf32> to vector<16x256xf32>
      %15 = arith.addf %12, %14 : vector<16x256xf32>
      %cst_14 = arith.constant 0.000000e+00 : f32
      %16 = vector.broadcast %cst_14 : f32 to vector<16x256xf32>
      %17 = arith.maximumf %15, %16 : vector<16x256xf32>
      %c0_15 = arith.constant 0 : index
      %c0_16 = arith.constant 0 : index
      %18 = vector.load %arg6[%c0_15, %c0_16] : memref<16x256xf32, #tpu.memory_space<vmem>>, vector<16x256xf32>
      tpu.vector_store %arg6[%c0_15, %c0_16], %17 {strides = array<i32>} : memref<16x256xf32, #tpu.memory_space<vmem>>, vector<16x256xf32>,
    } else {
    }
    return
  }
  func.func @transform_0(%arg0: i32, %arg1: i32, %arg2: i32) -> (i32, i32) {
    %c0_i32 = arith.constant 0 : i32
    return %arg0, %arg2 : i32, i32
  }
  func.func @transform_1(%arg0: i32, %arg1: i32, %arg2: i32) -> (i32, i32) {
    %c0_i32 = arith.constant 0 : i32
    return %arg2, %arg1 : i32, i32
  }
  func.func @transform_2(%arg0: i32, %arg1: i32, %arg2: i32) -> (i32, i32) {
    %c0_i32 = arith.constant 0 : i32
    %c0_i32_0 = arith.constant 0 : i32
    return %c0_i32, %arg1 : i32, i32
  }
  func.func @transform_3(%arg0: i32, %arg1: i32, %arg2: i32) -> (i32, i32) {
    %c0_i32 = arith.constant 0 : i32
    return %arg0, %arg1 : i32, i32
  }
}

module attributes {stable_mosaic.version = 11 : i64} {
  func.func @_mm_bias_act_kernel(%arg0: i32, %arg1: i32, %arg2: i32, %arg3: memref<16x256xbf16, #tpu.memory_space<vmem>>, %arg4: memref<256x256xbf16, #tpu.memory_space<vmem>>, %arg5: memref<1x256xf32, #tpu.memory_space<vmem>>, %arg6: memref<16x256xf32, #tpu.memory_space<vmem>>, %arg7: memref<16x256xf32, #tpu.memory_space<vmem>>) attributes {dimension_semantics = [#tpu.dimension_semantics<parallel>, #tpu.dimension_semantics<parallel>, #tpu.dimension_semantics<arbitrary>], iteration_bounds = array<i64: 1, 1, 1>, scalar_prefetch = 0 : i64, scratch_operands = 1 : i64, tpu.core_type = #tpu.core_type<tc>, window_params = [{transform_indices = @transform_0, window_bounds = array<i64: 16, 256>}, {transform_indices = @transform_1, window_bounds = array<i64: 256, 256>}, {transform_indices = @transform_2, window_bounds = array<i64: 1, 256>}, {transform_indices = @transform_3, window_bounds = array<i64: 16, 256>}]} {
    %c0_i32 = arith.constant 0 : i32
    %0 = arith.cmpi eq, %arg2, %c0_i32 : i32
    %1 = arith.extui %0 : i1 to i32
    %c0_i32_0 = arith.constant 0 : i32
    %2 = arith.cmpi ne, %1, %c0_i32_0 : i32
    scf.if %2 {
      %cst_10 = arith.constant 0.000000e+00 : f32
      %12 = vector.broadcast %cst_10 : f32 to vector<16x256xf32>
      %c0_11 = arith.constant 0 : index
      %c0_12 = arith.constant 0 : index
      %13 = vector.load %arg7[%c0_11, %c0_12] : memref<16x256xf32, #tpu.memory_space<vmem>>, vector<16x256xf32>
      tpu.vector_store %arg7[%c0_11, %c0_12], %12 {strides = array<i32>} : memref<16x256xf32, #tpu.memory_space<vmem>>, vector<16x256xf32>,
    } else {
    }
    %c0 = arith.constant 0 : index
    %c0_1 = arith.constant 0 : index
    %3 = vector.load %arg7[%c0, %c0_1] : memref<16x256xf32, #tpu.memory_space<vmem>>, vector<16x256xf32>
    %c0_2 = arith.constant 0 : index
    %c0_3 = arith.constant 0 : index
    %4 = vector.load %arg3[%c0_2, %c0_3] : memref<16x256xbf16, #tpu.memory_space<vmem>>, vector<16x256xbf16>
    %c0_4 = arith.constant 0 : index
    %c0_5 = arith.constant 0 : index
    %5 = vector.load %arg4[%c0_4, %c0_5] : memref<256x256xbf16, #tpu.memory_space<vmem>>, vector<256x256xbf16>
    %cst = arith.constant dense<0.000000e+00> : vector<16x256xf32>
    %6 = tpu.matmul %4, %5, %cst {dimension_numbers = #tpu.dot_dimension_numbers<[1], [0], [0], [1], [0, 0, 1, 1], [], []>} : vector<16x256xbf16>, vector<256x256xbf16>, vector<16x256xf32> -> vector<16x256xf32>
    %7 = arith.addf %3, %6 : vector<16x256xf32>
    %c0_6 = arith.constant 0 : index
    %c0_7 = arith.constant 0 : index
    %8 = vector.load %arg7[%c0_6, %c0_7] : memref<16x256xf32, #tpu.memory_space<vmem>>, vector<16x256xf32>
    tpu.vector_store %arg7[%c0_6, %c0_7], %7 {strides = array<i32>} : memref<16x256xf32, #tpu.memory_space<vmem>>, vector<16x256xf32>,
    %c0_i32_8 = arith.constant 0 : i32
    %9 = arith.cmpi eq, %arg2, %c0_i32_8 : i32
    %10 = arith.extui %9 : i1 to i32
    %c0_i32_9 = arith.constant 0 : i32
    %11 = arith.cmpi ne, %10, %c0_i32_9 : i32
    scf.if %11 {
      %c0_10 = arith.constant 0 : index
      %c0_11 = arith.constant 0 : index
      %12 = vector.load %arg7[%c0_10, %c0_11] : memref<16x256xf32, #tpu.memory_space<vmem>>, vector<16x256xf32>
      %c0_12 = arith.constant 0 : index
      %c0_13 = arith.constant 0 : index
      %13 = vector.load %arg5[%c0_12, %c0_13] : memref<1x256xf32, #tpu.memory_space<vmem>>, vector<1x256xf32>
      %14 = vector.broadcast %13 : vector<1x256xf32> to vector<16x256xf32>
      %15 = arith.addf %12, %14 : vector<16x256xf32>
      %c0_14 = arith.constant 0 : index
      %c0_15 = arith.constant 0 : index
      %16 = vector.load %arg6[%c0_14, %c0_15] : memref<16x256xf32, #tpu.memory_space<vmem>>, vector<16x256xf32>
      tpu.vector_store %arg6[%c0_14, %c0_15], %15 {strides = array<i32>} : memref<16x256xf32, #tpu.memory_space<vmem>>, vector<16x256xf32>,
    } else {
    }
    return
  }
  func.func @transform_0(%arg0: i32, %arg1: i32, %arg2: i32) -> (i32, i32) {
    %c0_i32 = arith.constant 0 : i32
    return %arg0, %arg2 : i32, i32
  }
  func.func @transform_1(%arg0: i32, %arg1: i32, %arg2: i32) -> (i32, i32) {
    %c0_i32 = arith.constant 0 : i32
    return %arg2, %arg1 : i32, i32
  }
  func.func @transform_2(%arg0: i32, %arg1: i32, %arg2: i32) -> (i32, i32) {
    %c0_i32 = arith.constant 0 : i32
    %c0_i32_0 = arith.constant 0 : i32
    return %c0_i32, %arg1 : i32, i32
  }
  func.func @transform_3(%arg0: i32, %arg1: i32, %arg2: i32) -> (i32, i32) {
    %c0_i32 = arith.constant 0 : i32
    return %arg0, %arg1 : i32, i32
  }
}

module attributes {stable_mosaic.version = 11 : i64} {
  func.func @_convex_upsample_kernel(%arg0: i32, %arg1: i32, %arg2: memref<1x9x16x4xf32, #tpu.memory_space<vmem>>, %arg3: memref<1x2x9x4xf32, #tpu.memory_space<vmem>>, %arg4: memref<1x2x16x4xf32, #tpu.memory_space<vmem>>) attributes {dimension_semantics = [#tpu.dimension_semantics<parallel>, #tpu.dimension_semantics<parallel>], iteration_bounds = array<i64: 1, 1>, scalar_prefetch = 0 : i64, scratch_operands = 0 : i64, tpu.core_type = #tpu.core_type<tc>, window_params = [{transform_indices = @transform_0, window_bounds = array<i64: 1, 9, 16, 4>}, {transform_indices = @transform_1, window_bounds = array<i64: 1, 2, 9, 4>}, {transform_indices = @transform_2, window_bounds = array<i64: 1, 2, 16, 4>}]} {
    %c0 = arith.constant 0 : index
    %c0_0 = arith.constant 0 : index
    %c0_1 = arith.constant 0 : index
    %c0_2 = arith.constant 0 : index
    %0 = vector.load %arg2[%c0, %c0_0, %c0_1, %c0_2] : memref<1x9x16x4xf32, #tpu.memory_space<vmem>>, vector<1x9x16x4xf32>
    %1 = vector.shape_cast %0 : vector<1x9x16x4xf32> to vector<9x16x4xf32>
    %2 = vector.extract_strided_slice %1 {offsets = [0, 0, 0], sizes = [1, 16, 4], strides = [1, 1, 1]} : vector<9x16x4xf32> to vector<1x16x4xf32>
    %3 = vector.shape_cast %2 : vector<1x16x4xf32> to vector<16x4xf32>
    %4 = vector.extract_strided_slice %1 {offsets = [1, 0, 0], sizes = [1, 16, 4], strides = [1, 1, 1]} : vector<9x16x4xf32> to vector<1x16x4xf32>
    %5 = vector.shape_cast %4 : vector<1x16x4xf32> to vector<16x4xf32>
    %6 = arith.maximumf %3, %5 : vector<16x4xf32>
    %7 = vector.extract_strided_slice %1 {offsets = [2, 0, 0], sizes = [1, 16, 4], strides = [1, 1, 1]} : vector<9x16x4xf32> to vector<1x16x4xf32>
    %8 = vector.shape_cast %7 : vector<1x16x4xf32> to vector<16x4xf32>
    %9 = arith.maximumf %6, %8 : vector<16x4xf32>
    %10 = vector.extract_strided_slice %1 {offsets = [3, 0, 0], sizes = [1, 16, 4], strides = [1, 1, 1]} : vector<9x16x4xf32> to vector<1x16x4xf32>
    %11 = vector.shape_cast %10 : vector<1x16x4xf32> to vector<16x4xf32>
    %12 = arith.maximumf %9, %11 : vector<16x4xf32>
    %13 = vector.extract_strided_slice %1 {offsets = [4, 0, 0], sizes = [1, 16, 4], strides = [1, 1, 1]} : vector<9x16x4xf32> to vector<1x16x4xf32>
    %14 = vector.shape_cast %13 : vector<1x16x4xf32> to vector<16x4xf32>
    %15 = arith.maximumf %12, %14 : vector<16x4xf32>
    %16 = vector.extract_strided_slice %1 {offsets = [5, 0, 0], sizes = [1, 16, 4], strides = [1, 1, 1]} : vector<9x16x4xf32> to vector<1x16x4xf32>
    %17 = vector.shape_cast %16 : vector<1x16x4xf32> to vector<16x4xf32>
    %18 = arith.maximumf %15, %17 : vector<16x4xf32>
    %19 = vector.extract_strided_slice %1 {offsets = [6, 0, 0], sizes = [1, 16, 4], strides = [1, 1, 1]} : vector<9x16x4xf32> to vector<1x16x4xf32>
    %20 = vector.shape_cast %19 : vector<1x16x4xf32> to vector<16x4xf32>
    %21 = arith.maximumf %18, %20 : vector<16x4xf32>
    %22 = vector.extract_strided_slice %1 {offsets = [7, 0, 0], sizes = [1, 16, 4], strides = [1, 1, 1]} : vector<9x16x4xf32> to vector<1x16x4xf32>
    %23 = vector.shape_cast %22 : vector<1x16x4xf32> to vector<16x4xf32>
    %24 = arith.maximumf %21, %23 : vector<16x4xf32>
    %25 = vector.extract_strided_slice %1 {offsets = [8, 0, 0], sizes = [1, 16, 4], strides = [1, 1, 1]} : vector<9x16x4xf32> to vector<1x16x4xf32>
    %26 = vector.shape_cast %25 : vector<1x16x4xf32> to vector<16x4xf32>
    %27 = arith.maximumf %24, %26 : vector<16x4xf32>
    %28 = vector.extract_strided_slice %1 {offsets = [0, 0, 0], sizes = [1, 16, 4], strides = [1, 1, 1]} : vector<9x16x4xf32> to vector<1x16x4xf32>
    %29 = vector.shape_cast %28 : vector<1x16x4xf32> to vector<16x4xf32>
    %30 = arith.subf %29, %27 : vector<16x4xf32>
    %31 = math.exp %30 : vector<16x4xf32>
    %32 = vector.extract_strided_slice %1 {offsets = [1, 0, 0], sizes = [1, 16, 4], strides = [1, 1, 1]} : vector<9x16x4xf32> to vector<1x16x4xf32>
    %33 = vector.shape_cast %32 : vector<1x16x4xf32> to vector<16x4xf32>
    %34 = arith.subf %33, %27 : vector<16x4xf32>
    %35 = math.exp %34 : vector<16x4xf32>
    %36 = vector.extract_strided_slice %1 {offsets = [2, 0, 0], sizes = [1, 16, 4], strides = [1, 1, 1]} : vector<9x16x4xf32> to vector<1x16x4xf32>
    %37 = vector.shape_cast %36 : vector<1x16x4xf32> to vector<16x4xf32>
    %38 = arith.subf %37, %27 : vector<16x4xf32>
    %39 = math.exp %38 : vector<16x4xf32>
    %40 = vector.extract_strided_slice %1 {offsets = [3, 0, 0], sizes = [1, 16, 4], strides = [1, 1, 1]} : vector<9x16x4xf32> to vector<1x16x4xf32>
    %41 = vector.shape_cast %40 : vector<1x16x4xf32> to vector<16x4xf32>
    %42 = arith.subf %41, %27 : vector<16x4xf32>
    %43 = math.exp %42 : vector<16x4xf32>
    %44 = vector.extract_strided_slice %1 {offsets = [4, 0, 0], sizes = [1, 16, 4], strides = [1, 1, 1]} : vector<9x16x4xf32> to vector<1x16x4xf32>
    %45 = vector.shape_cast %44 : vector<1x16x4xf32> to vector<16x4xf32>
    %46 = arith.subf %45, %27 : vector<16x4xf32>
    %47 = math.exp %46 : vector<16x4xf32>
    %48 = vector.extract_strided_slice %1 {offsets = [5, 0, 0], sizes = [1, 16, 4], strides = [1, 1, 1]} : vector<9x16x4xf32> to vector<1x16x4xf32>
    %49 = vector.shape_cast %48 : vector<1x16x4xf32> to vector<16x4xf32>
    %50 = arith.subf %49, %27 : vector<16x4xf32>
    %51 = math.exp %50 : vector<16x4xf32>
    %52 = vector.extract_strided_slice %1 {offsets = [6, 0, 0], sizes = [1, 16, 4], strides = [1, 1, 1]} : vector<9x16x4xf32> to vector<1x16x4xf32>
    %53 = vector.shape_cast %52 : vector<1x16x4xf32> to vector<16x4xf32>
    %54 = arith.subf %53, %27 : vector<16x4xf32>
    %55 = math.exp %54 : vector<16x4xf32>
    %56 = vector.extract_strided_slice %1 {offsets = [7, 0, 0], sizes = [1, 16, 4], strides = [1, 1, 1]} : vector<9x16x4xf32> to vector<1x16x4xf32>
    %57 = vector.shape_cast %56 : vector<1x16x4xf32> to vector<16x4xf32>
    %58 = arith.subf %57, %27 : vector<16x4xf32>
    %59 = math.exp %58 : vector<16x4xf32>
    %60 = vector.extract_strided_slice %1 {offsets = [8, 0, 0], sizes = [1, 16, 4], strides = [1, 1, 1]} : vector<9x16x4xf32> to vector<1x16x4xf32>
    %61 = vector.shape_cast %60 : vector<1x16x4xf32> to vector<16x4xf32>
    %62 = arith.subf %61, %27 : vector<16x4xf32>
    %63 = math.exp %62 : vector<16x4xf32>
    %64 = arith.addf %31, %35 : vector<16x4xf32>
    %65 = arith.addf %64, %39 : vector<16x4xf32>
    %66 = arith.addf %65, %43 : vector<16x4xf32>
    %67 = arith.addf %66, %47 : vector<16x4xf32>
    %68 = arith.addf %67, %51 : vector<16x4xf32>
    %69 = arith.addf %68, %55 : vector<16x4xf32>
    %70 = arith.addf %69, %59 : vector<16x4xf32>
    %71 = arith.addf %70, %63 : vector<16x4xf32>
    %72 = tpu.reciprocal %71 {approx = true} : vector<16x4xf32> -> vector<16x4xf32>
    %c0_3 = arith.constant 0 : index
    %c0_4 = arith.constant 0 : index
    %c0_5 = arith.constant 0 : index
    %c0_6 = arith.constant 0 : index
    %73 = vector.load %arg3[%c0_3, %c0_4, %c0_5, %c0_6] : memref<1x2x9x4xf32, #tpu.memory_space<vmem>>, vector<1x2x9x4xf32>
    %74 = vector.shape_cast %73 : vector<1x2x9x4xf32> to vector<2x9x4xf32>
    %cst = arith.constant 0.000000e+00 : f32
    %75 = vector.broadcast %cst : f32 to vector<2x16x4xf32>
    %76 = arith.mulf %31, %72 : vector<16x4xf32>
    %77 = vector.shape_cast %76 : vector<16x4xf32> to vector<1x16x4xf32>
    %78 = vector.extract_strided_slice %74 {offsets = [0, 0, 0], sizes = [2, 1, 4], strides = [1, 1, 1]} : vector<2x9x4xf32> to vector<2x1x4xf32>
    %79 = vector.shape_cast %78 : vector<2x1x4xf32> to vector<2x4xf32>
    %80 = vector.shape_cast %79 : vector<2x4xf32> to vector<2x1x4xf32>
    %81 = vector.broadcast %77 : vector<1x16x4xf32> to vector<2x16x4xf32>
    %82 = vector.broadcast %80 : vector<2x1x4xf32> to vector<2x16x4xf32>
    %83 = arith.mulf %81, %82 : vector<2x16x4xf32>
    %84 = arith.addf %75, %83 : vector<2x16x4xf32>
    %85 = arith.mulf %35, %72 : vector<16x4xf32>
    %86 = vector.shape_cast %85 : vector<16x4xf32> to vector<1x16x4xf32>
    %87 = vector.extract_strided_slice %74 {offsets = [0, 1, 0], sizes = [2, 1, 4], strides = [1, 1, 1]} : vector<2x9x4xf32> to vector<2x1x4xf32>
    %88 = vector.shape_cast %87 : vector<2x1x4xf32> to vector<2x4xf32>
    %89 = vector.shape_cast %88 : vector<2x4xf32> to vector<2x1x4xf32>
    %90 = vector.broadcast %86 : vector<1x16x4xf32> to vector<2x16x4xf32>
    %91 = vector.broadcast %89 : vector<2x1x4xf32> to vector<2x16x4xf32>
    %92 = arith.mulf %90, %91 : vector<2x16x4xf32>
    %93 = arith.addf %84, %92 : vector<2x16x4xf32>
    %94 = arith.mulf %39, %72 : vector<16x4xf32>
    %95 = vector.shape_cast %94 : vector<16x4xf32> to vector<1x16x4xf32>
    %96 = vector.extract_strided_slice %74 {offsets = [0, 2, 0], sizes = [2, 1, 4], strides = [1, 1, 1]} : vector<2x9x4xf32> to vector<2x1x4xf32>
    %97 = vector.shape_cast %96 : vector<2x1x4xf32> to vector<2x4xf32>
    %98 = vector.shape_cast %97 : vector<2x4xf32> to vector<2x1x4xf32>
    %99 = vector.broadcast %95 : vector<1x16x4xf32> to vector<2x16x4xf32>
    %100 = vector.broadcast %98 : vector<2x1x4xf32> to vector<2x16x4xf32>
    %101 = arith.mulf %99, %100 : vector<2x16x4xf32>
    %102 = arith.addf %93, %101 : vector<2x16x4xf32>
    %103 = arith.mulf %43, %72 : vector<16x4xf32>
    %104 = vector.shape_cast %103 : vector<16x4xf32> to vector<1x16x4xf32>
    %105 = vector.extract_strided_slice %74 {offsets = [0, 3, 0], sizes = [2, 1, 4], strides = [1, 1, 1]} : vector<2x9x4xf32> to vector<2x1x4xf32>
    %106 = vector.shape_cast %105 : vector<2x1x4xf32> to vector<2x4xf32>
    %107 = vector.shape_cast %106 : vector<2x4xf32> to vector<2x1x4xf32>
    %108 = vector.broadcast %104 : vector<1x16x4xf32> to vector<2x16x4xf32>
    %109 = vector.broadcast %107 : vector<2x1x4xf32> to vector<2x16x4xf32>
    %110 = arith.mulf %108, %109 : vector<2x16x4xf32>
    %111 = arith.addf %102, %110 : vector<2x16x4xf32>
    %112 = arith.mulf %47, %72 : vector<16x4xf32>
    %113 = vector.shape_cast %112 : vector<16x4xf32> to vector<1x16x4xf32>
    %114 = vector.extract_strided_slice %74 {offsets = [0, 4, 0], sizes = [2, 1, 4], strides = [1, 1, 1]} : vector<2x9x4xf32> to vector<2x1x4xf32>
    %115 = vector.shape_cast %114 : vector<2x1x4xf32> to vector<2x4xf32>
    %116 = vector.shape_cast %115 : vector<2x4xf32> to vector<2x1x4xf32>
    %117 = vector.broadcast %113 : vector<1x16x4xf32> to vector<2x16x4xf32>
    %118 = vector.broadcast %116 : vector<2x1x4xf32> to vector<2x16x4xf32>
    %119 = arith.mulf %117, %118 : vector<2x16x4xf32>
    %120 = arith.addf %111, %119 : vector<2x16x4xf32>
    %121 = arith.mulf %51, %72 : vector<16x4xf32>
    %122 = vector.shape_cast %121 : vector<16x4xf32> to vector<1x16x4xf32>
    %123 = vector.extract_strided_slice %74 {offsets = [0, 5, 0], sizes = [2, 1, 4], strides = [1, 1, 1]} : vector<2x9x4xf32> to vector<2x1x4xf32>
    %124 = vector.shape_cast %123 : vector<2x1x4xf32> to vector<2x4xf32>
    %125 = vector.shape_cast %124 : vector<2x4xf32> to vector<2x1x4xf32>
    %126 = vector.broadcast %122 : vector<1x16x4xf32> to vector<2x16x4xf32>
    %127 = vector.broadcast %125 : vector<2x1x4xf32> to vector<2x16x4xf32>
    %128 = arith.mulf %126, %127 : vector<2x16x4xf32>
    %129 = arith.addf %120, %128 : vector<2x16x4xf32>
    %130 = arith.mulf %55, %72 : vector<16x4xf32>
    %131 = vector.shape_cast %130 : vector<16x4xf32> to vector<1x16x4xf32>
    %132 = vector.extract_strided_slice %74 {offsets = [0, 6, 0], sizes = [2, 1, 4], strides = [1, 1, 1]} : vector<2x9x4xf32> to vector<2x1x4xf32>
    %133 = vector.shape_cast %132 : vector<2x1x4xf32> to vector<2x4xf32>
    %134 = vector.shape_cast %133 : vector<2x4xf32> to vector<2x1x4xf32>
    %135 = vector.broadcast %131 : vector<1x16x4xf32> to vector<2x16x4xf32>
    %136 = vector.broadcast %134 : vector<2x1x4xf32> to vector<2x16x4xf32>
    %137 = arith.mulf %135, %136 : vector<2x16x4xf32>
    %138 = arith.addf %129, %137 : vector<2x16x4xf32>
    %139 = arith.mulf %59, %72 : vector<16x4xf32>
    %140 = vector.shape_cast %139 : vector<16x4xf32> to vector<1x16x4xf32>
    %141 = vector.extract_strided_slice %74 {offsets = [0, 7, 0], sizes = [2, 1, 4], strides = [1, 1, 1]} : vector<2x9x4xf32> to vector<2x1x4xf32>
    %142 = vector.shape_cast %141 : vector<2x1x4xf32> to vector<2x4xf32>
    %143 = vector.shape_cast %142 : vector<2x4xf32> to vector<2x1x4xf32>
    %144 = vector.broadcast %140 : vector<1x16x4xf32> to vector<2x16x4xf32>
    %145 = vector.broadcast %143 : vector<2x1x4xf32> to vector<2x16x4xf32>
    %146 = arith.mulf %144, %145 : vector<2x16x4xf32>
    %147 = arith.addf %138, %146 : vector<2x16x4xf32>
    %148 = arith.mulf %63, %72 : vector<16x4xf32>
    %149 = vector.shape_cast %148 : vector<16x4xf32> to vector<1x16x4xf32>
    %150 = vector.extract_strided_slice %74 {offsets = [0, 8, 0], sizes = [2, 1, 4], strides = [1, 1, 1]} : vector<2x9x4xf32> to vector<2x1x4xf32>
    %151 = vector.shape_cast %150 : vector<2x1x4xf32> to vector<2x4xf32>
    %152 = vector.shape_cast %151 : vector<2x4xf32> to vector<2x1x4xf32>
    %153 = vector.broadcast %149 : vector<1x16x4xf32> to vector<2x16x4xf32>
    %154 = vector.broadcast %152 : vector<2x1x4xf32> to vector<2x16x4xf32>
    %155 = arith.mulf %153, %154 : vector<2x16x4xf32>
    %156 = arith.addf %147, %155 : vector<2x16x4xf32>
    %c0_7 = arith.constant 0 : index
    %c0_8 = arith.constant 0 : index
    %c0_9 = arith.constant 0 : index
    %c0_10 = arith.constant 0 : index
    %157 = vector.load %arg4[%c0_7, %c0_8, %c0_9, %c0_10] : memref<1x2x16x4xf32, #tpu.memory_space<vmem>>, vector<1x2x16x4xf32>
    %158 = vector.shape_cast %157 : vector<1x2x16x4xf32> to vector<2x16x4xf32>
    %159 = vector.shape_cast %156 : vector<2x16x4xf32> to vector<1x2x16x4xf32>
    tpu.vector_store %arg4[%c0_7, %c0_8, %c0_9, %c0_10], %159 {strides = array<i32>} : memref<1x2x16x4xf32, #tpu.memory_space<vmem>>, vector<1x2x16x4xf32>,
    return
  }
  func.func @transform_0(%arg0: i32, %arg1: i32) -> (i32, i32, i32, i32) {
    %c0_i32 = arith.constant 0 : i32
    %c0_i32_0 = arith.constant 0 : i32
    %c0_i32_1 = arith.constant 0 : i32
    return %arg0, %c0_i32, %c0_i32_0, %arg1 : i32, i32, i32, i32
  }
  func.func @transform_1(%arg0: i32, %arg1: i32) -> (i32, i32, i32, i32) {
    %c0_i32 = arith.constant 0 : i32
    %c0_i32_0 = arith.constant 0 : i32
    %c0_i32_1 = arith.constant 0 : i32
    return %arg0, %c0_i32, %c0_i32_0, %arg1 : i32, i32, i32, i32
  }
  func.func @transform_2(%arg0: i32, %arg1: i32) -> (i32, i32, i32, i32) {
    %c0_i32 = arith.constant 0 : i32
    %c0_i32_0 = arith.constant 0 : i32
    %c0_i32_1 = arith.constant 0 : i32
    return %arg0, %c0_i32, %c0_i32_0, %arg1 : i32, i32, i32, i32
  }
}

module attributes {stable_mosaic.version = 11 : i64} {
  func.func @_corr_kernel(%arg0: i32, %arg1: i32, %arg2: memref<1x256x64xf32, #tpu.memory_space<vmem>>, %arg3: memref<1x9x256x64xf32, #tpu.memory_space<vmem>>, %arg4: memref<1x9x64xf32, #tpu.memory_space<vmem>>) attributes {dimension_semantics = [#tpu.dimension_semantics<parallel>, #tpu.dimension_semantics<parallel>], iteration_bounds = array<i64: 1, 1>, scalar_prefetch = 0 : i64, scratch_operands = 0 : i64, tpu.core_type = #tpu.core_type<tc>, window_params = [{transform_indices = @transform_0, window_bounds = array<i64: 1, 256, 64>}, {transform_indices = @transform_1, window_bounds = array<i64: 1, 9, 256, 64>}, {transform_indices = @transform_2, window_bounds = array<i64: 1, 9, 64>}]} {
    %c0 = arith.constant 0 : index
    %c0_0 = arith.constant 0 : index
    %c0_1 = arith.constant 0 : index
    %0 = vector.load %arg2[%c0, %c0_0, %c0_1] : memref<1x256x64xf32, #tpu.memory_space<vmem>>, vector<1x256x64xf32>
    %1 = vector.shape_cast %0 : vector<1x256x64xf32> to vector<256x64xf32>
    %cst = arith.constant 6.250000e-02 : f32
    %2 = vector.broadcast %cst : f32 to vector<256x64xf32>
    %3 = arith.mulf %1, %2 : vector<256x64xf32>
    %c0_2 = arith.constant 0 : index
    %c0_3 = arith.constant 0 : index
    %c0_4 = arith.constant 0 : index
    %c0_5 = arith.constant 0 : index
    %4 = vector.load %arg3[%c0_2, %c0_3, %c0_4, %c0_5] : memref<1x9x256x64xf32, #tpu.memory_space<vmem>>, vector<1x1x256x64xf32>
    %5 = vector.shape_cast %4 : vector<1x1x256x64xf32> to vector<256x64xf32>
    %6 = arith.mulf %5, %3 : vector<256x64xf32>
    %cst_6 = arith.constant dense<0.000000e+00> : vector<64xf32>
    %7 = vector.multi_reduction <add>, %6, %cst_6 [0] : vector<256x64xf32> to vector<64xf32>
    %8 = vector.shape_cast %7 : vector<64xf32> to vector<1x64xf32>
    %c0_7 = arith.constant 0 : index
    %c0_8 = arith.constant 0 : index
    %c0_9 = arith.constant 0 : index
    %9 = vector.load %arg4[%c0_7, %c0_8, %c0_9] : memref<1x9x64xf32, #tpu.memory_space<vmem>>, vector<1x1x64xf32>
    %10 = vector.shape_cast %9 : vector<1x1x64xf32> to vector<1x64xf32>
    %11 = vector.shape_cast %8 : vector<1x64xf32> to vector<1x1x64xf32>
    tpu.vector_store %arg4[%c0_7, %c0_8, %c0_9], %11 {strides = array<i32>} : memref<1x9x64xf32, #tpu.memory_space<vmem>>, vector<1x1x64xf32>,
    %c0_10 = arith.constant 0 : index
    %c1 = arith.constant 1 : index
    %c0_11 = arith.constant 0 : index
    %c0_12 = arith.constant 0 : index
    %12 = vector.load %arg3[%c0_10, %c1, %c0_11, %c0_12] : memref<1x9x256x64xf32, #tpu.memory_space<vmem>>, vector<1x1x256x64xf32>
    %13 = vector.shape_cast %12 : vector<1x1x256x64xf32> to vector<256x64xf32>
    %14 = arith.mulf %13, %3 : vector<256x64xf32>
    %cst_13 = arith.constant dense<0.000000e+00> : vector<64xf32>
    %15 = vector.multi_reduction <add>, %14, %cst_13 [0] : vector<256x64xf32> to vector<64xf32>
    %16 = vector.shape_cast %15 : vector<64xf32> to vector<1x64xf32>
    %c0_14 = arith.constant 0 : index
    %c1_15 = arith.constant 1 : index
    %c0_16 = arith.constant 0 : index
    %17 = vector.load %arg4[%c0_14, %c1_15, %c0_16] : memref<1x9x64xf32, #tpu.memory_space<vmem>>, vector<1x1x64xf32>
    %18 = vector.shape_cast %17 : vector<1x1x64xf32> to vector<1x64xf32>
    %19 = vector.shape_cast %16 : vector<1x64xf32> to vector<1x1x64xf32>
    tpu.vector_store %arg4[%c0_14, %c1_15, %c0_16], %19 {strides = array<i32>} : memref<1x9x64xf32, #tpu.memory_space<vmem>>, vector<1x1x64xf32>,
    %c0_17 = arith.constant 0 : index
    %c2 = arith.constant 2 : index
    %c0_18 = arith.constant 0 : index
    %c0_19 = arith.constant 0 : index
    %20 = vector.load %arg3[%c0_17, %c2, %c0_18, %c0_19] : memref<1x9x256x64xf32, #tpu.memory_space<vmem>>, vector<1x1x256x64xf32>
    %21 = vector.shape_cast %20 : vector<1x1x256x64xf32> to vector<256x64xf32>
    %22 = arith.mulf %21, %3 : vector<256x64xf32>
    %cst_20 = arith.constant dense<0.000000e+00> : vector<64xf32>
    %23 = vector.multi_reduction <add>, %22, %cst_20 [0] : vector<256x64xf32> to vector<64xf32>
    %24 = vector.shape_cast %23 : vector<64xf32> to vector<1x64xf32>
    %c0_21 = arith.constant 0 : index
    %c2_22 = arith.constant 2 : index
    %c0_23 = arith.constant 0 : index
    %25 = vector.load %arg4[%c0_21, %c2_22, %c0_23] : memref<1x9x64xf32, #tpu.memory_space<vmem>>, vector<1x1x64xf32>
    %26 = vector.shape_cast %25 : vector<1x1x64xf32> to vector<1x64xf32>
    %27 = vector.shape_cast %24 : vector<1x64xf32> to vector<1x1x64xf32>
    tpu.vector_store %arg4[%c0_21, %c2_22, %c0_23], %27 {strides = array<i32>} : memref<1x9x64xf32, #tpu.memory_space<vmem>>, vector<1x1x64xf32>,
    %c0_24 = arith.constant 0 : index
    %c3 = arith.constant 3 : index
    %c0_25 = arith.constant 0 : index
    %c0_26 = arith.constant 0 : index
    %28 = vector.load %arg3[%c0_24, %c3, %c0_25, %c0_26] : memref<1x9x256x64xf32, #tpu.memory_space<vmem>>, vector<1x1x256x64xf32>
    %29 = vector.shape_cast %28 : vector<1x1x256x64xf32> to vector<256x64xf32>
    %30 = arith.mulf %29, %3 : vector<256x64xf32>
    %cst_27 = arith.constant dense<0.000000e+00> : vector<64xf32>
    %31 = vector.multi_reduction <add>, %30, %cst_27 [0] : vector<256x64xf32> to vector<64xf32>
    %32 = vector.shape_cast %31 : vector<64xf32> to vector<1x64xf32>
    %c0_28 = arith.constant 0 : index
    %c3_29 = arith.constant 3 : index
    %c0_30 = arith.constant 0 : index
    %33 = vector.load %arg4[%c0_28, %c3_29, %c0_30] : memref<1x9x64xf32, #tpu.memory_space<vmem>>, vector<1x1x64xf32>
    %34 = vector.shape_cast %33 : vector<1x1x64xf32> to vector<1x64xf32>
    %35 = vector.shape_cast %32 : vector<1x64xf32> to vector<1x1x64xf32>
    tpu.vector_store %arg4[%c0_28, %c3_29, %c0_30], %35 {strides = array<i32>} : memref<1x9x64xf32, #tpu.memory_space<vmem>>, vector<1x1x64xf32>,
    %c0_31 = arith.constant 0 : index
    %c4 = arith.constant 4 : index
    %c0_32 = arith.constant 0 : index
    %c0_33 = arith.constant 0 : index
    %36 = vector.load %arg3[%c0_31, %c4, %c0_32, %c0_33] : memref<1x9x256x64xf32, #tpu.memory_space<vmem>>, vector<1x1x256x64xf32>
    %37 = vector.shape_cast %36 : vector<1x1x256x64xf32> to vector<256x64xf32>
    %38 = arith.mulf %37, %3 : vector<256x64xf32>
    %cst_34 = arith.constant dense<0.000000e+00> : vector<64xf32>
    %39 = vector.multi_reduction <add>, %38, %cst_34 [0] : vector<256x64xf32> to vector<64xf32>
    %40 = vector.shape_cast %39 : vector<64xf32> to vector<1x64xf32>
    %c0_35 = arith.constant 0 : index
    %c4_36 = arith.constant 4 : index
    %c0_37 = arith.constant 0 : index
    %41 = vector.load %arg4[%c0_35, %c4_36, %c0_37] : memref<1x9x64xf32, #tpu.memory_space<vmem>>, vector<1x1x64xf32>
    %42 = vector.shape_cast %41 : vector<1x1x64xf32> to vector<1x64xf32>
    %43 = vector.shape_cast %40 : vector<1x64xf32> to vector<1x1x64xf32>
    tpu.vector_store %arg4[%c0_35, %c4_36, %c0_37], %43 {strides = array<i32>} : memref<1x9x64xf32, #tpu.memory_space<vmem>>, vector<1x1x64xf32>,
    %c0_38 = arith.constant 0 : index
    %c5 = arith.constant 5 : index
    %c0_39 = arith.constant 0 : index
    %c0_40 = arith.constant 0 : index
    %44 = vector.load %arg3[%c0_38, %c5, %c0_39, %c0_40] : memref<1x9x256x64xf32, #tpu.memory_space<vmem>>, vector<1x1x256x64xf32>
    %45 = vector.shape_cast %44 : vector<1x1x256x64xf32> to vector<256x64xf32>
    %46 = arith.mulf %45, %3 : vector<256x64xf32>
    %cst_41 = arith.constant dense<0.000000e+00> : vector<64xf32>
    %47 = vector.multi_reduction <add>, %46, %cst_41 [0] : vector<256x64xf32> to vector<64xf32>
    %48 = vector.shape_cast %47 : vector<64xf32> to vector<1x64xf32>
    %c0_42 = arith.constant 0 : index
    %c5_43 = arith.constant 5 : index
    %c0_44 = arith.constant 0 : index
    %49 = vector.load %arg4[%c0_42, %c5_43, %c0_44] : memref<1x9x64xf32, #tpu.memory_space<vmem>>, vector<1x1x64xf32>
    %50 = vector.shape_cast %49 : vector<1x1x64xf32> to vector<1x64xf32>
    %51 = vector.shape_cast %48 : vector<1x64xf32> to vector<1x1x64xf32>
    tpu.vector_store %arg4[%c0_42, %c5_43, %c0_44], %51 {strides = array<i32>} : memref<1x9x64xf32, #tpu.memory_space<vmem>>, vector<1x1x64xf32>,
    %c0_45 = arith.constant 0 : index
    %c6 = arith.constant 6 : index
    %c0_46 = arith.constant 0 : index
    %c0_47 = arith.constant 0 : index
    %52 = vector.load %arg3[%c0_45, %c6, %c0_46, %c0_47] : memref<1x9x256x64xf32, #tpu.memory_space<vmem>>, vector<1x1x256x64xf32>
    %53 = vector.shape_cast %52 : vector<1x1x256x64xf32> to vector<256x64xf32>
    %54 = arith.mulf %53, %3 : vector<256x64xf32>
    %cst_48 = arith.constant dense<0.000000e+00> : vector<64xf32>
    %55 = vector.multi_reduction <add>, %54, %cst_48 [0] : vector<256x64xf32> to vector<64xf32>
    %56 = vector.shape_cast %55 : vector<64xf32> to vector<1x64xf32>
    %c0_49 = arith.constant 0 : index
    %c6_50 = arith.constant 6 : index
    %c0_51 = arith.constant 0 : index
    %57 = vector.load %arg4[%c0_49, %c6_50, %c0_51] : memref<1x9x64xf32, #tpu.memory_space<vmem>>, vector<1x1x64xf32>
    %58 = vector.shape_cast %57 : vector<1x1x64xf32> to vector<1x64xf32>
    %59 = vector.shape_cast %56 : vector<1x64xf32> to vector<1x1x64xf32>
    tpu.vector_store %arg4[%c0_49, %c6_50, %c0_51], %59 {strides = array<i32>} : memref<1x9x64xf32, #tpu.memory_space<vmem>>, vector<1x1x64xf32>,
    %c0_52 = arith.constant 0 : index
    %c7 = arith.constant 7 : index
    %c0_53 = arith.constant 0 : index
    %c0_54 = arith.constant 0 : index
    %60 = vector.load %arg3[%c0_52, %c7, %c0_53, %c0_54] : memref<1x9x256x64xf32, #tpu.memory_space<vmem>>, vector<1x1x256x64xf32>
    %61 = vector.shape_cast %60 : vector<1x1x256x64xf32> to vector<256x64xf32>
    %62 = arith.mulf %61, %3 : vector<256x64xf32>
    %cst_55 = arith.constant dense<0.000000e+00> : vector<64xf32>
    %63 = vector.multi_reduction <add>, %62, %cst_55 [0] : vector<256x64xf32> to vector<64xf32>
    %64 = vector.shape_cast %63 : vector<64xf32> to vector<1x64xf32>
    %c0_56 = arith.constant 0 : index
    %c7_57 = arith.constant 7 : index
    %c0_58 = arith.constant 0 : index
    %65 = vector.load %arg4[%c0_56, %c7_57, %c0_58] : memref<1x9x64xf32, #tpu.memory_space<vmem>>, vector<1x1x64xf32>
    %66 = vector.shape_cast %65 : vector<1x1x64xf32> to vector<1x64xf32>
    %67 = vector.shape_cast %64 : vector<1x64xf32> to vector<1x1x64xf32>
    tpu.vector_store %arg4[%c0_56, %c7_57, %c0_58], %67 {strides = array<i32>} : memref<1x9x64xf32, #tpu.memory_space<vmem>>, vector<1x1x64xf32>,
    %c0_59 = arith.constant 0 : index
    %c8 = arith.constant 8 : index
    %c0_60 = arith.constant 0 : index
    %c0_61 = arith.constant 0 : index
    %68 = vector.load %arg3[%c0_59, %c8, %c0_60, %c0_61] : memref<1x9x256x64xf32, #tpu.memory_space<vmem>>, vector<1x1x256x64xf32>
    %69 = vector.shape_cast %68 : vector<1x1x256x64xf32> to vector<256x64xf32>
    %70 = arith.mulf %69, %3 : vector<256x64xf32>
    %cst_62 = arith.constant dense<0.000000e+00> : vector<64xf32>
    %71 = vector.multi_reduction <add>, %70, %cst_62 [0] : vector<256x64xf32> to vector<64xf32>
    %72 = vector.shape_cast %71 : vector<64xf32> to vector<1x64xf32>
    %c0_63 = arith.constant 0 : index
    %c8_64 = arith.constant 8 : index
    %c0_65 = arith.constant 0 : index
    %73 = vector.load %arg4[%c0_63, %c8_64, %c0_65] : memref<1x9x64xf32, #tpu.memory_space<vmem>>, vector<1x1x64xf32>
    %74 = vector.shape_cast %73 : vector<1x1x64xf32> to vector<1x64xf32>
    %75 = vector.shape_cast %72 : vector<1x64xf32> to vector<1x1x64xf32>
    tpu.vector_store %arg4[%c0_63, %c8_64, %c0_65], %75 {strides = array<i32>} : memref<1x9x64xf32, #tpu.memory_space<vmem>>, vector<1x1x64xf32>,
    return
  }
  func.func @transform_0(%arg0: i32, %arg1: i32) -> (i32, i32, i32) {
    %c0_i32 = arith.constant 0 : i32
    %c0_i32_0 = arith.constant 0 : i32
    return %arg0, %c0_i32, %arg1 : i32, i32, i32
  }
  func.func @transform_1(%arg0: i32, %arg1: i32) -> (i32, i32, i32, i32) {
    %c0_i32 = arith.constant 0 : i32
    %c0_i32_0 = arith.constant 0 : i32
    %c0_i32_1 = arith.constant 0 : i32
    return %arg0, %c0_i32, %c0_i32_0, %arg1 : i32, i32, i32, i32
  }
  func.func @transform_2(%arg0: i32, %arg1: i32) -> (i32, i32, i32) {
    %c0_i32 = arith.constant 0 : i32
    %c0_i32_0 = arith.constant 0 : i32
    return %arg0, %c0_i32, %arg1 : i32, i32, i32
  }
}

module attributes {stable_mosaic.version = 11 : i64} {
  func.func @_mm_bias_act_kernel(%arg0: i32, %arg1: i32, %arg2: i32, %arg3: memref<64x128xbf16, #tpu.memory_space<vmem>>, %arg4: memref<128x128xbf16, #tpu.memory_space<vmem>>, %arg5: memref<1x128xf32, #tpu.memory_space<vmem>>, %arg6: memref<64x128xf32, #tpu.memory_space<vmem>>, %arg7: memref<64x128xf32, #tpu.memory_space<vmem>>) attributes {dimension_semantics = [#tpu.dimension_semantics<parallel>, #tpu.dimension_semantics<parallel>, #tpu.dimension_semantics<arbitrary>], iteration_bounds = array<i64: 1, 1, 1>, scalar_prefetch = 0 : i64, scratch_operands = 1 : i64, tpu.core_type = #tpu.core_type<tc>, window_params = [{transform_indices = @transform_0, window_bounds = array<i64: 64, 128>}, {transform_indices = @transform_1, window_bounds = array<i64: 128, 128>}, {transform_indices = @transform_2, window_bounds = array<i64: 1, 128>}, {transform_indices = @transform_3, window_bounds = array<i64: 64, 128>}]} {
    %c0_i32 = arith.constant 0 : i32
    %0 = arith.cmpi eq, %arg2, %c0_i32 : i32
    %1 = arith.extui %0 : i1 to i32
    %c0_i32_0 = arith.constant 0 : i32
    %2 = arith.cmpi ne, %1, %c0_i32_0 : i32
    scf.if %2 {
      %cst_10 = arith.constant 0.000000e+00 : f32
      %12 = vector.broadcast %cst_10 : f32 to vector<64x128xf32>
      %c0_11 = arith.constant 0 : index
      %c0_12 = arith.constant 0 : index
      %13 = vector.load %arg7[%c0_11, %c0_12] : memref<64x128xf32, #tpu.memory_space<vmem>>, vector<64x128xf32>
      tpu.vector_store %arg7[%c0_11, %c0_12], %12 {strides = array<i32>} : memref<64x128xf32, #tpu.memory_space<vmem>>, vector<64x128xf32>,
    } else {
    }
    %c0 = arith.constant 0 : index
    %c0_1 = arith.constant 0 : index
    %3 = vector.load %arg7[%c0, %c0_1] : memref<64x128xf32, #tpu.memory_space<vmem>>, vector<64x128xf32>
    %c0_2 = arith.constant 0 : index
    %c0_3 = arith.constant 0 : index
    %4 = vector.load %arg3[%c0_2, %c0_3] : memref<64x128xbf16, #tpu.memory_space<vmem>>, vector<64x128xbf16>
    %c0_4 = arith.constant 0 : index
    %c0_5 = arith.constant 0 : index
    %5 = vector.load %arg4[%c0_4, %c0_5] : memref<128x128xbf16, #tpu.memory_space<vmem>>, vector<128x128xbf16>
    %cst = arith.constant dense<0.000000e+00> : vector<64x128xf32>
    %6 = tpu.matmul %4, %5, %cst {dimension_numbers = #tpu.dot_dimension_numbers<[1], [0], [0], [1], [0, 0, 1, 1], [], []>} : vector<64x128xbf16>, vector<128x128xbf16>, vector<64x128xf32> -> vector<64x128xf32>
    %7 = arith.addf %3, %6 : vector<64x128xf32>
    %c0_6 = arith.constant 0 : index
    %c0_7 = arith.constant 0 : index
    %8 = vector.load %arg7[%c0_6, %c0_7] : memref<64x128xf32, #tpu.memory_space<vmem>>, vector<64x128xf32>
    tpu.vector_store %arg7[%c0_6, %c0_7], %7 {strides = array<i32>} : memref<64x128xf32, #tpu.memory_space<vmem>>, vector<64x128xf32>,
    %c0_i32_8 = arith.constant 0 : i32
    %9 = arith.cmpi eq, %arg2, %c0_i32_8 : i32
    %10 = arith.extui %9 : i1 to i32
    %c0_i32_9 = arith.constant 0 : i32
    %11 = arith.cmpi ne, %10, %c0_i32_9 : i32
    scf.if %11 {
      %c0_10 = arith.constant 0 : index
      %c0_11 = arith.constant 0 : index
      %12 = vector.load %arg7[%c0_10, %c0_11] : memref<64x128xf32, #tpu.memory_space<vmem>>, vector<64x128xf32>
      %c0_12 = arith.constant 0 : index
      %c0_13 = arith.constant 0 : index
      %13 = vector.load %arg5[%c0_12, %c0_13] : memref<1x128xf32, #tpu.memory_space<vmem>>, vector<1x128xf32>
      %14 = vector.broadcast %13 : vector<1x128xf32> to vector<64x128xf32>
      %15 = arith.addf %12, %14 : vector<64x128xf32>
      %cst_14 = arith.constant 0.000000e+00 : f32
      %16 = vector.broadcast %cst_14 : f32 to vector<64x128xf32>
      %17 = arith.maximumf %15, %16 : vector<64x128xf32>
      %c0_15 = arith.constant 0 : index
      %c0_16 = arith.constant 0 : index
      %18 = vector.load %arg6[%c0_15, %c0_16] : memref<64x128xf32, #tpu.memory_space<vmem>>, vector<64x128xf32>
      tpu.vector_store %arg6[%c0_15, %c0_16], %17 {strides = array<i32>} : memref<64x128xf32, #tpu.memory_space<vmem>>, vector<64x128xf32>,
    } else {
    }
    return
  }
  func.func @transform_0(%arg0: i32, %arg1: i32, %arg2: i32) -> (i32, i32) {
    %c0_i32 = arith.constant 0 : i32
    return %arg0, %arg2 : i32, i32
  }
  func.func @transform_1(%arg0: i32, %arg1: i32, %arg2: i32) -> (i32, i32) {
    %c0_i32 = arith.constant 0 : i32
    return %arg2, %arg1 : i32, i32
  }
  func.func @transform_2(%arg0: i32, %arg1: i32, %arg2: i32) -> (i32, i32) {
    %c0_i32 = arith.constant 0 : i32
    %c0_i32_0 = arith.constant 0 : i32
    return %c0_i32, %arg1 : i32, i32
  }
  func.func @transform_3(%arg0: i32, %arg1: i32, %arg2: i32) -> (i32, i32) {
    %c0_i32 = arith.constant 0 : i32
    return %arg0, %arg1 : i32, i32
  }
}

module attributes {stable_mosaic.version = 11 : i64} {
  func.func @_mm_bias_act_kernel(%arg0: i32, %arg1: i32, %arg2: i32, %arg3: memref<64x384xbf16, #tpu.memory_space<vmem>>, %arg4: memref<384x256xbf16, #tpu.memory_space<vmem>>, %arg5: memref<1x256xf32, #tpu.memory_space<vmem>>, %arg6: memref<64x256xf32, #tpu.memory_space<vmem>>, %arg7: memref<64x256xf32, #tpu.memory_space<vmem>>) attributes {dimension_semantics = [#tpu.dimension_semantics<parallel>, #tpu.dimension_semantics<parallel>, #tpu.dimension_semantics<arbitrary>], iteration_bounds = array<i64: 1, 1, 1>, scalar_prefetch = 0 : i64, scratch_operands = 1 : i64, tpu.core_type = #tpu.core_type<tc>, window_params = [{transform_indices = @transform_0, window_bounds = array<i64: 64, 384>}, {transform_indices = @transform_1, window_bounds = array<i64: 384, 256>}, {transform_indices = @transform_2, window_bounds = array<i64: 1, 256>}, {transform_indices = @transform_3, window_bounds = array<i64: 64, 256>}]} {
    %c0_i32 = arith.constant 0 : i32
    %0 = arith.cmpi eq, %arg2, %c0_i32 : i32
    %1 = arith.extui %0 : i1 to i32
    %c0_i32_0 = arith.constant 0 : i32
    %2 = arith.cmpi ne, %1, %c0_i32_0 : i32
    scf.if %2 {
      %cst_10 = arith.constant 0.000000e+00 : f32
      %12 = vector.broadcast %cst_10 : f32 to vector<64x256xf32>
      %c0_11 = arith.constant 0 : index
      %c0_12 = arith.constant 0 : index
      %13 = vector.load %arg7[%c0_11, %c0_12] : memref<64x256xf32, #tpu.memory_space<vmem>>, vector<64x256xf32>
      tpu.vector_store %arg7[%c0_11, %c0_12], %12 {strides = array<i32>} : memref<64x256xf32, #tpu.memory_space<vmem>>, vector<64x256xf32>,
    } else {
    }
    %c0 = arith.constant 0 : index
    %c0_1 = arith.constant 0 : index
    %3 = vector.load %arg7[%c0, %c0_1] : memref<64x256xf32, #tpu.memory_space<vmem>>, vector<64x256xf32>
    %c0_2 = arith.constant 0 : index
    %c0_3 = arith.constant 0 : index
    %4 = vector.load %arg3[%c0_2, %c0_3] : memref<64x384xbf16, #tpu.memory_space<vmem>>, vector<64x384xbf16>
    %c0_4 = arith.constant 0 : index
    %c0_5 = arith.constant 0 : index
    %5 = vector.load %arg4[%c0_4, %c0_5] : memref<384x256xbf16, #tpu.memory_space<vmem>>, vector<384x256xbf16>
    %cst = arith.constant dense<0.000000e+00> : vector<64x256xf32>
    %6 = tpu.matmul %4, %5, %cst {dimension_numbers = #tpu.dot_dimension_numbers<[1], [0], [0], [1], [0, 0, 1, 1], [], []>} : vector<64x384xbf16>, vector<384x256xbf16>, vector<64x256xf32> -> vector<64x256xf32>
    %7 = arith.addf %3, %6 : vector<64x256xf32>
    %c0_6 = arith.constant 0 : index
    %c0_7 = arith.constant 0 : index
    %8 = vector.load %arg7[%c0_6, %c0_7] : memref<64x256xf32, #tpu.memory_space<vmem>>, vector<64x256xf32>
    tpu.vector_store %arg7[%c0_6, %c0_7], %7 {strides = array<i32>} : memref<64x256xf32, #tpu.memory_space<vmem>>, vector<64x256xf32>,
    %c0_i32_8 = arith.constant 0 : i32
    %9 = arith.cmpi eq, %arg2, %c0_i32_8 : i32
    %10 = arith.extui %9 : i1 to i32
    %c0_i32_9 = arith.constant 0 : i32
    %11 = arith.cmpi ne, %10, %c0_i32_9 : i32
    scf.if %11 {
      %c0_10 = arith.constant 0 : index
      %c0_11 = arith.constant 0 : index
      %12 = vector.load %arg7[%c0_10, %c0_11] : memref<64x256xf32, #tpu.memory_space<vmem>>, vector<64x256xf32>
      %c0_12 = arith.constant 0 : index
      %c0_13 = arith.constant 0 : index
      %13 = vector.load %arg5[%c0_12, %c0_13] : memref<1x256xf32, #tpu.memory_space<vmem>>, vector<1x256xf32>
      %14 = vector.broadcast %13 : vector<1x256xf32> to vector<64x256xf32>
      %15 = arith.addf %12, %14 : vector<64x256xf32>
      %16 = arith.negf %15 : vector<64x256xf32>
      %17 = math.exp %16 : vector<64x256xf32>
      %cst_14 = arith.constant 1.000000e+00 : f32
      %18 = vector.broadcast %cst_14 : f32 to vector<64x256xf32>
      %19 = arith.addf %18, %17 : vector<64x256xf32>
      %20 = arith.divf %18, %19 : vector<64x256xf32>
      %c0_15 = arith.constant 0 : index
      %c0_16 = arith.constant 0 : index
      %21 = vector.load %arg6[%c0_15, %c0_16] : memref<64x256xf32, #tpu.memory_space<vmem>>, vector<64x256xf32>
      tpu.vector_store %arg6[%c0_15, %c0_16], %20 {strides = array<i32>} : memref<64x256xf32, #tpu.memory_space<vmem>>, vector<64x256xf32>,
    } else {
    }
    return
  }
  func.func @transform_0(%arg0: i32, %arg1: i32, %arg2: i32) -> (i32, i32) {
    %c0_i32 = arith.constant 0 : i32
    return %arg0, %arg2 : i32, i32
  }
  func.func @transform_1(%arg0: i32, %arg1: i32, %arg2: i32) -> (i32, i32) {
    %c0_i32 = arith.constant 0 : i32
    return %arg2, %arg1 : i32, i32
  }
  func.func @transform_2(%arg0: i32, %arg1: i32, %arg2: i32) -> (i32, i32) {
    %c0_i32 = arith.constant 0 : i32
    %c0_i32_0 = arith.constant 0 : i32
    return %c0_i32, %arg1 : i32, i32
  }
  func.func @transform_3(%arg0: i32, %arg1: i32, %arg2: i32) -> (i32, i32) {
    %c0_i32 = arith.constant 0 : i32
    return %arg0, %arg1 : i32, i32
  }
}

module attributes {stable_mosaic.version = 11 : i64} {
  func.func @_mm_bias_act_kernel(%arg0: i32, %arg1: i32, %arg2: i32, %arg3: memref<64x384xbf16, #tpu.memory_space<vmem>>, %arg4: memref<384x128xbf16, #tpu.memory_space<vmem>>, %arg5: memref<1x128xf32, #tpu.memory_space<vmem>>, %arg6: memref<64x128xf32, #tpu.memory_space<vmem>>, %arg7: memref<64x128xf32, #tpu.memory_space<vmem>>) attributes {dimension_semantics = [#tpu.dimension_semantics<parallel>, #tpu.dimension_semantics<parallel>, #tpu.dimension_semantics<arbitrary>], iteration_bounds = array<i64: 1, 1, 1>, scalar_prefetch = 0 : i64, scratch_operands = 1 : i64, tpu.core_type = #tpu.core_type<tc>, window_params = [{transform_indices = @transform_0, window_bounds = array<i64: 64, 384>}, {transform_indices = @transform_1, window_bounds = array<i64: 384, 128>}, {transform_indices = @transform_2, window_bounds = array<i64: 1, 128>}, {transform_indices = @transform_3, window_bounds = array<i64: 64, 128>}]} {
    %c0_i32 = arith.constant 0 : i32
    %0 = arith.cmpi eq, %arg2, %c0_i32 : i32
    %1 = arith.extui %0 : i1 to i32
    %c0_i32_0 = arith.constant 0 : i32
    %2 = arith.cmpi ne, %1, %c0_i32_0 : i32
    scf.if %2 {
      %cst_10 = arith.constant 0.000000e+00 : f32
      %12 = vector.broadcast %cst_10 : f32 to vector<64x128xf32>
      %c0_11 = arith.constant 0 : index
      %c0_12 = arith.constant 0 : index
      %13 = vector.load %arg7[%c0_11, %c0_12] : memref<64x128xf32, #tpu.memory_space<vmem>>, vector<64x128xf32>
      tpu.vector_store %arg7[%c0_11, %c0_12], %12 {strides = array<i32>} : memref<64x128xf32, #tpu.memory_space<vmem>>, vector<64x128xf32>,
    } else {
    }
    %c0 = arith.constant 0 : index
    %c0_1 = arith.constant 0 : index
    %3 = vector.load %arg7[%c0, %c0_1] : memref<64x128xf32, #tpu.memory_space<vmem>>, vector<64x128xf32>
    %c0_2 = arith.constant 0 : index
    %c0_3 = arith.constant 0 : index
    %4 = vector.load %arg3[%c0_2, %c0_3] : memref<64x384xbf16, #tpu.memory_space<vmem>>, vector<64x384xbf16>
    %c0_4 = arith.constant 0 : index
    %c0_5 = arith.constant 0 : index
    %5 = vector.load %arg4[%c0_4, %c0_5] : memref<384x128xbf16, #tpu.memory_space<vmem>>, vector<384x128xbf16>
    %cst = arith.constant dense<0.000000e+00> : vector<64x128xf32>
    %6 = tpu.matmul %4, %5, %cst {dimension_numbers = #tpu.dot_dimension_numbers<[1], [0], [0], [1], [0, 0, 1, 1], [], []>} : vector<64x384xbf16>, vector<384x128xbf16>, vector<64x128xf32> -> vector<64x128xf32>
    %7 = arith.addf %3, %6 : vector<64x128xf32>
    %c0_6 = arith.constant 0 : index
    %c0_7 = arith.constant 0 : index
    %8 = vector.load %arg7[%c0_6, %c0_7] : memref<64x128xf32, #tpu.memory_space<vmem>>, vector<64x128xf32>
    tpu.vector_store %arg7[%c0_6, %c0_7], %7 {strides = array<i32>} : memref<64x128xf32, #tpu.memory_space<vmem>>, vector<64x128xf32>,
    %c0_i32_8 = arith.constant 0 : i32
    %9 = arith.cmpi eq, %arg2, %c0_i32_8 : i32
    %10 = arith.extui %9 : i1 to i32
    %c0_i32_9 = arith.constant 0 : i32
    %11 = arith.cmpi ne, %10, %c0_i32_9 : i32
    scf.if %11 {
      %c0_10 = arith.constant 0 : index
      %c0_11 = arith.constant 0 : index
      %12 = vector.load %arg7[%c0_10, %c0_11] : memref<64x128xf32, #tpu.memory_space<vmem>>, vector<64x128xf32>
      %c0_12 = arith.constant 0 : index
      %c0_13 = arith.constant 0 : index
      %13 = vector.load %arg5[%c0_12, %c0_13] : memref<1x128xf32, #tpu.memory_space<vmem>>, vector<1x128xf32>
      %14 = vector.broadcast %13 : vector<1x128xf32> to vector<64x128xf32>
      %15 = arith.addf %12, %14 : vector<64x128xf32>
      %16 = math.tanh %15 : vector<64x128xf32>
      %c0_14 = arith.constant 0 : index
      %c0_15 = arith.constant 0 : index
      %17 = vector.load %arg6[%c0_14, %c0_15] : memref<64x128xf32, #tpu.memory_space<vmem>>, vector<64x128xf32>
      tpu.vector_store %arg6[%c0_14, %c0_15], %16 {strides = array<i32>} : memref<64x128xf32, #tpu.memory_space<vmem>>, vector<64x128xf32>,
    } else {
    }
    return
  }
  func.func @transform_0(%arg0: i32, %arg1: i32, %arg2: i32) -> (i32, i32) {
    %c0_i32 = arith.constant 0 : i32
    return %arg0, %arg2 : i32, i32
  }
  func.func @transform_1(%arg0: i32, %arg1: i32, %arg2: i32) -> (i32, i32) {
    %c0_i32 = arith.constant 0 : i32
    return %arg2, %arg1 : i32, i32
  }
  func.func @transform_2(%arg0: i32, %arg1: i32, %arg2: i32) -> (i32, i32) {
    %c0_i32 = arith.constant 0 : i32
    %c0_i32_0 = arith.constant 0 : i32
    return %c0_i32, %arg1 : i32, i32
  }
  func.func @transform_3(%arg0: i32, %arg1: i32, %arg2: i32) -> (i32, i32) {
    %c0_i32 = arith.constant 0 : i32
    return %arg0, %arg1 : i32, i32
  }
}

module attributes {stable_mosaic.version = 11 : i64} {
  func.func @_mm_bias_act_kernel(%arg0: i32, %arg1: i32, %arg2: i32, %arg3: memref<64x128xbf16, #tpu.memory_space<vmem>>, %arg4: memref<128x256xbf16, #tpu.memory_space<vmem>>, %arg5: memref<1x256xf32, #tpu.memory_space<vmem>>, %arg6: memref<64x256xf32, #tpu.memory_space<vmem>>, %arg7: memref<64x256xf32, #tpu.memory_space<vmem>>) attributes {dimension_semantics = [#tpu.dimension_semantics<parallel>, #tpu.dimension_semantics<parallel>, #tpu.dimension_semantics<arbitrary>], iteration_bounds = array<i64: 1, 1, 1>, scalar_prefetch = 0 : i64, scratch_operands = 1 : i64, tpu.core_type = #tpu.core_type<tc>, window_params = [{transform_indices = @transform_0, window_bounds = array<i64: 64, 128>}, {transform_indices = @transform_1, window_bounds = array<i64: 128, 256>}, {transform_indices = @transform_2, window_bounds = array<i64: 1, 256>}, {transform_indices = @transform_3, window_bounds = array<i64: 64, 256>}]} {
    %c0_i32 = arith.constant 0 : i32
    %0 = arith.cmpi eq, %arg2, %c0_i32 : i32
    %1 = arith.extui %0 : i1 to i32
    %c0_i32_0 = arith.constant 0 : i32
    %2 = arith.cmpi ne, %1, %c0_i32_0 : i32
    scf.if %2 {
      %cst_10 = arith.constant 0.000000e+00 : f32
      %12 = vector.broadcast %cst_10 : f32 to vector<64x256xf32>
      %c0_11 = arith.constant 0 : index
      %c0_12 = arith.constant 0 : index
      %13 = vector.load %arg7[%c0_11, %c0_12] : memref<64x256xf32, #tpu.memory_space<vmem>>, vector<64x256xf32>
      tpu.vector_store %arg7[%c0_11, %c0_12], %12 {strides = array<i32>} : memref<64x256xf32, #tpu.memory_space<vmem>>, vector<64x256xf32>,
    } else {
    }
    %c0 = arith.constant 0 : index
    %c0_1 = arith.constant 0 : index
    %3 = vector.load %arg7[%c0, %c0_1] : memref<64x256xf32, #tpu.memory_space<vmem>>, vector<64x256xf32>
    %c0_2 = arith.constant 0 : index
    %c0_3 = arith.constant 0 : index
    %4 = vector.load %arg3[%c0_2, %c0_3] : memref<64x128xbf16, #tpu.memory_space<vmem>>, vector<64x128xbf16>
    %c0_4 = arith.constant 0 : index
    %c0_5 = arith.constant 0 : index
    %5 = vector.load %arg4[%c0_4, %c0_5] : memref<128x256xbf16, #tpu.memory_space<vmem>>, vector<128x256xbf16>
    %cst = arith.constant dense<0.000000e+00> : vector<64x256xf32>
    %6 = tpu.matmul %4, %5, %cst {dimension_numbers = #tpu.dot_dimension_numbers<[1], [0], [0], [1], [0, 0, 1, 1], [], []>} : vector<64x128xbf16>, vector<128x256xbf16>, vector<64x256xf32> -> vector<64x256xf32>
    %7 = arith.addf %3, %6 : vector<64x256xf32>
    %c0_6 = arith.constant 0 : index
    %c0_7 = arith.constant 0 : index
    %8 = vector.load %arg7[%c0_6, %c0_7] : memref<64x256xf32, #tpu.memory_space<vmem>>, vector<64x256xf32>
    tpu.vector_store %arg7[%c0_6, %c0_7], %7 {strides = array<i32>} : memref<64x256xf32, #tpu.memory_space<vmem>>, vector<64x256xf32>,
    %c0_i32_8 = arith.constant 0 : i32
    %9 = arith.cmpi eq, %arg2, %c0_i32_8 : i32
    %10 = arith.extui %9 : i1 to i32
    %c0_i32_9 = arith.constant 0 : i32
    %11 = arith.cmpi ne, %10, %c0_i32_9 : i32
    scf.if %11 {
      %c0_10 = arith.constant 0 : index
      %c0_11 = arith.constant 0 : index
      %12 = vector.load %arg7[%c0_10, %c0_11] : memref<64x256xf32, #tpu.memory_space<vmem>>, vector<64x256xf32>
      %c0_12 = arith.constant 0 : index
      %c0_13 = arith.constant 0 : index
      %13 = vector.load %arg5[%c0_12, %c0_13] : memref<1x256xf32, #tpu.memory_space<vmem>>, vector<1x256xf32>
      %14 = vector.broadcast %13 : vector<1x256xf32> to vector<64x256xf32>
      %15 = arith.addf %12, %14 : vector<64x256xf32>
      %cst_14 = arith.constant 0.000000e+00 : f32
      %16 = vector.broadcast %cst_14 : f32 to vector<64x256xf32>
      %17 = arith.maximumf %15, %16 : vector<64x256xf32>
      %c0_15 = arith.constant 0 : index
      %c0_16 = arith.constant 0 : index
      %18 = vector.load %arg6[%c0_15, %c0_16] : memref<64x256xf32, #tpu.memory_space<vmem>>, vector<64x256xf32>
      tpu.vector_store %arg6[%c0_15, %c0_16], %17 {strides = array<i32>} : memref<64x256xf32, #tpu.memory_space<vmem>>, vector<64x256xf32>,
    } else {
    }
    return
  }
  func.func @transform_0(%arg0: i32, %arg1: i32, %arg2: i32) -> (i32, i32) {
    %c0_i32 = arith.constant 0 : i32
    return %arg0, %arg2 : i32, i32
  }
  func.func @transform_1(%arg0: i32, %arg1: i32, %arg2: i32) -> (i32, i32) {
    %c0_i32 = arith.constant 0 : i32
    return %arg2, %arg1 : i32, i32
  }
  func.func @transform_2(%arg0: i32, %arg1: i32, %arg2: i32) -> (i32, i32) {
    %c0_i32 = arith.constant 0 : i32
    %c0_i32_0 = arith.constant 0 : i32
    return %c0_i32, %arg1 : i32, i32
  }
  func.func @transform_3(%arg0: i32, %arg1: i32, %arg2: i32) -> (i32, i32) {
    %c0_i32 = arith.constant 0 : i32
    return %arg0, %arg1 : i32, i32
  }
}

module attributes {stable_mosaic.version = 11 : i64} {
  func.func @_mm_bias_act_kernel(%arg0: i32, %arg1: i32, %arg2: i32, %arg3: memref<64x256xbf16, #tpu.memory_space<vmem>>, %arg4: memref<256x256xbf16, #tpu.memory_space<vmem>>, %arg5: memref<1x256xf32, #tpu.memory_space<vmem>>, %arg6: memref<64x256xf32, #tpu.memory_space<vmem>>, %arg7: memref<64x256xf32, #tpu.memory_space<vmem>>) attributes {dimension_semantics = [#tpu.dimension_semantics<parallel>, #tpu.dimension_semantics<parallel>, #tpu.dimension_semantics<arbitrary>], iteration_bounds = array<i64: 1, 1, 1>, scalar_prefetch = 0 : i64, scratch_operands = 1 : i64, tpu.core_type = #tpu.core_type<tc>, window_params = [{transform_indices = @transform_0, window_bounds = array<i64: 64, 256>}, {transform_indices = @transform_1, window_bounds = array<i64: 256, 256>}, {transform_indices = @transform_2, window_bounds = array<i64: 1, 256>}, {transform_indices = @transform_3, window_bounds = array<i64: 64, 256>}]} {
    %c0_i32 = arith.constant 0 : i32
    %0 = arith.cmpi eq, %arg2, %c0_i32 : i32
    %1 = arith.extui %0 : i1 to i32
    %c0_i32_0 = arith.constant 0 : i32
    %2 = arith.cmpi ne, %1, %c0_i32_0 : i32
    scf.if %2 {
      %cst_10 = arith.constant 0.000000e+00 : f32
      %12 = vector.broadcast %cst_10 : f32 to vector<64x256xf32>
      %c0_11 = arith.constant 0 : index
      %c0_12 = arith.constant 0 : index
      %13 = vector.load %arg7[%c0_11, %c0_12] : memref<64x256xf32, #tpu.memory_space<vmem>>, vector<64x256xf32>
      tpu.vector_store %arg7[%c0_11, %c0_12], %12 {strides = array<i32>} : memref<64x256xf32, #tpu.memory_space<vmem>>, vector<64x256xf32>,
    } else {
    }
    %c0 = arith.constant 0 : index
    %c0_1 = arith.constant 0 : index
    %3 = vector.load %arg7[%c0, %c0_1] : memref<64x256xf32, #tpu.memory_space<vmem>>, vector<64x256xf32>
    %c0_2 = arith.constant 0 : index
    %c0_3 = arith.constant 0 : index
    %4 = vector.load %arg3[%c0_2, %c0_3] : memref<64x256xbf16, #tpu.memory_space<vmem>>, vector<64x256xbf16>
    %c0_4 = arith.constant 0 : index
    %c0_5 = arith.constant 0 : index
    %5 = vector.load %arg4[%c0_4, %c0_5] : memref<256x256xbf16, #tpu.memory_space<vmem>>, vector<256x256xbf16>
    %cst = arith.constant dense<0.000000e+00> : vector<64x256xf32>
    %6 = tpu.matmul %4, %5, %cst {dimension_numbers = #tpu.dot_dimension_numbers<[1], [0], [0], [1], [0, 0, 1, 1], [], []>} : vector<64x256xbf16>, vector<256x256xbf16>, vector<64x256xf32> -> vector<64x256xf32>
    %7 = arith.addf %3, %6 : vector<64x256xf32>
    %c0_6 = arith.constant 0 : index
    %c0_7 = arith.constant 0 : index
    %8 = vector.load %arg7[%c0_6, %c0_7] : memref<64x256xf32, #tpu.memory_space<vmem>>, vector<64x256xf32>
    tpu.vector_store %arg7[%c0_6, %c0_7], %7 {strides = array<i32>} : memref<64x256xf32, #tpu.memory_space<vmem>>, vector<64x256xf32>,
    %c0_i32_8 = arith.constant 0 : i32
    %9 = arith.cmpi eq, %arg2, %c0_i32_8 : i32
    %10 = arith.extui %9 : i1 to i32
    %c0_i32_9 = arith.constant 0 : i32
    %11 = arith.cmpi ne, %10, %c0_i32_9 : i32
    scf.if %11 {
      %c0_10 = arith.constant 0 : index
      %c0_11 = arith.constant 0 : index
      %12 = vector.load %arg7[%c0_10, %c0_11] : memref<64x256xf32, #tpu.memory_space<vmem>>, vector<64x256xf32>
      %c0_12 = arith.constant 0 : index
      %c0_13 = arith.constant 0 : index
      %13 = vector.load %arg5[%c0_12, %c0_13] : memref<1x256xf32, #tpu.memory_space<vmem>>, vector<1x256xf32>
      %14 = vector.broadcast %13 : vector<1x256xf32> to vector<64x256xf32>
      %15 = arith.addf %12, %14 : vector<64x256xf32>
      %c0_14 = arith.constant 0 : index
      %c0_15 = arith.constant 0 : index
      %16 = vector.load %arg6[%c0_14, %c0_15] : memref<64x256xf32, #tpu.memory_space<vmem>>, vector<64x256xf32>
      tpu.vector_store %arg6[%c0_14, %c0_15], %15 {strides = array<i32>} : memref<64x256xf32, #tpu.memory_space<vmem>>, vector<64x256xf32>,
    } else {
    }
    return
  }
  func.func @transform_0(%arg0: i32, %arg1: i32, %arg2: i32) -> (i32, i32) {
    %c0_i32 = arith.constant 0 : i32
    return %arg0, %arg2 : i32, i32
  }
  func.func @transform_1(%arg0: i32, %arg1: i32, %arg2: i32) -> (i32, i32) {
    %c0_i32 = arith.constant 0 : i32
    return %arg2, %arg1 : i32, i32
  }
  func.func @transform_2(%arg0: i32, %arg1: i32, %arg2: i32) -> (i32, i32) {
    %c0_i32 = arith.constant 0 : i32
    %c0_i32_0 = arith.constant 0 : i32
    return %c0_i32, %arg1 : i32, i32
  }
  func.func @transform_3(%arg0: i32, %arg1: i32, %arg2: i32) -> (i32, i32) {
    %c0_i32 = arith.constant 0 : i32
    return %arg0, %arg1 : i32, i32
  }
}

module attributes {stable_mosaic.version = 11 : i64} {
  func.func @_convex_upsample_kernel(%arg0: i32, %arg1: i32, %arg2: memref<1x9x16x64xf32, #tpu.memory_space<vmem>>, %arg3: memref<1x2x9x64xf32, #tpu.memory_space<vmem>>, %arg4: memref<1x2x16x64xf32, #tpu.memory_space<vmem>>) attributes {dimension_semantics = [#tpu.dimension_semantics<parallel>, #tpu.dimension_semantics<parallel>], iteration_bounds = array<i64: 1, 1>, scalar_prefetch = 0 : i64, scratch_operands = 0 : i64, tpu.core_type = #tpu.core_type<tc>, window_params = [{transform_indices = @transform_0, window_bounds = array<i64: 1, 9, 16, 64>}, {transform_indices = @transform_1, window_bounds = array<i64: 1, 2, 9, 64>}, {transform_indices = @transform_2, window_bounds = array<i64: 1, 2, 16, 64>}]} {
    %c0 = arith.constant 0 : index
    %c0_0 = arith.constant 0 : index
    %c0_1 = arith.constant 0 : index
    %c0_2 = arith.constant 0 : index
    %0 = vector.load %arg2[%c0, %c0_0, %c0_1, %c0_2] : memref<1x9x16x64xf32, #tpu.memory_space<vmem>>, vector<1x9x16x64xf32>
    %1 = vector.shape_cast %0 : vector<1x9x16x64xf32> to vector<9x16x64xf32>
    %2 = vector.extract_strided_slice %1 {offsets = [0, 0, 0], sizes = [1, 16, 64], strides = [1, 1, 1]} : vector<9x16x64xf32> to vector<1x16x64xf32>
    %3 = vector.shape_cast %2 : vector<1x16x64xf32> to vector<16x64xf32>
    %4 = vector.extract_strided_slice %1 {offsets = [1, 0, 0], sizes = [1, 16, 64], strides = [1, 1, 1]} : vector<9x16x64xf32> to vector<1x16x64xf32>
    %5 = vector.shape_cast %4 : vector<1x16x64xf32> to vector<16x64xf32>
    %6 = arith.maximumf %3, %5 : vector<16x64xf32>
    %7 = vector.extract_strided_slice %1 {offsets = [2, 0, 0], sizes = [1, 16, 64], strides = [1, 1, 1]} : vector<9x16x64xf32> to vector<1x16x64xf32>
    %8 = vector.shape_cast %7 : vector<1x16x64xf32> to vector<16x64xf32>
    %9 = arith.maximumf %6, %8 : vector<16x64xf32>
    %10 = vector.extract_strided_slice %1 {offsets = [3, 0, 0], sizes = [1, 16, 64], strides = [1, 1, 1]} : vector<9x16x64xf32> to vector<1x16x64xf32>
    %11 = vector.shape_cast %10 : vector<1x16x64xf32> to vector<16x64xf32>
    %12 = arith.maximumf %9, %11 : vector<16x64xf32>
    %13 = vector.extract_strided_slice %1 {offsets = [4, 0, 0], sizes = [1, 16, 64], strides = [1, 1, 1]} : vector<9x16x64xf32> to vector<1x16x64xf32>
    %14 = vector.shape_cast %13 : vector<1x16x64xf32> to vector<16x64xf32>
    %15 = arith.maximumf %12, %14 : vector<16x64xf32>
    %16 = vector.extract_strided_slice %1 {offsets = [5, 0, 0], sizes = [1, 16, 64], strides = [1, 1, 1]} : vector<9x16x64xf32> to vector<1x16x64xf32>
    %17 = vector.shape_cast %16 : vector<1x16x64xf32> to vector<16x64xf32>
    %18 = arith.maximumf %15, %17 : vector<16x64xf32>
    %19 = vector.extract_strided_slice %1 {offsets = [6, 0, 0], sizes = [1, 16, 64], strides = [1, 1, 1]} : vector<9x16x64xf32> to vector<1x16x64xf32>
    %20 = vector.shape_cast %19 : vector<1x16x64xf32> to vector<16x64xf32>
    %21 = arith.maximumf %18, %20 : vector<16x64xf32>
    %22 = vector.extract_strided_slice %1 {offsets = [7, 0, 0], sizes = [1, 16, 64], strides = [1, 1, 1]} : vector<9x16x64xf32> to vector<1x16x64xf32>
    %23 = vector.shape_cast %22 : vector<1x16x64xf32> to vector<16x64xf32>
    %24 = arith.maximumf %21, %23 : vector<16x64xf32>
    %25 = vector.extract_strided_slice %1 {offsets = [8, 0, 0], sizes = [1, 16, 64], strides = [1, 1, 1]} : vector<9x16x64xf32> to vector<1x16x64xf32>
    %26 = vector.shape_cast %25 : vector<1x16x64xf32> to vector<16x64xf32>
    %27 = arith.maximumf %24, %26 : vector<16x64xf32>
    %28 = vector.extract_strided_slice %1 {offsets = [0, 0, 0], sizes = [1, 16, 64], strides = [1, 1, 1]} : vector<9x16x64xf32> to vector<1x16x64xf32>
    %29 = vector.shape_cast %28 : vector<1x16x64xf32> to vector<16x64xf32>
    %30 = arith.subf %29, %27 : vector<16x64xf32>
    %31 = math.exp %30 : vector<16x64xf32>
    %32 = vector.extract_strided_slice %1 {offsets = [1, 0, 0], sizes = [1, 16, 64], strides = [1, 1, 1]} : vector<9x16x64xf32> to vector<1x16x64xf32>
    %33 = vector.shape_cast %32 : vector<1x16x64xf32> to vector<16x64xf32>
    %34 = arith.subf %33, %27 : vector<16x64xf32>
    %35 = math.exp %34 : vector<16x64xf32>
    %36 = vector.extract_strided_slice %1 {offsets = [2, 0, 0], sizes = [1, 16, 64], strides = [1, 1, 1]} : vector<9x16x64xf32> to vector<1x16x64xf32>
    %37 = vector.shape_cast %36 : vector<1x16x64xf32> to vector<16x64xf32>
    %38 = arith.subf %37, %27 : vector<16x64xf32>
    %39 = math.exp %38 : vector<16x64xf32>
    %40 = vector.extract_strided_slice %1 {offsets = [3, 0, 0], sizes = [1, 16, 64], strides = [1, 1, 1]} : vector<9x16x64xf32> to vector<1x16x64xf32>
    %41 = vector.shape_cast %40 : vector<1x16x64xf32> to vector<16x64xf32>
    %42 = arith.subf %41, %27 : vector<16x64xf32>
    %43 = math.exp %42 : vector<16x64xf32>
    %44 = vector.extract_strided_slice %1 {offsets = [4, 0, 0], sizes = [1, 16, 64], strides = [1, 1, 1]} : vector<9x16x64xf32> to vector<1x16x64xf32>
    %45 = vector.shape_cast %44 : vector<1x16x64xf32> to vector<16x64xf32>
    %46 = arith.subf %45, %27 : vector<16x64xf32>
    %47 = math.exp %46 : vector<16x64xf32>
    %48 = vector.extract_strided_slice %1 {offsets = [5, 0, 0], sizes = [1, 16, 64], strides = [1, 1, 1]} : vector<9x16x64xf32> to vector<1x16x64xf32>
    %49 = vector.shape_cast %48 : vector<1x16x64xf32> to vector<16x64xf32>
    %50 = arith.subf %49, %27 : vector<16x64xf32>
    %51 = math.exp %50 : vector<16x64xf32>
    %52 = vector.extract_strided_slice %1 {offsets = [6, 0, 0], sizes = [1, 16, 64], strides = [1, 1, 1]} : vector<9x16x64xf32> to vector<1x16x64xf32>
    %53 = vector.shape_cast %52 : vector<1x16x64xf32> to vector<16x64xf32>
    %54 = arith.subf %53, %27 : vector<16x64xf32>
    %55 = math.exp %54 : vector<16x64xf32>
    %56 = vector.extract_strided_slice %1 {offsets = [7, 0, 0], sizes = [1, 16, 64], strides = [1, 1, 1]} : vector<9x16x64xf32> to vector<1x16x64xf32>
    %57 = vector.shape_cast %56 : vector<1x16x64xf32> to vector<16x64xf32>
    %58 = arith.subf %57, %27 : vector<16x64xf32>
    %59 = math.exp %58 : vector<16x64xf32>
    %60 = vector.extract_strided_slice %1 {offsets = [8, 0, 0], sizes = [1, 16, 64], strides = [1, 1, 1]} : vector<9x16x64xf32> to vector<1x16x64xf32>
    %61 = vector.shape_cast %60 : vector<1x16x64xf32> to vector<16x64xf32>
    %62 = arith.subf %61, %27 : vector<16x64xf32>
    %63 = math.exp %62 : vector<16x64xf32>
    %64 = arith.addf %31, %35 : vector<16x64xf32>
    %65 = arith.addf %64, %39 : vector<16x64xf32>
    %66 = arith.addf %65, %43 : vector<16x64xf32>
    %67 = arith.addf %66, %47 : vector<16x64xf32>
    %68 = arith.addf %67, %51 : vector<16x64xf32>
    %69 = arith.addf %68, %55 : vector<16x64xf32>
    %70 = arith.addf %69, %59 : vector<16x64xf32>
    %71 = arith.addf %70, %63 : vector<16x64xf32>
    %72 = tpu.reciprocal %71 {approx = true} : vector<16x64xf32> -> vector<16x64xf32>
    %c0_3 = arith.constant 0 : index
    %c0_4 = arith.constant 0 : index
    %c0_5 = arith.constant 0 : index
    %c0_6 = arith.constant 0 : index
    %73 = vector.load %arg3[%c0_3, %c0_4, %c0_5, %c0_6] : memref<1x2x9x64xf32, #tpu.memory_space<vmem>>, vector<1x2x9x64xf32>
    %74 = vector.shape_cast %73 : vector<1x2x9x64xf32> to vector<2x9x64xf32>
    %cst = arith.constant 0.000000e+00 : f32
    %75 = vector.broadcast %cst : f32 to vector<2x16x64xf32>
    %76 = arith.mulf %31, %72 : vector<16x64xf32>
    %77 = vector.shape_cast %76 : vector<16x64xf32> to vector<1x16x64xf32>
    %78 = vector.extract_strided_slice %74 {offsets = [0, 0, 0], sizes = [2, 1, 64], strides = [1, 1, 1]} : vector<2x9x64xf32> to vector<2x1x64xf32>
    %79 = vector.shape_cast %78 : vector<2x1x64xf32> to vector<2x64xf32>
    %80 = vector.shape_cast %79 : vector<2x64xf32> to vector<2x1x64xf32>
    %81 = vector.broadcast %77 : vector<1x16x64xf32> to vector<2x16x64xf32>
    %82 = vector.broadcast %80 : vector<2x1x64xf32> to vector<2x16x64xf32>
    %83 = arith.mulf %81, %82 : vector<2x16x64xf32>
    %84 = arith.addf %75, %83 : vector<2x16x64xf32>
    %85 = arith.mulf %35, %72 : vector<16x64xf32>
    %86 = vector.shape_cast %85 : vector<16x64xf32> to vector<1x16x64xf32>
    %87 = vector.extract_strided_slice %74 {offsets = [0, 1, 0], sizes = [2, 1, 64], strides = [1, 1, 1]} : vector<2x9x64xf32> to vector<2x1x64xf32>
    %88 = vector.shape_cast %87 : vector<2x1x64xf32> to vector<2x64xf32>
    %89 = vector.shape_cast %88 : vector<2x64xf32> to vector<2x1x64xf32>
    %90 = vector.broadcast %86 : vector<1x16x64xf32> to vector<2x16x64xf32>
    %91 = vector.broadcast %89 : vector<2x1x64xf32> to vector<2x16x64xf32>
    %92 = arith.mulf %90, %91 : vector<2x16x64xf32>
    %93 = arith.addf %84, %92 : vector<2x16x64xf32>
    %94 = arith.mulf %39, %72 : vector<16x64xf32>
    %95 = vector.shape_cast %94 : vector<16x64xf32> to vector<1x16x64xf32>
    %96 = vector.extract_strided_slice %74 {offsets = [0, 2, 0], sizes = [2, 1, 64], strides = [1, 1, 1]} : vector<2x9x64xf32> to vector<2x1x64xf32>
    %97 = vector.shape_cast %96 : vector<2x1x64xf32> to vector<2x64xf32>
    %98 = vector.shape_cast %97 : vector<2x64xf32> to vector<2x1x64xf32>
    %99 = vector.broadcast %95 : vector<1x16x64xf32> to vector<2x16x64xf32>
    %100 = vector.broadcast %98 : vector<2x1x64xf32> to vector<2x16x64xf32>
    %101 = arith.mulf %99, %100 : vector<2x16x64xf32>
    %102 = arith.addf %93, %101 : vector<2x16x64xf32>
    %103 = arith.mulf %43, %72 : vector<16x64xf32>
    %104 = vector.shape_cast %103 : vector<16x64xf32> to vector<1x16x64xf32>
    %105 = vector.extract_strided_slice %74 {offsets = [0, 3, 0], sizes = [2, 1, 64], strides = [1, 1, 1]} : vector<2x9x64xf32> to vector<2x1x64xf32>
    %106 = vector.shape_cast %105 : vector<2x1x64xf32> to vector<2x64xf32>
    %107 = vector.shape_cast %106 : vector<2x64xf32> to vector<2x1x64xf32>
    %108 = vector.broadcast %104 : vector<1x16x64xf32> to vector<2x16x64xf32>
    %109 = vector.broadcast %107 : vector<2x1x64xf32> to vector<2x16x64xf32>
    %110 = arith.mulf %108, %109 : vector<2x16x64xf32>
    %111 = arith.addf %102, %110 : vector<2x16x64xf32>
    %112 = arith.mulf %47, %72 : vector<16x64xf32>
    %113 = vector.shape_cast %112 : vector<16x64xf32> to vector<1x16x64xf32>
    %114 = vector.extract_strided_slice %74 {offsets = [0, 4, 0], sizes = [2, 1, 64], strides = [1, 1, 1]} : vector<2x9x64xf32> to vector<2x1x64xf32>
    %115 = vector.shape_cast %114 : vector<2x1x64xf32> to vector<2x64xf32>
    %116 = vector.shape_cast %115 : vector<2x64xf32> to vector<2x1x64xf32>
    %117 = vector.broadcast %113 : vector<1x16x64xf32> to vector<2x16x64xf32>
    %118 = vector.broadcast %116 : vector<2x1x64xf32> to vector<2x16x64xf32>
    %119 = arith.mulf %117, %118 : vector<2x16x64xf32>
    %120 = arith.addf %111, %119 : vector<2x16x64xf32>
    %121 = arith.mulf %51, %72 : vector<16x64xf32>
    %122 = vector.shape_cast %121 : vector<16x64xf32> to vector<1x16x64xf32>
    %123 = vector.extract_strided_slice %74 {offsets = [0, 5, 0], sizes = [2, 1, 64], strides = [1, 1, 1]} : vector<2x9x64xf32> to vector<2x1x64xf32>
    %124 = vector.shape_cast %123 : vector<2x1x64xf32> to vector<2x64xf32>
    %125 = vector.shape_cast %124 : vector<2x64xf32> to vector<2x1x64xf32>
    %126 = vector.broadcast %122 : vector<1x16x64xf32> to vector<2x16x64xf32>
    %127 = vector.broadcast %125 : vector<2x1x64xf32> to vector<2x16x64xf32>
    %128 = arith.mulf %126, %127 : vector<2x16x64xf32>
    %129 = arith.addf %120, %128 : vector<2x16x64xf32>
    %130 = arith.mulf %55, %72 : vector<16x64xf32>
    %131 = vector.shape_cast %130 : vector<16x64xf32> to vector<1x16x64xf32>
    %132 = vector.extract_strided_slice %74 {offsets = [0, 6, 0], sizes = [2, 1, 64], strides = [1, 1, 1]} : vector<2x9x64xf32> to vector<2x1x64xf32>
    %133 = vector.shape_cast %132 : vector<2x1x64xf32> to vector<2x64xf32>
    %134 = vector.shape_cast %133 : vector<2x64xf32> to vector<2x1x64xf32>
    %135 = vector.broadcast %131 : vector<1x16x64xf32> to vector<2x16x64xf32>
    %136 = vector.broadcast %134 : vector<2x1x64xf32> to vector<2x16x64xf32>
    %137 = arith.mulf %135, %136 : vector<2x16x64xf32>
    %138 = arith.addf %129, %137 : vector<2x16x64xf32>
    %139 = arith.mulf %59, %72 : vector<16x64xf32>
    %140 = vector.shape_cast %139 : vector<16x64xf32> to vector<1x16x64xf32>
    %141 = vector.extract_strided_slice %74 {offsets = [0, 7, 0], sizes = [2, 1, 64], strides = [1, 1, 1]} : vector<2x9x64xf32> to vector<2x1x64xf32>
    %142 = vector.shape_cast %141 : vector<2x1x64xf32> to vector<2x64xf32>
    %143 = vector.shape_cast %142 : vector<2x64xf32> to vector<2x1x64xf32>
    %144 = vector.broadcast %140 : vector<1x16x64xf32> to vector<2x16x64xf32>
    %145 = vector.broadcast %143 : vector<2x1x64xf32> to vector<2x16x64xf32>
    %146 = arith.mulf %144, %145 : vector<2x16x64xf32>
    %147 = arith.addf %138, %146 : vector<2x16x64xf32>
    %148 = arith.mulf %63, %72 : vector<16x64xf32>
    %149 = vector.shape_cast %148 : vector<16x64xf32> to vector<1x16x64xf32>
    %150 = vector.extract_strided_slice %74 {offsets = [0, 8, 0], sizes = [2, 1, 64], strides = [1, 1, 1]} : vector<2x9x64xf32> to vector<2x1x64xf32>
    %151 = vector.shape_cast %150 : vector<2x1x64xf32> to vector<2x64xf32>
    %152 = vector.shape_cast %151 : vector<2x64xf32> to vector<2x1x64xf32>
    %153 = vector.broadcast %149 : vector<1x16x64xf32> to vector<2x16x64xf32>
    %154 = vector.broadcast %152 : vector<2x1x64xf32> to vector<2x16x64xf32>
    %155 = arith.mulf %153, %154 : vector<2x16x64xf32>
    %156 = arith.addf %147, %155 : vector<2x16x64xf32>
    %c0_7 = arith.constant 0 : index
    %c0_8 = arith.constant 0 : index
    %c0_9 = arith.constant 0 : index
    %c0_10 = arith.constant 0 : index
    %157 = vector.load %arg4[%c0_7, %c0_8, %c0_9, %c0_10] : memref<1x2x16x64xf32, #tpu.memory_space<vmem>>, vector<1x2x16x64xf32>
    %158 = vector.shape_cast %157 : vector<1x2x16x64xf32> to vector<2x16x64xf32>
    %159 = vector.shape_cast %156 : vector<2x16x64xf32> to vector<1x2x16x64xf32>
    tpu.vector_store %arg4[%c0_7, %c0_8, %c0_9, %c0_10], %159 {strides = array<i32>} : memref<1x2x16x64xf32, #tpu.memory_space<vmem>>, vector<1x2x16x64xf32>,
    return
  }
  func.func @transform_0(%arg0: i32, %arg1: i32) -> (i32, i32, i32, i32) {
    %c0_i32 = arith.constant 0 : i32
    %c0_i32_0 = arith.constant 0 : i32
    %c0_i32_1 = arith.constant 0 : i32
    return %arg0, %c0_i32, %c0_i32_0, %arg1 : i32, i32, i32, i32
  }
  func.func @transform_1(%arg0: i32, %arg1: i32) -> (i32, i32, i32, i32) {
    %c0_i32 = arith.constant 0 : i32
    %c0_i32_0 = arith.constant 0 : i32
    %c0_i32_1 = arith.constant 0 : i32
    return %arg0, %c0_i32, %c0_i32_0, %arg1 : i32, i32, i32, i32
  }
  func.func @transform_2(%arg0: i32, %arg1: i32) -> (i32, i32, i32, i32) {
    %c0_i32 = arith.constant 0 : i32
    %c0_i32_0 = arith.constant 0 : i32
    %c0_i32_1 = arith.constant 0 : i32
    return %arg0, %c0_i32, %c0_i32_0, %arg1 : i32, i32, i32, i32
  }
}

</mosaic_0001>

<llo_original>
// kernel: dip_forward.70
$region0: #{dip_forward.70}
  #allocation0 [shape = 'u32[]', space=smem, size = 0x4, offset = 0x4, fixed_abs, tag = 'smem constant byte address 0x4 - core index']
  #allocation1 [shape = 'u32[144,128]{1,0:T(1,128)}', space=vmem, size = 0x12000, scoped, tag = 'internal scratch']
  #allocation2 [shape = 'f32[256,128]{1,0:T(8,128)}', space=vmem, size = 0x20000, scoped, tag = 'scratch operand']
  %s0 = inlined_call_operand.vmem [shape: bf16[256,256], index: 0, kind: input, shape index: {}]
  %s1 = inlined_call_operand.vmem [shape: bf16[256,128], index: 1, kind: input, shape index: {}]
  %s2 = inlined_call_operand.vmem [shape: f32[1,128], index: 2, kind: input, shape index: {}]
  %s3 = inlined_call_operand.vmem [shape: f32[256,128], index: 3, kind: output, shape index: {}]
  %s4 = sld [smem:[#allocation0]]
  $region30: #{dip_forward.70} parent=0
    _
  %s6 = ssub.s32 1, %s4
  %s7 = scalar_select 0, %s6, %s4
  // Predicated region
  $region2: #{dip_forward.70} parent=0 // pred_check
    _
  $region3: #{dip_forward.70} parent=0 // pred_check_branch
    %9 = sbr.rel (0) target = $region5
  $region4: #{dip_forward.70} parent=0 // pred_region
    _
  $region5: #{dip_forward.70} parent=0 // pred_fallthru
    _
  // Predicated region
  $region6: #{dip_forward.70} parent=0 // pred_check
    _
  $region7: #{dip_forward.70} parent=0 // pred_check_branch
    %11 = sbr.rel (0) target = $region9
  $region8: #{dip_forward.70} parent=0 // pred_region
    _
  $region9: #{dip_forward.70} parent=0 // pred_fallthru
    _
  // Predicated region
  $region10: #{dip_forward.70} parent=0 // pred_check
    _
  $region11: #{dip_forward.70} parent=0 // pred_check_branch
    %13 = sbr.rel (0) target = $region13
  $region12: #{dip_forward.70} parent=0 // pred_region
    _
  $region13: #{dip_forward.70} parent=0 // pred_fallthru
    _
  %p15 = scmp.eq.s32.totalorder 0, 0
  // Predicated region
  $region14: #{dip_forward.70} parent=0 // pred_check
    %p16 = pneg %p15
  $region15: #{dip_forward.70} parent=0 // pred_check_branch
    %18 = sbr.rel (%p16) target = $region17
  $region16: #{dip_forward.70} parent=0 // pred_region
    %19 = vst [vmem:[#allocation2] sm:$0xff] 0.0
    %20 = vst [vmem:[#allocation2 + $0x8] sm:$0xff] 0.0
    %21 = vst [vmem:[#allocation2 + $0x10] sm:$0xff] 0.0
    %22 = vst [vmem:[#allocation2 + $0x18] sm:$0xff] 0.0
    %23 = vst [vmem:[#allocation2 + $0x20] sm:$0xff] 0.0
    %24 = vst [vmem:[#allocation2 + $0x28] sm:$0xff] 0.0
    %25 = vst [vmem:[#allocation2 + $0x30] sm:$0xff] 0.0
    %26 = vst [vmem:[#allocation2 + $0x38] sm:$0xff] 0.0
    %27 = vst [vmem:[#allocation2 + $0x40] sm:$0xff] 0.0
    %28 = vst [vmem:[#allocation2 + $0x48] sm:$0xff] 0.0
    %29 = vst [vmem:[#allocation2 + $0x50] sm:$0xff] 0.0
    %30 = vst [vmem:[#allocation2 + $0x58] sm:$0xff] 0.0
    %31 = vst [vmem:[#allocation2 + $0x60] sm:$0xff] 0.0
    %32 = vst [vmem:[#allocation2 + $0x68] sm:$0xff] 0.0
    %33 = vst [vmem:[#allocation2 + $0x70] sm:$0xff] 0.0
    %34 = vst [vmem:[#allocation2 + $0x78] sm:$0xff] 0.0
    %35 = vst [vmem:[#allocation2 + $0x80] sm:$0xff] 0.0
    %36 = vst [vmem:[#allocation2 + $0x88] sm:$0xff] 0.0
    %37 = vst [vmem:[#allocation2 + $0x90] sm:$0xff] 0.0
    %38 = vst [vmem:[#allocation2 + $0x98] sm:$0xff] 0.0
    %39 = vst [vmem:[#allocation2 + $0xa0] sm:$0xff] 0.0
    %40 = vst [vmem:[#allocation2 + $0xa8] sm:$0xff] 0.0
    %41 = vst [vmem:[#allocation2 + $0xb0] sm:$0xff] 0.0
    %42 = vst [vmem:[#allocation2 + $0xb8] sm:$0xff] 0.0
    %43 = vst [vmem:[#allocation2 + $0xc0] sm:$0xff] 0.0
    %44 = vst [vmem:[#allocation2 + $0xc8] sm:$0xff] 0.0
    %45 = vst [vmem:[#allocation2 + $0xd0] sm:$0xff] 0.0
    %46 = vst [vmem:[#allocation2 + $0xd8] sm:$0xff] 0.0
    %47 = vst [vmem:[#allocation2 + $0xe0] sm:$0xff] 0.0
    %48 = vst [vmem:[#allocation2 + $0xe8] sm:$0xff] 0.0
    %49 = vst [vmem:[#allocation2 + $0xf0] sm:$0xff] 0.0
    %50 = vst [vmem:[#allocation2 + $0xf8] sm:$0xff] 0.0
  $region17: #{dip_forward.70} parent=0 // pred_fallthru
    _
  %v51 = vld [vmem:[#allocation2] sm:$0xff]
  %v52 = vld [vmem:[#allocation2 + $0x8] sm:$0xff]
  %v53 = vld [vmem:[#allocation2 + $0x10] sm:$0xff]
  %v54 = vld [vmem:[#allocation2 + $0x18] sm:$0xff]
  %v55 = vld [vmem:[#allocation2 + $0x20] sm:$0xff]
  %v56 = vld [vmem:[#allocation2 + $0x28] sm:$0xff]
  %v57 = vld [vmem:[#allocation2 + $0x30] sm:$0xff]
  %v58 = vld [vmem:[#allocation2 + $0x38] sm:$0xff]
  %v59 = vld [vmem:[#allocation2 + $0x40] sm:$0xff]
  %v60 = vld [vmem:[#allocation2 + $0x48] sm:$0xff]
  %v61 = vld [vmem:[#allocation2 + $0x50] sm:$0xff]
  %v62 = vld [vmem:[#allocation2 + $0x58] sm:$0xff]
  %v63 = vld [vmem:[#allocation2 + $0x60] sm:$0xff]
  %v64 = vld [vmem:[#allocation2 + $0x68] sm:$0xff]
  %v65 = vld [vmem:[#allocation2 + $0x70] sm:$0xff]
  %v66 = vld [vmem:[#allocation2 + $0x78] sm:$0xff]
  %v67 = vld [vmem:[#allocation2 + $0x80] sm:$0xff]
  %v68 = vld [vmem:[#allocation2 + $0x88] sm:$0xff]
  %v69 = vld [vmem:[#allocation2 + $0x90] sm:$0xff]
  %v70 = vld [vmem:[#allocation2 + $0x98] sm:$0xff]
  %v71 = vld [vmem:[#allocation2 + $0xa0] sm:$0xff]
  %v72 = vld [vmem:[#allocation2 + $0xa8] sm:$0xff]
  %v73 = vld [vmem:[#allocation2 + $0xb0] sm:$0xff]
  %v74 = vld [vmem:[#allocation2 + $0xb8] sm:$0xff]
  %v75 = vld [vmem:[#allocation2 + $0xc0] sm:$0xff]
  %v76 = vld [vmem:[#allocation2 + $0xc8] sm:$0xff]
  %v77 = vld [vmem:[#allocation2 + $0xd0] sm:$0xff]
  %v78 = vld [vmem:[#allocation2 + $0xd8] sm:$0xff]
  %v79 = vld [vmem:[#allocation2 + $0xe0] sm:$0xff]
  %v80 = vld [vmem:[#allocation2 + $0xe8] sm:$0xff]
  %v81 = vld [vmem:[#allocation2 + $0xf0] sm:$0xff]
  %v82 = vld [vmem:[#allocation2 + $0xf8] sm:$0xff]
  %v83 = vld [vmem:[%s0] sm:$0xff]
  %v84 = vld [vmem:[%s0 + $0x8] sm:$0xff]
  %v85 = vld [vmem:[%s0 + $0x10] sm:$0xff]
  %v86 = vld [vmem:[%s0 + $0x18] sm:$0xff]
  %v87 = vld [vmem:[%s0 + $0x20] sm:$0xff]
  %v88 = vld [vmem:[%s0 + $0x28] sm:$0xff]
  %v89 = vld [vmem:[%s0 + $0x30] sm:$0xff]
  %v90 = vld [vmem:[%s0 + $0x38] sm:$0xff]
  %v91 = vld [vmem:[%s0 + $0x40] sm:$0xff]
  %v92 = vld [vmem:[%s0 + $0x48] sm:$0xff]
  %v93 = vld [vmem:[%s0 + $0x50] sm:$0xff]
  %v94 = vld [vmem:[%s0 + $0x58] sm:$0xff]
  %v95 = vld [vmem:[%s0 + $0x60] sm:$0xff]
  %v96 = vld [vmem:[%s0 + $0x68] sm:$0xff]
  %v97 = vld [vmem:[%s0 + $0x70] sm:$0xff]
  %v98 = vld [vmem:[%s0 + $0x78] sm:$0xff]
  %v99 = vld [vmem:[%s0 + $0x80] sm:$0xff]
  %v100 = vld [vmem:[%s0 + $0x88] sm:$0xff]
  %v101 = vld [vmem:[%s0 + $0x90] sm:$0xff]
  %v102 = vld [vmem:[%s0 + $0x98] sm:$0xff]
  %v103 = vld [vmem:[%s0 + $0xa0] sm:$0xff]
  %v104 = vld [vmem:[%s0 + $0xa8] sm:$0xff]
  %v105 = vld [vmem:[%s0 + $0xb0] sm:$0xff]
  %v106 = vld [vmem:[%s0 + $0xb8] sm:$0xff]
  %v107 = vld [vmem:[%s0 + $0xc0] sm:$0xff]
  %v108 = vld [vmem:[%s0 + $0xc8] sm:$0xff]
  %v109 = vld [vmem:[%s0 + $0xd0] sm:$0xff]
  %v110 = vld [vmem:[%s0 + $0xd8] sm:$0xff]
  %v111 = vld [vmem:[%s0 + $0xe0] sm:$0xff]
  %v112 = vld [vmem:[%s0 + $0xe8] sm:$0xff]
  %v113 = vld [vmem:[%s0 + $0xf0] sm:$0xff]
  %v114 = vld [vmem:[%s0 + $0xf8] sm:$0xff]
  %v115 = vld [vmem:[%s1] sm:$0xf]
  %v116 = vld [vmem:[%s1 + $0x4] sm:$0xf]
  %v117 = vld [vmem:[%s1 + $0x8] sm:$0xf]
  %v118 = vld [vmem:[%s1 + $0xc] sm:$0xf]
  %v119 = vld [vmem:[%s1 + $0x10] sm:$0xf]
  %v120 = vld [vmem:[%s1 + $0x14] sm:$0xf]
  %v121 = vld [vmem:[%s1 + $0x18] sm:$0xf]
  %v122 = vld [vmem:[%s1 + $0x1c] sm:$0xf]
  %v123 = vld [vmem:[%s1 + $0x20] sm:$0xf]
  %v124 = vld [vmem:[%s1 + $0x24] sm:$0xf]
  %v125 = vld [vmem:[%s1 + $0x28] sm:$0xf]
  %v126 = vld [vmem:[%s1 + $0x2c] sm:$0xf]
  %v127 = vld [vmem:[%s1 + $0x30] sm:$0xf]
  %v128 = vld [vmem:[%s1 + $0x34] sm:$0xf]
  %v129 = vld [vmem:[%s1 + $0x38] sm:$0xf]
  %v130 = vld [vmem:[%s1 + $0x3c] sm:$0xf]
  %v131 = vld [vmem:[%s1 + $0x40] sm:$0xf]
  %v132 = vld [vmem:[%s1 + $0x44] sm:$0xf]
  %v133 = vld [vmem:[%s1 + $0x48] sm:$0xf]
  %v134 = vld [vmem:[%s1 + $0x4c] sm:$0xf]
  %v135 = vld [vmem:[%s1 + $0x50] sm:$0xf]
  %v136 = vld [vmem:[%s1 + $0x54] sm:$0xf]
  %v137 = vld [vmem:[%s1 + $0x58] sm:$0xf]
  %v138 = vld [vmem:[%s1 + $0x5c] sm:$0xf]
  %v139 = vld [vmem:[%s1 + $0x60] sm:$0xf]
  %v140 = vld [vmem:[%s1 + $0x64] sm:$0xf]
  %v141 = vld [vmem:[%s1 + $0x68] sm:$0xf]
  %v142 = vld [vmem:[%s1 + $0x6c] sm:$0xf]
  %v143 = vld [vmem:[%s1 + $0x70] sm:$0xf]
  %v144 = vld [vmem:[%s1 + $0x74] sm:$0xf]
  %v145 = vld [vmem:[%s1 + $0x78] sm:$0xf]
  %v146 = vld [vmem:[%s1 + $0x7c] sm:$0xf]
  %v179 = vunpack.c.l.b16 %v83
  %v180 = vunpack.c.h.b16 %v83
  %v181 = vunpack.c.l.b16 %v84
  %v182 = vunpack.c.h.b16 %v84
  %v183 = vunpack.c.l.b16 %v85
  %v184 = vunpack.c.h.b16 %v85
  %v185 = vunpack.c.l.b16 %v86
  %v186 = vunpack.c.h.b16 %v86
  %v187 = vunpack.c.l.b16 %v87
  %v188 = vunpack.c.h.b16 %v87
  %v189 = vunpack.c.l.b16 %v88
  %v190 = vunpack.c.h.b16 %v88
  %v191 = vunpack.c.l.b16 %v89
  %v192 = vunpack.c.h.b16 %v89
  %v193 = vunpack.c.l.b16 %v90
  %v194 = vunpack.c.h.b16 %v90
  %v195 = vunpack.c.l.b16 %v91
  %v196 = vunpack.c.h.b16 %v91
  %v197 = vunpack.c.l.b16 %v92
  %v198 = vunpack.c.h.b16 %v92
  %v199 = vunpack.c.l.b16 %v93
  %v200 = vunpack.c.h.b16 %v93
  %v201 = vunpack.c.l.b16 %v94
  %v202 = vunpack.c.h.b16 %v94
  %v203 = vunpack.c.l.b16 %v95
  %v204 = vunpack.c.h.b16 %v95
  %v205 = vunpack.c.l.b16 %v96
  %v206 = vunpack.c.h.b16 %v96
  %v207 = vunpack.c.l.b16 %v97
  %v208 = vunpack.c.h.b16 %v97
  %v209 = vunpack.c.l.b16 %v98
  %v210 = vunpack.c.h.b16 %v98
  %v211 = vunpack.c.l.b16 %v99
  %v212 = vunpack.c.h.b16 %v99
  %v213 = vunpack.c.l.b16 %v100
  %v214 = vunpack.c.h.b16 %v100
  %v215 = vunpack.c.l.b16 %v101
  %v216 = vunpack.c.h.b16 %v101
  %v217 = vunpack.c.l.b16 %v102
  %v218 = vunpack.c.h.b16 %v102
  %v219 = vunpack.c.l.b16 %v103
  %v220 = vunpack.c.h.b16 %v103
  %v221 = vunpack.c.l.b16 %v104
  %v222 = vunpack.c.h.b16 %v104
  %v223 = vunpack.c.l.b16 %v105
  %v224 = vunpack.c.h.b16 %v105
  %v225 = vunpack.c.l.b16 %v106
  %v226 = vunpack.c.h.b16 %v106
  %v227 = vunpack.c.l.b16 %v107
  %v228 = vunpack.c.h.b16 %v107
  %v229 = vunpack.c.l.b16 %v108
  %v230 = vunpack.c.h.b16 %v108
  %v231 = vunpack.c.l.b16 %v109
  %v232 = vunpack.c.h.b16 %v109
  %v233 = vunpack.c.l.b16 %v110
  %v234 = vunpack.c.h.b16 %v110
  %v235 = vunpack.c.l.b16 %v111
  %v236 = vunpack.c.h.b16 %v111
  %v237 = vunpack.c.l.b16 %v112
  %v238 = vunpack.c.h.b16 %v112
  %v239 = vunpack.c.l.b16 %v113
  %v240 = vunpack.c.h.b16 %v113
  %v241 = vunpack.c.l.b16 %v114
  %v242 = vunpack.c.h.b16 %v114
  %v243 = vpack.c.b16 %v181, %v179
  %v244 = vpack.c.b16 %v182, %v180
  %v245 = vpack.c.b16 %v185, %v183
  %v246 = vpack.c.b16 %v186, %v184
  %v247 = vpack.c.b16 %v189, %v187
  %v248 = vpack.c.b16 %v190, %v188
  %v249 = vpack.c.b16 %v193, %v191
  %v250 = vpack.c.b16 %v194, %v192
  %v251 = vpack.c.b16 %v197, %v195
  %v252 = vpack.c.b16 %v198, %v196
  %v253 = vpack.c.b16 %v201, %v199
  %v254 = vpack.c.b16 %v202, %v200
  %v255 = vpack.c.b16 %v205, %v203
  %v256 = vpack.c.b16 %v206, %v204
  %v257 = vpack.c.b16 %v209, %v207
  %v258 = vpack.c.b16 %v210, %v208
  %v259 = vpack.c.b16 %v213, %v211
  %v260 = vpack.c.b16 %v214, %v212
  %v261 = vpack.c.b16 %v217, %v215
  %v262 = vpack.c.b16 %v218, %v216
  %v263 = vpack.c.b16 %v221, %v219
  %v264 = vpack.c.b16 %v222, %v220
  %v265 = vpack.c.b16 %v225, %v223
  %v266 = vpack.c.b16 %v226, %v224
  %v267 = vpack.c.b16 %v229, %v227
  %v268 = vpack.c.b16 %v230, %v228
  %v269 = vpack.c.b16 %v233, %v231
  %v270 = vpack.c.b16 %v234, %v232
  %v271 = vpack.c.b16 %v237, %v235
  %v272 = vpack.c.b16 %v238, %v236
  %v273 = vpack.c.b16 %v241, %v239
  %v274 = vpack.c.b16 %v242, %v240
  %v339 = vunpack.c.l.b16 %v115
  %v340 = vunpack.c.l.b16 %v116
  %v341 = vunpack.c.l.b16 %v117
  %v342 = vunpack.c.l.b16 %v118
  %v343 = vunpack.c.l.b16 %v119
  %v344 = vunpack.c.l.b16 %v120
  %v345 = vunpack.c.l.b16 %v121
  %v346 = vunpack.c.l.b16 %v122
  %v347 = vunpack.c.l.b16 %v123
  %v348 = vunpack.c.l.b16 %v124
  %v349 = vunpack.c.l.b16 %v125
  %v350 = vunpack.c.l.b16 %v126
  %v351 = vunpack.c.l.b16 %v127
  %v352 = vunpack.c.l.b16 %v128
  %v353 = vunpack.c.l.b16 %v129
  %v354 = vunpack.c.l.b16 %v130
  %v355 = vunpack.c.l.b16 %v131
  %v356 = vunpack.c.l.b16 %v132
  %v357 = vunpack.c.l.b16 %v133
  %v358 = vunpack.c.l.b16 %v134
  %v359 = vunpack.c.l.b16 %v135
  %v360 = vunpack.c.l.b16 %v136
  %v361 = vunpack.c.l.b16 %v137
  %v362 = vunpack.c.l.b16 %v138
  %v363 = vunpack.c.l.b16 %v139
  %v364 = vunpack.c.l.b16 %v140
  %v365 = vunpack.c.l.b16 %v141
  %v366 = vunpack.c.l.b16 %v142
  %v367 = vunpack.c.l.b16 %v143
  %v368 = vunpack.c.l.b16 %v144
  %v369 = vunpack.c.l.b16 %v145
  %v370 = vunpack.c.l.b16 %v146
  %v371 = vpack.c.b16 %v340, %v339
  %v372 = vpack.c.b16 %v342, %v341
  %v373 = vpack.c.b16 %v344, %v343
  %v374 = vpack.c.b16 %v346, %v345
  %v375 = vpack.c.b16 %v348, %v347
  %v376 = vpack.c.b16 %v350, %v349
  %v377 = vpack.c.b16 %v352, %v351
  %v378 = vpack.c.b16 %v354, %v353
  %v379 = vpack.c.b16 %v356, %v355
  %v380 = vpack.c.b16 %v358, %v357
  %v381 = vpack.c.b16 %v360, %v359
  %v382 = vpack.c.b16 %v362, %v361
  %v383 = vpack.c.b16 %v364, %v363
  %v384 = vpack.c.b16 %v366, %v365
  %v385 = vpack.c.b16 %v368, %v367
  %v386 = vpack.c.b16 %v370, %v369
  %403 = vmatprep.subr.bf16.mxu0 0
  %404 = vmatpush1.bf16.msra.mxu0 %v371
  %405 = vmatprep.subr.bf16.mxu0 0
  %406 = vmatpush1.bf16.msra.mxu0 %v372
  %407 = vmatprep.subr.bf16.mxu0 0
  %408 = vmatpush1.bf16.msra.mxu0 %v373
  %409 = vmatprep.subr.bf16.mxu0 0
  %410 = vmatpush1.bf16.msra.mxu0 %v374
  %411 = vmatprep.subr.bf16.mxu0 0
  %412 = vmatpush1.bf16.msra.mxu0 %v375
  %413 = vmatprep.subr.bf16.mxu0 0
  %414 = vmatpush1.bf16.msra.mxu0 %v376
  %415 = vmatprep.subr.bf16.mxu0 0
  %416 = vmatpush1.bf16.msra.mxu0 %v377
  %417 = vmatprep.subr.bf16.mxu0 0
  %418 = vmatpush1.bf16.msra.mxu0 %v378
  %419 = vmatprep.subr.bf16.mxu0 0
  %420 = vmatpush1.bf16.msra.mxu0 %v379
  %421 = vmatprep.subr.bf16.mxu0 0
  %422 = vmatpush1.bf16.msra.mxu0 %v380
  %423 = vmatprep.subr.bf16.mxu0 0
  %424 = vmatpush1.bf16.msra.mxu0 %v381
  %425 = vmatprep.subr.bf16.mxu0 0
  %426 = vmatpush1.bf16.msra.mxu0 %v382
  %427 = vmatprep.subr.bf16.mxu0 0
  %428 = vmatpush1.bf16.msra.mxu0 %v383
  %429 = vmatprep.subr.bf16.mxu0 0
  %430 = vmatpush1.bf16.msra.mxu0 %v384
  %431 = vmatprep.subr.bf16.mxu0 0
  %432 = vmatpush1.bf16.msra.mxu0 %v385
  %433 = vmatprep.subr.bf16.mxu0 0
  %434 = vmatpush1.bf16.msra.mxu0 %v386
  %435 = vmatprep.mubr.bf16.mxu0 %v244
  %436 = vmatmul.mubr.bf16.gmra.mrb[0].mxu0 %v243
  %v437 = vpop.f32.mrb[0].mxu0
  %v438 = vadd.f32 0.0, %v437
  %v439 = vpop.f32.mrb[0].mxu0
  %v440 = vpop.f32.mrb[0].mxu0
  %v441 = vadd.f32 0.0, %v440
  %v442 = vpop.f32.mrb[0].mxu0
  %443 = vmatprep.mubr.bf16.mxu0 %v246
  %444 = vmatmul.mubr.bf16.gmra.mrb[0].mxu0 %v245
  %v445 = vpop.f32.mrb[0].mxu0
  %v446 = vadd.f32 0.0, %v445
  %v447 = vpop.f32.mrb[0].mxu0
  %v448 = vpop.f32.mrb[0].mxu0
  %v449 = vadd.f32 0.0, %v448
  %v450 = vpop.f32.mrb[0].mxu0
  %451 = vmatprep.mubr.bf16.mxu0 %v248
  %452 = vmatmul.mubr.bf16.gmra.mrb[0].mxu0 %v247
  %v453 = vpop.f32.mrb[0].mxu0
  %v454 = vadd.f32 0.0, %v453
  %v455 = vpop.f32.mrb[0].mxu0
  %v456 = vpop.f32.mrb[0].mxu0
  %v457 = vadd.f32 0.0, %v456
  %v458 = vpop.f32.mrb[0].mxu0
  %459 = vmatprep.mubr.bf16.mxu0 %v250
  %460 = vmatmul.mubr.bf16.gmra.mrb[0].mxu0 %v249
  %v461 = vpop.f32.mrb[0].mxu0
  %v462 = vadd.f32 0.0, %v461
  %v463 = vpop.f32.mrb[0].mxu0
  %v464 = vpop.f32.mrb[0].mxu0
  %v465 = vadd.f32 0.0, %v464
  %v466 = vpop.f32.mrb[0].mxu0
  %467 = vmatprep.mubr.bf16.mxu0 %v252
  %468 = vmatmul.mubr.bf16.gmra.mrb[0].mxu0 %v251
  %v469 = vpop.f32.mrb[0].mxu0
  %v470 = vadd.f32 0.0, %v469
  %v471 = vpop.f32.mrb[0].mxu0
  %v472 = vpop.f32.mrb[0].mxu0
  %v473 = vadd.f32 0.0, %v472
  %v474 = vpop.f32.mrb[0].mxu0
  %475 = vmatprep.mubr.bf16.mxu0 %v254
  %476 = vmatmul.mubr.bf16.gmra.mrb[0].mxu0 %v253
  %v477 = vpop.f32.mrb[0].mxu0
  %v478 = vadd.f32 0.0, %v477
  %v479 = vpop.f32.mrb[0].mxu0
  %v480 = vpop.f32.mrb[0].mxu0
  %v481 = vadd.f32 0.0, %v480
  %v482 = vpop.f32.mrb[0].mxu0
  %483 = vmatprep.mubr.bf16.mxu0 %v256
  %484 = vmatmul.mubr.bf16.gmra.mrb[0].mxu0 %v255
  %v485 = vpop.f32.mrb[0].mxu0
  %v486 = vadd.f32 0.0, %v485
  %v487 = vpop.f32.mrb[0].mxu0
  %v488 = vpop.f32.mrb[0].mxu0
  %v489 = vadd.f32 0.0, %v488
  %v490 = vpop.f32.mrb[0].mxu0
  %491 = vmatprep.mubr.bf16.mxu0 %v258
  %492 = vmatmul.mubr.bf16.gmra.mrb[0].mxu0 %v257
  %v493 = vpop.f32.mrb[0].mxu0
  %v494 = vadd.f32 0.0, %v493
  %v495 = vpop.f32.mrb[0].mxu0
  %v496 = vpop.f32.mrb[0].mxu0
  %v497 = vadd.f32 0.0, %v496
  %v498 = vpop.f32.mrb[0].mxu0
  %499 = vmatprep.mubr.bf16.mxu0 %v260
  %500 = vmatmul.mubr.bf16.gmra.mrb[0].mxu0 %v259
  %v501 = vpop.f32.mrb[0].mxu0
  %v502 = vadd.f32 0.0, %v501
  %v503 = vpop.f32.mrb[0].mxu0
  %v504 = vpop.f32.mrb[0].mxu0
  %v505 = vadd.f32 0.0, %v504
  %v506 = vpop.f32.mrb[0].mxu0
  %507 = vmatprep.mubr.bf16.mxu0 %v262
  %508 = vmatmul.mubr.bf16.gmra.mrb[0].mxu0 %v261
  %v509 = vpop.f32.mrb[0].mxu0
  %v510 = vadd.f32 0.0, %v509
  %v511 = vpop.f32.mrb[0].mxu0
  %v512 = vpop.f32.mrb[0].mxu0
  %v513 = vadd.f32 0.0, %v512
  %v514 = vpop.f32.mrb[0].mxu0
  %515 = vmatprep.mubr.bf16.mxu0 %v264
  %516 = vmatmul.mubr.bf16.gmra.mrb[0].mxu0 %v263
  %v517 = vpop.f32.mrb[0].mxu0
  %v518 = vadd.f32 0.0, %v517
  %v519 = vpop.f32.mrb[0].mxu0
  %v520 = vpop.f32.mrb[0].mxu0
  %v521 = vadd.f32 0.0, %v520
  %v522 = vpop.f32.mrb[0].mxu0
  %523 = vmatprep.mubr.bf16.mxu0 %v266
  %524 = vmatmul.mubr.bf16.gmra.mrb[0].mxu0 %v265
  %v525 = vpop.f32.mrb[0].mxu0
  %v526 = vadd.f32 0.0, %v525
  %v527 = vpop.f32.mrb[0].mxu0
  %v528 = vpop.f32.mrb[0].mxu0
  %v529 = vadd.f32 0.0, %v528
  %v530 = vpop.f32.mrb[0].mxu0
  %531 = vmatprep.mubr.bf16.mxu0 %v268
  %532 = vmatmul.mubr.bf16.gmra.mrb[0].mxu0 %v267
  %v533 = vpop.f32.mrb[0].mxu0
  %v534 = vadd.f32 0.0, %v533
  %v535 = vpop.f32.mrb[0].mxu0
  %v536 = vpop.f32.mrb[0].mxu0
  %v537 = vadd.f32 0.0, %v536
  %v538 = vpop.f32.mrb[0].mxu0
  %539 = vmatprep.mubr.bf16.mxu0 %v270
  %540 = vmatmul.mubr.bf16.gmra.mrb[0].mxu0 %v269
  %v541 = vpop.f32.mrb[0].mxu0
  %v542 = vadd.f32 0.0, %v541
  %v543 = vpop.f32.mrb[0].mxu0
  %v544 = vpop.f32.mrb[0].mxu0
  %v545 = vadd.f32 0.0, %v544
  %v546 = vpop.f32.mrb[0].mxu0
  %547 = vmatprep.mubr.bf16.mxu0 %v272
  %548 = vmatmul.mubr.bf16.gmra.mrb[0].mxu0 %v271
  %v549 = vpop.f32.mrb[0].mxu0
  %v550 = vadd.f32 0.0, %v549
  %v551 = vpop.f32.mrb[0].mxu0
  %v552 = vpop.f32.mrb[0].mxu0
  %v553 = vadd.f32 0.0, %v552
  %v554 = vpop.f32.mrb[0].mxu0
  %555 = vmatprep.mubr.bf16.mxu0 %v274
  %556 = vmatmul.mubr.bf16.gmra.mrb[0].mxu0 %v273
  %v557 = vpop.f32.mrb[0].mxu0
  %v558 = vadd.f32 0.0, %v557
  %v559 = vpop.f32.mrb[0].mxu0
  %v560 = vpop.f32.mrb[0].mxu0
  %v561 = vadd.f32 0.0, %v560
  %v562 = vpop.f32.mrb[0].mxu0
  %563 = vdwg.mxu0
  %v564 = vadd.f32 %v51, %v438
  %v565 = vadd.f32 %v52, %v441
  %v566 = vadd.f32 %v53, %v446
  %v567 = vadd.f32 %v54, %v449
  %v568 = vadd.f32 %v55, %v454
  %v569 = vadd.f32 %v56, %v457
  %v570 = vadd.f32 %v57, %v462
  %v571 = vadd.f32 %v58, %v465
  %v572 = vadd.f32 %v59, %v470
  %v573 = vadd.f32 %v60, %v473
  %v574 = vadd.f32 %v61, %v478
  %v575 = vadd.f32 %v62, %v481
  %v576 = vadd.f32 %v63, %v486
  %v577 = vadd.f32 %v64, %v489
  %v578 = vadd.f32 %v65, %v494
  %v579 = vadd.f32 %v66, %v497
  %v580 = vadd.f32 %v67, %v502
  %v581 = vadd.f32 %v68, %v505
  %v582 = vadd.f32 %v69, %v510
  %v583 = vadd.f32 %v70, %v513
  %v584 = vadd.f32 %v71, %v518
  %v585 = vadd.f32 %v72, %v521
  %v586 = vadd.f32 %v73, %v526
  %v587 = vadd.f32 %v74, %v529
  %v588 = vadd.f32 %v75, %v534
  %v589 = vadd.f32 %v76, %v537
  %v590 = vadd.f32 %v77, %v542
  %v591 = vadd.f32 %v78, %v545
  %v592 = vadd.f32 %v79, %v550
  %v593 = vadd.f32 %v80, %v553
  %v594 = vadd.f32 %v81, %v558
  %v595 = vadd.f32 %v82, %v561
  %596 = vst [vmem:[#allocation2] sm:$0xff] %v564
  %597 = vst [vmem:[#allocation2 + $0x8] sm:$0xff] %v565
  %598 = vst [vmem:[#allocation2 + $0x10] sm:$0xff] %v566
  %599 = vst [vmem:[#allocation2 + $0x18] sm:$0xff] %v567
  %600 = vst [vmem:[#allocation2 + $0x20] sm:$0xff] %v568
  %601 = vst [vmem:[#allocation2 + $0x28] sm:$0xff] %v569
  %602 = vst [vmem:[#allocation2 + $0x30] sm:$0xff] %v570
  %603 = vst [vmem:[#allocation2 + $0x38] sm:$0xff] %v571
  %604 = vst [vmem:[#allocation2 + $0x40] sm:$0xff] %v572
  %605 = vst [vmem:[#allocation2 + $0x48] sm:$0xff] %v573
  %606 = vst [vmem:[#allocation2 + $0x50] sm:$0xff] %v574
  %607 = vst [vmem:[#allocation2 + $0x58] sm:$0xff] %v575
  %608 = vst [vmem:[#allocation2 + $0x60] sm:$0xff] %v576
  %609 = vst [vmem:[#allocation2 + $0x68] sm:$0xff] %v577
  %610 = vst [vmem:[#allocation2 + $0x70] sm:$0xff] %v578
  %611 = vst [vmem:[#allocation2 + $0x78] sm:$0xff] %v579
  %612 = vst [vmem:[#allocation2 + $0x80] sm:$0xff] %v580
  %613 = vst [vmem:[#allocation2 + $0x88] sm:$0xff] %v581
  %614 = vst [vmem:[#allocation2 + $0x90] sm:$0xff] %v582
  %615 = vst [vmem:[#allocation2 + $0x98] sm:$0xff] %v583
  %616 = vst [vmem:[#allocation2 + $0xa0] sm:$0xff] %v584
  %617 = vst [vmem:[#allocation2 + $0xa8] sm:$0xff] %v585
  %618 = vst [vmem:[#allocation2 + $0xb0] sm:$0xff] %v586
  %619 = vst [vmem:[#allocation2 + $0xb8] sm:$0xff] %v587
  %620 = vst [vmem:[#allocation2 + $0xc0] sm:$0xff] %v588
  %621 = vst [vmem:[#allocation2 + $0xc8] sm:$0xff] %v589
  %622 = vst [vmem:[#allocation2 + $0xd0] sm:$0xff] %v590
  %623 = vst [vmem:[#allocation2 + $0xd8] sm:$0xff] %v591
  %624 = vst [vmem:[#allocation2 + $0xe0] sm:$0xff] %v592
  %625 = vst [vmem:[#allocation2 + $0xe8] sm:$0xff] %v593
  %626 = vst [vmem:[#allocation2 + $0xf0] sm:$0xff] %v594
  %627 = vst [vmem:[#allocation2 + $0xf8] sm:$0xff] %v595
  // Predicated region
  $region18: #{dip_forward.70} parent=0 // pred_check
    %p628 = pneg %p15
  $region19: #{dip_forward.70} parent=0 // pred_check_branch
    %630 = sbr.rel (%p628) target = $region21
  $region20: #{dip_forward.70} parent=0 // pred_region
    %v631 = vld [vmem:[#allocation2] sm:$0xff]
    %v632 = vld [vmem:[#allocation2 + $0x8] sm:$0xff]
    %v633 = vld [vmem:[#allocation2 + $0x10] sm:$0xff]
    %v634 = vld [vmem:[#allocation2 + $0x18] sm:$0xff]
    %v635 = vld [vmem:[#allocation2 + $0x20] sm:$0xff]
    %v636 = vld [vmem:[#allocation2 + $0x28] sm:$0xff]
    %v637 = vld [vmem:[#allocation2 + $0x30] sm:$0xff]
    %v638 = vld [vmem:[#allocation2 + $0x38] sm:$0xff]
    %v639 = vld [vmem:[#allocation2 + $0x40] sm:$0xff]
    %v640 = vld [vmem:[#allocation2 + $0x48] sm:$0xff]
    %v641 = vld [vmem:[#allocation2 + $0x50] sm:$0xff]
    %v642 = vld [vmem:[#allocation2 + $0x58] sm:$0xff]
    %v643 = vld [vmem:[#allocation2 + $0x60] sm:$0xff]
    %v644 = vld [vmem:[#allocation2 + $0x68] sm:$0xff]
    %v645 = vld [vmem:[#allocation2 + $0x70] sm:$0xff]
    %v646 = vld [vmem:[#allocation2 + $0x78] sm:$0xff]
    %v647 = vld [vmem:[#allocation2 + $0x80] sm:$0xff]
    %v648 = vld [vmem:[#allocation2 + $0x88] sm:$0xff]
    %v649 = vld [vmem:[#allocation2 + $0x90] sm:$0xff]
    %v650 = vld [vmem:[#allocation2 + $0x98] sm:$0xff]
    %v651 = vld [vmem:[#allocation2 + $0xa0] sm:$0xff]
    %v652 = vld [vmem:[#allocation2 + $0xa8] sm:$0xff]
    %v653 = vld [vmem:[#allocation2 + $0xb0] sm:$0xff]
    %v654 = vld [vmem:[#allocation2 + $0xb8] sm:$0xff]
    %v655 = vld [vmem:[#allocation2 + $0xc0] sm:$0xff]
    %v656 = vld [vmem:[#allocation2 + $0xc8] sm:$0xff]
    %v657 = vld [vmem:[#allocation2 + $0xd0] sm:$0xff]
    %v658 = vld [vmem:[#allocation2 + $0xd8] sm:$0xff]
    %v659 = vld [vmem:[#allocation2 + $0xe0] sm:$0xff]
    %v660 = vld [vmem:[#allocation2 + $0xe8] sm:$0xff]
    %v661 = vld [vmem:[#allocation2 + $0xf0] sm:$0xff]
    %v662 = vld [vmem:[#allocation2 + $0xf8] sm:$0xff]
    %v663 = vld [vmem:[%s2] sm:$0x1]
    %v665 = vlaneseq
    %v666 = vshrl.u32 %v665, 7
    %v667 = vsub.s32 0, %v666
    %v668 = vrot.slane %v663, %v667
    %v670 = vadd.f32 %v631, %v668
    %v671 = vadd.f32 %v632, %v668
    %v672 = vadd.f32 %v633, %v668
    %v673 = vadd.f32 %v634, %v668
    %v674 = vadd.f32 %v635, %v668
    %v675 = vadd.f32 %v636, %v668
    %v676 = vadd.f32 %v637, %v668
    %v677 = vadd.f32 %v638, %v668
    %v678 = vadd.f32 %v639, %v668
    %v679 = vadd.f32 %v640, %v668
    %v680 = vadd.f32 %v641, %v668
    %v681 = vadd.f32 %v642, %v668
    %v682 = vadd.f32 %v643, %v668
    %v683 = vadd.f32 %v644, %v668
    %v684 = vadd.f32 %v645, %v668
    %v685 = vadd.f32 %v646, %v668
    %v686 = vadd.f32 %v647, %v668
    %v687 = vadd.f32 %v648, %v668
    %v688 = vadd.f32 %v649, %v668
    %v689 = vadd.f32 %v650, %v668
    %v690 = vadd.f32 %v651, %v668
    %v691 = vadd.f32 %v652, %v668
    %v692 = vadd.f32 %v653, %v668
    %v693 = vadd.f32 %v654, %v668
    %v694 = vadd.f32 %v655, %v668
    %v695 = vadd.f32 %v656, %v668
    %v696 = vadd.f32 %v657, %v668
    %v697 = vadd.f32 %v658, %v668
    %v698 = vadd.f32 %v659, %v668
    %v699 = vadd.f32 %v660, %v668
    %v700 = vadd.f32 %v661, %v668
    %v701 = vadd.f32 %v662, %v668
    %702 = vst [vmem:[%s3] sm:$0xff] %v670
    %703 = vst [vmem:[%s3 + $0x8] sm:$0xff] %v671
    %704 = vst [vmem:[%s3 + $0x10] sm:$0xff] %v672
    %705 = vst [vmem:[%s3 + $0x18] sm:$0xff] %v673
    %706 = vst [vmem:[%s3 + $0x20] sm:$0xff] %v674
    %707 = vst [vmem:[%s3 + $0x28] sm:$0xff] %v675
    %708 = vst [vmem:[%s3 + $0x30] sm:$0xff] %v676
    %709 = vst [vmem:[%s3 + $0x38] sm:$0xff] %v677
    %710 = vst [vmem:[%s3 + $0x40] sm:$0xff] %v678
    %711 = vst [vmem:[%s3 + $0x48] sm:$0xff] %v679
    %712 = vst [vmem:[%s3 + $0x50] sm:$0xff] %v680
    %713 = vst [vmem:[%s3 + $0x58] sm:$0xff] %v681
    %714 = vst [vmem:[%s3 + $0x60] sm:$0xff] %v682
    %715 = vst [vmem:[%s3 + $0x68] sm:$0xff] %v683
    %716 = vst [vmem:[%s3 + $0x70] sm:$0xff] %v684
    %717 = vst [vmem:[%s3 + $0x78] sm:$0xff] %v685
    %718 = vst [vmem:[%s3 + $0x80] sm:$0xff] %v686
    %719 = vst [vmem:[%s3 + $0x88] sm:$0xff] %v687
    %720 = vst [vmem:[%s3 + $0x90] sm:$0xff] %v688
    %721 = vst [vmem:[%s3 + $0x98] sm:$0xff] %v689
    %722 = vst [vmem:[%s3 + $0xa0] sm:$0xff] %v690
    %723 = vst [vmem:[%s3 + $0xa8] sm:$0xff] %v691
    %724 = vst [vmem:[%s3 + $0xb0] sm:$0xff] %v692
    %725 = vst [vmem:[%s3 + $0xb8] sm:$0xff] %v693
    %726 = vst [vmem:[%s3 + $0xc0] sm:$0xff] %v694
    %727 = vst [vmem:[%s3 + $0xc8] sm:$0xff] %v695
    %728 = vst [vmem:[%s3 + $0xd0] sm:$0xff] %v696
    %729 = vst [vmem:[%s3 + $0xd8] sm:$0xff] %v697
    %730 = vst [vmem:[%s3 + $0xe0] sm:$0xff] %v698
    %731 = vst [vmem:[%s3 + $0xe8] sm:$0xff] %v699
    %732 = vst [vmem:[%s3 + $0xf0] sm:$0xff] %v700
    %733 = vst [vmem:[%s3 + $0xf8] sm:$0xff] %v701
  $region21: #{dip_forward.70} parent=0 // pred_fallthru
    _
  // Predicated region
  $region22: #{dip_forward.70} parent=0 // pred_check
    _
  $region23: #{dip_forward.70} parent=0 // pred_check_branch
    %735 = sbr.rel (0) target = $region25
  $region24: #{dip_forward.70} parent=0 // pred_region
    _
  $region25: #{dip_forward.70} parent=0 // pred_fallthru
    _
  // Predicated region
  $region26: #{dip_forward.70} parent=0 // pred_check
    _
  $region27: #{dip_forward.70} parent=0 // pred_check_branch
    %737 = sbr.rel (0) target = $region29
  $region28: #{dip_forward.70} parent=0 // pred_region
    _
  $region29: #{dip_forward.70} parent=0 // pred_fallthru
    _

// kernel: dip_forward.74
$region0: #{dip_forward.74}
  #allocation0 [shape = 'u32[]', space=smem, size = 0x4, offset = 0x4, fixed_abs, tag = 'smem constant byte address 0x4 - core index']
  #allocation1 [shape = 'u32[144,128]{1,0:T(1,128)}', space=vmem, size = 0x12000, scoped, tag = 'internal scratch']
  #allocation2 [shape = 'f32[64,128]{1,0:T(8,128)}', space=vmem, size = 0x8000, scoped, tag = 'scratch operand']
  %s0 = inlined_call_operand.vmem [shape: bf16[64,1024], index: 0, kind: input, shape index: {}]
  %s1 = inlined_call_operand.vmem [shape: bf16[1024,128], index: 1, kind: input, shape index: {}]
  %s2 = inlined_call_operand.vmem [shape: f32[1,128], index: 2, kind: input, shape index: {}]
  %s3 = inlined_call_operand.vmem [shape: f32[64,128], index: 3, kind: output, shape index: {}]
  %s4 = sld [smem:[#allocation0]]
  $region76: #{dip_forward.74} parent=0
    _
  %s6 = ssub.s32 1, %s4
  %s7 = scalar_select 0, %s6, %s4
  $region1: #{dip_forward.74} parent=0
    #allocation3 [shape = 'u8[131072]{0}', space=vmem, size = 0x20000, scoped, tag = 'input window, operand 0']
    loop: start=0, step=1, limit=4
    $region2: #{dip_forward.74} parent=1 // loop_pre_header
      _
    $region3: #{dip_forward.74} parent=1 // loop_header
      %s9 = sphi 0, %s13
      %p10 = scmp.ge.s32.totalorder %s9, 4
      %s16 = sphi 0, %s35
      %s17 = sphi 0, %s31
      %s18 = sphi 0, %s27
      %s19 = sphi 0, %s16
      %s20 = sphi 0, %s17
      %s21 = sphi 0, %s18
      %s22 = sphi 0, %s19
      %s23 = sphi 0, %s20
      %s24 = sphi 0, %s21
      %s40 = sphi 0, %s42
      %s43 = sphi 0, %s40
      %s44 = sphi 0, %s43
      %s60 = sphi 0, %s44
      %s68 = sphi 0, %s70
      %s71 = sphi 0, %s68
      %s72 = sphi 0, %s71
      %s88 = sphi 0, %s72
      %s94 = sphi 0, %s96
      %s97 = sphi 0, %s94
      %s98 = sphi 0, %s97
      %s114 = sphi 0, %s98
      %s122 = sphi 0, %s124
      %s125 = sphi 0, %s122
      %s126 = sphi 0, %s125
      %s142 = sphi 0, %s126
    $region4: #{dip_forward.74} parent=1 // loop_header_branch
      %12 = sbr.rel (%p10) target = $region8
    $region5: #{dip_forward.74} parent=1 // loop_body
      %s14 = ssub.s32 %s9, 1
      %s15 = ssub.s32 %s9, 2
      %s25 = sadd.s32 1, %s18
      %p26 = scmp.ge.s32.totalorder %s25, 2
      %s27 = scalar_select %p26, 0, %s25
      %s28 = sadd.s32 1, %s17
      %s29 = scalar_select %p26, %s28, %s17
      %p30 = scmp.ge.s32.totalorder %s29, 1
      %s31 = scalar_select %p30, 0, %s29
      %s32 = sadd.s32 1, %s16
      %s33 = scalar_select %p30, %s32, %s16
      %p34 = scmp.ge.s32.totalorder %s33, 1
      %s35 = scalar_select %p34, 0, %s33
      %s36 = ssub.s32 %s16, %s35
      %s37 = ssub.s32 %s18, %s27
      %s38 = sor.u32 %s36, %s37
      %p39 = scmp.eq.s32.totalorder %s38, 0
      %s41 = sadd.s32 %s40, 1
      %s42 = scalar_select %p39, %s40, %s41
      %p45 = pneg %p39
      %p46 = scmp.eq.s32.totalorder %s9, 1
      %p47 = por %p45, %p46
      %p48 = scmp.ne.s32.totalorder %s40, %s43
      %p49 = scmp.eq.s32.totalorder %s9, 0
      %p50 = por %p48, %p49
      %p51 = scmp.ne.s32.totalorder %s40, %s43
      %p52 = scmp.eq.s32.totalorder %s14, 1
      %p53 = por %p51, %p52
      %p54 = scmp.ne.s32.totalorder %s43, %s44
      %p55 = scmp.eq.s32.totalorder %s14, 0
      %p56 = por %p54, %p55
      %p57 = scmp.ne.s32.totalorder %s43, %s44
      %p58 = scmp.eq.s32.totalorder %s15, 1
      %p59 = por %p57, %p58
      %p61 = scmp.ne.s32.totalorder %s44, %s60
      %p62 = scmp.eq.s32.totalorder %s15, 0
      %p63 = por %p61, %p62
      %s64 = ssub.s32 %s18, %s27
      %s65 = ssub.s32 %s17, %s31
      %s66 = sor.u32 %s64, %s65
      %p67 = scmp.eq.s32.totalorder %s66, 0
      %s69 = sadd.s32 %s68, 1
      %s70 = scalar_select %p67, %s68, %s69
      %p73 = pneg %p67
      %p74 = scmp.eq.s32.totalorder %s9, 1
      %p75 = por %p73, %p74
      %p76 = scmp.ne.s32.totalorder %s68, %s71
      %p77 = scmp.eq.s32.totalorder %s9, 0
      %p78 = por %p76, %p77
      %p79 = scmp.ne.s32.totalorder %s68, %s71
      %p80 = scmp.eq.s32.totalorder %s14, 1
      %p81 = por %p79, %p80
      %p82 = scmp.ne.s32.totalorder %s71, %s72
      %p83 = scmp.eq.s32.totalorder %s14, 0
      %p84 = por %p82, %p83
      %p85 = scmp.ne.s32.totalorder %s71, %s72
      %p86 = scmp.eq.s32.totalorder %s15, 1
      %p87 = por %p85, %p86
      %p89 = scmp.ne.s32.totalorder %s72, %s88
      %p90 = scmp.eq.s32.totalorder %s15, 0
      %p91 = por %p89, %p90
      %s92 = ssub.s32 %s17, %s31
      %p93 = scmp.eq.s32.totalorder %s92, 0
      %s95 = sadd.s32 %s94, 1
      %s96 = scalar_select %p93, %s94, %s95
      %p99 = pneg %p93
      %p100 = scmp.eq.s32.totalorder %s9, 1
      %p101 = por %p99, %p100
      %p102 = scmp.ne.s32.totalorder %s94, %s97
      %p103 = scmp.eq.s32.totalorder %s9, 0
      %p104 = por %p102, %p103
      %p105 = scmp.ne.s32.totalorder %s94, %s97
      %p106 = scmp.eq.s32.totalorder %s14, 1
      %p107 = por %p105, %p106
      %p108 = scmp.ne.s32.totalorder %s97, %s98
      %p109 = scmp.eq.s32.totalorder %s14, 0
      %p110 = por %p108, %p109
      %p111 = scmp.ne.s32.totalorder %s97, %s98
      %p112 = scmp.eq.s32.totalorder %s15, 1
      %p113 = por %p111, %p112
      %p115 = scmp.ne.s32.totalorder %s98, %s114
      %p116 = scmp.eq.s32.totalorder %s15, 0
      %p117 = por %p115, %p116
      %s118 = ssub.s32 %s16, %s35
      %s119 = ssub.s32 %s17, %s31
      %s120 = sor.u32 %s118, %s119
      %p121 = scmp.eq.s32.totalorder %s120, 0
      %s123 = sadd.s32 %s122, 1
      %s124 = scalar_select %p121, %s122, %s123
      %p127 = pneg %p121
      %p128 = scmp.eq.s32.totalorder %s9, 1
      %p129 = por %p127, %p128
      %p130 = scmp.ne.s32.totalorder %s122, %s125
      %p131 = scmp.eq.s32.totalorder %s9, 0
      %p132 = por %p130, %p131
      %p133 = scmp.ne.s32.totalorder %s122, %s125
      %p134 = scmp.eq.s32.totalorder %s14, 1
      %p135 = por %p133, %p134
      %p136 = scmp.ne.s32.totalorder %s125, %s126
      %p137 = scmp.eq.s32.totalorder %s14, 0
      %p138 = por %p136, %p137
      %p139 = scmp.ne.s32.totalorder %s125, %s126
      %p140 = scmp.eq.s32.totalorder %s15, 1
      %p141 = por %p139, %p140
      %p143 = scmp.ne.s32.totalorder %s126, %s142
      %p144 = scmp.eq.s32.totalorder %s15, 0
      %p145 = por %p143, %p144
      %p146 = scmp.le.s32.totalorder 1, %s9
      %p147 = scmp.lt.s32.totalorder %s9, 3
      %p148 = pnand %p146, %p147
      %p149 = pneg %p148
      // Predicated region
      $region9: #{dip_forward.74} parent=5 // pred_check
        _
      $region10: #{dip_forward.74} parent=5 // pred_check_branch
        %151 = sbr.rel (%p148) target = $region12
      $region11: #{dip_forward.74} parent=5 // pred_region
        %s152 = ssub.s32 %s9, 1
        // Predicated region
        $region13: #{dip_forward.74} parent=11 // pred_check
          %p153 = pneg %p110
        $region14: #{dip_forward.74} parent=11 // pred_check_branch
          %155 = sbr.rel (%p153) target = $region16
        $region15: #{dip_forward.74} parent=11 // pred_region
          %p156 = scmp.lt.s32.totalorder %s20, 0
          %s157 = scalar_select %p156, %s20, 0
          %s158 = scalar_lea.vmem %s2, %s157
        $region16: #{dip_forward.74} parent=11 // pred_fallthru
          _
      $region12: #{dip_forward.74} parent=5 // pred_fallthru
        _
      %p159 = scmp.lt.s32.totalorder %s9, 2
      // Predicated region
      $region17: #{dip_forward.74} parent=5 // pred_check
        %p160 = pneg %p159
      $region18: #{dip_forward.74} parent=5 // pred_check_branch
        %162 = sbr.rel (%p160) target = $region20
      $region19: #{dip_forward.74} parent=5 // pred_region
        // Predicated region
        $region21: #{dip_forward.74} parent=19 // pred_check
          %p163 = pneg %p50
        $region22: #{dip_forward.74} parent=19 // pred_check_branch
          %165 = sbr.rel (%p163) target = $region24
        $region23: #{dip_forward.74} parent=19 // pred_region
          %s166 = sand.u32 %s40, 1
          %s167 = sand.u32 %s40, 1
          %s168 = smul.addr %s167, 128
          %s169 = scalar_lea.vmem [#allocation3], %s168
          %s170 = smul.u32 8, %s16
          %s171 = smul.u32 4, %s18
          %s172 = smul.addr %s170, 8
          %s173 = sadd.s32 %s171, %s172
          %s174 = smul.addr %s173, 4
          %s175 = scalar_lea.vmem %s0, %s174
          // Predicated region
          $region25: #{dip_forward.74} parent=23 // pred_check
            _
          $region26: #{dip_forward.74} parent=23 // pred_check_branch
            %177 = sbr.rel (0) target = $region28
          $region27: #{dip_forward.74} parent=23 // pred_region
            // Predicated region
            $region29: #{dip_forward.74} parent=27 // pred_check
              _
            $region30: #{dip_forward.74} parent=27 // pred_check_branch
              %179 = sbr.rel (0) target = $region32
            $region31: #{dip_forward.74} parent=27 // pred_region
              loop: start=0, step=1, limit=1
              $region33: #{dip_forward.74} parent=31 // loop_pre_header
                _
              $region34: #{dip_forward.74} parent=31 // loop_header
                %s181 = sphi 0, %s185
                %p182 = scmp.ge.s32.totalorder %s181, 1
                %s186 = sphi %s175, %s175
                %s187 = sphi %s169, %s169
              $region35: #{dip_forward.74} parent=31 // loop_header_branch
                %184 = sbr.rel (%p182) target = $region39
              $region36: #{dip_forward.74} parent=31 // loop_body
                %v188 = vld [vmem:[%s186] sm:$0xff]
                %189 = vst [vmem:[%s187] sm:$0xff] %v188
                %v190 = vld [vmem:[%s186 + $0x8] sm:$0xff]
                %191 = vst [vmem:[%s187 + $0x8] sm:$0xff] %v190
                %v192 = vld [vmem:[%s186 + $0x20] sm:$0xff]
                %193 = vst [vmem:[%s187 + $0x10] sm:$0xff] %v192
                %v194 = vld [vmem:[%s186 + $0x28] sm:$0xff]
                %195 = vst [vmem:[%s187 + $0x18] sm:$0xff] %v194
                %v196 = vld [vmem:[%s186 + $0x40] sm:$0xff]
                %197 = vst [vmem:[%s187 + $0x20] sm:$0xff] %v196
                %v198 = vld [vmem:[%s186 + $0x48] sm:$0xff]
                %199 = vst [vmem:[%s187 + $0x28] sm:$0xff] %v198
                %v200 = vld [vmem:[%s186 + $0x60] sm:$0xff]
                %201 = vst [vmem:[%s187 + $0x30] sm:$0xff] %v200
                %v202 = vld [vmem:[%s186 + $0x68] sm:$0xff]
                %203 = vst [vmem:[%s187 + $0x38] sm:$0xff] %v202
                %v204 = vld [vmem:[%s186 + $0x80] sm:$0xff]
                %205 = vst [vmem:[%s187 + $0x40] sm:$0xff] %v204
                %v206 = vld [vmem:[%s186 + $0x88] sm:$0xff]
                %207 = vst [vmem:[%s187 + $0x48] sm:$0xff] %v206
                %v208 = vld [vmem:[%s186 + $0xa0] sm:$0xff]
                %209 = vst [vmem:[%s187 + $0x50] sm:$0xff] %v208
                %v210 = vld [vmem:[%s186 + $0xa8] sm:$0xff]
                %211 = vst [vmem:[%s187 + $0x58] sm:$0xff] %v210
                %v212 = vld [vmem:[%s186 + $0xc0] sm:$0xff]
                %213 = vst [vmem:[%s187 + $0x60] sm:$0xff] %v212
                %v214 = vld [vmem:[%s186 + $0xc8] sm:$0xff]
                %215 = vst [vmem:[%s187 + $0x68] sm:$0xff] %v214
                %v216 = vld [vmem:[%s186 + $0xe0] sm:$0xff]
                %217 = vst [vmem:[%s187 + $0x70] sm:$0xff] %v216
                %v218 = vld [vmem:[%s186 + $0xe8] sm:$0xff]
                %219 = vst [vmem:[%s187 + $0x78] sm:$0xff] %v218
              $region37: #{dip_forward.74} parent=31 // loop_footer
                %s185 = sadd.s32 1, %s181
              $region38: #{dip_forward.74} parent=31 // loop_footer_branch
                %180 = sbr.rel target = $region34
              $region39: #{dip_forward.74} parent=31 // loop_exit
                _
            $region32: #{dip_forward.74} parent=27 // pred_fallthru
              _
            // Predicated region
            $region40: #{dip_forward.74} parent=27 // pred_check
              _
            $region41: #{dip_forward.74} parent=27 // pred_check_branch
              %221 = sbr.rel target = $region43
            $region42: #{dip_forward.74} parent=27 // pred_region
              _
            $region43: #{dip_forward.74} parent=27 // pred_fallthru
              _
          $region28: #{dip_forward.74} parent=23 // pred_fallthru
            _
          %222 = vnop
        $region24: #{dip_forward.74} parent=19 // pred_fallthru
          _
        // Predicated region
        $region44: #{dip_forward.74} parent=19 // pred_check
          %p223 = pneg %p78
        $region45: #{dip_forward.74} parent=19 // pred_check_branch
          %225 = sbr.rel (%p223) target = $region47
        $region46: #{dip_forward.74} parent=19 // pred_region
          %s226 = smul.u32 64, %s18
          %p227 = scmp.lt.s32.totalorder %s226, 127
          %s228 = scalar_select %p227, %s226, 127
          %p229 = scmp.lt.s32.totalorder %s17, 0
          %s230 = scalar_select %p229, %s17, 0
          %s231 = sadd.s32 %s230, %s228
          %s232 = smul.addr %s231, 4
          %s233 = scalar_lea.vmem %s1, %s232
          %s234 = smul.u32 64, %s18
        $region47: #{dip_forward.74} parent=19 // pred_fallthru
          _
      $region20: #{dip_forward.74} parent=5 // pred_fallthru
        _
      %p235 = scmp.le.s32.totalorder 1, %s9
      %p236 = scmp.lt.s32.totalorder %s9, 3
      %p237 = pnand %p235, %p236
      %p238 = pneg %p237
      // Predicated region
      $region48: #{dip_forward.74} parent=5 // pred_check
        _
      $region49: #{dip_forward.74} parent=5 // pred_check_branch
        %240 = sbr.rel (%p237) target = $region51
      $region50: #{dip_forward.74} parent=5 // pred_region
        %s241 = ssub.s32 %s9, 1
        %s242 = sand.u32 %s43, 1
        %s243 = sand.u32 %s43, 1
        %s244 = smul.addr %s243, 128
        %s245 = scalar_lea.vmem [#allocation3], %s244
        // Predicated region
        $region52: #{dip_forward.74} parent=50 // pred_check
          %p246 = pneg %p56
        $region53: #{dip_forward.74} parent=50 // pred_check_branch
          %248 = sbr.rel (%p246) target = $region55
        $region54: #{dip_forward.74} parent=50 // pred_region
          _
        $region55: #{dip_forward.74} parent=50 // pred_fallthru
          _
        %s249 = sand.u32 %s43, 1
        %s250 = sand.u32 %s43, 1
        %s251 = smul.addr %s250, 128
        %s252 = scalar_lea.vmem [#allocation3], %s251
        %p253 = pneg %p56
        %p254 = pneg %p53
        %s255 = smul.u32 64, %s21
        %p256 = scmp.lt.s32.totalorder %s255, 127
        %s257 = scalar_select %p256, %s255, 127
        %p258 = scmp.lt.s32.totalorder %s20, 0
        %s259 = scalar_select %p258, %s20, 0
        %s260 = sadd.s32 %s259, %s257
        %s261 = smul.addr %s260, 4
        %s262 = scalar_lea.vmem %s1, %s261
        %p263 = pneg %p84
        %p264 = pneg %p81
        %p265 = scmp.lt.s32.totalorder %s20, 0
        %s266 = scalar_select %p265, %s20, 0
        %s267 = scalar_lea.vmem %s2, %s266
        %p268 = pneg %p110
        %p269 = pneg %p107
        %p270 = pneg %p138
        %p271 = pneg %p135
        %s272 = smul.u32 8, %s19
        %p273 = scmp.lt.s32.totalorder %s272, 7
        %s274 = scalar_select %p273, %s272, 7
        %p275 = scmp.lt.s32.totalorder %s20, 0
        %s276 = scalar_select %p275, %s20, 0
        %s277 = sadd.s32 %s276, %s274
        %s278 = smul.addr %s277, 8
        %s279 = scalar_lea.vmem %s3, %s278
        %s280 = smul.u32 8, %s19
        %s281 = smul.u32 4, %s21
        %s282 = smul.u32 64, %s21
        %p283 = scmp.lt.s32.totalorder %s282, 127
        %s284 = scalar_select %p283, %s282, 127
        %p285 = scmp.lt.s32.totalorder %s20, 0
        %s286 = scalar_select %p285, %s20, 0
        %s287 = sadd.s32 %s286, %s284
        %s288 = smul.addr %s287, 4
        %s289 = scalar_lea.vmem %s1, %s288
        %s290 = smul.u32 64, %s21
        %p291 = scmp.lt.s32.totalorder %s20, 0
        %s292 = scalar_select %p291, %s20, 0
        %s293 = scalar_lea.vmem %s2, %s292
        %s294 = smul.u32 8, %s19
        %p295 = scmp.lt.s32.totalorder %s294, 7
        %s296 = scalar_select %p295, %s294, 7
        %p297 = scmp.lt.s32.totalorder %s20, 0
        %s298 = scalar_select %p297, %s20, 0
        %s299 = sadd.s32 %s298, %s296
        %s300 = smul.addr %s299, 8
        %s301 = scalar_lea.vmem %s3, %s300
        %s302 = smul.u32 8, %s19
        %p304 = scmp.eq.s32.totalorder %s21, 0
        // Predicated region
        $region56: #{dip_forward.74} parent=50 // pred_check
          %p305 = pneg %p304
        $region57: #{dip_forward.74} parent=50 // pred_check_branch
          %307 = sbr.rel (%p305) target = $region59
        $region58: #{dip_forward.74} parent=50 // pred_region
          %308 = vst [vmem:[#allocation2] sm:$0xff] 0.0
          %309 = vst [vmem:[#allocation2 + $0x8] sm:$0xff] 0.0
          %310 = vst [vmem:[#allocation2 + $0x10] sm:$0xff] 0.0
          %311 = vst [vmem:[#allocation2 + $0x18] sm:$0xff] 0.0
          %312 = vst [vmem:[#allocation2 + $0x20] sm:$0xff] 0.0
          %313 = vst [vmem:[#allocation2 + $0x28] sm:$0xff] 0.0
          %314 = vst [vmem:[#allocation2 + $0x30] sm:$0xff] 0.0
          %315 = vst [vmem:[#allocation2 + $0x38] sm:$0xff] 0.0
        $region59: #{dip_forward.74} parent=50 // pred_fallthru
          _
        %v316 = vld [vmem:[#allocation2] sm:$0xff]
        %v317 = vld [vmem:[#allocation2 + $0x8] sm:$0xff]
        %v318 = vld [vmem:[#allocation2 + $0x10] sm:$0xff]
        %v319 = vld [vmem:[#allocation2 + $0x18] sm:$0xff]
        %v320 = vld [vmem:[#allocation2 + $0x20] sm:$0xff]
        %v321 = vld [vmem:[#allocation2 + $0x28] sm:$0xff]
        %v322 = vld [vmem:[#allocation2 + $0x30] sm:$0xff]
        %v323 = vld [vmem:[#allocation2 + $0x38] sm:$0xff]
        %v324 = vld [vmem:[%s245] sm:$0xff]
        %v325 = vld [vmem:[%s245 + $0x8] sm:$0xff]
        %v326 = vld [vmem:[%s245 + $0x10] sm:$0xff]
        %v327 = vld [vmem:[%s245 + $0x18] sm:$0xff]
        %v328 = vld [vmem:[%s245 + $0x20] sm:$0xff]
        %v329 = vld [vmem:[%s245 + $0x28] sm:$0xff]
        %v330 = vld [vmem:[%s245 + $0x30] sm:$0xff]
        %v331 = vld [vmem:[%s245 + $0x38] sm:$0xff]
        %v332 = vld [vmem:[%s245 + $0x40] sm:$0xff]
        %v333 = vld [vmem:[%s245 + $0x48] sm:$0xff]
        %v334 = vld [vmem:[%s245 + $0x50] sm:$0xff]
        %v335 = vld [vmem:[%s245 + $0x58] sm:$0xff]
        %v336 = vld [vmem:[%s245 + $0x60] sm:$0xff]
        %v337 = vld [vmem:[%s245 + $0x68] sm:$0xff]
        %v338 = vld [vmem:[%s245 + $0x70] sm:$0xff]
        %v339 = vld [vmem:[%s245 + $0x78] sm:$0xff]
        %v340 = vld [vmem:[%s289] sm:$0xf]
        %v341 = vld [vmem:[%s289 + $0x4] sm:$0xf]
        %v342 = vld [vmem:[%s289 + $0x8] sm:$0xf]
        %v343 = vld [vmem:[%s289 + $0xc] sm:$0xf]
        %v344 = vld [vmem:[%s289 + $0x10] sm:$0xf]
        %v345 = vld [vmem:[%s289 + $0x14] sm:$0xf]
        %v346 = vld [vmem:[%s289 + $0x18] sm:$0xf]
        %v347 = vld [vmem:[%s289 + $0x1c] sm:$0xf]
        %v348 = vld [vmem:[%s289 + $0x20] sm:$0xf]
        %v349 = vld [vmem:[%s289 + $0x24] sm:$0xf]
        %v350 = vld [vmem:[%s289 + $0x28] sm:$0xf]
        %v351 = vld [vmem:[%s289 + $0x2c] sm:$0xf]
        %v352 = vld [vmem:[%s289 + $0x30] sm:$0xf]
        %v353 = vld [vmem:[%s289 + $0x34] sm:$0xf]
        %v354 = vld [vmem:[%s289 + $0x38] sm:$0xf]
        %v355 = vld [vmem:[%s289 + $0x3c] sm:$0xf]
        %v356 = vld [vmem:[%s289 + $0x40] sm:$0xf]
        %v357 = vld [vmem:[%s289 + $0x44] sm:$0xf]
        %v358 = vld [vmem:[%s289 + $0x48] sm:$0xf]
        %v359 = vld [vmem:[%s289 + $0x4c] sm:$0xf]
        %v360 = vld [vmem:[%s289 + $0x50] sm:$0xf]
        %v361 = vld [vmem:[%s289 + $0x54] sm:$0xf]
        %v362 = vld [vmem:[%s289 + $0x58] sm:$0xf]
        %v363 = vld [vmem:[%s289 + $0x5c] sm:$0xf]
        %v364 = vld [vmem:[%s289 + $0x60] sm:$0xf]
        %v365 = vld [vmem:[%s289 + $0x64] sm:$0xf]
        %v366 = vld [vmem:[%s289 + $0x68] sm:$0xf]
        %v367 = vld [vmem:[%s289 + $0x6c] sm:$0xf]
        %v368 = vld [vmem:[%s289 + $0x70] sm:$0xf]
        %v369 = vld [vmem:[%s289 + $0x74] sm:$0xf]
        %v370 = vld [vmem:[%s289 + $0x78] sm:$0xf]
        %v371 = vld [vmem:[%s289 + $0x7c] sm:$0xf]
        %v372 = vld [vmem:[%s289 + $0x80] sm:$0xf]
        %v373 = vld [vmem:[%s289 + $0x84] sm:$0xf]
        %v374 = vld [vmem:[%s289 + $0x88] sm:$0xf]
        %v375 = vld [vmem:[%s289 + $0x8c] sm:$0xf]
        %v376 = vld [vmem:[%s289 + $0x90] sm:$0xf]
        %v377 = vld [vmem:[%s289 + $0x94] sm:$0xf]
        %v378 = vld [vmem:[%s289 + $0x98] sm:$0xf]
        %v379 = vld [vmem:[%s289 + $0x9c] sm:$0xf]
        %v380 = vld [vmem:[%s289 + $0xa0] sm:$0xf]
        %v381 = vld [vmem:[%s289 + $0xa4] sm:$0xf]
        %v382 = vld [vmem:[%s289 + $0xa8] sm:$0xf]
        %v383 = vld [vmem:[%s289 + $0xac] sm:$0xf]
        %v384 = vld [vmem:[%s289 + $0xb0] sm:$0xf]
        %v385 = vld [vmem:[%s289 + $0xb4] sm:$0xf]
        %v386 = vld [vmem:[%s289 + $0xb8] sm:$0xf]
        %v387 = vld [vmem:[%s289 + $0xbc] sm:$0xf]
        %v388 = vld [vmem:[%s289 + $0xc0] sm:$0xf]
        %v389 = vld [vmem:[%s289 + $0xc4] sm:$0xf]
        %v390 = vld [vmem:[%s289 + $0xc8] sm:$0xf]
        %v391 = vld [vmem:[%s289 + $0xcc] sm:$0xf]
        %v392 = vld [vmem:[%s289 + $0xd0] sm:$0xf]
        %v393 = vld [vmem:[%s289 + $0xd4] sm:$0xf]
        %v394 = vld [vmem:[%s289 + $0xd8] sm:$0xf]
        %v395 = vld [vmem:[%s289 + $0xdc] sm:$0xf]
        %v396 = vld [vmem:[%s289 + $0xe0] sm:$0xf]
        %v397 = vld [vmem:[%s289 + $0xe4] sm:$0xf]
        %v398 = vld [vmem:[%s289 + $0xe8] sm:$0xf]
        %v399 = vld [vmem:[%s289 + $0xec] sm:$0xf]
        %v400 = vld [vmem:[%s289 + $0xf0] sm:$0xf]
        %v401 = vld [vmem:[%s289 + $0xf4] sm:$0xf]
        %v402 = vld [vmem:[%s289 + $0xf8] sm:$0xf]
        %v403 = vld [vmem:[%s289 + $0xfc] sm:$0xf]
        %v420 = vunpack.c.l.b16 %v324
        %v421 = vunpack.c.h.b16 %v324
        %v422 = vunpack.c.l.b16 %v325
        %v423 = vunpack.c.h.b16 %v325
        %v424 = vunpack.c.l.b16 %v326
        %v425 = vunpack.c.h.b16 %v326
        %v426 = vunpack.c.l.b16 %v327
        %v427 = vunpack.c.h.b16 %v327
        %v428 = vunpack.c.l.b16 %v328
        %v429 = vunpack.c.h.b16 %v328
        %v430 = vunpack.c.l.b16 %v329
        %v431 = vunpack.c.h.b16 %v329
        %v432 = vunpack.c.l.b16 %v330
        %v433 = vunpack.c.h.b16 %v330
        %v434 = vunpack.c.l.b16 %v331
        %v435 = vunpack.c.h.b16 %v331
        %v436 = vunpack.c.l.b16 %v332
        %v437 = vunpack.c.h.b16 %v332
        %v438 = vunpack.c.l.b16 %v333
        %v439 = vunpack.c.h.b16 %v333
        %v440 = vunpack.c.l.b16 %v334
        %v441 = vunpack.c.h.b16 %v334
        %v442 = vunpack.c.l.b16 %v335
        %v443 = vunpack.c.h.b16 %v335
        %v444 = vunpack.c.l.b16 %v336
        %v445 = vunpack.c.h.b16 %v336
        %v446 = vunpack.c.l.b16 %v337
        %v447 = vunpack.c.h.b16 %v337
        %v448 = vunpack.c.l.b16 %v338
        %v449 = vunpack.c.h.b16 %v338
        %v450 = vunpack.c.l.b16 %v339
        %v451 = vunpack.c.h.b16 %v339
        %v452 = vpack.c.b16 %v424, %v420
        %v453 = vpack.c.b16 %v425, %v421
        %v454 = vpack.c.b16 %v426, %v422
        %v455 = vpack.c.b16 %v427, %v423
        %v456 = vpack.c.b16 %v432, %v428
        %v457 = vpack.c.b16 %v433, %v429
        %v458 = vpack.c.b16 %v434, %v430
        %v459 = vpack.c.b16 %v435, %v431
        %v460 = vpack.c.b16 %v440, %v436
        %v461 = vpack.c.b16 %v441, %v437
        %v462 = vpack.c.b16 %v442, %v438
        %v463 = vpack.c.b16 %v443, %v439
        %v464 = vpack.c.b16 %v448, %v444
        %v465 = vpack.c.b16 %v449, %v445
        %v466 = vpack.c.b16 %v450, %v446
        %v467 = vpack.c.b16 %v451, %v447
        %v548 = vunpack.c.l.b16 %v340
        %v549 = vunpack.c.l.b16 %v341
        %v550 = vunpack.c.l.b16 %v342
        %v551 = vunpack.c.l.b16 %v343
        %v552 = vunpack.c.l.b16 %v344
        %v553 = vunpack.c.l.b16 %v345
        %v554 = vunpack.c.l.b16 %v346
        %v555 = vunpack.c.l.b16 %v347
        %v556 = vunpack.c.l.b16 %v348
        %v557 = vunpack.c.l.b16 %v349
        %v558 = vunpack.c.l.b16 %v350
        %v559 = vunpack.c.l.b16 %v351
        %v560 = vunpack.c.l.b16 %v352
        %v561 = vunpack.c.l.b16 %v353
        %v562 = vunpack.c.l.b16 %v354
        %v563 = vunpack.c.l.b16 %v355
        %v564 = vunpack.c.l.b16 %v356
        %v565 = vunpack.c.l.b16 %v357
        %v566 = vunpack.c.l.b16 %v358
        %v567 = vunpack.c.l.b16 %v359
        %v568 = vunpack.c.l.b16 %v360
        %v569 = vunpack.c.l.b16 %v361
        %v570 = vunpack.c.l.b16 %v362
        %v571 = vunpack.c.l.b16 %v363
        %v572 = vunpack.c.l.b16 %v364
        %v573 = vunpack.c.l.b16 %v365
        %v574 = vunpack.c.l.b16 %v366
        %v575 = vunpack.c.l.b16 %v367
        %v576 = vunpack.c.l.b16 %v368
        %v577 = vunpack.c.l.b16 %v369
        %v578 = vunpack.c.l.b16 %v370
        %v579 = vunpack.c.l.b16 %v371
        %v580 = vunpack.c.l.b16 %v372
        %v581 = vunpack.c.l.b16 %v373
        %v582 = vunpack.c.l.b16 %v374
        %v583 = vunpack.c.l.b16 %v375
        %v584 = vunpack.c.l.b16 %v376
        %v585 = vunpack.c.l.b16 %v377
        %v586 = vunpack.c.l.b16 %v378
        %v587 = vunpack.c.l.b16 %v379
        %v588 = vunpack.c.l.b16 %v380
        %v589 = vunpack.c.l.b16 %v381
        %v590 = vunpack.c.l.b16 %v382
        %v591 = vunpack.c.l.b16 %v383
        %v592 = vunpack.c.l.b16 %v384
        %v593 = vunpack.c.l.b16 %v385
        %v594 = vunpack.c.l.b16 %v386
        %v595 = vunpack.c.l.b16 %v387
        %v596 = vunpack.c.l.b16 %v388
        %v597 = vunpack.c.l.b16 %v389
        %v598 = vunpack.c.l.b16 %v390
        %v599 = vunpack.c.l.b16 %v391
        %v600 = vunpack.c.l.b16 %v392
        %v601 = vunpack.c.l.b16 %v393
        %v602 = vunpack.c.l.b16 %v394
        %v603 = vunpack.c.l.b16 %v395
        %v604 = vunpack.c.l.b16 %v396
        %v605 = vunpack.c.l.b16 %v397
        %v606 = vunpack.c.l.b16 %v398
        %v607 = vunpack.c.l.b16 %v399
        %v608 = vunpack.c.l.b16 %v400
        %v609 = vunpack.c.l.b16 %v401
        %v610 = vunpack.c.l.b16 %v402
        %v611 = vunpack.c.l.b16 %v403
        %v612 = vpack.c.b16 %v549, %v548
        %v613 = vpack.c.b16 %v551, %v550
        %v614 = vpack.c.b16 %v553, %v552
        %v615 = vpack.c.b16 %v555, %v554
        %v616 = vpack.c.b16 %v557, %v556
        %v617 = vpack.c.b16 %v559, %v558
        %v618 = vpack.c.b16 %v561, %v560
        %v619 = vpack.c.b16 %v563, %v562
        %v620 = vpack.c.b16 %v565, %v564
        %v621 = vpack.c.b16 %v567, %v566
        %v622 = vpack.c.b16 %v569, %v568
        %v623 = vpack.c.b16 %v571, %v570
        %v624 = vpack.c.b16 %v573, %v572
        %v625 = vpack.c.b16 %v575, %v574
        %v626 = vpack.c.b16 %v577, %v576
        %v627 = vpack.c.b16 %v579, %v578
        %v628 = vpack.c.b16 %v581, %v580
        %v629 = vpack.c.b16 %v583, %v582
        %v630 = vpack.c.b16 %v585, %v584
        %v631 = vpack.c.b16 %v587, %v586
        %v632 = vpack.c.b16 %v589, %v588
        %v633 = vpack.c.b16 %v591, %v590
        %v634 = vpack.c.b16 %v593, %v592
        %v635 = vpack.c.b16 %v595, %v594
        %v636 = vpack.c.b16 %v597, %v596
        %v637 = vpack.c.b16 %v599, %v598
        %v638 = vpack.c.b16 %v601, %v600
        %v639 = vpack.c.b16 %v603, %v602
        %v640 = vpack.c.b16 %v605, %v604
        %v641 = vpack.c.b16 %v607, %v606
        %v642 = vpack.c.b16 %v609, %v608
        %v643 = vpack.c.b16 %v611, %v610
        %676 = vmatprep.subr.bf16.mxu0 0
        %677 = vmatpush1.bf16.msra.mxu0 %v612
        %678 = vmatprep.subr.bf16.mxu0 0
        %679 = vmatpush1.bf16.msra.mxu0 %v613
        %680 = vmatprep.subr.bf16.mxu0 0
        %681 = vmatpush1.bf16.msra.mxu0 %v614
        %682 = vmatprep.subr.bf16.mxu0 0
        %683 = vmatpush1.bf16.msra.mxu0 %v615
        %684 = vmatprep.subr.bf16.mxu0 0
        %685 = vmatpush1.bf16.msra.mxu0 %v616
        %686 = vmatprep.subr.bf16.mxu0 0
        %687 = vmatpush1.bf16.msra.mxu0 %v617
        %688 = vmatprep.subr.bf16.mxu0 0
        %689 = vmatpush1.bf16.msra.mxu0 %v618
        %690 = vmatprep.subr.bf16.mxu0 0
        %691 = vmatpush1.bf16.msra.mxu0 %v619
        %692 = vmatprep.subr.bf16.mxu0 0
        %693 = vmatpush1.bf16.msra.mxu0 %v620
        %694 = vmatprep.subr.bf16.mxu0 0
        %695 = vmatpush1.bf16.msra.mxu0 %v621
        %696 = vmatprep.subr.bf16.mxu0 0
        %697 = vmatpush1.bf16.msra.mxu0 %v622
        %698 = vmatprep.subr.bf16.mxu0 0
        %699 = vmatpush1.bf16.msra.mxu0 %v623
        %700 = vmatprep.subr.bf16.mxu0 0
        %701 = vmatpush1.bf16.msra.mxu0 %v624
        %702 = vmatprep.subr.bf16.mxu0 0
        %703 = vmatpush1.bf16.msra.mxu0 %v625
        %704 = vmatprep.subr.bf16.mxu0 0
        %705 = vmatpush1.bf16.msra.mxu0 %v626
        %706 = vmatprep.subr.bf16.mxu0 0
        %707 = vmatpush1.bf16.msra.mxu0 %v627
        %708 = vmatprep.mubr.bf16.mxu0 %v453
        %709 = vmatmul.mubr.bf16.gmra.mrb[0].mxu0 %v452
        %v710 = vpop.f32.mrb[0].mxu0
        %v711 = vadd.f32 0.0, %v710
        %v712 = vpop.f32.mrb[0].mxu0
        %v713 = vpop.f32.mrb[0].mxu0
        %v714 = vadd.f32 0.0, %v713
        %v715 = vpop.f32.mrb[0].mxu0
        %716 = vmatprep.mubr.bf16.mxu0 %v457
        %717 = vmatmul.mubr.bf16.gmra.mrb[0].mxu0 %v456
        %v718 = vpop.f32.mrb[0].mxu0
        %v719 = vadd.f32 0.0, %v718
        %v720 = vpop.f32.mrb[0].mxu0
        %v721 = vpop.f32.mrb[0].mxu0
        %v722 = vadd.f32 0.0, %v721
        %v723 = vpop.f32.mrb[0].mxu0
        %724 = vmatprep.mubr.bf16.mxu0 %v461
        %725 = vmatmul.mubr.bf16.gmra.mrb[0].mxu0 %v460
        %v726 = vpop.f32.mrb[0].mxu0
        %v727 = vadd.f32 0.0, %v726
        %v728 = vpop.f32.mrb[0].mxu0
        %v729 = vpop.f32.mrb[0].mxu0
        %v730 = vadd.f32 0.0, %v729
        %v731 = vpop.f32.mrb[0].mxu0
        %732 = vmatprep.mubr.bf16.mxu0 %v465
        %733 = vmatmul.mubr.bf16.gmra.mrb[0].mxu0 %v464
        %v734 = vpop.f32.mrb[0].mxu0
        %v735 = vadd.f32 0.0, %v734
        %v736 = vpop.f32.mrb[0].mxu0
        %v737 = vpop.f32.mrb[0].mxu0
        %v738 = vadd.f32 0.0, %v737
        %v739 = vpop.f32.mrb[0].mxu0
        %740 = vdwg.mxu0
        %741 = vmatprep.subr.bf16.mxu0 0
        %742 = vmatpush1.bf16.msra.mxu0 %v628
        %743 = vmatprep.subr.bf16.mxu0 0
        %744 = vmatpush1.bf16.msra.mxu0 %v629
        %745 = vmatprep.subr.bf16.mxu0 0
        %746 = vmatpush1.bf16.msra.mxu0 %v630
        %747 = vmatprep.subr.bf16.mxu0 0
        %748 = vmatpush1.bf16.msra.mxu0 %v631
        %749 = vmatprep.subr.bf16.mxu0 0
        %750 = vmatpush1.bf16.msra.mxu0 %v632
        %751 = vmatprep.subr.bf16.mxu0 0
        %752 = vmatpush1.bf16.msra.mxu0 %v633
        %753 = vmatprep.subr.bf16.mxu0 0
        %754 = vmatpush1.bf16.msra.mxu0 %v634
        %755 = vmatprep.subr.bf16.mxu0 0
        %756 = vmatpush1.bf16.msra.mxu0 %v635
        %757 = vmatprep.subr.bf16.mxu0 0
        %758 = vmatpush1.bf16.msra.mxu0 %v636
        %759 = vmatprep.subr.bf16.mxu0 0
        %760 = vmatpush1.bf16.msra.mxu0 %v637
        %761 = vmatprep.subr.bf16.mxu0 0
        %762 = vmatpush1.bf16.msra.mxu0 %v638
        %763 = vmatprep.subr.bf16.mxu0 0
        %764 = vmatpush1.bf16.msra.mxu0 %v639
        %765 = vmatprep.subr.bf16.mxu0 0
        %766 = vmatpush1.bf16.msra.mxu0 %v640
        %767 = vmatprep.subr.bf16.mxu0 0
        %768 = vmatpush1.bf16.msra.mxu0 %v641
        %769 = vmatprep.subr.bf16.mxu0 0
        %770 = vmatpush1.bf16.msra.mxu0 %v642
        %771 = vmatprep.subr.bf16.mxu0 0
        %772 = vmatpush1.bf16.msra.mxu0 %v643
        %773 = vmatprep.mubr.bf16.mxu0 %v455
        %774 = vmatmul.mubr.bf16.gmra.mrb[0].mxu0 %v454
        %v775 = vpop.f32.mrb[0].mxu0
        %v776 = vadd.f32 %v711, %v775
        %v777 = vpop.f32.mrb[0].mxu0
        %v778 = vpop.f32.mrb[0].mxu0
        %v779 = vadd.f32 %v714, %v778
        %v780 = vpop.f32.mrb[0].mxu0
        %781 = vmatprep.mubr.bf16.mxu0 %v459
        %782 = vmatmul.mubr.bf16.gmra.mrb[0].mxu0 %v458
        %v783 = vpop.f32.mrb[0].mxu0
        %v784 = vadd.f32 %v719, %v783
        %v785 = vpop.f32.mrb[0].mxu0
        %v786 = vpop.f32.mrb[0].mxu0
        %v787 = vadd.f32 %v722, %v786
        %v788 = vpop.f32.mrb[0].mxu0
        %789 = vmatprep.mubr.bf16.mxu0 %v463
        %790 = vmatmul.mubr.bf16.gmra.mrb[0].mxu0 %v462
        %v791 = vpop.f32.mrb[0].mxu0
        %v792 = vadd.f32 %v727, %v791
        %v793 = vpop.f32.mrb[0].mxu0
        %v794 = vpop.f32.mrb[0].mxu0
        %v795 = vadd.f32 %v730, %v794
        %v796 = vpop.f32.mrb[0].mxu0
        %797 = vmatprep.mubr.bf16.mxu0 %v467
        %798 = vmatmul.mubr.bf16.gmra.mrb[0].mxu0 %v466
        %v799 = vpop.f32.mrb[0].mxu0
        %v800 = vadd.f32 %v735, %v799
        %v801 = vpop.f32.mrb[0].mxu0
        %v802 = vpop.f32.mrb[0].mxu0
        %v803 = vadd.f32 %v738, %v802
        %v804 = vpop.f32.mrb[0].mxu0
        %805 = vdwg.mxu0
        %v806 = vadd.f32 %v316, %v776
        %v807 = vadd.f32 %v317, %v779
        %v808 = vadd.f32 %v318, %v784
        %v809 = vadd.f32 %v319, %v787
        %v810 = vadd.f32 %v320, %v792
        %v811 = vadd.f32 %v321, %v795
        %v812 = vadd.f32 %v322, %v800
        %v813 = vadd.f32 %v323, %v803
        %814 = vst [vmem:[#allocation2] sm:$0xff] %v806
        %815 = vst [vmem:[#allocation2 + $0x8] sm:$0xff] %v807
        %816 = vst [vmem:[#allocation2 + $0x10] sm:$0xff] %v808
        %817 = vst [vmem:[#allocation2 + $0x18] sm:$0xff] %v809
        %818 = vst [vmem:[#allocation2 + $0x20] sm:$0xff] %v810
        %819 = vst [vmem:[#allocation2 + $0x28] sm:$0xff] %v811
        %820 = vst [vmem:[#allocation2 + $0x30] sm:$0xff] %v812
        %821 = vst [vmem:[#allocation2 + $0x38] sm:$0xff] %v813
        %p822 = scmp.eq.s32.totalorder %s21, 1
        // Predicated region
        $region60: #{dip_forward.74} parent=50 // pred_check
          %p823 = pneg %p822
        $region61: #{dip_forward.74} parent=50 // pred_check_branch
          %825 = sbr.rel (%p823) target = $region63
        $region62: #{dip_forward.74} parent=50 // pred_region
          %v826 = vld [vmem:[#allocation2] sm:$0xff]
          %v827 = vld [vmem:[#allocation2 + $0x8] sm:$0xff]
          %v828 = vld [vmem:[#allocation2 + $0x10] sm:$0xff]
          %v829 = vld [vmem:[#allocation2 + $0x18] sm:$0xff]
          %v830 = vld [vmem:[#allocation2 + $0x20] sm:$0xff]
          %v831 = vld [vmem:[#allocation2 + $0x28] sm:$0xff]
          %v832 = vld [vmem:[#allocation2 + $0x30] sm:$0xff]
          %v833 = vld [vmem:[#allocation2 + $0x38] sm:$0xff]
          %v834 = vld [vmem:[%s293] sm:$0x1]
          %v836 = vlaneseq
          %v837 = vshrl.u32 %v836, 7
          %v838 = vsub.s32 0, %v837
          %v839 = vrot.slane %v834, %v838
          %v841 = vadd.f32 %v826, %v839
          %v842 = vadd.f32 %v827, %v839
          %v843 = vadd.f32 %v828, %v839
          %v844 = vadd.f32 %v829, %v839
          %v845 = vadd.f32 %v830, %v839
          %v846 = vadd.f32 %v831, %v839
          %v847 = vadd.f32 %v832, %v839
          %v848 = vadd.f32 %v833, %v839
          %849 = vst [vmem:[%s301] sm:$0xff] %v841
          %850 = vst [vmem:[%s301 + $0x8] sm:$0xff] %v842
          %851 = vst [vmem:[%s301 + $0x10] sm:$0xff] %v843
          %852 = vst [vmem:[%s301 + $0x18] sm:$0xff] %v844
          %853 = vst [vmem:[%s301 + $0x20] sm:$0xff] %v845
          %854 = vst [vmem:[%s301 + $0x28] sm:$0xff] %v846
          %855 = vst [vmem:[%s301 + $0x30] sm:$0xff] %v847
          %856 = vst [vmem:[%s301 + $0x38] sm:$0xff] %v848
        $region63: #{dip_forward.74} parent=50 // pred_fallthru
          _
        %s857 = smul.u32 8, %s19
        %p858 = scmp.lt.s32.totalorder %s857, 7
        %s859 = scalar_select %p858, %s857, 7
        %p860 = scmp.lt.s32.totalorder %s20, 0
        %s861 = scalar_select %p860, %s20, 0
        %s862 = sadd.s32 %s861, %s859
        %s863 = smul.addr %s862, 8
        %s864 = scalar_lea.vmem %s3, %s863
        // Predicated region
        $region64: #{dip_forward.74} parent=50 // pred_check
          %p865 = pneg %p135
        $region65: #{dip_forward.74} parent=50 // pred_check_branch
          %867 = sbr.rel (%p865) target = $region67
        $region66: #{dip_forward.74} parent=50 // pred_region
          %s868 = smul.u32 8, %s19
        $region67: #{dip_forward.74} parent=50 // pred_fallthru
          _
        // Predicated region
        $region68: #{dip_forward.74} parent=50 // pred_check
          %p869 = pneg %p135
        $region69: #{dip_forward.74} parent=50 // pred_check_branch
          %871 = sbr.rel (%p869) target = $region71
        $region70: #{dip_forward.74} parent=50 // pred_region
          %s872 = smul.u32 8, %s19
          %p873 = scmp.lt.s32.totalorder %s872, 7
          %s874 = scalar_select %p873, %s872, 7
          %p875 = scmp.lt.s32.totalorder %s20, 0
          %s876 = scalar_select %p875, %s20, 0
          %s877 = sadd.s32 %s876, %s874
          %s878 = smul.addr %s877, 8
          %s879 = scalar_lea.vmem %s3, %s878
        $region71: #{dip_forward.74} parent=50 // pred_fallthru
          _
      $region51: #{dip_forward.74} parent=5 // pred_fallthru
        _
      %p880 = scmp.le.s32.totalorder 2, %s9
      // Predicated region
      $region72: #{dip_forward.74} parent=5 // pred_check
        %p881 = pneg %p880
      $region73: #{dip_forward.74} parent=5 // pred_check_branch
        %883 = sbr.rel (%p881) target = $region75
      $region74: #{dip_forward.74} parent=5 // pred_region
        %s884 = ssub.s32 %s9, 2
      $region75: #{dip_forward.74} parent=5 // pred_fallthru
        _
    $region6: #{dip_forward.74} parent=1 // loop_footer
      %s13 = sadd.s32 1, %s9
    $region7: #{dip_forward.74} parent=1 // loop_footer_branch
      %8 = sbr.rel target = $region3
    $region8: #{dip_forward.74} parent=1 // loop_exit
      _

// kernel: dip_forward.72
$region0: #{dip_forward.72}
  #allocation0 [shape = 'u32[]', space=smem, size = 0x4, offset = 0x4, fixed_abs, tag = 'smem constant byte address 0x4 - core index']
  #allocation1 [shape = 'u32[144,128]{1,0:T(1,128)}', space=vmem, size = 0x12000, scoped, tag = 'internal scratch']
  #allocation2 [shape = 'f32[64,256]{1,0:T(8,128)}', space=vmem, size = 0x10000, scoped, tag = 'scratch operand']
  %s0 = inlined_call_operand.vmem [shape: bf16[64,128], index: 0, kind: input, shape index: {}]
  %s1 = inlined_call_operand.vmem [shape: bf16[128,256], index: 1, kind: input, shape index: {}]
  %s2 = inlined_call_operand.vmem [shape: f32[1,256], index: 2, kind: input, shape index: {}]
  %s3 = inlined_call_operand.vmem [shape: f32[64,256], index: 3, kind: output, shape index: {}]
  %s4 = sld [smem:[#allocation0]]
  $region30: #{dip_forward.72} parent=0
    _
  %s6 = ssub.s32 1, %s4
  %s7 = scalar_select 0, %s6, %s4
  // Predicated region
  $region2: #{dip_forward.72} parent=0 // pred_check
    _
  $region3: #{dip_forward.72} parent=0 // pred_check_branch
    %9 = sbr.rel (0) target = $region5
  $region4: #{dip_forward.72} parent=0 // pred_region
    _
  $region5: #{dip_forward.72} parent=0 // pred_fallthru
    _
  // Predicated region
  $region6: #{dip_forward.72} parent=0 // pred_check
    _
  $region7: #{dip_forward.72} parent=0 // pred_check_branch
    %11 = sbr.rel (0) target = $region9
  $region8: #{dip_forward.72} parent=0 // pred_region
    _
  $region9: #{dip_forward.72} parent=0 // pred_fallthru
    _
  // Predicated region
  $region10: #{dip_forward.72} parent=0 // pred_check
    _
  $region11: #{dip_forward.72} parent=0 // pred_check_branch
    %13 = sbr.rel (0) target = $region13
  $region12: #{dip_forward.72} parent=0 // pred_region
    _
  $region13: #{dip_forward.72} parent=0 // pred_fallthru
    _
  %p15 = scmp.eq.s32.totalorder 0, 0
  // Predicated region
  $region14: #{dip_forward.72} parent=0 // pred_check
    %p16 = pneg %p15
  $region15: #{dip_forward.72} parent=0 // pred_check_branch
    %18 = sbr.rel (%p16) target = $region17
  $region16: #{dip_forward.72} parent=0 // pred_region
    %19 = vst [vmem:[#allocation2] sm:$0xff] 0.0
    %20 = vst [vmem:[#allocation2 + $0x8] sm:$0xff] 0.0
    %21 = vst [vmem:[#allocation2 + $0x10] sm:$0xff] 0.0
    %22 = vst [vmem:[#allocation2 + $0x18] sm:$0xff] 0.0
    %23 = vst [vmem:[#allocation2 + $0x20] sm:$0xff] 0.0
    %24 = vst [vmem:[#allocation2 + $0x28] sm:$0xff] 0.0
    %25 = vst [vmem:[#allocation2 + $0x30] sm:$0xff] 0.0
    %26 = vst [vmem:[#allocation2 + $0x38] sm:$0xff] 0.0
    %27 = vst [vmem:[#allocation2 + $0x40] sm:$0xff] 0.0
    %28 = vst [vmem:[#allocation2 + $0x48] sm:$0xff] 0.0
    %29 = vst [vmem:[#allocation2 + $0x50] sm:$0xff] 0.0
    %30 = vst [vmem:[#allocation2 + $0x58] sm:$0xff] 0.0
    %31 = vst [vmem:[#allocation2 + $0x60] sm:$0xff] 0.0
    %32 = vst [vmem:[#allocation2 + $0x68] sm:$0xff] 0.0
    %33 = vst [vmem:[#allocation2 + $0x70] sm:$0xff] 0.0
    %34 = vst [vmem:[#allocation2 + $0x78] sm:$0xff] 0.0
  $region17: #{dip_forward.72} parent=0 // pred_fallthru
    _
  %v35 = vld [vmem:[#allocation2] sm:$0xff]
  %v36 = vld [vmem:[#allocation2 + $0x8] sm:$0xff]
  %v37 = vld [vmem:[#allocation2 + $0x10] sm:$0xff]
  %v38 = vld [vmem:[#allocation2 + $0x18] sm:$0xff]
  %v39 = vld [vmem:[#allocation2 + $0x20] sm:$0xff]
  %v40 = vld [vmem:[#allocation2 + $0x28] sm:$0xff]
  %v41 = vld [vmem:[#allocation2 + $0x30] sm:$0xff]
  %v42 = vld [vmem:[#allocation2 + $0x38] sm:$0xff]
  %v43 = vld [vmem:[#allocation2 + $0x40] sm:$0xff]
  %v44 = vld [vmem:[#allocation2 + $0x48] sm:$0xff]
  %v45 = vld [vmem:[#allocation2 + $0x50] sm:$0xff]
  %v46 = vld [vmem:[#allocation2 + $0x58] sm:$0xff]
  %v47 = vld [vmem:[#allocation2 + $0x60] sm:$0xff]
  %v48 = vld [vmem:[#allocation2 + $0x68] sm:$0xff]
  %v49 = vld [vmem:[#allocation2 + $0x70] sm:$0xff]
  %v50 = vld [vmem:[#allocation2 + $0x78] sm:$0xff]
  %v51 = vld [vmem:[%s0] sm:$0xf]
  %v52 = vld [vmem:[%s0 + $0x4] sm:$0xf]
  %v53 = vld [vmem:[%s0 + $0x8] sm:$0xf]
  %v54 = vld [vmem:[%s0 + $0xc] sm:$0xf]
  %v55 = vld [vmem:[%s0 + $0x10] sm:$0xf]
  %v56 = vld [vmem:[%s0 + $0x14] sm:$0xf]
  %v57 = vld [vmem:[%s0 + $0x18] sm:$0xf]
  %v58 = vld [vmem:[%s0 + $0x1c] sm:$0xf]
  %v59 = vld [vmem:[%s1] sm:$0xff]
  %v60 = vld [vmem:[%s1 + $0x8] sm:$0xff]
  %v61 = vld [vmem:[%s1 + $0x10] sm:$0xff]
  %v62 = vld [vmem:[%s1 + $0x18] sm:$0xff]
  %v63 = vld [vmem:[%s1 + $0x20] sm:$0xff]
  %v64 = vld [vmem:[%s1 + $0x28] sm:$0xff]
  %v65 = vld [vmem:[%s1 + $0x30] sm:$0xff]
  %v66 = vld [vmem:[%s1 + $0x38] sm:$0xff]
  %v67 = vld [vmem:[%s1 + $0x40] sm:$0xff]
  %v68 = vld [vmem:[%s1 + $0x48] sm:$0xff]
  %v69 = vld [vmem:[%s1 + $0x50] sm:$0xff]
  %v70 = vld [vmem:[%s1 + $0x58] sm:$0xff]
  %v71 = vld [vmem:[%s1 + $0x60] sm:$0xff]
  %v72 = vld [vmem:[%s1 + $0x68] sm:$0xff]
  %v73 = vld [vmem:[%s1 + $0x70] sm:$0xff]
  %v74 = vld [vmem:[%s1 + $0x78] sm:$0xff]
  %v83 = vunpack.c.l.b16 %v51
  %v84 = vunpack.c.l.b16 %v52
  %v85 = vunpack.c.l.b16 %v53
  %v86 = vunpack.c.l.b16 %v54
  %v87 = vunpack.c.l.b16 %v55
  %v88 = vunpack.c.l.b16 %v56
  %v89 = vunpack.c.l.b16 %v57
  %v90 = vunpack.c.l.b16 %v58
  %v91 = vpack.c.b16 %v84, %v83
  %v92 = vpack.c.b16 %v86, %v85
  %v93 = vpack.c.b16 %v88, %v87
  %v94 = vpack.c.b16 %v90, %v89
  %v115 = vunpack.c.l.b16 %v59
  %v116 = vunpack.c.h.b16 %v59
  %v117 = vunpack.c.l.b16 %v60
  %v118 = vunpack.c.h.b16 %v60
  %v119 = vunpack.c.l.b16 %v61
  %v120 = vunpack.c.h.b16 %v61
  %v121 = vunpack.c.l.b16 %v62
  %v122 = vunpack.c.h.b16 %v62
  %v123 = vunpack.c.l.b16 %v63
  %v124 = vunpack.c.h.b16 %v63
  %v125 = vunpack.c.l.b16 %v64
  %v126 = vunpack.c.h.b16 %v64
  %v127 = vunpack.c.l.b16 %v65
  %v128 = vunpack.c.h.b16 %v65
  %v129 = vunpack.c.l.b16 %v66
  %v130 = vunpack.c.h.b16 %v66
  %v131 = vunpack.c.l.b16 %v67
  %v132 = vunpack.c.h.b16 %v67
  %v133 = vunpack.c.l.b16 %v68
  %v134 = vunpack.c.h.b16 %v68
  %v135 = vunpack.c.l.b16 %v69
  %v136 = vunpack.c.h.b16 %v69
  %v137 = vunpack.c.l.b16 %v70
  %v138 = vunpack.c.h.b16 %v70
  %v139 = vunpack.c.l.b16 %v71
  %v140 = vunpack.c.h.b16 %v71
  %v141 = vunpack.c.l.b16 %v72
  %v142 = vunpack.c.h.b16 %v72
  %v143 = vunpack.c.l.b16 %v73
  %v144 = vunpack.c.h.b16 %v73
  %v145 = vunpack.c.l.b16 %v74
  %v146 = vunpack.c.h.b16 %v74
  %v147 = vpack.c.b16 %v117, %v115
  %v148 = vpack.c.b16 %v118, %v116
  %v149 = vpack.c.b16 %v121, %v119
  %v150 = vpack.c.b16 %v122, %v120
  %v151 = vpack.c.b16 %v125, %v123
  %v152 = vpack.c.b16 %v126, %v124
  %v153 = vpack.c.b16 %v129, %v127
  %v154 = vpack.c.b16 %v130, %v128
  %v155 = vpack.c.b16 %v133, %v131
  %v156 = vpack.c.b16 %v134, %v132
  %v157 = vpack.c.b16 %v137, %v135
  %v158 = vpack.c.b16 %v138, %v136
  %v159 = vpack.c.b16 %v141, %v139
  %v160 = vpack.c.b16 %v142, %v140
  %v161 = vpack.c.b16 %v145, %v143
  %v162 = vpack.c.b16 %v146, %v144
  %179 = vmatprep.subr.bf16.mxu0 %v148
  %180 = vmatpush1.bf16.msra.mxu0 %v147
  %181 = vmatprep.subr.bf16.mxu0 %v150
  %182 = vmatpush1.bf16.msra.mxu0 %v149
  %183 = vmatprep.subr.bf16.mxu0 %v152
  %184 = vmatpush1.bf16.msra.mxu0 %v151
  %185 = vmatprep.subr.bf16.mxu0 %v154
  %186 = vmatpush1.bf16.msra.mxu0 %v153
  %187 = vmatprep.subr.bf16.mxu0 %v156
  %188 = vmatpush1.bf16.msra.mxu0 %v155
  %189 = vmatprep.subr.bf16.mxu0 %v158
  %190 = vmatpush1.bf16.msra.mxu0 %v157
  %191 = vmatprep.subr.bf16.mxu0 %v160
  %192 = vmatpush1.bf16.msra.mxu0 %v159
  %193 = vmatprep.subr.bf16.mxu0 %v162
  %194 = vmatpush1.bf16.msra.mxu0 %v161
  %195 = vmatprep.subr.bf16.mxu0 0
  %196 = vmatpush1.bf16.msra.mxu0 0
  %197 = vmatprep.subr.bf16.mxu0 0
  %198 = vmatpush1.bf16.msra.mxu0 0
  %199 = vmatprep.subr.bf16.mxu0 0
  %200 = vmatpush1.bf16.msra.mxu0 0
  %201 = vmatprep.subr.bf16.mxu0 0
  %202 = vmatpush1.bf16.msra.mxu0 0
  %203 = vmatprep.subr.bf16.mxu0 0
  %204 = vmatpush1.bf16.msra.mxu0 0
  %205 = vmatprep.subr.bf16.mxu0 0
  %206 = vmatpush1.bf16.msra.mxu0 0
  %207 = vmatprep.subr.bf16.mxu0 0
  %208 = vmatpush1.bf16.msra.mxu0 0
  %209 = vmatprep.subr.bf16.mxu0 0
  %210 = vmatpush1.bf16.msra.mxu0 0
  %211 = vmatprep.mubr.bf16.mxu0 0
  %212 = vmatmul.mubr.bf16.gmra.mrb[0].mxu0 %v91
  %v213 = vpop.f32.mrb[0].mxu0
  %v214 = vadd.f32 0.0, %v213
  %v215 = vpop.f32.mrb[0].mxu0
  %v216 = vadd.f32 0.0, %v215
  %v217 = vpop.f32.mrb[0].mxu0
  %v218 = vadd.f32 0.0, %v217
  %v219 = vpop.f32.mrb[0].mxu0
  %v220 = vadd.f32 0.0, %v219
  %221 = vmatprep.mubr.bf16.mxu0 0
  %222 = vmatmul.mubr.bf16.gmra.mrb[0].mxu0 %v92
  %v223 = vpop.f32.mrb[0].mxu0
  %v224 = vadd.f32 0.0, %v223
  %v225 = vpop.f32.mrb[0].mxu0
  %v226 = vadd.f32 0.0, %v225
  %v227 = vpop.f32.mrb[0].mxu0
  %v228 = vadd.f32 0.0, %v227
  %v229 = vpop.f32.mrb[0].mxu0
  %v230 = vadd.f32 0.0, %v229
  %231 = vmatprep.mubr.bf16.mxu0 0
  %232 = vmatmul.mubr.bf16.gmra.mrb[0].mxu0 %v93
  %v233 = vpop.f32.mrb[0].mxu0
  %v234 = vadd.f32 0.0, %v233
  %v235 = vpop.f32.mrb[0].mxu0
  %v236 = vadd.f32 0.0, %v235
  %v237 = vpop.f32.mrb[0].mxu0
  %v238 = vadd.f32 0.0, %v237
  %v239 = vpop.f32.mrb[0].mxu0
  %v240 = vadd.f32 0.0, %v239
  %241 = vmatprep.mubr.bf16.mxu0 0
  %242 = vmatmul.mubr.bf16.gmra.mrb[0].mxu0 %v94
  %v243 = vpop.f32.mrb[0].mxu0
  %v244 = vadd.f32 0.0, %v243
  %v245 = vpop.f32.mrb[0].mxu0
  %v246 = vadd.f32 0.0, %v245
  %v247 = vpop.f32.mrb[0].mxu0
  %v248 = vadd.f32 0.0, %v247
  %v249 = vpop.f32.mrb[0].mxu0
  %v250 = vadd.f32 0.0, %v249
  %251 = vdwg.mxu0
  %v252 = vadd.f32 %v35, %v214
  %v253 = vadd.f32 %v36, %v216
  %v254 = vadd.f32 %v37, %v218
  %v255 = vadd.f32 %v38, %v220
  %v256 = vadd.f32 %v39, %v224
  %v257 = vadd.f32 %v40, %v226
  %v258 = vadd.f32 %v41, %v228
  %v259 = vadd.f32 %v42, %v230
  %v260 = vadd.f32 %v43, %v234
  %v261 = vadd.f32 %v44, %v236
  %v262 = vadd.f32 %v45, %v238
  %v263 = vadd.f32 %v46, %v240
  %v264 = vadd.f32 %v47, %v244
  %v265 = vadd.f32 %v48, %v246
  %v266 = vadd.f32 %v49, %v248
  %v267 = vadd.f32 %v50, %v250
  %268 = vst [vmem:[#allocation2] sm:$0xff] %v252
  %269 = vst [vmem:[#allocation2 + $0x8] sm:$0xff] %v253
  %270 = vst [vmem:[#allocation2 + $0x10] sm:$0xff] %v254
  %271 = vst [vmem:[#allocation2 + $0x18] sm:$0xff] %v255
  %272 = vst [vmem:[#allocation2 + $0x20] sm:$0xff] %v256
  %273 = vst [vmem:[#allocation2 + $0x28] sm:$0xff] %v257
  %274 = vst [vmem:[#allocation2 + $0x30] sm:$0xff] %v258
  %275 = vst [vmem:[#allocation2 + $0x38] sm:$0xff] %v259
  %276 = vst [vmem:[#allocation2 + $0x40] sm:$0xff] %v260
  %277 = vst [vmem:[#allocation2 + $0x48] sm:$0xff] %v261
  %278 = vst [vmem:[#allocation2 + $0x50] sm:$0xff] %v262
  %279 = vst [vmem:[#allocation2 + $0x58] sm:$0xff] %v263
  %280 = vst [vmem:[#allocation2 + $0x60] sm:$0xff] %v264
  %281 = vst [vmem:[#allocation2 + $0x68] sm:$0xff] %v265
  %282 = vst [vmem:[#allocation2 + $0x70] sm:$0xff] %v266
  %283 = vst [vmem:[#allocation2 + $0x78] sm:$0xff] %v267
  // Predicated region
  $region18: #{dip_forward.72} parent=0 // pred_check
    %p284 = pneg %p15
  $region19: #{dip_forward.72} parent=0 // pred_check_branch
    %286 = sbr.rel (%p284) target = $region21
  $region20: #{dip_forward.72} parent=0 // pred_region
    %v287 = vld [vmem:[#allocation2] sm:$0xff]
    %v288 = vld [vmem:[#allocation2 + $0x8] sm:$0xff]
    %v289 = vld [vmem:[#allocation2 + $0x10] sm:$0xff]
    %v290 = vld [vmem:[#allocation2 + $0x18] sm:$0xff]
    %v291 = vld [vmem:[#allocation2 + $0x20] sm:$0xff]
    %v292 = vld [vmem:[#allocation2 + $0x28] sm:$0xff]
    %v293 = vld [vmem:[#allocation2 + $0x30] sm:$0xff]
    %v294 = vld [vmem:[#allocation2 + $0x38] sm:$0xff]
    %v295 = vld [vmem:[#allocation2 + $0x40] sm:$0xff]
    %v296 = vld [vmem:[#allocation2 + $0x48] sm:$0xff]
    %v297 = vld [vmem:[#allocation2 + $0x50] sm:$0xff]
    %v298 = vld [vmem:[#allocation2 + $0x58] sm:$0xff]
    %v299 = vld [vmem:[#allocation2 + $0x60] sm:$0xff]
    %v300 = vld [vmem:[#allocation2 + $0x68] sm:$0xff]
    %v301 = vld [vmem:[#allocation2 + $0x70] sm:$0xff]
    %v302 = vld [vmem:[#allocation2 + $0x78] sm:$0xff]
    %v303 = vld [vmem:[%s2] sm:$0x3]
    %v305 = vlaneseq
    %v306 = vshrl.u32 %v305, 7
    %v307 = vsub.s32 0, %v306
    %v308 = vrot.slane %v303, %v307
    %v309 = vlaneseq
    %v310 = vshrl.u32 %v309, 7
    %v311 = vsub.s32 1, %v310
    %v312 = vrot.slane %v303, %v311
    %v315 = vadd.f32 %v287, %v308
    %v316 = vadd.f32 %v288, %v312
    %v317 = vadd.f32 %v289, %v308
    %v318 = vadd.f32 %v290, %v312
    %v319 = vadd.f32 %v291, %v308
    %v320 = vadd.f32 %v292, %v312
    %v321 = vadd.f32 %v293, %v308
    %v322 = vadd.f32 %v294, %v312
    %v323 = vadd.f32 %v295, %v308
    %v324 = vadd.f32 %v296, %v312
    %v325 = vadd.f32 %v297, %v308
    %v326 = vadd.f32 %v298, %v312
    %v327 = vadd.f32 %v299, %v308
    %v328 = vadd.f32 %v300, %v312
    %v329 = vadd.f32 %v301, %v308
    %v330 = vadd.f32 %v302, %v312
    %331 = vst [vmem:[%s3] sm:$0xff] %v315
    %332 = vst [vmem:[%s3 + $0x8] sm:$0xff] %v316
    %333 = vst [vmem:[%s3 + $0x10] sm:$0xff] %v317
    %334 = vst [vmem:[%s3 + $0x18] sm:$0xff] %v318
    %335 = vst [vmem:[%s3 + $0x20] sm:$0xff] %v319
    %336 = vst [vmem:[%s3 + $0x28] sm:$0xff] %v320
    %337 = vst [vmem:[%s3 + $0x30] sm:$0xff] %v321
    %338 = vst [vmem:[%s3 + $0x38] sm:$0xff] %v322
    %339 = vst [vmem:[%s3 + $0x40] sm:$0xff] %v323
    %340 = vst [vmem:[%s3 + $0x48] sm:$0xff] %v324
    %341 = vst [vmem:[%s3 + $0x50] sm:$0xff] %v325
    %342 = vst [vmem:[%s3 + $0x58] sm:$0xff] %v326
    %343 = vst [vmem:[%s3 + $0x60] sm:$0xff] %v327
    %344 = vst [vmem:[%s3 + $0x68] sm:$0xff] %v328
    %345 = vst [vmem:[%s3 + $0x70] sm:$0xff] %v329
    %346 = vst [vmem:[%s3 + $0x78] sm:$0xff] %v330
  $region21: #{dip_forward.72} parent=0 // pred_fallthru
    _
  // Predicated region
  $region22: #{dip_forward.72} parent=0 // pred_check
    _
  $region23: #{dip_forward.72} parent=0 // pred_check_branch
    %348 = sbr.rel (0) target = $region25
  $region24: #{dip_forward.72} parent=0 // pred_region
    _
  $region25: #{dip_forward.72} parent=0 // pred_fallthru
    _
  // Predicated region
  $region26: #{dip_forward.72} parent=0 // pred_check
    _
  $region27: #{dip_forward.72} parent=0 // pred_check_branch
    %350 = sbr.rel (0) target = $region29
  $region28: #{dip_forward.72} parent=0 // pred_region
    _
  $region29: #{dip_forward.72} parent=0 // pred_fallthru
    _

// kernel: dip_forward.77
$region0: #{dip_forward.77}
  #allocation0 [shape = 'u32[]', space=smem, size = 0x4, offset = 0x4, fixed_abs, tag = 'smem constant byte address 0x4 - core index']
  #allocation1 [shape = 'u32[144,128]{1,0:T(1,128)}', space=vmem, size = 0x12000, scoped, tag = 'internal scratch']
  #allocation2 [shape = 'f32[16,128]{1,0:T(8,128)}', space=vmem, size = 0x2000, scoped, tag = 'scratch operand']
  %s0 = inlined_call_operand.vmem [shape: bf16[16,128], index: 0, kind: input, shape index: {}]
  %s1 = inlined_call_operand.vmem [shape: bf16[128,128], index: 1, kind: input, shape index: {}]
  %s2 = inlined_call_operand.vmem [shape: f32[1,128], index: 2, kind: input, shape index: {}]
  %s3 = inlined_call_operand.vmem [shape: f32[16,128], index: 3, kind: output, shape index: {}]
  %s4 = sld [smem:[#allocation0]]
  $region30: #{dip_forward.77} parent=0
    _
  %s6 = ssub.s32 1, %s4
  %s7 = scalar_select 0, %s6, %s4
  // Predicated region
  $region2: #{dip_forward.77} parent=0 // pred_check
    _
  $region3: #{dip_forward.77} parent=0 // pred_check_branch
    %9 = sbr.rel (0) target = $region5
  $region4: #{dip_forward.77} parent=0 // pred_region
    _
  $region5: #{dip_forward.77} parent=0 // pred_fallthru
    _
  // Predicated region
  $region6: #{dip_forward.77} parent=0 // pred_check
    _
  $region7: #{dip_forward.77} parent=0 // pred_check_branch
    %11 = sbr.rel (0) target = $region9
  $region8: #{dip_forward.77} parent=0 // pred_region
    _
  $region9: #{dip_forward.77} parent=0 // pred_fallthru
    _
  // Predicated region
  $region10: #{dip_forward.77} parent=0 // pred_check
    _
  $region11: #{dip_forward.77} parent=0 // pred_check_branch
    %13 = sbr.rel (0) target = $region13
  $region12: #{dip_forward.77} parent=0 // pred_region
    _
  $region13: #{dip_forward.77} parent=0 // pred_fallthru
    _
  %p15 = scmp.eq.s32.totalorder 0, 0
  // Predicated region
  $region14: #{dip_forward.77} parent=0 // pred_check
    %p16 = pneg %p15
  $region15: #{dip_forward.77} parent=0 // pred_check_branch
    %18 = sbr.rel (%p16) target = $region17
  $region16: #{dip_forward.77} parent=0 // pred_region
    %19 = vst [vmem:[#allocation2] sm:$0xff] 0.0
    %20 = vst [vmem:[#allocation2 + $0x8] sm:$0xff] 0.0
  $region17: #{dip_forward.77} parent=0 // pred_fallthru
    _
  %v21 = vld [vmem:[#allocation2] sm:$0xff]
  %v22 = vld [vmem:[#allocation2 + $0x8] sm:$0xff]
  %v23 = vld [vmem:[%s0] sm:$0xf]
  %v24 = vld [vmem:[%s0 + $0x4] sm:$0xf]
  %v25 = vld [vmem:[%s1] sm:$0xf]
  %v26 = vld [vmem:[%s1 + $0x4] sm:$0xf]
  %v27 = vld [vmem:[%s1 + $0x8] sm:$0xf]
  %v28 = vld [vmem:[%s1 + $0xc] sm:$0xf]
  %v29 = vld [vmem:[%s1 + $0x10] sm:$0xf]
  %v30 = vld [vmem:[%s1 + $0x14] sm:$0xf]
  %v31 = vld [vmem:[%s1 + $0x18] sm:$0xf]
  %v32 = vld [vmem:[%s1 + $0x1c] sm:$0xf]
  %v33 = vld [vmem:[%s1 + $0x20] sm:$0xf]
  %v34 = vld [vmem:[%s1 + $0x24] sm:$0xf]
  %v35 = vld [vmem:[%s1 + $0x28] sm:$0xf]
  %v36 = vld [vmem:[%s1 + $0x2c] sm:$0xf]
  %v37 = vld [vmem:[%s1 + $0x30] sm:$0xf]
  %v38 = vld [vmem:[%s1 + $0x34] sm:$0xf]
  %v39 = vld [vmem:[%s1 + $0x38] sm:$0xf]
  %v40 = vld [vmem:[%s1 + $0x3c] sm:$0xf]
  %v43 = vunpack.c.l.b16 %v23
  %v44 = vunpack.c.l.b16 %v24
  %v45 = vpack.c.b16 %v44, %v43
  %v63 = vunpack.c.l.b16 %v25
  %v64 = vunpack.c.l.b16 %v26
  %v65 = vunpack.c.l.b16 %v27
  %v66 = vunpack.c.l.b16 %v28
  %v67 = vunpack.c.l.b16 %v29
  %v68 = vunpack.c.l.b16 %v30
  %v69 = vunpack.c.l.b16 %v31
  %v70 = vunpack.c.l.b16 %v32
  %v71 = vunpack.c.l.b16 %v33
  %v72 = vunpack.c.l.b16 %v34
  %v73 = vunpack.c.l.b16 %v35
  %v74 = vunpack.c.l.b16 %v36
  %v75 = vunpack.c.l.b16 %v37
  %v76 = vunpack.c.l.b16 %v38
  %v77 = vunpack.c.l.b16 %v39
  %v78 = vunpack.c.l.b16 %v40
  %v79 = vpack.c.b16 %v64, %v63
  %v80 = vpack.c.b16 %v66, %v65
  %v81 = vpack.c.b16 %v68, %v67
  %v82 = vpack.c.b16 %v70, %v69
  %v83 = vpack.c.b16 %v72, %v71
  %v84 = vpack.c.b16 %v74, %v73
  %v85 = vpack.c.b16 %v76, %v75
  %v86 = vpack.c.b16 %v78, %v77
  %95 = vmatprep.subr.bf16.mxu0 0
  %96 = vmatpush1.bf16.msra.mxu0 %v79
  %97 = vmatprep.subr.bf16.mxu0 0
  %98 = vmatpush1.bf16.msra.mxu0 %v80
  %99 = vmatprep.subr.bf16.mxu0 0
  %100 = vmatpush1.bf16.msra.mxu0 %v81
  %101 = vmatprep.subr.bf16.mxu0 0
  %102 = vmatpush1.bf16.msra.mxu0 %v82
  %103 = vmatprep.subr.bf16.mxu0 0
  %104 = vmatpush1.bf16.msra.mxu0 %v83
  %105 = vmatprep.subr.bf16.mxu0 0
  %106 = vmatpush1.bf16.msra.mxu0 %v84
  %107 = vmatprep.subr.bf16.mxu0 0
  %108 = vmatpush1.bf16.msra.mxu0 %v85
  %109 = vmatprep.subr.bf16.mxu0 0
  %110 = vmatpush1.bf16.msra.mxu0 %v86
  %111 = vmatprep.subr.bf16.mxu0 0
  %112 = vmatpush1.bf16.msra.mxu0 0
  %113 = vmatprep.subr.bf16.mxu0 0
  %114 = vmatpush1.bf16.msra.mxu0 0
  %115 = vmatprep.subr.bf16.mxu0 0
  %116 = vmatpush1.bf16.msra.mxu0 0
  %117 = vmatprep.subr.bf16.mxu0 0
  %118 = vmatpush1.bf16.msra.mxu0 0
  %119 = vmatprep.subr.bf16.mxu0 0
  %120 = vmatpush1.bf16.msra.mxu0 0
  %121 = vmatprep.subr.bf16.mxu0 0
  %122 = vmatpush1.bf16.msra.mxu0 0
  %123 = vmatprep.subr.bf16.mxu0 0
  %124 = vmatpush1.bf16.msra.mxu0 0
  %125 = vmatprep.subr.bf16.mxu0 0
  %126 = vmatpush1.bf16.msra.mxu0 0
  %127 = vmatprep.mubr.bf16.mxu0 0
  %128 = vmatmul.mubr.bf16.gmra.mrb[0].mxu0 %v45
  %v129 = vpop.f32.mrb[0].mxu0
  %v130 = vadd.f32 0.0, %v129
  %v131 = vpop.f32.mrb[0].mxu0
  %v132 = vpop.f32.mrb[0].mxu0
  %v133 = vadd.f32 0.0, %v132
  %v134 = vpop.f32.mrb[0].mxu0
  %135 = vdwg.mxu0
  %v136 = vadd.f32 %v21, %v130
  %v137 = vadd.f32 %v22, %v133
  %138 = vst [vmem:[#allocation2] sm:$0xff] %v136
  %139 = vst [vmem:[#allocation2 + $0x8] sm:$0xff] %v137
  // Predicated region
  $region18: #{dip_forward.77} parent=0 // pred_check
    %p140 = pneg %p15
  $region19: #{dip_forward.77} parent=0 // pred_check_branch
    %142 = sbr.rel (%p140) target = $region21
  $region20: #{dip_forward.77} parent=0 // pred_region
    %v143 = vld [vmem:[#allocation2] sm:$0xff]
    %v144 = vld [vmem:[#allocation2 + $0x8] sm:$0xff]
    %v145 = vld [vmem:[%s2] sm:$0x1]
    %v147 = vlaneseq
    %v148 = vshrl.u32 %v147, 7
    %v149 = vsub.s32 0, %v148
    %v150 = vrot.slane %v145, %v149
    %v152 = vadd.f32 %v143, %v150
    %v153 = vadd.f32 %v144, %v150
    %v154 = vmax.f32 %v152, 0.0
    %v155 = vmax.f32 %v153, 0.0
    %156 = vst [vmem:[%s3] sm:$0xff] %v154
    %157 = vst [vmem:[%s3 + $0x8] sm:$0xff] %v155
  $region21: #{dip_forward.77} parent=0 // pred_fallthru
    _
  // Predicated region
  $region22: #{dip_forward.77} parent=0 // pred_check
    _
  $region23: #{dip_forward.77} parent=0 // pred_check_branch
    %159 = sbr.rel (0) target = $region25
  $region24: #{dip_forward.77} parent=0 // pred_region
    _
  $region25: #{dip_forward.77} parent=0 // pred_fallthru
    _
  // Predicated region
  $region26: #{dip_forward.77} parent=0 // pred_check
    _
  $region27: #{dip_forward.77} parent=0 // pred_check_branch
    %161 = sbr.rel (0) target = $region29
  $region28: #{dip_forward.77} parent=0 // pred_region
    _
  $region29: #{dip_forward.77} parent=0 // pred_fallthru
    _

// kernel: dip_forward.76
$region0: #{dip_forward.76}
  #allocation0 [shape = 'u32[]', space=smem, size = 0x4, offset = 0x4, fixed_abs, tag = 'smem constant byte address 0x4 - core index']
  #allocation1 [shape = 'u32[144,128]{1,0:T(1,128)}', space=vmem, size = 0x12000, scoped, tag = 'internal scratch']
  %s0 = inlined_call_operand.vmem [shape: f32[1,256,4], index: 0, kind: input, shape index: {}]
  %s1 = inlined_call_operand.vmem [shape: f32[1,9,256,4], index: 1, kind: input, shape index: {}]
  %s2 = inlined_call_operand.vmem [shape: f32[1,9,4], index: 2, kind: output, shape index: {}]
  %s3 = sld [smem:[#allocation0]]
  $region18: #{dip_forward.76} parent=0
    _
  %s5 = ssub.s32 1, %s3
  %s6 = scalar_select 0, %s5, %s3
  // Predicated region
  $region2: #{dip_forward.76} parent=0 // pred_check
    _
  $region3: #{dip_forward.76} parent=0 // pred_check_branch
    %8 = sbr.rel (0) target = $region5
  $region4: #{dip_forward.76} parent=0 // pred_region
    _
  $region5: #{dip_forward.76} parent=0 // pred_fallthru
    _
  // Predicated region
  $region6: #{dip_forward.76} parent=0 // pred_check
    _
  $region7: #{dip_forward.76} parent=0 // pred_check_branch
    %10 = sbr.rel (0) target = $region9
  $region8: #{dip_forward.76} parent=0 // pred_region
    _
  $region9: #{dip_forward.76} parent=0 // pred_fallthru
    _
  %v11 = vld [vmem:[%s0] sm:$0xff]
  %v12 = vld [vmem:[%s0 + $0x8] sm:$0xff]
  %v13 = vld [vmem:[%s0 + $0x10] sm:$0xff]
  %v14 = vld [vmem:[%s0 + $0x18] sm:$0xff]
  %v15 = vld [vmem:[%s0 + $0x20] sm:$0xff]
  %v16 = vld [vmem:[%s0 + $0x28] sm:$0xff]
  %v17 = vld [vmem:[%s0 + $0x30] sm:$0xff]
  %v18 = vld [vmem:[%s0 + $0x38] sm:$0xff]
  %v19 = vld [vmem:[%s0 + $0x40] sm:$0xff]
  %v20 = vld [vmem:[%s0 + $0x48] sm:$0xff]
  %v21 = vld [vmem:[%s0 + $0x50] sm:$0xff]
  %v22 = vld [vmem:[%s0 + $0x58] sm:$0xff]
  %v23 = vld [vmem:[%s0 + $0x60] sm:$0xff]
  %v24 = vld [vmem:[%s0 + $0x68] sm:$0xff]
  %v25 = vld [vmem:[%s0 + $0x70] sm:$0xff]
  %v26 = vld [vmem:[%s0 + $0x78] sm:$0xff]
  %v27 = vld [vmem:[%s0 + $0x80] sm:$0xff]
  %v28 = vld [vmem:[%s0 + $0x88] sm:$0xff]
  %v29 = vld [vmem:[%s0 + $0x90] sm:$0xff]
  %v30 = vld [vmem:[%s0 + $0x98] sm:$0xff]
  %v31 = vld [vmem:[%s0 + $0xa0] sm:$0xff]
  %v32 = vld [vmem:[%s0 + $0xa8] sm:$0xff]
  %v33 = vld [vmem:[%s0 + $0xb0] sm:$0xff]
  %v34 = vld [vmem:[%s0 + $0xb8] sm:$0xff]
  %v35 = vld [vmem:[%s0 + $0xc0] sm:$0xff]
  %v36 = vld [vmem:[%s0 + $0xc8] sm:$0xff]
  %v37 = vld [vmem:[%s0 + $0xd0] sm:$0xff]
  %v38 = vld [vmem:[%s0 + $0xd8] sm:$0xff]
  %v39 = vld [vmem:[%s0 + $0xe0] sm:$0xff]
  %v40 = vld [vmem:[%s0 + $0xe8] sm:$0xff]
  %v41 = vld [vmem:[%s0 + $0xf0] sm:$0xff]
  %v42 = vld [vmem:[%s0 + $0xf8] sm:$0xff]
  %v43 = vmul.f32 %v11, 0.0625
  %v44 = vmul.f32 %v12, 0.0625
  %v45 = vmul.f32 %v13, 0.0625
  %v46 = vmul.f32 %v14, 0.0625
  %v47 = vmul.f32 %v15, 0.0625
  %v48 = vmul.f32 %v16, 0.0625
  %v49 = vmul.f32 %v17, 0.0625
  %v50 = vmul.f32 %v18, 0.0625
  %v51 = vmul.f32 %v19, 0.0625
  %v52 = vmul.f32 %v20, 0.0625
  %v53 = vmul.f32 %v21, 0.0625
  %v54 = vmul.f32 %v22, 0.0625
  %v55 = vmul.f32 %v23, 0.0625
  %v56 = vmul.f32 %v24, 0.0625
  %v57 = vmul.f32 %v25, 0.0625
  %v58 = vmul.f32 %v26, 0.0625
  %v59 = vmul.f32 %v27, 0.0625
  %v60 = vmul.f32 %v28, 0.0625
  %v61 = vmul.f32 %v29, 0.0625
  %v62 = vmul.f32 %v30, 0.0625
  %v63 = vmul.f32 %v31, 0.0625
  %v64 = vmul.f32 %v32, 0.0625
  %v65 = vmul.f32 %v33, 0.0625
  %v66 = vmul.f32 %v34, 0.0625
  %v67 = vmul.f32 %v35, 0.0625
  %v68 = vmul.f32 %v36, 0.0625
  %v69 = vmul.f32 %v37, 0.0625
  %v70 = vmul.f32 %v38, 0.0625
  %v71 = vmul.f32 %v39, 0.0625
  %v72 = vmul.f32 %v40, 0.0625
  %v73 = vmul.f32 %v41, 0.0625
  %v74 = vmul.f32 %v42, 0.0625
  %v75 = vld [vmem:[%s1] sm:$0xff]
  %v76 = vld [vmem:[%s1 + $0x8] sm:$0xff]
  %v77 = vld [vmem:[%s1 + $0x10] sm:$0xff]
  %v78 = vld [vmem:[%s1 + $0x18] sm:$0xff]
  %v79 = vld [vmem:[%s1 + $0x20] sm:$0xff]
  %v80 = vld [vmem:[%s1 + $0x28] sm:$0xff]
  %v81 = vld [vmem:[%s1 + $0x30] sm:$0xff]
  %v82 = vld [vmem:[%s1 + $0x38] sm:$0xff]
  %v83 = vld [vmem:[%s1 + $0x40] sm:$0xff]
  %v84 = vld [vmem:[%s1 + $0x48] sm:$0xff]
  %v85 = vld [vmem:[%s1 + $0x50] sm:$0xff]
  %v86 = vld [vmem:[%s1 + $0x58] sm:$0xff]
  %v87 = vld [vmem:[%s1 + $0x60] sm:$0xff]
  %v88 = vld [vmem:[%s1 + $0x68] sm:$0xff]
  %v89 = vld [vmem:[%s1 + $0x70] sm:$0xff]
  %v90 = vld [vmem:[%s1 + $0x78] sm:$0xff]
  %v91 = vld [vmem:[%s1 + $0x80] sm:$0xff]
  %v92 = vld [vmem:[%s1 + $0x88] sm:$0xff]
  %v93 = vld [vmem:[%s1 + $0x90] sm:$0xff]
  %v94 = vld [vmem:[%s1 + $0x98] sm:$0xff]
  %v95 = vld [vmem:[%s1 + $0xa0] sm:$0xff]
  %v96 = vld [vmem:[%s1 + $0xa8] sm:$0xff]
  %v97 = vld [vmem:[%s1 + $0xb0] sm:$0xff]
  %v98 = vld [vmem:[%s1 + $0xb8] sm:$0xff]
  %v99 = vld [vmem:[%s1 + $0xc0] sm:$0xff]
  %v100 = vld [vmem:[%s1 + $0xc8] sm:$0xff]
  %v101 = vld [vmem:[%s1 + $0xd0] sm:$0xff]
  %v102 = vld [vmem:[%s1 + $0xd8] sm:$0xff]
  %v103 = vld [vmem:[%s1 + $0xe0] sm:$0xff]
  %v104 = vld [vmem:[%s1 + $0xe8] sm:$0xff]
  %v105 = vld [vmem:[%s1 + $0xf0] sm:$0xff]
  %v106 = vld [vmem:[%s1 + $0xf8] sm:$0xff]
  %v107 = vmul.f32 %v75, %v43
  %v108 = vmul.f32 %v76, %v44
  %v109 = vmul.f32 %v77, %v45
  %v110 = vmul.f32 %v78, %v46
  %v111 = vmul.f32 %v79, %v47
  %v112 = vmul.f32 %v80, %v48
  %v113 = vmul.f32 %v81, %v49
  %v114 = vmul.f32 %v82, %v50
  %v115 = vmul.f32 %v83, %v51
  %v116 = vmul.f32 %v84, %v52
  %v117 = vmul.f32 %v85, %v53
  %v118 = vmul.f32 %v86, %v54
  %v119 = vmul.f32 %v87, %v55
  %v120 = vmul.f32 %v88, %v56
  %v121 = vmul.f32 %v89, %v57
  %v122 = vmul.f32 %v90, %v58
  %v123 = vmul.f32 %v91, %v59
  %v124 = vmul.f32 %v92, %v60
  %v125 = vmul.f32 %v93, %v61
  %v126 = vmul.f32 %v94, %v62
  %v127 = vmul.f32 %v95, %v63
  %v128 = vmul.f32 %v96, %v64
  %v129 = vmul.f32 %v97, %v65
  %v130 = vmul.f32 %v98, %v66
  %v131 = vmul.f32 %v99, %v67
  %v132 = vmul.f32 %v100, %v68
  %v133 = vmul.f32 %v101, %v69
  %v134 = vmul.f32 %v102, %v70
  %v135 = vmul.f32 %v103, %v71
  %v136 = vmul.f32 %v104, %v72
  %v137 = vmul.f32 %v105, %v73
  %v138 = vmul.f32 %v106, %v74
  %vm139 = vcmask 31744
  %v140 = vsel %vm139, %v107, 0.0
  %v141 = vsel %vm139, %v108, 0.0
  %v142 = vadd.f32 %v140, %v141
  %v143 = vsel %vm139, %v109, 0.0
  %v144 = vadd.f32 %v142, %v143
  %v145 = vsel %vm139, %v110, 0.0
  %v146 = vadd.f32 %v144, %v145
  %v147 = vsel %vm139, %v111, 0.0
  %v148 = vadd.f32 %v146, %v147
  %v149 = vsel %vm139, %v112, 0.0
  %v150 = vadd.f32 %v148, %v149
  %v151 = vsel %vm139, %v113, 0.0
  %v152 = vadd.f32 %v150, %v151
  %v153 = vsel %vm139, %v114, 0.0
  %v154 = vadd.f32 %v152, %v153
  %v155 = vsel %vm139, %v115, 0.0
  %v156 = vadd.f32 %v154, %v155
  %v157 = vsel %vm139, %v116, 0.0
  %v158 = vadd.f32 %v156, %v157
  %v159 = vsel %vm139, %v117, 0.0
  %v160 = vadd.f32 %v158, %v159
  %v161 = vsel %vm139, %v118, 0.0
  %v162 = vadd.f32 %v160, %v161
  %v163 = vsel %vm139, %v119, 0.0
  %v164 = vadd.f32 %v162, %v163
  %v165 = vsel %vm139, %v120, 0.0
  %v166 = vadd.f32 %v164, %v165
  %v167 = vsel %vm139, %v121, 0.0
  %v168 = vadd.f32 %v166, %v167
  %v169 = vsel %vm139, %v122, 0.0
  %v170 = vadd.f32 %v168, %v169
  %v171 = vsel %vm139, %v123, 0.0
  %v172 = vadd.f32 %v170, %v171
  %v173 = vsel %vm139, %v124, 0.0
  %v174 = vadd.f32 %v172, %v173
  %v175 = vsel %vm139, %v125, 0.0
  %v176 = vadd.f32 %v174, %v175
  %v177 = vsel %vm139, %v126, 0.0
  %v178 = vadd.f32 %v176, %v177
  %v179 = vsel %vm139, %v127, 0.0
  %v180 = vadd.f32 %v178, %v179
  %v181 = vsel %vm139, %v128, 0.0
  %v182 = vadd.f32 %v180, %v181
  %v183 = vsel %vm139, %v129, 0.0
  %v184 = vadd.f32 %v182, %v183
  %v185 = vsel %vm139, %v130, 0.0
  %v186 = vadd.f32 %v184, %v185
  %v187 = vsel %vm139, %v131, 0.0
  %v188 = vadd.f32 %v186, %v187
  %v189 = vsel %vm139, %v132, 0.0
  %v190 = vadd.f32 %v188, %v189
  %v191 = vsel %vm139, %v133, 0.0
  %v192 = vadd.f32 %v190, %v191
  %v193 = vsel %vm139, %v134, 0.0
  %v194 = vadd.f32 %v192, %v193
  %v195 = vsel %vm139, %v135, 0.0
  %v196 = vadd.f32 %v194, %v195
  %v197 = vsel %vm139, %v136, 0.0
  %v198 = vadd.f32 %v196, %v197
  %v199 = vsel %vm139, %v137, 0.0
  %v200 = vadd.f32 %v198, %v199
  %v201 = vsel %vm139, %v138, 0.0
  %v202 = vadd.f32 %v200, %v201
  %v203 = vrot.slane %v202, 4
  %v204 = vadd.f32 %v202, %v203
  %v205 = vrot.slane %v204, 2
  %v206 = vadd.f32 %v204, %v205
  %v207 = vrot.slane %v206, 1
  %v208 = vadd.f32 %v206, %v207
  %vm209 = vcmask 24576
  %210 = vst.msk [vmem:[%s2] sm:$0x1] %vm209, %v208
  %s211 = scalar_lea.vmem %s1, 256
  %v212 = vld [vmem:[%s211] sm:$0xff]
  %v213 = vld [vmem:[%s211 + $0x8] sm:$0xff]
  %v214 = vld [vmem:[%s211 + $0x10] sm:$0xff]
  %v215 = vld [vmem:[%s211 + $0x18] sm:$0xff]
  %v216 = vld [vmem:[%s211 + $0x20] sm:$0xff]
  %v217 = vld [vmem:[%s211 + $0x28] sm:$0xff]
  %v218 = vld [vmem:[%s211 + $0x30] sm:$0xff]
  %v219 = vld [vmem:[%s211 + $0x38] sm:$0xff]
  %v220 = vld [vmem:[%s211 + $0x40] sm:$0xff]
  %v221 = vld [vmem:[%s211 + $0x48] sm:$0xff]
  %v222 = vld [vmem:[%s211 + $0x50] sm:$0xff]
  %v223 = vld [vmem:[%s211 + $0x58] sm:$0xff]
  %v224 = vld [vmem:[%s211 + $0x60] sm:$0xff]
  %v225 = vld [vmem:[%s211 + $0x68] sm:$0xff]
  %v226 = vld [vmem:[%s211 + $0x70] sm:$0xff]
  %v227 = vld [vmem:[%s211 + $0x78] sm:$0xff]
  %v228 = vld [vmem:[%s211 + $0x80] sm:$0xff]
  %v229 = vld [vmem:[%s211 + $0x88] sm:$0xff]
  %v230 = vld [vmem:[%s211 + $0x90] sm:$0xff]
  %v231 = vld [vmem:[%s211 + $0x98] sm:$0xff]
  %v232 = vld [vmem:[%s211 + $0xa0] sm:$0xff]
  %v233 = vld [vmem:[%s211 + $0xa8] sm:$0xff]
  %v234 = vld [vmem:[%s211 + $0xb0] sm:$0xff]
  %v235 = vld [vmem:[%s211 + $0xb8] sm:$0xff]
  %v236 = vld [vmem:[%s211 + $0xc0] sm:$0xff]
  %v237 = vld [vmem:[%s211 + $0xc8] sm:$0xff]
  %v238 = vld [vmem:[%s211 + $0xd0] sm:$0xff]
  %v239 = vld [vmem:[%s211 + $0xd8] sm:$0xff]
  %v240 = vld [vmem:[%s211 + $0xe0] sm:$0xff]
  %v241 = vld [vmem:[%s211 + $0xe8] sm:$0xff]
  %v242 = vld [vmem:[%s211 + $0xf0] sm:$0xff]
  %v243 = vld [vmem:[%s211 + $0xf8] sm:$0xff]
  %v244 = vmul.f32 %v212, %v43
  %v245 = vmul.f32 %v213, %v44
  %v246 = vmul.f32 %v214, %v45
  %v247 = vmul.f32 %v215, %v46
  %v248 = vmul.f32 %v216, %v47
  %v249 = vmul.f32 %v217, %v48
  %v250 = vmul.f32 %v218, %v49
  %v251 = vmul.f32 %v219, %v50
  %v252 = vmul.f32 %v220, %v51
  %v253 = vmul.f32 %v221, %v52
  %v254 = vmul.f32 %v222, %v53
  %v255 = vmul.f32 %v223, %v54
  %v256 = vmul.f32 %v224, %v55
  %v257 = vmul.f32 %v225, %v56
  %v258 = vmul.f32 %v226, %v57
  %v259 = vmul.f32 %v227, %v58
  %v260 = vmul.f32 %v228, %v59
  %v261 = vmul.f32 %v229, %v60
  %v262 = vmul.f32 %v230, %v61
  %v263 = vmul.f32 %v231, %v62
  %v264 = vmul.f32 %v232, %v63
  %v265 = vmul.f32 %v233, %v64
  %v266 = vmul.f32 %v234, %v65
  %v267 = vmul.f32 %v235, %v66
  %v268 = vmul.f32 %v236, %v67
  %v269 = vmul.f32 %v237, %v68
  %v270 = vmul.f32 %v238, %v69
  %v271 = vmul.f32 %v239, %v70
  %v272 = vmul.f32 %v240, %v71
  %v273 = vmul.f32 %v241, %v72
  %v274 = vmul.f32 %v242, %v73
  %v275 = vmul.f32 %v243, %v74
  %v276 = vsel %vm139, %v244, 0.0
  %v277 = vsel %vm139, %v245, 0.0
  %v278 = vadd.f32 %v276, %v277
  %v279 = vsel %vm139, %v246, 0.0
  %v280 = vadd.f32 %v278, %v279
  %v281 = vsel %vm139, %v247, 0.0
  %v282 = vadd.f32 %v280, %v281
  %v283 = vsel %vm139, %v248, 0.0
  %v284 = vadd.f32 %v282, %v283
  %v285 = vsel %vm139, %v249, 0.0
  %v286 = vadd.f32 %v284, %v285
  %v287 = vsel %vm139, %v250, 0.0
  %v288 = vadd.f32 %v286, %v287
  %v289 = vsel %vm139, %v251, 0.0
  %v290 = vadd.f32 %v288, %v289
  %v291 = vsel %vm139, %v252, 0.0
  %v292 = vadd.f32 %v290, %v291
  %v293 = vsel %vm139, %v253, 0.0
  %v294 = vadd.f32 %v292, %v293
  %v295 = vsel %vm139, %v254, 0.0
  %v296 = vadd.f32 %v294, %v295
  %v297 = vsel %vm139, %v255, 0.0
  %v298 = vadd.f32 %v296, %v297
  %v299 = vsel %vm139, %v256, 0.0
  %v300 = vadd.f32 %v298, %v299
  %v301 = vsel %vm139, %v257, 0.0
  %v302 = vadd.f32 %v300, %v301
  %v303 = vsel %vm139, %v258, 0.0
  %v304 = vadd.f32 %v302, %v303
  %v305 = vsel %vm139, %v259, 0.0
  %v306 = vadd.f32 %v304, %v305
  %v307 = vsel %vm139, %v260, 0.0
  %v308 = vadd.f32 %v306, %v307
  %v309 = vsel %vm139, %v261, 0.0
  %v310 = vadd.f32 %v308, %v309
  %v311 = vsel %vm139, %v262, 0.0
  %v312 = vadd.f32 %v310, %v311
  %v313 = vsel %vm139, %v263, 0.0
  %v314 = vadd.f32 %v312, %v313
  %v315 = vsel %vm139, %v264, 0.0
  %v316 = vadd.f32 %v314, %v315
  %v317 = vsel %vm139, %v265, 0.0
  %v318 = vadd.f32 %v316, %v317
  %v319 = vsel %vm139, %v266, 0.0
  %v320 = vadd.f32 %v318, %v319
  %v321 = vsel %vm139, %v267, 0.0
  %v322 = vadd.f32 %v320, %v321
  %v323 = vsel %vm139, %v268, 0.0
  %v324 = vadd.f32 %v322, %v323
  %v325 = vsel %vm139, %v269, 0.0
  %v326 = vadd.f32 %v324, %v325
  %v327 = vsel %vm139, %v270, 0.0
  %v328 = vadd.f32 %v326, %v327
  %v329 = vsel %vm139, %v271, 0.0
  %v330 = vadd.f32 %v328, %v329
  %v331 = vsel %vm139, %v272, 0.0
  %v332 = vadd.f32 %v330, %v331
  %v333 = vsel %vm139, %v273, 0.0
  %v334 = vadd.f32 %v332, %v333
  %v335 = vsel %vm139, %v274, 0.0
  %v336 = vadd.f32 %v334, %v335
  %v337 = vsel %vm139, %v275, 0.0
  %v338 = vadd.f32 %v336, %v337
  %v339 = vrot.slane %v338, 4
  %v340 = vadd.f32 %v338, %v339
  %v341 = vrot.slane %v340, 2
  %v342 = vadd.f32 %v340, %v341
  %v343 = vrot.slane %v342, 1
  %v344 = vadd.f32 %v342, %v343
  %345 = vst.msk [vmem:[%s2 + $0x1] sm:$0x1] %vm209, %v344
  %s346 = scalar_lea.vmem %s1, 512
  %v347 = vld [vmem:[%s346] sm:$0xff]
  %v348 = vld [vmem:[%s346 + $0x8] sm:$0xff]
  %v349 = vld [vmem:[%s346 + $0x10] sm:$0xff]
  %v350 = vld [vmem:[%s346 + $0x18] sm:$0xff]
  %v351 = vld [vmem:[%s346 + $0x20] sm:$0xff]
  %v352 = vld [vmem:[%s346 + $0x28] sm:$0xff]
  %v353 = vld [vmem:[%s346 + $0x30] sm:$0xff]
  %v354 = vld [vmem:[%s346 + $0x38] sm:$0xff]
  %v355 = vld [vmem:[%s346 + $0x40] sm:$0xff]
  %v356 = vld [vmem:[%s346 + $0x48] sm:$0xff]
  %v357 = vld [vmem:[%s346 + $0x50] sm:$0xff]
  %v358 = vld [vmem:[%s346 + $0x58] sm:$0xff]
  %v359 = vld [vmem:[%s346 + $0x60] sm:$0xff]
  %v360 = vld [vmem:[%s346 + $0x68] sm:$0xff]
  %v361 = vld [vmem:[%s346 + $0x70] sm:$0xff]
  %v362 = vld [vmem:[%s346 + $0x78] sm:$0xff]
  %v363 = vld [vmem:[%s346 + $0x80] sm:$0xff]
  %v364 = vld [vmem:[%s346 + $0x88] sm:$0xff]
  %v365 = vld [vmem:[%s346 + $0x90] sm:$0xff]
  %v366 = vld [vmem:[%s346 + $0x98] sm:$0xff]
  %v367 = vld [vmem:[%s346 + $0xa0] sm:$0xff]
  %v368 = vld [vmem:[%s346 + $0xa8] sm:$0xff]
  %v369 = vld [vmem:[%s346 + $0xb0] sm:$0xff]
  %v370 = vld [vmem:[%s346 + $0xb8] sm:$0xff]
  %v371 = vld [vmem:[%s346 + $0xc0] sm:$0xff]
  %v372 = vld [vmem:[%s346 + $0xc8] sm:$0xff]
  %v373 = vld [vmem:[%s346 + $0xd0] sm:$0xff]
  %v374 = vld [vmem:[%s346 + $0xd8] sm:$0xff]
  %v375 = vld [vmem:[%s346 + $0xe0] sm:$0xff]
  %v376 = vld [vmem:[%s346 + $0xe8] sm:$0xff]
  %v377 = vld [vmem:[%s346 + $0xf0] sm:$0xff]
  %v378 = vld [vmem:[%s346 + $0xf8] sm:$0xff]
  %v379 = vmul.f32 %v347, %v43
  %v380 = vmul.f32 %v348, %v44
  %v381 = vmul.f32 %v349, %v45
  %v382 = vmul.f32 %v350, %v46
  %v383 = vmul.f32 %v351, %v47
  %v384 = vmul.f32 %v352, %v48
  %v385 = vmul.f32 %v353, %v49
  %v386 = vmul.f32 %v354, %v50
  %v387 = vmul.f32 %v355, %v51
  %v388 = vmul.f32 %v356, %v52
  %v389 = vmul.f32 %v357, %v53
  %v390 = vmul.f32 %v358, %v54
  %v391 = vmul.f32 %v359, %v55
  %v392 = vmul.f32 %v360, %v56
  %v393 = vmul.f32 %v361, %v57
  %v394 = vmul.f32 %v362, %v58
  %v395 = vmul.f32 %v363, %v59
  %v396 = vmul.f32 %v364, %v60
  %v397 = vmul.f32 %v365, %v61
  %v398 = vmul.f32 %v366, %v62
  %v399 = vmul.f32 %v367, %v63
  %v400 = vmul.f32 %v368, %v64
  %v401 = vmul.f32 %v369, %v65
  %v402 = vmul.f32 %v370, %v66
  %v403 = vmul.f32 %v371, %v67
  %v404 = vmul.f32 %v372, %v68
  %v405 = vmul.f32 %v373, %v69
  %v406 = vmul.f32 %v374, %v70
  %v407 = vmul.f32 %v375, %v71
  %v408 = vmul.f32 %v376, %v72
  %v409 = vmul.f32 %v377, %v73
  %v410 = vmul.f32 %v378, %v74
  %v411 = vsel %vm139, %v379, 0.0
  %v412 = vsel %vm139, %v380, 0.0
  %v413 = vadd.f32 %v411, %v412
  %v414 = vsel %vm139, %v381, 0.0
  %v415 = vadd.f32 %v413, %v414
  %v416 = vsel %vm139, %v382, 0.0
  %v417 = vadd.f32 %v415, %v416
  %v418 = vsel %vm139, %v383, 0.0
  %v419 = vadd.f32 %v417, %v418
  %v420 = vsel %vm139, %v384, 0.0
  %v421 = vadd.f32 %v419, %v420
  %v422 = vsel %vm139, %v385, 0.0
  %v423 = vadd.f32 %v421, %v422
  %v424 = vsel %vm139, %v386, 0.0
  %v425 = vadd.f32 %v423, %v424
  %v426 = vsel %vm139, %v387, 0.0
  %v427 = vadd.f32 %v425, %v426
  %v428 = vsel %vm139, %v388, 0.0
  %v429 = vadd.f32 %v427, %v428
  %v430 = vsel %vm139, %v389, 0.0
  %v431 = vadd.f32 %v429, %v430
  %v432 = vsel %vm139, %v390, 0.0
  %v433 = vadd.f32 %v431, %v432
  %v434 = vsel %vm139, %v391, 0.0
  %v435 = vadd.f32 %v433, %v434
  %v436 = vsel %vm139, %v392, 0.0
  %v437 = vadd.f32 %v435, %v436
  %v438 = vsel %vm139, %v393, 0.0
  %v439 = vadd.f32 %v437, %v438
  %v440 = vsel %vm139, %v394, 0.0
  %v441 = vadd.f32 %v439, %v440
  %v442 = vsel %vm139, %v395, 0.0
  %v443 = vadd.f32 %v441, %v442
  %v444 = vsel %vm139, %v396, 0.0
  %v445 = vadd.f32 %v443, %v444
  %v446 = vsel %vm139, %v397, 0.0
  %v447 = vadd.f32 %v445, %v446
  %v448 = vsel %vm139, %v398, 0.0
  %v449 = vadd.f32 %v447, %v448
  %v450 = vsel %vm139, %v399, 0.0
  %v451 = vadd.f32 %v449, %v450
  %v452 = vsel %vm139, %v400, 0.0
  %v453 = vadd.f32 %v451, %v452
  %v454 = vsel %vm139, %v401, 0.0
  %v455 = vadd.f32 %v453, %v454
  %v456 = vsel %vm139, %v402, 0.0
  %v457 = vadd.f32 %v455, %v456
  %v458 = vsel %vm139, %v403, 0.0
  %v459 = vadd.f32 %v457, %v458
  %v460 = vsel %vm139, %v404, 0.0
  %v461 = vadd.f32 %v459, %v460
  %v462 = vsel %vm139, %v405, 0.0
  %v463 = vadd.f32 %v461, %v462
  %v464 = vsel %vm139, %v406, 0.0
  %v465 = vadd.f32 %v463, %v464
  %v466 = vsel %vm139, %v407, 0.0
  %v467 = vadd.f32 %v465, %v466
  %v468 = vsel %vm139, %v408, 0.0
  %v469 = vadd.f32 %v467, %v468
  %v470 = vsel %vm139, %v409, 0.0
  %v471 = vadd.f32 %v469, %v470
  %v472 = vsel %vm139, %v410, 0.0
  %v473 = vadd.f32 %v471, %v472
  %v474 = vrot.slane %v473, 4
  %v475 = vadd.f32 %v473, %v474
  %v476 = vrot.slane %v475, 2
  %v477 = vadd.f32 %v475, %v476
  %v478 = vrot.slane %v477, 1
  %v479 = vadd.f32 %v477, %v478
  %480 = vst.msk [vmem:[%s2 + $0x2] sm:$0x1] %vm209, %v479
  %s481 = scalar_lea.vmem %s1, 768
  %v482 = vld [vmem:[%s481] sm:$0xff]
  %v483 = vld [vmem:[%s481 + $0x8] sm:$0xff]
  %v484 = vld [vmem:[%s481 + $0x10] sm:$0xff]
  %v485 = vld [vmem:[%s481 + $0x18] sm:$0xff]
  %v486 = vld [vmem:[%s481 + $0x20] sm:$0xff]
  %v487 = vld [vmem:[%s481 + $0x28] sm:$0xff]
  %v488 = vld [vmem:[%s481 + $0x30] sm:$0xff]
  %v489 = vld [vmem:[%s481 + $0x38] sm:$0xff]
  %v490 = vld [vmem:[%s481 + $0x40] sm:$0xff]
  %v491 = vld [vmem:[%s481 + $0x48] sm:$0xff]
  %v492 = vld [vmem:[%s481 + $0x50] sm:$0xff]
  %v493 = vld [vmem:[%s481 + $0x58] sm:$0xff]
  %v494 = vld [vmem:[%s481 + $0x60] sm:$0xff]
  %v495 = vld [vmem:[%s481 + $0x68] sm:$0xff]
  %v496 = vld [vmem:[%s481 + $0x70] sm:$0xff]
  %v497 = vld [vmem:[%s481 + $0x78] sm:$0xff]
  %v498 = vld [vmem:[%s481 + $0x80] sm:$0xff]
  %v499 = vld [vmem:[%s481 + $0x88] sm:$0xff]
  %v500 = vld [vmem:[%s481 + $0x90] sm:$0xff]
  %v501 = vld [vmem:[%s481 + $0x98] sm:$0xff]
  %v502 = vld [vmem:[%s481 + $0xa0] sm:$0xff]
  %v503 = vld [vmem:[%s481 + $0xa8] sm:$0xff]
  %v504 = vld [vmem:[%s481 + $0xb0] sm:$0xff]
  %v505 = vld [vmem:[%s481 + $0xb8] sm:$0xff]
  %v506 = vld [vmem:[%s481 + $0xc0] sm:$0xff]
  %v507 = vld [vmem:[%s481 + $0xc8] sm:$0xff]
  %v508 = vld [vmem:[%s481 + $0xd0] sm:$0xff]
  %v509 = vld [vmem:[%s481 + $0xd8] sm:$0xff]
  %v510 = vld [vmem:[%s481 + $0xe0] sm:$0xff]
  %v511 = vld [vmem:[%s481 + $0xe8] sm:$0xff]
  %v512 = vld [vmem:[%s481 + $0xf0] sm:$0xff]
  %v513 = vld [vmem:[%s481 + $0xf8] sm:$0xff]
  %v514 = vmul.f32 %v482, %v43
  %v515 = vmul.f32 %v483, %v44
  %v516 = vmul.f32 %v484, %v45
  %v517 = vmul.f32 %v485, %v46
  %v518 = vmul.f32 %v486, %v47
  %v519 = vmul.f32 %v487, %v48
  %v520 = vmul.f32 %v488, %v49
  %v521 = vmul.f32 %v489, %v50
  %v522 = vmul.f32 %v490, %v51
  %v523 = vmul.f32 %v491, %v52
  %v524 = vmul.f32 %v492, %v53
  %v525 = vmul.f32 %v493, %v54
  %v526 = vmul.f32 %v494, %v55
  %v527 = vmul.f32 %v495, %v56
  %v528 = vmul.f32 %v496, %v57
  %v529 = vmul.f32 %v497, %v58
  %v530 = vmul.f32 %v498, %v59
  %v531 = vmul.f32 %v499, %v60
  %v532 = vmul.f32 %v500, %v61
  %v533 = vmul.f32 %v501, %v62
  %v534 = vmul.f32 %v502, %v63
  %v535 = vmul.f32 %v503, %v64
  %v536 = vmul.f32 %v504, %v65
  %v537 = vmul.f32 %v505, %v66
  %v538 = vmul.f32 %v506, %v67
  %v539 = vmul.f32 %v507, %v68
  %v540 = vmul.f32 %v508, %v69
  %v541 = vmul.f32 %v509, %v70
  %v542 = vmul.f32 %v510, %v71
  %v543 = vmul.f32 %v511, %v72
  %v544 = vmul.f32 %v512, %v73
  %v545 = vmul.f32 %v513, %v74
  %v546 = vsel %vm139, %v514, 0.0
  %v547 = vsel %vm139, %v515, 0.0
  %v548 = vadd.f32 %v546, %v547
  %v549 = vsel %vm139, %v516, 0.0
  %v550 = vadd.f32 %v548, %v549
  %v551 = vsel %vm139, %v517, 0.0
  %v552 = vadd.f32 %v550, %v551
  %v553 = vsel %vm139, %v518, 0.0
  %v554 = vadd.f32 %v552, %v553
  %v555 = vsel %vm139, %v519, 0.0
  %v556 = vadd.f32 %v554, %v555
  %v557 = vsel %vm139, %v520, 0.0
  %v558 = vadd.f32 %v556, %v557
  %v559 = vsel %vm139, %v521, 0.0
  %v560 = vadd.f32 %v558, %v559
  %v561 = vsel %vm139, %v522, 0.0
  %v562 = vadd.f32 %v560, %v561
  %v563 = vsel %vm139, %v523, 0.0
  %v564 = vadd.f32 %v562, %v563
  %v565 = vsel %vm139, %v524, 0.0
  %v566 = vadd.f32 %v564, %v565
  %v567 = vsel %vm139, %v525, 0.0
  %v568 = vadd.f32 %v566, %v567
  %v569 = vsel %vm139, %v526, 0.0
  %v570 = vadd.f32 %v568, %v569
  %v571 = vsel %vm139, %v527, 0.0
  %v572 = vadd.f32 %v570, %v571
  %v573 = vsel %vm139, %v528, 0.0
  %v574 = vadd.f32 %v572, %v573
  %v575 = vsel %vm139, %v529, 0.0
  %v576 = vadd.f32 %v574, %v575
  %v577 = vsel %vm139, %v530, 0.0
  %v578 = vadd.f32 %v576, %v577
  %v579 = vsel %vm139, %v531, 0.0
  %v580 = vadd.f32 %v578, %v579
  %v581 = vsel %vm139, %v532, 0.0
  %v582 = vadd.f32 %v580, %v581
  %v583 = vsel %vm139, %v533, 0.0
  %v584 = vadd.f32 %v582, %v583
  %v585 = vsel %vm139, %v534, 0.0
  %v586 = vadd.f32 %v584, %v585
  %v587 = vsel %vm139, %v535, 0.0
  %v588 = vadd.f32 %v586, %v587
  %v589 = vsel %vm139, %v536, 0.0
  %v590 = vadd.f32 %v588, %v589
  %v591 = vsel %vm139, %v537, 0.0
  %v592 = vadd.f32 %v590, %v591
  %v593 = vsel %vm139, %v538, 0.0
  %v594 = vadd.f32 %v592, %v593
  %v595 = vsel %vm139, %v539, 0.0
  %v596 = vadd.f32 %v594, %v595
  %v597 = vsel %vm139, %v540, 0.0
  %v598 = vadd.f32 %v596, %v597
  %v599 = vsel %vm139, %v541, 0.0
  %v600 = vadd.f32 %v598, %v599
  %v601 = vsel %vm139, %v542, 0.0
  %v602 = vadd.f32 %v600, %v601
  %v603 = vsel %vm139, %v543, 0.0
  %v604 = vadd.f32 %v602, %v603
  %v605 = vsel %vm139, %v544, 0.0
  %v606 = vadd.f32 %v604, %v605
  %v607 = vsel %vm139, %v545, 0.0
  %v608 = vadd.f32 %v606, %v607
  %v609 = vrot.slane %v608, 4
  %v610 = vadd.f32 %v608, %v609
  %v611 = vrot.slane %v610, 2
  %v612 = vadd.f32 %v610, %v611
  %v613 = vrot.slane %v612, 1
  %v614 = vadd.f32 %v612, %v613
  %615 = vst.msk [vmem:[%s2 + $0x3] sm:$0x1] %vm209, %v614
  %s616 = scalar_lea.vmem %s1, 1024
  %v617 = vld [vmem:[%s616] sm:$0xff]
  %v618 = vld [vmem:[%s616 + $0x8] sm:$0xff]
  %v619 = vld [vmem:[%s616 + $0x10] sm:$0xff]
  %v620 = vld [vmem:[%s616 + $0x18] sm:$0xff]
  %v621 = vld [vmem:[%s616 + $0x20] sm:$0xff]
  %v622 = vld [vmem:[%s616 + $0x28] sm:$0xff]
  %v623 = vld [vmem:[%s616 + $0x30] sm:$0xff]
  %v624 = vld [vmem:[%s616 + $0x38] sm:$0xff]
  %v625 = vld [vmem:[%s616 + $0x40] sm:$0xff]
  %v626 = vld [vmem:[%s616 + $0x48] sm:$0xff]
  %v627 = vld [vmem:[%s616 + $0x50] sm:$0xff]
  %v628 = vld [vmem:[%s616 + $0x58] sm:$0xff]
  %v629 = vld [vmem:[%s616 + $0x60] sm:$0xff]
  %v630 = vld [vmem:[%s616 + $0x68] sm:$0xff]
  %v631 = vld [vmem:[%s616 + $0x70] sm:$0xff]
  %v632 = vld [vmem:[%s616 + $0x78] sm:$0xff]
  %v633 = vld [vmem:[%s616 + $0x80] sm:$0xff]
  %v634 = vld [vmem:[%s616 + $0x88] sm:$0xff]
  %v635 = vld [vmem:[%s616 + $0x90] sm:$0xff]
  %v636 = vld [vmem:[%s616 + $0x98] sm:$0xff]
  %v637 = vld [vmem:[%s616 + $0xa0] sm:$0xff]
  %v638 = vld [vmem:[%s616 + $0xa8] sm:$0xff]
  %v639 = vld [vmem:[%s616 + $0xb0] sm:$0xff]
  %v640 = vld [vmem:[%s616 + $0xb8] sm:$0xff]
  %v641 = vld [vmem:[%s616 + $0xc0] sm:$0xff]
  %v642 = vld [vmem:[%s616 + $0xc8] sm:$0xff]
  %v643 = vld [vmem:[%s616 + $0xd0] sm:$0xff]
  %v644 = vld [vmem:[%s616 + $0xd8] sm:$0xff]
  %v645 = vld [vmem:[%s616 + $0xe0] sm:$0xff]
  %v646 = vld [vmem:[%s616 + $0xe8] sm:$0xff]
  %v647 = vld [vmem:[%s616 + $0xf0] sm:$0xff]
  %v648 = vld [vmem:[%s616 + $0xf8] sm:$0xff]
  %v649 = vmul.f32 %v617, %v43
  %v650 = vmul.f32 %v618, %v44
  %v651 = vmul.f32 %v619, %v45
  %v652 = vmul.f32 %v620, %v46
  %v653 = vmul.f32 %v621, %v47
  %v654 = vmul.f32 %v622, %v48
  %v655 = vmul.f32 %v623, %v49
  %v656 = vmul.f32 %v624, %v50
  %v657 = vmul.f32 %v625, %v51
  %v658 = vmul.f32 %v626, %v52
  %v659 = vmul.f32 %v627, %v53
  %v660 = vmul.f32 %v628, %v54
  %v661 = vmul.f32 %v629, %v55
  %v662 = vmul.f32 %v630, %v56
  %v663 = vmul.f32 %v631, %v57
  %v664 = vmul.f32 %v632, %v58
  %v665 = vmul.f32 %v633, %v59
  %v666 = vmul.f32 %v634, %v60
  %v667 = vmul.f32 %v635, %v61
  %v668 = vmul.f32 %v636, %v62
  %v669 = vmul.f32 %v637, %v63
  %v670 = vmul.f32 %v638, %v64
  %v671 = vmul.f32 %v639, %v65
  %v672 = vmul.f32 %v640, %v66
  %v673 = vmul.f32 %v641, %v67
  %v674 = vmul.f32 %v642, %v68
  %v675 = vmul.f32 %v643, %v69
  %v676 = vmul.f32 %v644, %v70
  %v677 = vmul.f32 %v645, %v71
  %v678 = vmul.f32 %v646, %v72
  %v679 = vmul.f32 %v647, %v73
  %v680 = vmul.f32 %v648, %v74
  %v681 = vsel %vm139, %v649, 0.0
  %v682 = vsel %vm139, %v650, 0.0
  %v683 = vadd.f32 %v681, %v682
  %v684 = vsel %vm139, %v651, 0.0
  %v685 = vadd.f32 %v683, %v684
  %v686 = vsel %vm139, %v652, 0.0
  %v687 = vadd.f32 %v685, %v686
  %v688 = vsel %vm139, %v653, 0.0
  %v689 = vadd.f32 %v687, %v688
  %v690 = vsel %vm139, %v654, 0.0
  %v691 = vadd.f32 %v689, %v690
  %v692 = vsel %vm139, %v655, 0.0
  %v693 = vadd.f32 %v691, %v692
  %v694 = vsel %vm139, %v656, 0.0
  %v695 = vadd.f32 %v693, %v694
  %v696 = vsel %vm139, %v657, 0.0
  %v697 = vadd.f32 %v695, %v696
  %v698 = vsel %vm139, %v658, 0.0
  %v699 = vadd.f32 %v697, %v698
  %v700 = vsel %vm139, %v659, 0.0
  %v701 = vadd.f32 %v699, %v700
  %v702 = vsel %vm139, %v660, 0.0
  %v703 = vadd.f32 %v701, %v702
  %v704 = vsel %vm139, %v661, 0.0
  %v705 = vadd.f32 %v703, %v704
  %v706 = vsel %vm139, %v662, 0.0
  %v707 = vadd.f32 %v705, %v706
  %v708 = vsel %vm139, %v663, 0.0
  %v709 = vadd.f32 %v707, %v708
  %v710 = vsel %vm139, %v664, 0.0
  %v711 = vadd.f32 %v709, %v710
  %v712 = vsel %vm139, %v665, 0.0
  %v713 = vadd.f32 %v711, %v712
  %v714 = vsel %vm139, %v666, 0.0
  %v715 = vadd.f32 %v713, %v714
  %v716 = vsel %vm139, %v667, 0.0
  %v717 = vadd.f32 %v715, %v716
  %v718 = vsel %vm139, %v668, 0.0
  %v719 = vadd.f32 %v717, %v718
  %v720 = vsel %vm139, %v669, 0.0
  %v721 = vadd.f32 %v719, %v720
  %v722 = vsel %vm139, %v670, 0.0
  %v723 = vadd.f32 %v721, %v722
  %v724 = vsel %vm139, %v671, 0.0
  %v725 = vadd.f32 %v723, %v724
  %v726 = vsel %vm139, %v672, 0.0
  %v727 = vadd.f32 %v725, %v726
  %v728 = vsel %vm139, %v673, 0.0
  %v729 = vadd.f32 %v727, %v728
  %v730 = vsel %vm139, %v674, 0.0
  %v731 = vadd.f32 %v729, %v730
  %v732 = vsel %vm139, %v675, 0.0
  %v733 = vadd.f32 %v731, %v732
  %v734 = vsel %vm139, %v676, 0.0
  %v735 = vadd.f32 %v733, %v734
  %v736 = vsel %vm139, %v677, 0.0
  %v737 = vadd.f32 %v735, %v736
  %v738 = vsel %vm139, %v678, 0.0
  %v739 = vadd.f32 %v737, %v738
  %v740 = vsel %vm139, %v679, 0.0
  %v741 = vadd.f32 %v739, %v740
  %v742 = vsel %vm139, %v680, 0.0
  %v743 = vadd.f32 %v741, %v742
  %v744 = vrot.slane %v743, 4
  %v745 = vadd.f32 %v743, %v744
  %v746 = vrot.slane %v745, 2
  %v747 = vadd.f32 %v745, %v746
  %v748 = vrot.slane %v747, 1
  %v749 = vadd.f32 %v747, %v748
  %750 = vst.msk [vmem:[%s2 + $0x4] sm:$0x1] %vm209, %v749
  %s751 = scalar_lea.vmem %s1, 1280
  %v752 = vld [vmem:[%s751] sm:$0xff]
  %v753 = vld [vmem:[%s751 + $0x8] sm:$0xff]
  %v754 = vld [vmem:[%s751 + $0x10] sm:$0xff]
  %v755 = vld [vmem:[%s751 + $0x18] sm:$0xff]
  %v756 = vld [vmem:[%s751 + $0x20] sm:$0xff]
  %v757 = vld [vmem:[%s751 + $0x28] sm:$0xff]
  %v758 = vld [vmem:[%s751 + $0x30] sm:$0xff]
  %v759 = vld [vmem:[%s751 + $0x38] sm:$0xff]
  %v760 = vld [vmem:[%s751 + $0x40] sm:$0xff]
  %v761 = vld [vmem:[%s751 + $0x48] sm:$0xff]
  %v762 = vld [vmem:[%s751 + $0x50] sm:$0xff]
  %v763 = vld [vmem:[%s751 + $0x58] sm:$0xff]
  %v764 = vld [vmem:[%s751 + $0x60] sm:$0xff]
  %v765 = vld [vmem:[%s751 + $0x68] sm:$0xff]
  %v766 = vld [vmem:[%s751 + $0x70] sm:$0xff]
  %v767 = vld [vmem:[%s751 + $0x78] sm:$0xff]
  %v768 = vld [vmem:[%s751 + $0x80] sm:$0xff]
  %v769 = vld [vmem:[%s751 + $0x88] sm:$0xff]
  %v770 = vld [vmem:[%s751 + $0x90] sm:$0xff]
  %v771 = vld [vmem:[%s751 + $0x98] sm:$0xff]
  %v772 = vld [vmem:[%s751 + $0xa0] sm:$0xff]
  %v773 = vld [vmem:[%s751 + $0xa8] sm:$0xff]
  %v774 = vld [vmem:[%s751 + $0xb0] sm:$0xff]
  %v775 = vld [vmem:[%s751 + $0xb8] sm:$0xff]
  %v776 = vld [vmem:[%s751 + $0xc0] sm:$0xff]
  %v777 = vld [vmem:[%s751 + $0xc8] sm:$0xff]
  %v778 = vld [vmem:[%s751 + $0xd0] sm:$0xff]
  %v779 = vld [vmem:[%s751 + $0xd8] sm:$0xff]
  %v780 = vld [vmem:[%s751 + $0xe0] sm:$0xff]
  %v781 = vld [vmem:[%s751 + $0xe8] sm:$0xff]
  %v782 = vld [vmem:[%s751 + $0xf0] sm:$0xff]
  %v783 = vld [vmem:[%s751 + $0xf8] sm:$0xff]
  %v784 = vmul.f32 %v752, %v43
  %v785 = vmul.f32 %v753, %v44
  %v786 = vmul.f32 %v754, %v45
  %v787 = vmul.f32 %v755, %v46
  %v788 = vmul.f32 %v756, %v47
  %v789 = vmul.f32 %v757, %v48
  %v790 = vmul.f32 %v758, %v49
  %v791 = vmul.f32 %v759, %v50
  %v792 = vmul.f32 %v760, %v51
  %v793 = vmul.f32 %v761, %v52
  %v794 = vmul.f32 %v762, %v53
  %v795 = vmul.f32 %v763, %v54
  %v796 = vmul.f32 %v764, %v55
  %v797 = vmul.f32 %v765, %v56
  %v798 = vmul.f32 %v766, %v57
  %v799 = vmul.f32 %v767, %v58
  %v800 = vmul.f32 %v768, %v59
  %v801 = vmul.f32 %v769, %v60
  %v802 = vmul.f32 %v770, %v61
  %v803 = vmul.f32 %v771, %v62
  %v804 = vmul.f32 %v772, %v63
  %v805 = vmul.f32 %v773, %v64
  %v806 = vmul.f32 %v774, %v65
  %v807 = vmul.f32 %v775, %v66
  %v808 = vmul.f32 %v776, %v67
  %v809 = vmul.f32 %v777, %v68
  %v810 = vmul.f32 %v778, %v69
  %v811 = vmul.f32 %v779, %v70
  %v812 = vmul.f32 %v780, %v71
  %v813 = vmul.f32 %v781, %v72
  %v814 = vmul.f32 %v782, %v73
  %v815 = vmul.f32 %v783, %v74
  %v816 = vsel %vm139, %v784, 0.0
  %v817 = vsel %vm139, %v785, 0.0
  %v818 = vadd.f32 %v816, %v817
  %v819 = vsel %vm139, %v786, 0.0
  %v820 = vadd.f32 %v818, %v819
  %v821 = vsel %vm139, %v787, 0.0
  %v822 = vadd.f32 %v820, %v821
  %v823 = vsel %vm139, %v788, 0.0
  %v824 = vadd.f32 %v822, %v823
  %v825 = vsel %vm139, %v789, 0.0
  %v826 = vadd.f32 %v824, %v825
  %v827 = vsel %vm139, %v790, 0.0
  %v828 = vadd.f32 %v826, %v827
  %v829 = vsel %vm139, %v791, 0.0
  %v830 = vadd.f32 %v828, %v829
  %v831 = vsel %vm139, %v792, 0.0
  %v832 = vadd.f32 %v830, %v831
  %v833 = vsel %vm139, %v793, 0.0
  %v834 = vadd.f32 %v832, %v833
  %v835 = vsel %vm139, %v794, 0.0
  %v836 = vadd.f32 %v834, %v835
  %v837 = vsel %vm139, %v795, 0.0
  %v838 = vadd.f32 %v836, %v837
  %v839 = vsel %vm139, %v796, 0.0
  %v840 = vadd.f32 %v838, %v839
  %v841 = vsel %vm139, %v797, 0.0
  %v842 = vadd.f32 %v840, %v841
  %v843 = vsel %vm139, %v798, 0.0
  %v844 = vadd.f32 %v842, %v843
  %v845 = vsel %vm139, %v799, 0.0
  %v846 = vadd.f32 %v844, %v845
  %v847 = vsel %vm139, %v800, 0.0
  %v848 = vadd.f32 %v846, %v847
  %v849 = vsel %vm139, %v801, 0.0
  %v850 = vadd.f32 %v848, %v849
  %v851 = vsel %vm139, %v802, 0.0
  %v852 = vadd.f32 %v850, %v851
  %v853 = vsel %vm139, %v803, 0.0
  %v854 = vadd.f32 %v852, %v853
  %v855 = vsel %vm139, %v804, 0.0
  %v856 = vadd.f32 %v854, %v855
  %v857 = vsel %vm139, %v805, 0.0
  %v858 = vadd.f32 %v856, %v857
  %v859 = vsel %vm139, %v806, 0.0
  %v860 = vadd.f32 %v858, %v859
  %v861 = vsel %vm139, %v807, 0.0
  %v862 = vadd.f32 %v860, %v861
  %v863 = vsel %vm139, %v808, 0.0
  %v864 = vadd.f32 %v862, %v863
  %v865 = vsel %vm139, %v809, 0.0
  %v866 = vadd.f32 %v864, %v865
  %v867 = vsel %vm139, %v810, 0.0
  %v868 = vadd.f32 %v866, %v867
  %v869 = vsel %vm139, %v811, 0.0
  %v870 = vadd.f32 %v868, %v869
  %v871 = vsel %vm139, %v812, 0.0
  %v872 = vadd.f32 %v870, %v871
  %v873 = vsel %vm139, %v813, 0.0
  %v874 = vadd.f32 %v872, %v873
  %v875 = vsel %vm139, %v814, 0.0
  %v876 = vadd.f32 %v874, %v875
  %v877 = vsel %vm139, %v815, 0.0
  %v878 = vadd.f32 %v876, %v877
  %v879 = vrot.slane %v878, 4
  %v880 = vadd.f32 %v878, %v879
  %v881 = vrot.slane %v880, 2
  %v882 = vadd.f32 %v880, %v881
  %v883 = vrot.slane %v882, 1
  %v884 = vadd.f32 %v882, %v883
  %885 = vst.msk [vmem:[%s2 + $0x5] sm:$0x1] %vm209, %v884
  %s886 = scalar_lea.vmem %s1, 1536
  %v887 = vld [vmem:[%s886] sm:$0xff]
  %v888 = vld [vmem:[%s886 + $0x8] sm:$0xff]
  %v889 = vld [vmem:[%s886 + $0x10] sm:$0xff]
  %v890 = vld [vmem:[%s886 + $0x18] sm:$0xff]
  %v891 = vld [vmem:[%s886 + $0x20] sm:$0xff]
  %v892 = vld [vmem:[%s886 + $0x28] sm:$0xff]
  %v893 = vld [vmem:[%s886 + $0x30] sm:$0xff]
  %v894 = vld [vmem:[%s886 + $0x38] sm:$0xff]
  %v895 = vld [vmem:[%s886 + $0x40] sm:$0xff]
  %v896 = vld [vmem:[%s886 + $0x48] sm:$0xff]
  %v897 = vld [vmem:[%s886 + $0x50] sm:$0xff]
  %v898 = vld [vmem:[%s886 + $0x58] sm:$0xff]
  %v899 = vld [vmem:[%s886 + $0x60] sm:$0xff]
  %v900 = vld [vmem:[%s886 + $0x68] sm:$0xff]
  %v901 = vld [vmem:[%s886 + $0x70] sm:$0xff]
  %v902 = vld [vmem:[%s886 + $0x78] sm:$0xff]
  %v903 = vld [vmem:[%s886 + $0x80] sm:$0xff]
  %v904 = vld [vmem:[%s886 + $0x88] sm:$0xff]
  %v905 = vld [vmem:[%s886 + $0x90] sm:$0xff]
  %v906 = vld [vmem:[%s886 + $0x98] sm:$0xff]
  %v907 = vld [vmem:[%s886 + $0xa0] sm:$0xff]
  %v908 = vld [vmem:[%s886 + $0xa8] sm:$0xff]
  %v909 = vld [vmem:[%s886 + $0xb0] sm:$0xff]
  %v910 = vld [vmem:[%s886 + $0xb8] sm:$0xff]
  %v911 = vld [vmem:[%s886 + $0xc0] sm:$0xff]
  %v912 = vld [vmem:[%s886 + $0xc8] sm:$0xff]
  %v913 = vld [vmem:[%s886 + $0xd0] sm:$0xff]
  %v914 = vld [vmem:[%s886 + $0xd8] sm:$0xff]
  %v915 = vld [vmem:[%s886 + $0xe0] sm:$0xff]
  %v916 = vld [vmem:[%s886 + $0xe8] sm:$0xff]
  %v917 = vld [vmem:[%s886 + $0xf0] sm:$0xff]
  %v918 = vld [vmem:[%s886 + $0xf8] sm:$0xff]
  %v919 = vmul.f32 %v887, %v43
  %v920 = vmul.f32 %v888, %v44
  %v921 = vmul.f32 %v889, %v45
  %v922 = vmul.f32 %v890, %v46
  %v923 = vmul.f32 %v891, %v47
  %v924 = vmul.f32 %v892, %v48
  %v925 = vmul.f32 %v893, %v49
  %v926 = vmul.f32 %v894, %v50
  %v927 = vmul.f32 %v895, %v51
  %v928 = vmul.f32 %v896, %v52
  %v929 = vmul.f32 %v897, %v53
  %v930 = vmul.f32 %v898, %v54
  %v931 = vmul.f32 %v899, %v55
  %v932 = vmul.f32 %v900, %v56
  %v933 = vmul.f32 %v901, %v57
  %v934 = vmul.f32 %v902, %v58
  %v935 = vmul.f32 %v903, %v59
  %v936 = vmul.f32 %v904, %v60
  %v937 = vmul.f32 %v905, %v61
  %v938 = vmul.f32 %v906, %v62
  %v939 = vmul.f32 %v907, %v63
  %v940 = vmul.f32 %v908, %v64
  %v941 = vmul.f32 %v909, %v65
  %v942 = vmul.f32 %v910, %v66
  %v943 = vmul.f32 %v911, %v67
  %v944 = vmul.f32 %v912, %v68
  %v945 = vmul.f32 %v913, %v69
  %v946 = vmul.f32 %v914, %v70
  %v947 = vmul.f32 %v915, %v71
  %v948 = vmul.f32 %v916, %v72
  %v949 = vmul.f32 %v917, %v73
  %v950 = vmul.f32 %v918, %v74
  %v951 = vsel %vm139, %v919, 0.0
  %v952 = vsel %vm139, %v920, 0.0
  %v953 = vadd.f32 %v951, %v952
  %v954 = vsel %vm139, %v921, 0.0
  %v955 = vadd.f32 %v953, %v954
  %v956 = vsel %vm139, %v922, 0.0
  %v957 = vadd.f32 %v955, %v956
  %v958 = vsel %vm139, %v923, 0.0
  %v959 = vadd.f32 %v957, %v958
  %v960 = vsel %vm139, %v924, 0.0
  %v961 = vadd.f32 %v959, %v960
  %v962 = vsel %vm139, %v925, 0.0
  %v963 = vadd.f32 %v961, %v962
  %v964 = vsel %vm139, %v926, 0.0
  %v965 = vadd.f32 %v963, %v964
  %v966 = vsel %vm139, %v927, 0.0
  %v967 = vadd.f32 %v965, %v966
  %v968 = vsel %vm139, %v928, 0.0
  %v969 = vadd.f32 %v967, %v968
  %v970 = vsel %vm139, %v929, 0.0
  %v971 = vadd.f32 %v969, %v970
  %v972 = vsel %vm139, %v930, 0.0
  %v973 = vadd.f32 %v971, %v972
  %v974 = vsel %vm139, %v931, 0.0
  %v975 = vadd.f32 %v973, %v974
  %v976 = vsel %vm139, %v932, 0.0
  %v977 = vadd.f32 %v975, %v976
  %v978 = vsel %vm139, %v933, 0.0
  %v979 = vadd.f32 %v977, %v978
  %v980 = vsel %vm139, %v934, 0.0
  %v981 = vadd.f32 %v979, %v980
  %v982 = vsel %vm139, %v935, 0.0
  %v983 = vadd.f32 %v981, %v982
  %v984 = vsel %vm139, %v936, 0.0
  %v985 = vadd.f32 %v983, %v984
  %v986 = vsel %vm139, %v937, 0.0
  %v987 = vadd.f32 %v985, %v986
  %v988 = vsel %vm139, %v938, 0.0
  %v989 = vadd.f32 %v987, %v988
  %v990 = vsel %vm139, %v939, 0.0
  %v991 = vadd.f32 %v989, %v990
  %v992 = vsel %vm139, %v940, 0.0
  %v993 = vadd.f32 %v991, %v992
  %v994 = vsel %vm139, %v941, 0.0
  %v995 = vadd.f32 %v993, %v994
  %v996 = vsel %vm139, %v942, 0.0
  %v997 = vadd.f32 %v995, %v996
  %v998 = vsel %vm139, %v943, 0.0
  %v999 = vadd.f32 %v997, %v998
  %v1000 = vsel %vm139, %v944, 0.0
  %v1001 = vadd.f32 %v999, %v1000
  %v1002 = vsel %vm139, %v945, 0.0
  %v1003 = vadd.f32 %v1001, %v1002
  %v1004 = vsel %vm139, %v946, 0.0
  %v1005 = vadd.f32 %v1003, %v1004
  %v1006 = vsel %vm139, %v947, 0.0
  %v1007 = vadd.f32 %v1005, %v1006
  %v1008 = vsel %vm139, %v948, 0.0
  %v1009 = vadd.f32 %v1007, %v1008
  %v1010 = vsel %vm139, %v949, 0.0
  %v1011 = vadd.f32 %v1009, %v1010
  %v1012 = vsel %vm139, %v950, 0.0
  %v1013 = vadd.f32 %v1011, %v1012
  %v1014 = vrot.slane %v1013, 4
  %v1015 = vadd.f32 %v1013, %v1014
  %v1016 = vrot.slane %v1015, 2
  %v1017 = vadd.f32 %v1015, %v1016
  %v1018 = vrot.slane %v1017, 1
  %v1019 = vadd.f32 %v1017, %v1018
  %1020 = vst.msk [vmem:[%s2 + $0x6] sm:$0x1] %vm209, %v1019
  %s1021 = scalar_lea.vmem %s1, 1792
  %v1022 = vld [vmem:[%s1021] sm:$0xff]
  %v1023 = vld [vmem:[%s1021 + $0x8] sm:$0xff]
  %v1024 = vld [vmem:[%s1021 + $0x10] sm:$0xff]
  %v1025 = vld [vmem:[%s1021 + $0x18] sm:$0xff]
  %v1026 = vld [vmem:[%s1021 + $0x20] sm:$0xff]
  %v1027 = vld [vmem:[%s1021 + $0x28] sm:$0xff]
  %v1028 = vld [vmem:[%s1021 + $0x30] sm:$0xff]
  %v1029 = vld [vmem:[%s1021 + $0x38] sm:$0xff]
  %v1030 = vld [vmem:[%s1021 + $0x40] sm:$0xff]
  %v1031 = vld [vmem:[%s1021 + $0x48] sm:$0xff]
  %v1032 = vld [vmem:[%s1021 + $0x50] sm:$0xff]
  %v1033 = vld [vmem:[%s1021 + $0x58] sm:$0xff]
  %v1034 = vld [vmem:[%s1021 + $0x60] sm:$0xff]
  %v1035 = vld [vmem:[%s1021 + $0x68] sm:$0xff]
  %v1036 = vld [vmem:[%s1021 + $0x70] sm:$0xff]
  %v1037 = vld [vmem:[%s1021 + $0x78] sm:$0xff]
  %v1038 = vld [vmem:[%s1021 + $0x80] sm:$0xff]
  %v1039 = vld [vmem:[%s1021 + $0x88] sm:$0xff]
  %v1040 = vld [vmem:[%s1021 + $0x90] sm:$0xff]
  %v1041 = vld [vmem:[%s1021 + $0x98] sm:$0xff]
  %v1042 = vld [vmem:[%s1021 + $0xa0] sm:$0xff]
  %v1043 = vld [vmem:[%s1021 + $0xa8] sm:$0xff]
  %v1044 = vld [vmem:[%s1021 + $0xb0] sm:$0xff]
  %v1045 = vld [vmem:[%s1021 + $0xb8] sm:$0xff]
  %v1046 = vld [vmem:[%s1021 + $0xc0] sm:$0xff]
  %v1047 = vld [vmem:[%s1021 + $0xc8] sm:$0xff]
  %v1048 = vld [vmem:[%s1021 + $0xd0] sm:$0xff]
  %v1049 = vld [vmem:[%s1021 + $0xd8] sm:$0xff]
  %v1050 = vld [vmem:[%s1021 + $0xe0] sm:$0xff]
  %v1051 = vld [vmem:[%s1021 + $0xe8] sm:$0xff]
  %v1052 = vld [vmem:[%s1021 + $0xf0] sm:$0xff]
  %v1053 = vld [vmem:[%s1021 + $0xf8] sm:$0xff]
  %v1054 = vmul.f32 %v1022, %v43
  %v1055 = vmul.f32 %v1023, %v44
  %v1056 = vmul.f32 %v1024, %v45
  %v1057 = vmul.f32 %v1025, %v46
  %v1058 = vmul.f32 %v1026, %v47
  %v1059 = vmul.f32 %v1027, %v48
  %v1060 = vmul.f32 %v1028, %v49
  %v1061 = vmul.f32 %v1029, %v50
  %v1062 = vmul.f32 %v1030, %v51
  %v1063 = vmul.f32 %v1031, %v52
  %v1064 = vmul.f32 %v1032, %v53
  %v1065 = vmul.f32 %v1033, %v54
  %v1066 = vmul.f32 %v1034, %v55
  %v1067 = vmul.f32 %v1035, %v56
  %v1068 = vmul.f32 %v1036, %v57
  %v1069 = vmul.f32 %v1037, %v58
  %v1070 = vmul.f32 %v1038, %v59
  %v1071 = vmul.f32 %v1039, %v60
  %v1072 = vmul.f32 %v1040, %v61
  %v1073 = vmul.f32 %v1041, %v62
  %v1074 = vmul.f32 %v1042, %v63
  %v1075 = vmul.f32 %v1043, %v64
  %v1076 = vmul.f32 %v1044, %v65
  %v1077 = vmul.f32 %v1045, %v66
  %v1078 = vmul.f32 %v1046, %v67
  %v1079 = vmul.f32 %v1047, %v68
  %v1080 = vmul.f32 %v1048, %v69
  %v1081 = vmul.f32 %v1049, %v70
  %v1082 = vmul.f32 %v1050, %v71
  %v1083 = vmul.f32 %v1051, %v72
  %v1084 = vmul.f32 %v1052, %v73
  %v1085 = vmul.f32 %v1053, %v74
  %v1086 = vsel %vm139, %v1054, 0.0
  %v1087 = vsel %vm139, %v1055, 0.0
  %v1088 = vadd.f32 %v1086, %v1087
  %v1089 = vsel %vm139, %v1056, 0.0
  %v1090 = vadd.f32 %v1088, %v1089
  %v1091 = vsel %vm139, %v1057, 0.0
  %v1092 = vadd.f32 %v1090, %v1091
  %v1093 = vsel %vm139, %v1058, 0.0
  %v1094 = vadd.f32 %v1092, %v1093
  %v1095 = vsel %vm139, %v1059, 0.0
  %v1096 = vadd.f32 %v1094, %v1095
  %v1097 = vsel %vm139, %v1060, 0.0
  %v1098 = vadd.f32 %v1096, %v1097
  %v1099 = vsel %vm139, %v1061, 0.0
  %v1100 = vadd.f32 %v1098, %v1099
  %v1101 = vsel %vm139, %v1062, 0.0
  %v1102 = vadd.f32 %v1100, %v1101
  %v1103 = vsel %vm139, %v1063, 0.0
  %v1104 = vadd.f32 %v1102, %v1103
  %v1105 = vsel %vm139, %v1064, 0.0
  %v1106 = vadd.f32 %v1104, %v1105
  %v1107 = vsel %vm139, %v1065, 0.0
  %v1108 = vadd.f32 %v1106, %v1107
  %v1109 = vsel %vm139, %v1066, 0.0
  %v1110 = vadd.f32 %v1108, %v1109
  %v1111 = vsel %vm139, %v1067, 0.0
  %v1112 = vadd.f32 %v1110, %v1111
  %v1113 = vsel %vm139, %v1068, 0.0
  %v1114 = vadd.f32 %v1112, %v1113
  %v1115 = vsel %vm139, %v1069, 0.0
  %v1116 = vadd.f32 %v1114, %v1115
  %v1117 = vsel %vm139, %v1070, 0.0
  %v1118 = vadd.f32 %v1116, %v1117
  %v1119 = vsel %vm139, %v1071, 0.0
  %v1120 = vadd.f32 %v1118, %v1119
  %v1121 = vsel %vm139, %v1072, 0.0
  %v1122 = vadd.f32 %v1120, %v1121
  %v1123 = vsel %vm139, %v1073, 0.0
  %v1124 = vadd.f32 %v1122, %v1123
  %v1125 = vsel %vm139, %v1074, 0.0
  %v1126 = vadd.f32 %v1124, %v1125
  %v1127 = vsel %vm139, %v1075, 0.0
  %v1128 = vadd.f32 %v1126, %v1127
  %v1129 = vsel %vm139, %v1076, 0.0
  %v1130 = vadd.f32 %v1128, %v1129
  %v1131 = vsel %vm139, %v1077, 0.0
  %v1132 = vadd.f32 %v1130, %v1131
  %v1133 = vsel %vm139, %v1078, 0.0
  %v1134 = vadd.f32 %v1132, %v1133
  %v1135 = vsel %vm139, %v1079, 0.0
  %v1136 = vadd.f32 %v1134, %v1135
  %v1137 = vsel %vm139, %v1080, 0.0
  %v1138 = vadd.f32 %v1136, %v1137
  %v1139 = vsel %vm139, %v1081, 0.0
  %v1140 = vadd.f32 %v1138, %v1139
  %v1141 = vsel %vm139, %v1082, 0.0
  %v1142 = vadd.f32 %v1140, %v1141
  %v1143 = vsel %vm139, %v1083, 0.0
  %v1144 = vadd.f32 %v1142, %v1143
  %v1145 = vsel %vm139, %v1084, 0.0
  %v1146 = vadd.f32 %v1144, %v1145
  %v1147 = vsel %vm139, %v1085, 0.0
  %v1148 = vadd.f32 %v1146, %v1147
  %v1149 = vrot.slane %v1148, 4
  %v1150 = vadd.f32 %v1148, %v1149
  %v1151 = vrot.slane %v1150, 2
  %v1152 = vadd.f32 %v1150, %v1151
  %v1153 = vrot.slane %v1152, 1
  %v1154 = vadd.f32 %v1152, %v1153
  %1155 = vst.msk [vmem:[%s2 + $0x7] sm:$0x1] %vm209, %v1154
  %s1156 = scalar_lea.vmem %s1, 2048
  %v1157 = vld [vmem:[%s1156] sm:$0xff]
  %v1158 = vld [vmem:[%s1156 + $0x8] sm:$0xff]
  %v1159 = vld [vmem:[%s1156 + $0x10] sm:$0xff]
  %v1160 = vld [vmem:[%s1156 + $0x18] sm:$0xff]
  %v1161 = vld [vmem:[%s1156 + $0x20] sm:$0xff]
  %v1162 = vld [vmem:[%s1156 + $0x28] sm:$0xff]
  %v1163 = vld [vmem:[%s1156 + $0x30] sm:$0xff]
  %v1164 = vld [vmem:[%s1156 + $0x38] sm:$0xff]
  %v1165 = vld [vmem:[%s1156 + $0x40] sm:$0xff]
  %v1166 = vld [vmem:[%s1156 + $0x48] sm:$0xff]
  %v1167 = vld [vmem:[%s1156 + $0x50] sm:$0xff]
  %v1168 = vld [vmem:[%s1156 + $0x58] sm:$0xff]
  %v1169 = vld [vmem:[%s1156 + $0x60] sm:$0xff]
  %v1170 = vld [vmem:[%s1156 + $0x68] sm:$0xff]
  %v1171 = vld [vmem:[%s1156 + $0x70] sm:$0xff]
  %v1172 = vld [vmem:[%s1156 + $0x78] sm:$0xff]
  %v1173 = vld [vmem:[%s1156 + $0x80] sm:$0xff]
  %v1174 = vld [vmem:[%s1156 + $0x88] sm:$0xff]
  %v1175 = vld [vmem:[%s1156 + $0x90] sm:$0xff]
  %v1176 = vld [vmem:[%s1156 + $0x98] sm:$0xff]
  %v1177 = vld [vmem:[%s1156 + $0xa0] sm:$0xff]
  %v1178 = vld [vmem:[%s1156 + $0xa8] sm:$0xff]
  %v1179 = vld [vmem:[%s1156 + $0xb0] sm:$0xff]
  %v1180 = vld [vmem:[%s1156 + $0xb8] sm:$0xff]
  %v1181 = vld [vmem:[%s1156 + $0xc0] sm:$0xff]
  %v1182 = vld [vmem:[%s1156 + $0xc8] sm:$0xff]
  %v1183 = vld [vmem:[%s1156 + $0xd0] sm:$0xff]
  %v1184 = vld [vmem:[%s1156 + $0xd8] sm:$0xff]
  %v1185 = vld [vmem:[%s1156 + $0xe0] sm:$0xff]
  %v1186 = vld [vmem:[%s1156 + $0xe8] sm:$0xff]
  %v1187 = vld [vmem:[%s1156 + $0xf0] sm:$0xff]
  %v1188 = vld [vmem:[%s1156 + $0xf8] sm:$0xff]
  %v1189 = vmul.f32 %v1157, %v43
  %v1190 = vmul.f32 %v1158, %v44
  %v1191 = vmul.f32 %v1159, %v45
  %v1192 = vmul.f32 %v1160, %v46
  %v1193 = vmul.f32 %v1161, %v47
  %v1194 = vmul.f32 %v1162, %v48
  %v1195 = vmul.f32 %v1163, %v49
  %v1196 = vmul.f32 %v1164, %v50
  %v1197 = vmul.f32 %v1165, %v51
  %v1198 = vmul.f32 %v1166, %v52
  %v1199 = vmul.f32 %v1167, %v53
  %v1200 = vmul.f32 %v1168, %v54
  %v1201 = vmul.f32 %v1169, %v55
  %v1202 = vmul.f32 %v1170, %v56
  %v1203 = vmul.f32 %v1171, %v57
  %v1204 = vmul.f32 %v1172, %v58
  %v1205 = vmul.f32 %v1173, %v59
  %v1206 = vmul.f32 %v1174, %v60
  %v1207 = vmul.f32 %v1175, %v61
  %v1208 = vmul.f32 %v1176, %v62
  %v1209 = vmul.f32 %v1177, %v63
  %v1210 = vmul.f32 %v1178, %v64
  %v1211 = vmul.f32 %v1179, %v65
  %v1212 = vmul.f32 %v1180, %v66
  %v1213 = vmul.f32 %v1181, %v67
  %v1214 = vmul.f32 %v1182, %v68
  %v1215 = vmul.f32 %v1183, %v69
  %v1216 = vmul.f32 %v1184, %v70
  %v1217 = vmul.f32 %v1185, %v71
  %v1218 = vmul.f32 %v1186, %v72
  %v1219 = vmul.f32 %v1187, %v73
  %v1220 = vmul.f32 %v1188, %v74
  %v1221 = vsel %vm139, %v1189, 0.0
  %v1222 = vsel %vm139, %v1190, 0.0
  %v1223 = vadd.f32 %v1221, %v1222
  %v1224 = vsel %vm139, %v1191, 0.0
  %v1225 = vadd.f32 %v1223, %v1224
  %v1226 = vsel %vm139, %v1192, 0.0
  %v1227 = vadd.f32 %v1225, %v1226
  %v1228 = vsel %vm139, %v1193, 0.0
  %v1229 = vadd.f32 %v1227, %v1228
  %v1230 = vsel %vm139, %v1194, 0.0
  %v1231 = vadd.f32 %v1229, %v1230
  %v1232 = vsel %vm139, %v1195, 0.0
  %v1233 = vadd.f32 %v1231, %v1232
  %v1234 = vsel %vm139, %v1196, 0.0
  %v1235 = vadd.f32 %v1233, %v1234
  %v1236 = vsel %vm139, %v1197, 0.0
  %v1237 = vadd.f32 %v1235, %v1236
  %v1238 = vsel %vm139, %v1198, 0.0
  %v1239 = vadd.f32 %v1237, %v1238
  %v1240 = vsel %vm139, %v1199, 0.0
  %v1241 = vadd.f32 %v1239, %v1240
  %v1242 = vsel %vm139, %v1200, 0.0
  %v1243 = vadd.f32 %v1241, %v1242
  %v1244 = vsel %vm139, %v1201, 0.0
  %v1245 = vadd.f32 %v1243, %v1244
  %v1246 = vsel %vm139, %v1202, 0.0
  %v1247 = vadd.f32 %v1245, %v1246
  %v1248 = vsel %vm139, %v1203, 0.0
  %v1249 = vadd.f32 %v1247, %v1248
  %v1250 = vsel %vm139, %v1204, 0.0
  %v1251 = vadd.f32 %v1249, %v1250
  %v1252 = vsel %vm139, %v1205, 0.0
  %v1253 = vadd.f32 %v1251, %v1252
  %v1254 = vsel %vm139, %v1206, 0.0
  %v1255 = vadd.f32 %v1253, %v1254
  %v1256 = vsel %vm139, %v1207, 0.0
  %v1257 = vadd.f32 %v1255, %v1256
  %v1258 = vsel %vm139, %v1208, 0.0
  %v1259 = vadd.f32 %v1257, %v1258
  %v1260 = vsel %vm139, %v1209, 0.0
  %v1261 = vadd.f32 %v1259, %v1260
  %v1262 = vsel %vm139, %v1210, 0.0
  %v1263 = vadd.f32 %v1261, %v1262
  %v1264 = vsel %vm139, %v1211, 0.0
  %v1265 = vadd.f32 %v1263, %v1264
  %v1266 = vsel %vm139, %v1212, 0.0
  %v1267 = vadd.f32 %v1265, %v1266
  %v1268 = vsel %vm139, %v1213, 0.0
  %v1269 = vadd.f32 %v1267, %v1268
  %v1270 = vsel %vm139, %v1214, 0.0
  %v1271 = vadd.f32 %v1269, %v1270
  %v1272 = vsel %vm139, %v1215, 0.0
  %v1273 = vadd.f32 %v1271, %v1272
  %v1274 = vsel %vm139, %v1216, 0.0
  %v1275 = vadd.f32 %v1273, %v1274
  %v1276 = vsel %vm139, %v1217, 0.0
  %v1277 = vadd.f32 %v1275, %v1276
  %v1278 = vsel %vm139, %v1218, 0.0
  %v1279 = vadd.f32 %v1277, %v1278
  %v1280 = vsel %vm139, %v1219, 0.0
  %v1281 = vadd.f32 %v1279, %v1280
  %v1282 = vsel %vm139, %v1220, 0.0
  %v1283 = vadd.f32 %v1281, %v1282
  %v1284 = vrot.slane %v1283, 4
  %v1285 = vadd.f32 %v1283, %v1284
  %v1286 = vrot.slane %v1285, 2
  %v1287 = vadd.f32 %v1285, %v1286
  %v1288 = vrot.slane %v1287, 1
  %v1289 = vadd.f32 %v1287, %v1288
  %1290 = vst.msk [vmem:[%s2 + $0x8] sm:$0x1] %vm209, %v1289
  // Predicated region
  $region10: #{dip_forward.76} parent=0 // pred_check
    _
  $region11: #{dip_forward.76} parent=0 // pred_check_branch
    %1292 = sbr.rel (0) target = $region13
  $region12: #{dip_forward.76} parent=0 // pred_region
    _
  $region13: #{dip_forward.76} parent=0 // pred_fallthru
    _
  // Predicated region
  $region14: #{dip_forward.76} parent=0 // pred_check
    _
  $region15: #{dip_forward.76} parent=0 // pred_check_branch
    %1294 = sbr.rel (0) target = $region17
  $region16: #{dip_forward.76} parent=0 // pred_region
    _
  $region17: #{dip_forward.76} parent=0 // pred_fallthru
    _

// kernel: dip_forward.79
$region0: #{dip_forward.79}
  #allocation0 [shape = 'u32[]', space=smem, size = 0x4, offset = 0x4, fixed_abs, tag = 'smem constant byte address 0x4 - core index']
  #allocation1 [shape = 'u32[144,128]{1,0:T(1,128)}', space=vmem, size = 0x12000, scoped, tag = 'internal scratch']
  #allocation2 [shape = 'f32[16,256]{1,0:T(8,128)}', space=vmem, size = 0x4000, scoped, tag = 'scratch operand']
  %s0 = inlined_call_operand.vmem [shape: bf16[16,384], index: 0, kind: input, shape index: {}]
  %s1 = inlined_call_operand.vmem [shape: bf16[384,256], index: 1, kind: input, shape index: {}]
  %s2 = inlined_call_operand.vmem [shape: f32[1,256], index: 2, kind: input, shape index: {}]
  %s3 = inlined_call_operand.vmem [shape: f32[16,256], index: 3, kind: output, shape index: {}]
  %s4 = sld [smem:[#allocation0]]
  $region30: #{dip_forward.79} parent=0
    _
  %s6 = ssub.s32 1, %s4
  %s7 = scalar_select 0, %s6, %s4
  // Predicated region
  $region2: #{dip_forward.79} parent=0 // pred_check
    _
  $region3: #{dip_forward.79} parent=0 // pred_check_branch
    %9 = sbr.rel (0) target = $region5
  $region4: #{dip_forward.79} parent=0 // pred_region
    _
  $region5: #{dip_forward.79} parent=0 // pred_fallthru
    _
  // Predicated region
  $region6: #{dip_forward.79} parent=0 // pred_check
    _
  $region7: #{dip_forward.79} parent=0 // pred_check_branch
    %11 = sbr.rel (0) target = $region9
  $region8: #{dip_forward.79} parent=0 // pred_region
    _
  $region9: #{dip_forward.79} parent=0 // pred_fallthru
    _
  // Predicated region
  $region10: #{dip_forward.79} parent=0 // pred_check
    _
  $region11: #{dip_forward.79} parent=0 // pred_check_branch
    %13 = sbr.rel (0) target = $region13
  $region12: #{dip_forward.79} parent=0 // pred_region
    _
  $region13: #{dip_forward.79} parent=0 // pred_fallthru
    _
  %p15 = scmp.eq.s32.totalorder 0, 0
  // Predicated region
  $region14: #{dip_forward.79} parent=0 // pred_check
    %p16 = pneg %p15
  $region15: #{dip_forward.79} parent=0 // pred_check_branch
    %18 = sbr.rel (%p16) target = $region17
  $region16: #{dip_forward.79} parent=0 // pred_region
    %19 = vst [vmem:[#allocation2] sm:$0xff] 0.0
    %20 = vst [vmem:[#allocation2 + $0x8] sm:$0xff] 0.0
    %21 = vst [vmem:[#allocation2 + $0x10] sm:$0xff] 0.0
    %22 = vst [vmem:[#allocation2 + $0x18] sm:$0xff] 0.0
  $region17: #{dip_forward.79} parent=0 // pred_fallthru
    _
  %v23 = vld [vmem:[#allocation2] sm:$0xff]
  %v24 = vld [vmem:[#allocation2 + $0x8] sm:$0xff]
  %v25 = vld [vmem:[#allocation2 + $0x10] sm:$0xff]
  %v26 = vld [vmem:[#allocation2 + $0x18] sm:$0xff]
  %v27 = vld [vmem:[%s0] sm:$0xff]
  %v28 = vld [vmem:[%s0 + $0x8] sm:$0xf]
  %v29 = vld [vmem:[%s0 + $0xc] sm:$0xff]
  %v30 = vld [vmem:[%s0 + $0x14] sm:$0xf]
  %v31 = vld [vmem:[%s1] sm:$0xff]
  %v32 = vld [vmem:[%s1 + $0x8] sm:$0xff]
  %v33 = vld [vmem:[%s1 + $0x10] sm:$0xff]
  %v34 = vld [vmem:[%s1 + $0x18] sm:$0xff]
  %v35 = vld [vmem:[%s1 + $0x20] sm:$0xff]
  %v36 = vld [vmem:[%s1 + $0x28] sm:$0xff]
  %v37 = vld [vmem:[%s1 + $0x30] sm:$0xff]
  %v38 = vld [vmem:[%s1 + $0x38] sm:$0xff]
  %v39 = vld [vmem:[%s1 + $0x40] sm:$0xff]
  %v40 = vld [vmem:[%s1 + $0x48] sm:$0xff]
  %v41 = vld [vmem:[%s1 + $0x50] sm:$0xff]
  %v42 = vld [vmem:[%s1 + $0x58] sm:$0xff]
  %v43 = vld [vmem:[%s1 + $0x60] sm:$0xff]
  %v44 = vld [vmem:[%s1 + $0x68] sm:$0xff]
  %v45 = vld [vmem:[%s1 + $0x70] sm:$0xff]
  %v46 = vld [vmem:[%s1 + $0x78] sm:$0xff]
  %v47 = vld [vmem:[%s1 + $0x80] sm:$0xff]
  %v48 = vld [vmem:[%s1 + $0x88] sm:$0xff]
  %v49 = vld [vmem:[%s1 + $0x90] sm:$0xff]
  %v50 = vld [vmem:[%s1 + $0x98] sm:$0xff]
  %v51 = vld [vmem:[%s1 + $0xa0] sm:$0xff]
  %v52 = vld [vmem:[%s1 + $0xa8] sm:$0xff]
  %v53 = vld [vmem:[%s1 + $0xb0] sm:$0xff]
  %v54 = vld [vmem:[%s1 + $0xb8] sm:$0xff]
  %v55 = vld [vmem:[%s1 + $0xc0] sm:$0xff]
  %v56 = vld [vmem:[%s1 + $0xc8] sm:$0xff]
  %v57 = vld [vmem:[%s1 + $0xd0] sm:$0xff]
  %v58 = vld [vmem:[%s1 + $0xd8] sm:$0xff]
  %v59 = vld [vmem:[%s1 + $0xe0] sm:$0xff]
  %v60 = vld [vmem:[%s1 + $0xe8] sm:$0xff]
  %v61 = vld [vmem:[%s1 + $0xf0] sm:$0xff]
  %v62 = vld [vmem:[%s1 + $0xf8] sm:$0xff]
  %v63 = vld [vmem:[%s1 + $0x100] sm:$0xff]
  %v64 = vld [vmem:[%s1 + $0x108] sm:$0xff]
  %v65 = vld [vmem:[%s1 + $0x110] sm:$0xff]
  %v66 = vld [vmem:[%s1 + $0x118] sm:$0xff]
  %v67 = vld [vmem:[%s1 + $0x120] sm:$0xff]
  %v68 = vld [vmem:[%s1 + $0x128] sm:$0xff]
  %v69 = vld [vmem:[%s1 + $0x130] sm:$0xff]
  %v70 = vld [vmem:[%s1 + $0x138] sm:$0xff]
  %v71 = vld [vmem:[%s1 + $0x140] sm:$0xff]
  %v72 = vld [vmem:[%s1 + $0x148] sm:$0xff]
  %v73 = vld [vmem:[%s1 + $0x150] sm:$0xff]
  %v74 = vld [vmem:[%s1 + $0x158] sm:$0xff]
  %v75 = vld [vmem:[%s1 + $0x160] sm:$0xff]
  %v76 = vld [vmem:[%s1 + $0x168] sm:$0xff]
  %v77 = vld [vmem:[%s1 + $0x170] sm:$0xff]
  %v78 = vld [vmem:[%s1 + $0x178] sm:$0xff]
  %v83 = vunpack.c.l.b16 %v27
  %v84 = vunpack.c.h.b16 %v27
  %v85 = vunpack.c.l.b16 %v28
  %v86 = vunpack.c.l.b16 %v29
  %v87 = vunpack.c.h.b16 %v29
  %v88 = vunpack.c.l.b16 %v30
  %v89 = vpack.c.b16 %v86, %v83
  %v90 = vpack.c.b16 %v87, %v84
  %v91 = vpack.c.b16 %v88, %v85
  %v143 = vunpack.c.l.b16 %v31
  %v144 = vunpack.c.h.b16 %v31
  %v145 = vunpack.c.l.b16 %v32
  %v146 = vunpack.c.h.b16 %v32
  %v147 = vunpack.c.l.b16 %v33
  %v148 = vunpack.c.h.b16 %v33
  %v149 = vunpack.c.l.b16 %v34
  %v150 = vunpack.c.h.b16 %v34
  %v151 = vunpack.c.l.b16 %v35
  %v152 = vunpack.c.h.b16 %v35
  %v153 = vunpack.c.l.b16 %v36
  %v154 = vunpack.c.h.b16 %v36
  %v155 = vunpack.c.l.b16 %v37
  %v156 = vunpack.c.h.b16 %v37
  %v157 = vunpack.c.l.b16 %v38
  %v158 = vunpack.c.h.b16 %v38
  %v159 = vunpack.c.l.b16 %v39
  %v160 = vunpack.c.h.b16 %v39
  %v161 = vunpack.c.l.b16 %v40
  %v162 = vunpack.c.h.b16 %v40
  %v163 = vunpack.c.l.b16 %v41
  %v164 = vunpack.c.h.b16 %v41
  %v165 = vunpack.c.l.b16 %v42
  %v166 = vunpack.c.h.b16 %v42
  %v167 = vunpack.c.l.b16 %v43
  %v168 = vunpack.c.h.b16 %v43
  %v169 = vunpack.c.l.b16 %v44
  %v170 = vunpack.c.h.b16 %v44
  %v171 = vunpack.c.l.b16 %v45
  %v172 = vunpack.c.h.b16 %v45
  %v173 = vunpack.c.l.b16 %v46
  %v174 = vunpack.c.h.b16 %v46
  %v175 = vunpack.c.l.b16 %v47
  %v176 = vunpack.c.h.b16 %v47
  %v177 = vunpack.c.l.b16 %v48
  %v178 = vunpack.c.h.b16 %v48
  %v179 = vunpack.c.l.b16 %v49
  %v180 = vunpack.c.h.b16 %v49
  %v181 = vunpack.c.l.b16 %v50
  %v182 = vunpack.c.h.b16 %v50
  %v183 = vunpack.c.l.b16 %v51
  %v184 = vunpack.c.h.b16 %v51
  %v185 = vunpack.c.l.b16 %v52
  %v186 = vunpack.c.h.b16 %v52
  %v187 = vunpack.c.l.b16 %v53
  %v188 = vunpack.c.h.b16 %v53
  %v189 = vunpack.c.l.b16 %v54
  %v190 = vunpack.c.h.b16 %v54
  %v191 = vunpack.c.l.b16 %v55
  %v192 = vunpack.c.h.b16 %v55
  %v193 = vunpack.c.l.b16 %v56
  %v194 = vunpack.c.h.b16 %v56
  %v195 = vunpack.c.l.b16 %v57
  %v196 = vunpack.c.h.b16 %v57
  %v197 = vunpack.c.l.b16 %v58
  %v198 = vunpack.c.h.b16 %v58
  %v199 = vunpack.c.l.b16 %v59
  %v200 = vunpack.c.h.b16 %v59
  %v201 = vunpack.c.l.b16 %v60
  %v202 = vunpack.c.h.b16 %v60
  %v203 = vunpack.c.l.b16 %v61
  %v204 = vunpack.c.h.b16 %v61
  %v205 = vunpack.c.l.b16 %v62
  %v206 = vunpack.c.h.b16 %v62
  %v207 = vunpack.c.l.b16 %v63
  %v208 = vunpack.c.h.b16 %v63
  %v209 = vunpack.c.l.b16 %v64
  %v210 = vunpack.c.h.b16 %v64
  %v211 = vunpack.c.l.b16 %v65
  %v212 = vunpack.c.h.b16 %v65
  %v213 = vunpack.c.l.b16 %v66
  %v214 = vunpack.c.h.b16 %v66
  %v215 = vunpack.c.l.b16 %v67
  %v216 = vunpack.c.h.b16 %v67
  %v217 = vunpack.c.l.b16 %v68
  %v218 = vunpack.c.h.b16 %v68
  %v219 = vunpack.c.l.b16 %v69
  %v220 = vunpack.c.h.b16 %v69
  %v221 = vunpack.c.l.b16 %v70
  %v222 = vunpack.c.h.b16 %v70
  %v223 = vunpack.c.l.b16 %v71
  %v224 = vunpack.c.h.b16 %v71
  %v225 = vunpack.c.l.b16 %v72
  %v226 = vunpack.c.h.b16 %v72
  %v227 = vunpack.c.l.b16 %v73
  %v228 = vunpack.c.h.b16 %v73
  %v229 = vunpack.c.l.b16 %v74
  %v230 = vunpack.c.h.b16 %v74
  %v231 = vunpack.c.l.b16 %v75
  %v232 = vunpack.c.h.b16 %v75
  %v233 = vunpack.c.l.b16 %v76
  %v234 = vunpack.c.h.b16 %v76
  %v235 = vunpack.c.l.b16 %v77
  %v236 = vunpack.c.h.b16 %v77
  %v237 = vunpack.c.l.b16 %v78
  %v238 = vunpack.c.h.b16 %v78
  %v239 = vpack.c.b16 %v145, %v143
  %v240 = vpack.c.b16 %v146, %v144
  %v241 = vpack.c.b16 %v149, %v147
  %v242 = vpack.c.b16 %v150, %v148
  %v243 = vpack.c.b16 %v153, %v151
  %v244 = vpack.c.b16 %v154, %v152
  %v245 = vpack.c.b16 %v157, %v155
  %v246 = vpack.c.b16 %v158, %v156
  %v247 = vpack.c.b16 %v161, %v159
  %v248 = vpack.c.b16 %v162, %v160
  %v249 = vpack.c.b16 %v165, %v163
  %v250 = vpack.c.b16 %v166, %v164
  %v251 = vpack.c.b16 %v169, %v167
  %v252 = vpack.c.b16 %v170, %v168
  %v253 = vpack.c.b16 %v173, %v171
  %v254 = vpack.c.b16 %v174, %v172
  %v255 = vpack.c.b16 %v177, %v175
  %v256 = vpack.c.b16 %v178, %v176
  %v257 = vpack.c.b16 %v181, %v179
  %v258 = vpack.c.b16 %v182, %v180
  %v259 = vpack.c.b16 %v185, %v183
  %v260 = vpack.c.b16 %v186, %v184
  %v261 = vpack.c.b16 %v189, %v187
  %v262 = vpack.c.b16 %v190, %v188
  %v263 = vpack.c.b16 %v193, %v191
  %v264 = vpack.c.b16 %v194, %v192
  %v265 = vpack.c.b16 %v197, %v195
  %v266 = vpack.c.b16 %v198, %v196
  %v267 = vpack.c.b16 %v201, %v199
  %v268 = vpack.c.b16 %v202, %v200
  %v269 = vpack.c.b16 %v205, %v203
  %v270 = vpack.c.b16 %v206, %v204
  %v271 = vpack.c.b16 %v209, %v207
  %v272 = vpack.c.b16 %v210, %v208
  %v273 = vpack.c.b16 %v213, %v211
  %v274 = vpack.c.b16 %v214, %v212
  %v275 = vpack.c.b16 %v217, %v215
  %v276 = vpack.c.b16 %v218, %v216
  %v277 = vpack.c.b16 %v221, %v219
  %v278 = vpack.c.b16 %v222, %v220
  %v279 = vpack.c.b16 %v225, %v223
  %v280 = vpack.c.b16 %v226, %v224
  %v281 = vpack.c.b16 %v229, %v227
  %v282 = vpack.c.b16 %v230, %v228
  %v283 = vpack.c.b16 %v233, %v231
  %v284 = vpack.c.b16 %v234, %v232
  %v285 = vpack.c.b16 %v237, %v235
  %v286 = vpack.c.b16 %v238, %v236
  %335 = vmatprep.subr.bf16.mxu0 %v240
  %336 = vmatpush1.bf16.msra.mxu0 %v239
  %337 = vmatprep.subr.bf16.mxu0 %v242
  %338 = vmatpush1.bf16.msra.mxu0 %v241
  %339 = vmatprep.subr.bf16.mxu0 %v244
  %340 = vmatpush1.bf16.msra.mxu0 %v243
  %341 = vmatprep.subr.bf16.mxu0 %v246
  %342 = vmatpush1.bf16.msra.mxu0 %v245
  %343 = vmatprep.subr.bf16.mxu0 %v248
  %344 = vmatpush1.bf16.msra.mxu0 %v247
  %345 = vmatprep.subr.bf16.mxu0 %v250
  %346 = vmatpush1.bf16.msra.mxu0 %v249
  %347 = vmatprep.subr.bf16.mxu0 %v252
  %348 = vmatpush1.bf16.msra.mxu0 %v251
  %349 = vmatprep.subr.bf16.mxu0 %v254
  %350 = vmatpush1.bf16.msra.mxu0 %v253
  %351 = vmatprep.subr.bf16.mxu0 %v256
  %352 = vmatpush1.bf16.msra.mxu0 %v255
  %353 = vmatprep.subr.bf16.mxu0 %v258
  %354 = vmatpush1.bf16.msra.mxu0 %v257
  %355 = vmatprep.subr.bf16.mxu0 %v260
  %356 = vmatpush1.bf16.msra.mxu0 %v259
  %357 = vmatprep.subr.bf16.mxu0 %v262
  %358 = vmatpush1.bf16.msra.mxu0 %v261
  %359 = vmatprep.subr.bf16.mxu0 %v264
  %360 = vmatpush1.bf16.msra.mxu0 %v263
  %361 = vmatprep.subr.bf16.mxu0 %v266
  %362 = vmatpush1.bf16.msra.mxu0 %v265
  %363 = vmatprep.subr.bf16.mxu0 %v268
  %364 = vmatpush1.bf16.msra.mxu0 %v267
  %365 = vmatprep.subr.bf16.mxu0 %v270
  %366 = vmatpush1.bf16.msra.mxu0 %v269
  %367 = vmatprep.mubr.bf16.mxu0 %v90
  %368 = vmatmul.mubr.bf16.gmra.mrb[0].mxu0 %v89
  %v369 = vpop.f32.mrb[0].mxu0
  %v370 = vadd.f32 0.0, %v369
  %v371 = vpop.f32.mrb[0].mxu0
  %v372 = vadd.f32 0.0, %v371
  %v373 = vpop.f32.mrb[0].mxu0
  %v374 = vadd.f32 0.0, %v373
  %v375 = vpop.f32.mrb[0].mxu0
  %v376 = vadd.f32 0.0, %v375
  %377 = vdwg.mxu0
  %378 = vmatprep.subr.bf16.mxu0 %v272
  %379 = vmatpush1.bf16.msra.mxu0 %v271
  %380 = vmatprep.subr.bf16.mxu0 %v274
  %381 = vmatpush1.bf16.msra.mxu0 %v273
  %382 = vmatprep.subr.bf16.mxu0 %v276
  %383 = vmatpush1.bf16.msra.mxu0 %v275
  %384 = vmatprep.subr.bf16.mxu0 %v278
  %385 = vmatpush1.bf16.msra.mxu0 %v277
  %386 = vmatprep.subr.bf16.mxu0 %v280
  %387 = vmatpush1.bf16.msra.mxu0 %v279
  %388 = vmatprep.subr.bf16.mxu0 %v282
  %389 = vmatpush1.bf16.msra.mxu0 %v281
  %390 = vmatprep.subr.bf16.mxu0 %v284
  %391 = vmatpush1.bf16.msra.mxu0 %v283
  %392 = vmatprep.subr.bf16.mxu0 %v286
  %393 = vmatpush1.bf16.msra.mxu0 %v285
  %394 = vmatprep.subr.bf16.mxu0 0
  %395 = vmatpush1.bf16.msra.mxu0 0
  %396 = vmatprep.subr.bf16.mxu0 0
  %397 = vmatpush1.bf16.msra.mxu0 0
  %398 = vmatprep.subr.bf16.mxu0 0
  %399 = vmatpush1.bf16.msra.mxu0 0
  %400 = vmatprep.subr.bf16.mxu0 0
  %401 = vmatpush1.bf16.msra.mxu0 0
  %402 = vmatprep.subr.bf16.mxu0 0
  %403 = vmatpush1.bf16.msra.mxu0 0
  %404 = vmatprep.subr.bf16.mxu0 0
  %405 = vmatpush1.bf16.msra.mxu0 0
  %406 = vmatprep.subr.bf16.mxu0 0
  %407 = vmatpush1.bf16.msra.mxu0 0
  %408 = vmatprep.subr.bf16.mxu0 0
  %409 = vmatpush1.bf16.msra.mxu0 0
  %410 = vmatprep.mubr.bf16.mxu0 0
  %411 = vmatmul.mubr.bf16.gmra.mrb[0].mxu0 %v91
  %v412 = vpop.f32.mrb[0].mxu0
  %v413 = vadd.f32 %v370, %v412
  %v414 = vpop.f32.mrb[0].mxu0
  %v415 = vadd.f32 %v372, %v414
  %v416 = vpop.f32.mrb[0].mxu0
  %v417 = vadd.f32 %v374, %v416
  %v418 = vpop.f32.mrb[0].mxu0
  %v419 = vadd.f32 %v376, %v418
  %420 = vdwg.mxu0
  %v421 = vadd.f32 %v23, %v413
  %v422 = vadd.f32 %v24, %v415
  %v423 = vadd.f32 %v25, %v417
  %v424 = vadd.f32 %v26, %v419
  %425 = vst [vmem:[#allocation2] sm:$0xff] %v421
  %426 = vst [vmem:[#allocation2 + $0x8] sm:$0xff] %v422
  %427 = vst [vmem:[#allocation2 + $0x10] sm:$0xff] %v423
  %428 = vst [vmem:[#allocation2 + $0x18] sm:$0xff] %v424
  // Predicated region
  $region18: #{dip_forward.79} parent=0 // pred_check
    %p429 = pneg %p15
  $region19: #{dip_forward.79} parent=0 // pred_check_branch
    %431 = sbr.rel (%p429) target = $region21
  $region20: #{dip_forward.79} parent=0 // pred_region
    %v432 = vld [vmem:[#allocation2] sm:$0xff]
    %v433 = vld [vmem:[#allocation2 + $0x8] sm:$0xff]
    %v434 = vld [vmem:[#allocation2 + $0x10] sm:$0xff]
    %v435 = vld [vmem:[#allocation2 + $0x18] sm:$0xff]
    %v436 = vld [vmem:[%s2] sm:$0x3]
    %v438 = vlaneseq
    %v439 = vshrl.u32 %v438, 7
    %v440 = vsub.s32 0, %v439
    %v441 = vrot.slane %v436, %v440
    %v442 = vlaneseq
    %v443 = vshrl.u32 %v442, 7
    %v444 = vsub.s32 1, %v443
    %v445 = vrot.slane %v436, %v444
    %v448 = vadd.f32 %v432, %v441
    %v449 = vadd.f32 %v433, %v445
    %v450 = vadd.f32 %v434, %v441
    %v451 = vadd.f32 %v435, %v445
    %v452 = vxor.u32 %v448, 2147483648
    %v453 = vxor.u32 %v449, 2147483648
    %v454 = vxor.u32 %v450, 2147483648
    %v455 = vxor.u32 %v451, 2147483648
    %v456 = vmul.f32 %v452, 1.442695
    %v457 = vpow.pop %v456
    %v458 = vmul.f32 %v453, 1.442695
    %v459 = vpow.pop %v458
    %v460 = vmul.f32 %v454, 1.442695
    %v461 = vpow.pop %v460
    %v462 = vmul.f32 %v455, 1.442695
    %v463 = vpow.pop %v462
    %v464 = vadd.f32 %v457, 1.0
    %v465 = vadd.f32 %v459, 1.0
    %v466 = vadd.f32 %v461, 1.0
    %v467 = vadd.f32 %v463, 1.0
    %v468 = vrcp.pop %v464
    %v469 = vmul.f32 1.0, %v468
    %v470 = vrcp.pop %v465
    %v471 = vmul.f32 1.0, %v470
    %v472 = vrcp.pop %v466
    %v473 = vmul.f32 1.0, %v472
    %v474 = vrcp.pop %v467
    %v475 = vmul.f32 1.0, %v474
    %476 = vst [vmem:[%s3] sm:$0xff] %v469
    %477 = vst [vmem:[%s3 + $0x8] sm:$0xff] %v471
    %478 = vst [vmem:[%s3 + $0x10] sm:$0xff] %v473
    %479 = vst [vmem:[%s3 + $0x18] sm:$0xff] %v475
  $region21: #{dip_forward.79} parent=0 // pred_fallthru
    _
  // Predicated region
  $region22: #{dip_forward.79} parent=0 // pred_check
    _
  $region23: #{dip_forward.79} parent=0 // pred_check_branch
    %481 = sbr.rel (0) target = $region25
  $region24: #{dip_forward.79} parent=0 // pred_region
    _
  $region25: #{dip_forward.79} parent=0 // pred_fallthru
    _
  // Predicated region
  $region26: #{dip_forward.79} parent=0 // pred_check
    _
  $region27: #{dip_forward.79} parent=0 // pred_check_branch
    %483 = sbr.rel (0) target = $region29
  $region28: #{dip_forward.79} parent=0 // pred_region
    _
  $region29: #{dip_forward.79} parent=0 // pred_fallthru
    _

// kernel: dip_forward.80
$region0: #{dip_forward.80}
  #allocation0 [shape = 'u32[]', space=smem, size = 0x4, offset = 0x4, fixed_abs, tag = 'smem constant byte address 0x4 - core index']
  #allocation1 [shape = 'u32[144,128]{1,0:T(1,128)}', space=vmem, size = 0x12000, scoped, tag = 'internal scratch']
  #allocation2 [shape = 'f32[16,128]{1,0:T(8,128)}', space=vmem, size = 0x2000, scoped, tag = 'scratch operand']
  %s0 = inlined_call_operand.vmem [shape: bf16[16,384], index: 0, kind: input, shape index: {}]
  %s1 = inlined_call_operand.vmem [shape: bf16[384,128], index: 1, kind: input, shape index: {}]
  %s2 = inlined_call_operand.vmem [shape: f32[1,128], index: 2, kind: input, shape index: {}]
  %s3 = inlined_call_operand.vmem [shape: f32[16,128], index: 3, kind: output, shape index: {}]
  %s4 = sld [smem:[#allocation0]]
  $region30: #{dip_forward.80} parent=0
    _
  %s6 = ssub.s32 1, %s4
  %s7 = scalar_select 0, %s6, %s4
  // Predicated region
  $region2: #{dip_forward.80} parent=0 // pred_check
    _
  $region3: #{dip_forward.80} parent=0 // pred_check_branch
    %9 = sbr.rel (0) target = $region5
  $region4: #{dip_forward.80} parent=0 // pred_region
    _
  $region5: #{dip_forward.80} parent=0 // pred_fallthru
    _
  // Predicated region
  $region6: #{dip_forward.80} parent=0 // pred_check
    _
  $region7: #{dip_forward.80} parent=0 // pred_check_branch
    %11 = sbr.rel (0) target = $region9
  $region8: #{dip_forward.80} parent=0 // pred_region
    _
  $region9: #{dip_forward.80} parent=0 // pred_fallthru
    _
  // Predicated region
  $region10: #{dip_forward.80} parent=0 // pred_check
    _
  $region11: #{dip_forward.80} parent=0 // pred_check_branch
    %13 = sbr.rel (0) target = $region13
  $region12: #{dip_forward.80} parent=0 // pred_region
    _
  $region13: #{dip_forward.80} parent=0 // pred_fallthru
    _
  %p15 = scmp.eq.s32.totalorder 0, 0
  // Predicated region
  $region14: #{dip_forward.80} parent=0 // pred_check
    %p16 = pneg %p15
  $region15: #{dip_forward.80} parent=0 // pred_check_branch
    %18 = sbr.rel (%p16) target = $region17
  $region16: #{dip_forward.80} parent=0 // pred_region
    %19 = vst [vmem:[#allocation2] sm:$0xff] 0.0
    %20 = vst [vmem:[#allocation2 + $0x8] sm:$0xff] 0.0
  $region17: #{dip_forward.80} parent=0 // pred_fallthru
    _
  %v21 = vld [vmem:[#allocation2] sm:$0xff]
  %v22 = vld [vmem:[#allocation2 + $0x8] sm:$0xff]
  %v23 = vld [vmem:[%s0] sm:$0xff]
  %v24 = vld [vmem:[%s0 + $0x8] sm:$0xf]
  %v25 = vld [vmem:[%s0 + $0xc] sm:$0xff]
  %v26 = vld [vmem:[%s0 + $0x14] sm:$0xf]
  %v27 = vld [vmem:[%s1] sm:$0xf]
  %v28 = vld [vmem:[%s1 + $0x4] sm:$0xf]
  %v29 = vld [vmem:[%s1 + $0x8] sm:$0xf]
  %v30 = vld [vmem:[%s1 + $0xc] sm:$0xf]
  %v31 = vld [vmem:[%s1 + $0x10] sm:$0xf]
  %v32 = vld [vmem:[%s1 + $0x14] sm:$0xf]
  %v33 = vld [vmem:[%s1 + $0x18] sm:$0xf]
  %v34 = vld [vmem:[%s1 + $0x1c] sm:$0xf]
  %v35 = vld [vmem:[%s1 + $0x20] sm:$0xf]
  %v36 = vld [vmem:[%s1 + $0x24] sm:$0xf]
  %v37 = vld [vmem:[%s1 + $0x28] sm:$0xf]
  %v38 = vld [vmem:[%s1 + $0x2c] sm:$0xf]
  %v39 = vld [vmem:[%s1 + $0x30] sm:$0xf]
  %v40 = vld [vmem:[%s1 + $0x34] sm:$0xf]
  %v41 = vld [vmem:[%s1 + $0x38] sm:$0xf]
  %v42 = vld [vmem:[%s1 + $0x3c] sm:$0xf]
  %v43 = vld [vmem:[%s1 + $0x40] sm:$0xf]
  %v44 = vld [vmem:[%s1 + $0x44] sm:$0xf]
  %v45 = vld [vmem:[%s1 + $0x48] sm:$0xf]
  %v46 = vld [vmem:[%s1 + $0x4c] sm:$0xf]
  %v47 = vld [vmem:[%s1 + $0x50] sm:$0xf]
  %v48 = vld [vmem:[%s1 + $0x54] sm:$0xf]
  %v49 = vld [vmem:[%s1 + $0x58] sm:$0xf]
  %v50 = vld [vmem:[%s1 + $0x5c] sm:$0xf]
  %v51 = vld [vmem:[%s1 + $0x60] sm:$0xf]
  %v52 = vld [vmem:[%s1 + $0x64] sm:$0xf]
  %v53 = vld [vmem:[%s1 + $0x68] sm:$0xf]
  %v54 = vld [vmem:[%s1 + $0x6c] sm:$0xf]
  %v55 = vld [vmem:[%s1 + $0x70] sm:$0xf]
  %v56 = vld [vmem:[%s1 + $0x74] sm:$0xf]
  %v57 = vld [vmem:[%s1 + $0x78] sm:$0xf]
  %v58 = vld [vmem:[%s1 + $0x7c] sm:$0xf]
  %v59 = vld [vmem:[%s1 + $0x80] sm:$0xf]
  %v60 = vld [vmem:[%s1 + $0x84] sm:$0xf]
  %v61 = vld [vmem:[%s1 + $0x88] sm:$0xf]
  %v62 = vld [vmem:[%s1 + $0x8c] sm:$0xf]
  %v63 = vld [vmem:[%s1 + $0x90] sm:$0xf]
  %v64 = vld [vmem:[%s1 + $0x94] sm:$0xf]
  %v65 = vld [vmem:[%s1 + $0x98] sm:$0xf]
  %v66 = vld [vmem:[%s1 + $0x9c] sm:$0xf]
  %v67 = vld [vmem:[%s1 + $0xa0] sm:$0xf]
  %v68 = vld [vmem:[%s1 + $0xa4] sm:$0xf]
  %v69 = vld [vmem:[%s1 + $0xa8] sm:$0xf]
  %v70 = vld [vmem:[%s1 + $0xac] sm:$0xf]
  %v71 = vld [vmem:[%s1 + $0xb0] sm:$0xf]
  %v72 = vld [vmem:[%s1 + $0xb4] sm:$0xf]
  %v73 = vld [vmem:[%s1 + $0xb8] sm:$0xf]
  %v74 = vld [vmem:[%s1 + $0xbc] sm:$0xf]
  %v79 = vunpack.c.l.b16 %v23
  %v80 = vunpack.c.h.b16 %v23
  %v81 = vunpack.c.l.b16 %v24
  %v82 = vunpack.c.l.b16 %v25
  %v83 = vunpack.c.h.b16 %v25
  %v84 = vunpack.c.l.b16 %v26
  %v85 = vpack.c.b16 %v82, %v79
  %v86 = vpack.c.b16 %v83, %v80
  %v87 = vpack.c.b16 %v84, %v81
  %v139 = vunpack.c.l.b16 %v27
  %v140 = vunpack.c.l.b16 %v28
  %v141 = vunpack.c.l.b16 %v29
  %v142 = vunpack.c.l.b16 %v30
  %v143 = vunpack.c.l.b16 %v31
  %v144 = vunpack.c.l.b16 %v32
  %v145 = vunpack.c.l.b16 %v33
  %v146 = vunpack.c.l.b16 %v34
  %v147 = vunpack.c.l.b16 %v35
  %v148 = vunpack.c.l.b16 %v36
  %v149 = vunpack.c.l.b16 %v37
  %v150 = vunpack.c.l.b16 %v38
  %v151 = vunpack.c.l.b16 %v39
  %v152 = vunpack.c.l.b16 %v40
  %v153 = vunpack.c.l.b16 %v41
  %v154 = vunpack.c.l.b16 %v42
  %v155 = vunpack.c.l.b16 %v43
  %v156 = vunpack.c.l.b16 %v44
  %v157 = vunpack.c.l.b16 %v45
  %v158 = vunpack.c.l.b16 %v46
  %v159 = vunpack.c.l.b16 %v47
  %v160 = vunpack.c.l.b16 %v48
  %v161 = vunpack.c.l.b16 %v49
  %v162 = vunpack.c.l.b16 %v50
  %v163 = vunpack.c.l.b16 %v51
  %v164 = vunpack.c.l.b16 %v52
  %v165 = vunpack.c.l.b16 %v53
  %v166 = vunpack.c.l.b16 %v54
  %v167 = vunpack.c.l.b16 %v55
  %v168 = vunpack.c.l.b16 %v56
  %v169 = vunpack.c.l.b16 %v57
  %v170 = vunpack.c.l.b16 %v58
  %v171 = vunpack.c.l.b16 %v59
  %v172 = vunpack.c.l.b16 %v60
  %v173 = vunpack.c.l.b16 %v61
  %v174 = vunpack.c.l.b16 %v62
  %v175 = vunpack.c.l.b16 %v63
  %v176 = vunpack.c.l.b16 %v64
  %v177 = vunpack.c.l.b16 %v65
  %v178 = vunpack.c.l.b16 %v66
  %v179 = vunpack.c.l.b16 %v67
  %v180 = vunpack.c.l.b16 %v68
  %v181 = vunpack.c.l.b16 %v69
  %v182 = vunpack.c.l.b16 %v70
  %v183 = vunpack.c.l.b16 %v71
  %v184 = vunpack.c.l.b16 %v72
  %v185 = vunpack.c.l.b16 %v73
  %v186 = vunpack.c.l.b16 %v74
  %v187 = vpack.c.b16 %v140, %v139
  %v188 = vpack.c.b16 %v142, %v141
  %v189 = vpack.c.b16 %v144, %v143
  %v190 = vpack.c.b16 %v146, %v145
  %v191 = vpack.c.b16 %v148, %v147
  %v192 = vpack.c.b16 %v150, %v149
  %v193 = vpack.c.b16 %v152, %v151
  %v194 = vpack.c.b16 %v154, %v153
  %v195 = vpack.c.b16 %v156, %v155
  %v196 = vpack.c.b16 %v158, %v157
  %v197 = vpack.c.b16 %v160, %v159
  %v198 = vpack.c.b16 %v162, %v161
  %v199 = vpack.c.b16 %v164, %v163
  %v200 = vpack.c.b16 %v166, %v165
  %v201 = vpack.c.b16 %v168, %v167
  %v202 = vpack.c.b16 %v170, %v169
  %v203 = vpack.c.b16 %v172, %v171
  %v204 = vpack.c.b16 %v174, %v173
  %v205 = vpack.c.b16 %v176, %v175
  %v206 = vpack.c.b16 %v178, %v177
  %v207 = vpack.c.b16 %v180, %v179
  %v208 = vpack.c.b16 %v182, %v181
  %v209 = vpack.c.b16 %v184, %v183
  %v210 = vpack.c.b16 %v186, %v185
  %235 = vmatprep.subr.bf16.mxu0 0
  %236 = vmatpush1.bf16.msra.mxu0 %v187
  %237 = vmatprep.subr.bf16.mxu0 0
  %238 = vmatpush1.bf16.msra.mxu0 %v188
  %239 = vmatprep.subr.bf16.mxu0 0
  %240 = vmatpush1.bf16.msra.mxu0 %v189
  %241 = vmatprep.subr.bf16.mxu0 0
  %242 = vmatpush1.bf16.msra.mxu0 %v190
  %243 = vmatprep.subr.bf16.mxu0 0
  %244 = vmatpush1.bf16.msra.mxu0 %v191
  %245 = vmatprep.subr.bf16.mxu0 0
  %246 = vmatpush1.bf16.msra.mxu0 %v192
  %247 = vmatprep.subr.bf16.mxu0 0
  %248 = vmatpush1.bf16.msra.mxu0 %v193
  %249 = vmatprep.subr.bf16.mxu0 0
  %250 = vmatpush1.bf16.msra.mxu0 %v194
  %251 = vmatprep.subr.bf16.mxu0 0
  %252 = vmatpush1.bf16.msra.mxu0 %v195
  %253 = vmatprep.subr.bf16.mxu0 0
  %254 = vmatpush1.bf16.msra.mxu0 %v196
  %255 = vmatprep.subr.bf16.mxu0 0
  %256 = vmatpush1.bf16.msra.mxu0 %v197
  %257 = vmatprep.subr.bf16.mxu0 0
  %258 = vmatpush1.bf16.msra.mxu0 %v198
  %259 = vmatprep.subr.bf16.mxu0 0
  %260 = vmatpush1.bf16.msra.mxu0 %v199
  %261 = vmatprep.subr.bf16.mxu0 0
  %262 = vmatpush1.bf16.msra.mxu0 %v200
  %263 = vmatprep.subr.bf16.mxu0 0
  %264 = vmatpush1.bf16.msra.mxu0 %v201
  %265 = vmatprep.subr.bf16.mxu0 0
  %266 = vmatpush1.bf16.msra.mxu0 %v202
  %267 = vmatprep.mubr.bf16.mxu0 %v86
  %268 = vmatmul.mubr.bf16.gmra.mrb[0].mxu0 %v85
  %v269 = vpop.f32.mrb[0].mxu0
  %v270 = vadd.f32 0.0, %v269
  %v271 = vpop.f32.mrb[0].mxu0
  %v272 = vpop.f32.mrb[0].mxu0
  %v273 = vadd.f32 0.0, %v272
  %v274 = vpop.f32.mrb[0].mxu0
  %275 = vdwg.mxu0
  %276 = vmatprep.subr.bf16.mxu0 0
  %277 = vmatpush1.bf16.msra.mxu0 %v203
  %278 = vmatprep.subr.bf16.mxu0 0
  %279 = vmatpush1.bf16.msra.mxu0 %v204
  %280 = vmatprep.subr.bf16.mxu0 0
  %281 = vmatpush1.bf16.msra.mxu0 %v205
  %282 = vmatprep.subr.bf16.mxu0 0
  %283 = vmatpush1.bf16.msra.mxu0 %v206
  %284 = vmatprep.subr.bf16.mxu0 0
  %285 = vmatpush1.bf16.msra.mxu0 %v207
  %286 = vmatprep.subr.bf16.mxu0 0
  %287 = vmatpush1.bf16.msra.mxu0 %v208
  %288 = vmatprep.subr.bf16.mxu0 0
  %289 = vmatpush1.bf16.msra.mxu0 %v209
  %290 = vmatprep.subr.bf16.mxu0 0
  %291 = vmatpush1.bf16.msra.mxu0 %v210
  %292 = vmatprep.subr.bf16.mxu0 0
  %293 = vmatpush1.bf16.msra.mxu0 0
  %294 = vmatprep.subr.bf16.mxu0 0
  %295 = vmatpush1.bf16.msra.mxu0 0
  %296 = vmatprep.subr.bf16.mxu0 0
  %297 = vmatpush1.bf16.msra.mxu0 0
  %298 = vmatprep.subr.bf16.mxu0 0
  %299 = vmatpush1.bf16.msra.mxu0 0
  %300 = vmatprep.subr.bf16.mxu0 0
  %301 = vmatpush1.bf16.msra.mxu0 0
  %302 = vmatprep.subr.bf16.mxu0 0
  %303 = vmatpush1.bf16.msra.mxu0 0
  %304 = vmatprep.subr.bf16.mxu0 0
  %305 = vmatpush1.bf16.msra.mxu0 0
  %306 = vmatprep.subr.bf16.mxu0 0
  %307 = vmatpush1.bf16.msra.mxu0 0
  %308 = vmatprep.mubr.bf16.mxu0 0
  %309 = vmatmul.mubr.bf16.gmra.mrb[0].mxu0 %v87
  %v310 = vpop.f32.mrb[0].mxu0
  %v311 = vadd.f32 %v270, %v310
  %v312 = vpop.f32.mrb[0].mxu0
  %v313 = vpop.f32.mrb[0].mxu0
  %v314 = vadd.f32 %v273, %v313
  %v315 = vpop.f32.mrb[0].mxu0
  %316 = vdwg.mxu0
  %v317 = vadd.f32 %v21, %v311
  %v318 = vadd.f32 %v22, %v314
  %319 = vst [vmem:[#allocation2] sm:$0xff] %v317
  %320 = vst [vmem:[#allocation2 + $0x8] sm:$0xff] %v318
  // Predicated region
  $region18: #{dip_forward.80} parent=0 // pred_check
    %p321 = pneg %p15
  $region19: #{dip_forward.80} parent=0 // pred_check_branch
    %323 = sbr.rel (%p321) target = $region21
  $region20: #{dip_forward.80} parent=0 // pred_region
    %v324 = vld [vmem:[#allocation2] sm:$0xff]
    %v325 = vld [vmem:[#allocation2 + $0x8] sm:$0xff]
    %v326 = vld [vmem:[%s2] sm:$0x1]
    %v328 = vlaneseq
    %v329 = vshrl.u32 %v328, 7
    %v330 = vsub.s32 0, %v329
    %v331 = vrot.slane %v326, %v330
    %v333 = vadd.f32 %v324, %v331
    %v334 = vadd.f32 %v325, %v331
    %v335 = vtanh.pop %v333
    %v336 = vtanh.pop %v334
    %337 = vst [vmem:[%s3] sm:$0xff] %v335
    %338 = vst [vmem:[%s3 + $0x8] sm:$0xff] %v336
  $region21: #{dip_forward.80} parent=0 // pred_fallthru
    _
  // Predicated region
  $region22: #{dip_forward.80} parent=0 // pred_check
    _
  $region23: #{dip_forward.80} parent=0 // pred_check_branch
    %340 = sbr.rel (0) target = $region25
  $region24: #{dip_forward.80} parent=0 // pred_region
    _
  $region25: #{dip_forward.80} parent=0 // pred_fallthru
    _
  // Predicated region
  $region26: #{dip_forward.80} parent=0 // pred_check
    _
  $region27: #{dip_forward.80} parent=0 // pred_check_branch
    %342 = sbr.rel (0) target = $region29
  $region28: #{dip_forward.80} parent=0 // pred_region
    _
  $region29: #{dip_forward.80} parent=0 // pred_fallthru
    _

// kernel: dip_forward.81
$region0: #{dip_forward.81}
  #allocation0 [shape = 'u32[]', space=smem, size = 0x4, offset = 0x4, fixed_abs, tag = 'smem constant byte address 0x4 - core index']
  #allocation1 [shape = 'u32[144,128]{1,0:T(1,128)}', space=vmem, size = 0x12000, scoped, tag = 'internal scratch']
  #allocation2 [shape = 'f32[16,256]{1,0:T(8,128)}', space=vmem, size = 0x4000, scoped, tag = 'scratch operand']
  %s0 = inlined_call_operand.vmem [shape: bf16[16,128], index: 0, kind: input, shape index: {}]
  %s1 = inlined_call_operand.vmem [shape: bf16[128,256], index: 1, kind: input, shape index: {}]
  %s2 = inlined_call_operand.vmem [shape: f32[1,256], index: 2, kind: input, shape index: {}]
  %s3 = inlined_call_operand.vmem [shape: f32[16,256], index: 3, kind: output, shape index: {}]
  %s4 = sld [smem:[#allocation0]]
  $region30: #{dip_forward.81} parent=0
    _
  %s6 = ssub.s32 1, %s4
  %s7 = scalar_select 0, %s6, %s4
  // Predicated region
  $region2: #{dip_forward.81} parent=0 // pred_check
    _
  $region3: #{dip_forward.81} parent=0 // pred_check_branch
    %9 = sbr.rel (0) target = $region5
  $region4: #{dip_forward.81} parent=0 // pred_region
    _
  $region5: #{dip_forward.81} parent=0 // pred_fallthru
    _
  // Predicated region
  $region6: #{dip_forward.81} parent=0 // pred_check
    _
  $region7: #{dip_forward.81} parent=0 // pred_check_branch
    %11 = sbr.rel (0) target = $region9
  $region8: #{dip_forward.81} parent=0 // pred_region
    _
  $region9: #{dip_forward.81} parent=0 // pred_fallthru
    _
  // Predicated region
  $region10: #{dip_forward.81} parent=0 // pred_check
    _
  $region11: #{dip_forward.81} parent=0 // pred_check_branch
    %13 = sbr.rel (0) target = $region13
  $region12: #{dip_forward.81} parent=0 // pred_region
    _
  $region13: #{dip_forward.81} parent=0 // pred_fallthru
    _
  %p15 = scmp.eq.s32.totalorder 0, 0
  // Predicated region
  $region14: #{dip_forward.81} parent=0 // pred_check
    %p16 = pneg %p15
  $region15: #{dip_forward.81} parent=0 // pred_check_branch
    %18 = sbr.rel (%p16) target = $region17
  $region16: #{dip_forward.81} parent=0 // pred_region
    %19 = vst [vmem:[#allocation2] sm:$0xff] 0.0
    %20 = vst [vmem:[#allocation2 + $0x8] sm:$0xff] 0.0
    %21 = vst [vmem:[#allocation2 + $0x10] sm:$0xff] 0.0
    %22 = vst [vmem:[#allocation2 + $0x18] sm:$0xff] 0.0
  $region17: #{dip_forward.81} parent=0 // pred_fallthru
    _
  %v23 = vld [vmem:[#allocation2] sm:$0xff]
  %v24 = vld [vmem:[#allocation2 + $0x8] sm:$0xff]
  %v25 = vld [vmem:[#allocation2 + $0x10] sm:$0xff]
  %v26 = vld [vmem:[#allocation2 + $0x18] sm:$0xff]
  %v27 = vld [vmem:[%s0] sm:$0xf]
  %v28 = vld [vmem:[%s0 + $0x4] sm:$0xf]
  %v29 = vld [vmem:[%s1] sm:$0xff]
  %v30 = vld [vmem:[%s1 + $0x8] sm:$0xff]
  %v31 = vld [vmem:[%s1 + $0x10] sm:$0xff]
  %v32 = vld [vmem:[%s1 + $0x18] sm:$0xff]
  %v33 = vld [vmem:[%s1 + $0x20] sm:$0xff]
  %v34 = vld [vmem:[%s1 + $0x28] sm:$0xff]
  %v35 = vld [vmem:[%s1 + $0x30] sm:$0xff]
  %v36 = vld [vmem:[%s1 + $0x38] sm:$0xff]
  %v37 = vld [vmem:[%s1 + $0x40] sm:$0xff]
  %v38 = vld [vmem:[%s1 + $0x48] sm:$0xff]
  %v39 = vld [vmem:[%s1 + $0x50] sm:$0xff]
  %v40 = vld [vmem:[%s1 + $0x58] sm:$0xff]
  %v41 = vld [vmem:[%s1 + $0x60] sm:$0xff]
  %v42 = vld [vmem:[%s1 + $0x68] sm:$0xff]
  %v43 = vld [vmem:[%s1 + $0x70] sm:$0xff]
  %v44 = vld [vmem:[%s1 + $0x78] sm:$0xff]
  %v47 = vunpack.c.l.b16 %v27
  %v48 = vunpack.c.l.b16 %v28
  %v49 = vpack.c.b16 %v48, %v47
  %v67 = vunpack.c.l.b16 %v29
  %v68 = vunpack.c.h.b16 %v29
  %v69 = vunpack.c.l.b16 %v30
  %v70 = vunpack.c.h.b16 %v30
  %v71 = vunpack.c.l.b16 %v31
  %v72 = vunpack.c.h.b16 %v31
  %v73 = vunpack.c.l.b16 %v32
  %v74 = vunpack.c.h.b16 %v32
  %v75 = vunpack.c.l.b16 %v33
  %v76 = vunpack.c.h.b16 %v33
  %v77 = vunpack.c.l.b16 %v34
  %v78 = vunpack.c.h.b16 %v34
  %v79 = vunpack.c.l.b16 %v35
  %v80 = vunpack.c.h.b16 %v35
  %v81 = vunpack.c.l.b16 %v36
  %v82 = vunpack.c.h.b16 %v36
  %v83 = vunpack.c.l.b16 %v37
  %v84 = vunpack.c.h.b16 %v37
  %v85 = vunpack.c.l.b16 %v38
  %v86 = vunpack.c.h.b16 %v38
  %v87 = vunpack.c.l.b16 %v39
  %v88 = vunpack.c.h.b16 %v39
  %v89 = vunpack.c.l.b16 %v40
  %v90 = vunpack.c.h.b16 %v40
  %v91 = vunpack.c.l.b16 %v41
  %v92 = vunpack.c.h.b16 %v41
  %v93 = vunpack.c.l.b16 %v42
  %v94 = vunpack.c.h.b16 %v42
  %v95 = vunpack.c.l.b16 %v43
  %v96 = vunpack.c.h.b16 %v43
  %v97 = vunpack.c.l.b16 %v44
  %v98 = vunpack.c.h.b16 %v44
  %v99 = vpack.c.b16 %v69, %v67
  %v100 = vpack.c.b16 %v70, %v68
  %v101 = vpack.c.b16 %v73, %v71
  %v102 = vpack.c.b16 %v74, %v72
  %v103 = vpack.c.b16 %v77, %v75
  %v104 = vpack.c.b16 %v78, %v76
  %v105 = vpack.c.b16 %v81, %v79
  %v106 = vpack.c.b16 %v82, %v80
  %v107 = vpack.c.b16 %v85, %v83
  %v108 = vpack.c.b16 %v86, %v84
  %v109 = vpack.c.b16 %v89, %v87
  %v110 = vpack.c.b16 %v90, %v88
  %v111 = vpack.c.b16 %v93, %v91
  %v112 = vpack.c.b16 %v94, %v92
  %v113 = vpack.c.b16 %v97, %v95
  %v114 = vpack.c.b16 %v98, %v96
  %131 = vmatprep.subr.bf16.mxu0 %v100
  %132 = vmatpush1.bf16.msra.mxu0 %v99
  %133 = vmatprep.subr.bf16.mxu0 %v102
  %134 = vmatpush1.bf16.msra.mxu0 %v101
  %135 = vmatprep.subr.bf16.mxu0 %v104
  %136 = vmatpush1.bf16.msra.mxu0 %v103
  %137 = vmatprep.subr.bf16.mxu0 %v106
  %138 = vmatpush1.bf16.msra.mxu0 %v105
  %139 = vmatprep.subr.bf16.mxu0 %v108
  %140 = vmatpush1.bf16.msra.mxu0 %v107
  %141 = vmatprep.subr.bf16.mxu0 %v110
  %142 = vmatpush1.bf16.msra.mxu0 %v109
  %143 = vmatprep.subr.bf16.mxu0 %v112
  %144 = vmatpush1.bf16.msra.mxu0 %v111
  %145 = vmatprep.subr.bf16.mxu0 %v114
  %146 = vmatpush1.bf16.msra.mxu0 %v113
  %147 = vmatprep.subr.bf16.mxu0 0
  %148 = vmatpush1.bf16.msra.mxu0 0
  %149 = vmatprep.subr.bf16.mxu0 0
  %150 = vmatpush1.bf16.msra.mxu0 0
  %151 = vmatprep.subr.bf16.mxu0 0
  %152 = vmatpush1.bf16.msra.mxu0 0
  %153 = vmatprep.subr.bf16.mxu0 0
  %154 = vmatpush1.bf16.msra.mxu0 0
  %155 = vmatprep.subr.bf16.mxu0 0
  %156 = vmatpush1.bf16.msra.mxu0 0
  %157 = vmatprep.subr.bf16.mxu0 0
  %158 = vmatpush1.bf16.msra.mxu0 0
  %159 = vmatprep.subr.bf16.mxu0 0
  %160 = vmatpush1.bf16.msra.mxu0 0
  %161 = vmatprep.subr.bf16.mxu0 0
  %162 = vmatpush1.bf16.msra.mxu0 0
  %163 = vmatprep.mubr.bf16.mxu0 0
  %164 = vmatmul.mubr.bf16.gmra.mrb[0].mxu0 %v49
  %v165 = vpop.f32.mrb[0].mxu0
  %v166 = vadd.f32 0.0, %v165
  %v167 = vpop.f32.mrb[0].mxu0
  %v168 = vadd.f32 0.0, %v167
  %v169 = vpop.f32.mrb[0].mxu0
  %v170 = vadd.f32 0.0, %v169
  %v171 = vpop.f32.mrb[0].mxu0
  %v172 = vadd.f32 0.0, %v171
  %173 = vdwg.mxu0
  %v174 = vadd.f32 %v23, %v166
  %v175 = vadd.f32 %v24, %v168
  %v176 = vadd.f32 %v25, %v170
  %v177 = vadd.f32 %v26, %v172
  %178 = vst [vmem:[#allocation2] sm:$0xff] %v174
  %179 = vst [vmem:[#allocation2 + $0x8] sm:$0xff] %v175
  %180 = vst [vmem:[#allocation2 + $0x10] sm:$0xff] %v176
  %181 = vst [vmem:[#allocation2 + $0x18] sm:$0xff] %v177
  // Predicated region
  $region18: #{dip_forward.81} parent=0 // pred_check
    %p182 = pneg %p15
  $region19: #{dip_forward.81} parent=0 // pred_check_branch
    %184 = sbr.rel (%p182) target = $region21
  $region20: #{dip_forward.81} parent=0 // pred_region
    %v185 = vld [vmem:[#allocation2] sm:$0xff]
    %v186 = vld [vmem:[#allocation2 + $0x8] sm:$0xff]
    %v187 = vld [vmem:[#allocation2 + $0x10] sm:$0xff]
    %v188 = vld [vmem:[#allocation2 + $0x18] sm:$0xff]
    %v189 = vld [vmem:[%s2] sm:$0x3]
    %v191 = vlaneseq
    %v192 = vshrl.u32 %v191, 7
    %v193 = vsub.s32 0, %v192
    %v194 = vrot.slane %v189, %v193
    %v195 = vlaneseq
    %v196 = vshrl.u32 %v195, 7
    %v197 = vsub.s32 1, %v196
    %v198 = vrot.slane %v189, %v197
    %v201 = vadd.f32 %v185, %v194
    %v202 = vadd.f32 %v186, %v198
    %v203 = vadd.f32 %v187, %v194
    %v204 = vadd.f32 %v188, %v198
    %v205 = vmax.f32 %v201, 0.0
    %v206 = vmax.f32 %v202, 0.0
    %v207 = vmax.f32 %v203, 0.0
    %v208 = vmax.f32 %v204, 0.0
    %209 = vst [vmem:[%s3] sm:$0xff] %v205
    %210 = vst [vmem:[%s3 + $0x8] sm:$0xff] %v206
    %211 = vst [vmem:[%s3 + $0x10] sm:$0xff] %v207
    %212 = vst [vmem:[%s3 + $0x18] sm:$0xff] %v208
  $region21: #{dip_forward.81} parent=0 // pred_fallthru
    _
  // Predicated region
  $region22: #{dip_forward.81} parent=0 // pred_check
    _
  $region23: #{dip_forward.81} parent=0 // pred_check_branch
    %214 = sbr.rel (0) target = $region25
  $region24: #{dip_forward.81} parent=0 // pred_region
    _
  $region25: #{dip_forward.81} parent=0 // pred_fallthru
    _
  // Predicated region
  $region26: #{dip_forward.81} parent=0 // pred_check
    _
  $region27: #{dip_forward.81} parent=0 // pred_check_branch
    %216 = sbr.rel (0) target = $region29
  $region28: #{dip_forward.81} parent=0 // pred_region
    _
  $region29: #{dip_forward.81} parent=0 // pred_fallthru
    _

// kernel: dip_forward.82
$region0: #{dip_forward.82}
  #allocation0 [shape = 'u32[]', space=smem, size = 0x4, offset = 0x4, fixed_abs, tag = 'smem constant byte address 0x4 - core index']
  #allocation1 [shape = 'u32[144,128]{1,0:T(1,128)}', space=vmem, size = 0x12000, scoped, tag = 'internal scratch']
  #allocation2 [shape = 'f32[16,256]{1,0:T(8,128)}', space=vmem, size = 0x4000, scoped, tag = 'scratch operand']
  %s0 = inlined_call_operand.vmem [shape: bf16[16,256], index: 0, kind: input, shape index: {}]
  %s1 = inlined_call_operand.vmem [shape: bf16[256,256], index: 1, kind: input, shape index: {}]
  %s2 = inlined_call_operand.vmem [shape: f32[1,256], index: 2, kind: input, shape index: {}]
  %s3 = inlined_call_operand.vmem [shape: f32[16,256], index: 3, kind: output, shape index: {}]
  %s4 = sld [smem:[#allocation0]]
  $region30: #{dip_forward.82} parent=0
    _
  %s6 = ssub.s32 1, %s4
  %s7 = scalar_select 0, %s6, %s4
  // Predicated region
  $region2: #{dip_forward.82} parent=0 // pred_check
    _
  $region3: #{dip_forward.82} parent=0 // pred_check_branch
    %9 = sbr.rel (0) target = $region5
  $region4: #{dip_forward.82} parent=0 // pred_region
    _
  $region5: #{dip_forward.82} parent=0 // pred_fallthru
    _
  // Predicated region
  $region6: #{dip_forward.82} parent=0 // pred_check
    _
  $region7: #{dip_forward.82} parent=0 // pred_check_branch
    %11 = sbr.rel (0) target = $region9
  $region8: #{dip_forward.82} parent=0 // pred_region
    _
  $region9: #{dip_forward.82} parent=0 // pred_fallthru
    _
  // Predicated region
  $region10: #{dip_forward.82} parent=0 // pred_check
    _
  $region11: #{dip_forward.82} parent=0 // pred_check_branch
    %13 = sbr.rel (0) target = $region13
  $region12: #{dip_forward.82} parent=0 // pred_region
    _
  $region13: #{dip_forward.82} parent=0 // pred_fallthru
    _
  %p14 = scmp.eq.s32.totalorder 0, 0
  // Predicated region
  $region14: #{dip_forward.82} parent=0 // pred_check
    %p15 = pneg %p14
  $region15: #{dip_forward.82} parent=0 // pred_check_branch
    %17 = sbr.rel (%p15) target = $region17
  $region16: #{dip_forward.82} parent=0 // pred_region
    %18 = vst [vmem:[#allocation2] sm:$0xff] 0.0
    %19 = vst [vmem:[#allocation2 + $0x8] sm:$0xff] 0.0
    %20 = vst [vmem:[#allocation2 + $0x10] sm:$0xff] 0.0
    %21 = vst [vmem:[#allocation2 + $0x18] sm:$0xff] 0.0
  $region17: #{dip_forward.82} parent=0 // pred_fallthru
    _
  %v22 = vld [vmem:[#allocation2] sm:$0xff]
  %v23 = vld [vmem:[#allocation2 + $0x8] sm:$0xff]
  %v24 = vld [vmem:[#allocation2 + $0x10] sm:$0xff]
  %v25 = vld [vmem:[#allocation2 + $0x18] sm:$0xff]
  %v26 = vld [vmem:[%s0] sm:$0xff]
  %v27 = vld [vmem:[%s0 + $0x8] sm:$0xff]
  %v28 = vld [vmem:[%s1] sm:$0xff]
  %v29 = vld [vmem:[%s1 + $0x8] sm:$0xff]
  %v30 = vld [vmem:[%s1 + $0x10] sm:$0xff]
  %v31 = vld [vmem:[%s1 + $0x18] sm:$0xff]
  %v32 = vld [vmem:[%s1 + $0x20] sm:$0xff]
  %v33 = vld [vmem:[%s1 + $0x28] sm:$0xff]
  %v34 = vld [vmem:[%s1 + $0x30] sm:$0xff]
  %v35 = vld [vmem:[%s1 + $0x38] sm:$0xff]
  %v36 = vld [vmem:[%s1 + $0x40] sm:$0xff]
  %v37 = vld [vmem:[%s1 + $0x48] sm:$0xff]
  %v38 = vld [vmem:[%s1 + $0x50] sm:$0xff]
  %v39 = vld [vmem:[%s1 + $0x58] sm:$0xff]
  %v40 = vld [vmem:[%s1 + $0x60] sm:$0xff]
  %v41 = vld [vmem:[%s1 + $0x68] sm:$0xff]
  %v42 = vld [vmem:[%s1 + $0x70] sm:$0xff]
  %v43 = vld [vmem:[%s1 + $0x78] sm:$0xff]
  %v44 = vld [vmem:[%s1 + $0x80] sm:$0xff]
  %v45 = vld [vmem:[%s1 + $0x88] sm:$0xff]
  %v46 = vld [vmem:[%s1 + $0x90] sm:$0xff]
  %v47 = vld [vmem:[%s1 + $0x98] sm:$0xff]
  %v48 = vld [vmem:[%s1 + $0xa0] sm:$0xff]
  %v49 = vld [vmem:[%s1 + $0xa8] sm:$0xff]
  %v50 = vld [vmem:[%s1 + $0xb0] sm:$0xff]
  %v51 = vld [vmem:[%s1 + $0xb8] sm:$0xff]
  %v52 = vld [vmem:[%s1 + $0xc0] sm:$0xff]
  %v53 = vld [vmem:[%s1 + $0xc8] sm:$0xff]
  %v54 = vld [vmem:[%s1 + $0xd0] sm:$0xff]
  %v55 = vld [vmem:[%s1 + $0xd8] sm:$0xff]
  %v56 = vld [vmem:[%s1 + $0xe0] sm:$0xff]
  %v57 = vld [vmem:[%s1 + $0xe8] sm:$0xff]
  %v58 = vld [vmem:[%s1 + $0xf0] sm:$0xff]
  %v59 = vld [vmem:[%s1 + $0xf8] sm:$0xff]
  %v62 = vunpack.c.l.b16 %v26
  %v63 = vunpack.c.h.b16 %v26
  %v64 = vunpack.c.l.b16 %v27
  %v65 = vunpack.c.h.b16 %v27
  %v66 = vpack.c.b16 %v64, %v62
  %v67 = vpack.c.b16 %v65, %v63
  %v102 = vunpack.c.l.b16 %v28
  %v103 = vunpack.c.h.b16 %v28
  %v104 = vunpack.c.l.b16 %v29
  %v105 = vunpack.c.h.b16 %v29
  %v106 = vunpack.c.l.b16 %v30
  %v107 = vunpack.c.h.b16 %v30
  %v108 = vunpack.c.l.b16 %v31
  %v109 = vunpack.c.h.b16 %v31
  %v110 = vunpack.c.l.b16 %v32
  %v111 = vunpack.c.h.b16 %v32
  %v112 = vunpack.c.l.b16 %v33
  %v113 = vunpack.c.h.b16 %v33
  %v114 = vunpack.c.l.b16 %v34
  %v115 = vunpack.c.h.b16 %v34
  %v116 = vunpack.c.l.b16 %v35
  %v117 = vunpack.c.h.b16 %v35
  %v118 = vunpack.c.l.b16 %v36
  %v119 = vunpack.c.h.b16 %v36
  %v120 = vunpack.c.l.b16 %v37
  %v121 = vunpack.c.h.b16 %v37
  %v122 = vunpack.c.l.b16 %v38
  %v123 = vunpack.c.h.b16 %v38
  %v124 = vunpack.c.l.b16 %v39
  %v125 = vunpack.c.h.b16 %v39
  %v126 = vunpack.c.l.b16 %v40
  %v127 = vunpack.c.h.b16 %v40
  %v128 = vunpack.c.l.b16 %v41
  %v129 = vunpack.c.h.b16 %v41
  %v130 = vunpack.c.l.b16 %v42
  %v131 = vunpack.c.h.b16 %v42
  %v132 = vunpack.c.l.b16 %v43
  %v133 = vunpack.c.h.b16 %v43
  %v134 = vunpack.c.l.b16 %v44
  %v135 = vunpack.c.h.b16 %v44
  %v136 = vunpack.c.l.b16 %v45
  %v137 = vunpack.c.h.b16 %v45
  %v138 = vunpack.c.l.b16 %v46
  %v139 = vunpack.c.h.b16 %v46
  %v140 = vunpack.c.l.b16 %v47
  %v141 = vunpack.c.h.b16 %v47
  %v142 = vunpack.c.l.b16 %v48
  %v143 = vunpack.c.h.b16 %v48
  %v144 = vunpack.c.l.b16 %v49
  %v145 = vunpack.c.h.b16 %v49
  %v146 = vunpack.c.l.b16 %v50
  %v147 = vunpack.c.h.b16 %v50
  %v148 = vunpack.c.l.b16 %v51
  %v149 = vunpack.c.h.b16 %v51
  %v150 = vunpack.c.l.b16 %v52
  %v151 = vunpack.c.h.b16 %v52
  %v152 = vunpack.c.l.b16 %v53
  %v153 = vunpack.c.h.b16 %v53
  %v154 = vunpack.c.l.b16 %v54
  %v155 = vunpack.c.h.b16 %v54
  %v156 = vunpack.c.l.b16 %v55
  %v157 = vunpack.c.h.b16 %v55
  %v158 = vunpack.c.l.b16 %v56
  %v159 = vunpack.c.h.b16 %v56
  %v160 = vunpack.c.l.b16 %v57
  %v161 = vunpack.c.h.b16 %v57
  %v162 = vunpack.c.l.b16 %v58
  %v163 = vunpack.c.h.b16 %v58
  %v164 = vunpack.c.l.b16 %v59
  %v165 = vunpack.c.h.b16 %v59
  %v166 = vpack.c.b16 %v104, %v102
  %v167 = vpack.c.b16 %v105, %v103
  %v168 = vpack.c.b16 %v108, %v106
  %v169 = vpack.c.b16 %v109, %v107
  %v170 = vpack.c.b16 %v112, %v110
  %v171 = vpack.c.b16 %v113, %v111
  %v172 = vpack.c.b16 %v116, %v114
  %v173 = vpack.c.b16 %v117, %v115
  %v174 = vpack.c.b16 %v120, %v118
  %v175 = vpack.c.b16 %v121, %v119
  %v176 = vpack.c.b16 %v124, %v122
  %v177 = vpack.c.b16 %v125, %v123
  %v178 = vpack.c.b16 %v128, %v126
  %v179 = vpack.c.b16 %v129, %v127
  %v180 = vpack.c.b16 %v132, %v130
  %v181 = vpack.c.b16 %v133, %v131
  %v182 = vpack.c.b16 %v136, %v134
  %v183 = vpack.c.b16 %v137, %v135
  %v184 = vpack.c.b16 %v140, %v138
  %v185 = vpack.c.b16 %v141, %v139
  %v186 = vpack.c.b16 %v144, %v142
  %v187 = vpack.c.b16 %v145, %v143
  %v188 = vpack.c.b16 %v148, %v146
  %v189 = vpack.c.b16 %v149, %v147
  %v190 = vpack.c.b16 %v152, %v150
  %v191 = vpack.c.b16 %v153, %v151
  %v192 = vpack.c.b16 %v156, %v154
  %v193 = vpack.c.b16 %v157, %v155
  %v194 = vpack.c.b16 %v160, %v158
  %v195 = vpack.c.b16 %v161, %v159
  %v196 = vpack.c.b16 %v164, %v162
  %v197 = vpack.c.b16 %v165, %v163
  %230 = vmatprep.subr.bf16.mxu0 %v167
  %231 = vmatpush1.bf16.msra.mxu0 %v166
  %232 = vmatprep.subr.bf16.mxu0 %v169
  %233 = vmatpush1.bf16.msra.mxu0 %v168
  %234 = vmatprep.subr.bf16.mxu0 %v171
  %235 = vmatpush1.bf16.msra.mxu0 %v170
  %236 = vmatprep.subr.bf16.mxu0 %v173
  %237 = vmatpush1.bf16.msra.mxu0 %v172
  %238 = vmatprep.subr.bf16.mxu0 %v175
  %239 = vmatpush1.bf16.msra.mxu0 %v174
  %240 = vmatprep.subr.bf16.mxu0 %v177
  %241 = vmatpush1.bf16.msra.mxu0 %v176
  %242 = vmatprep.subr.bf16.mxu0 %v179
  %243 = vmatpush1.bf16.msra.mxu0 %v178
  %244 = vmatprep.subr.bf16.mxu0 %v181
  %245 = vmatpush1.bf16.msra.mxu0 %v180
  %246 = vmatprep.subr.bf16.mxu0 %v183
  %247 = vmatpush1.bf16.msra.mxu0 %v182
  %248 = vmatprep.subr.bf16.mxu0 %v185
  %249 = vmatpush1.bf16.msra.mxu0 %v184
  %250 = vmatprep.subr.bf16.mxu0 %v187
  %251 = vmatpush1.bf16.msra.mxu0 %v186
  %252 = vmatprep.subr.bf16.mxu0 %v189
  %253 = vmatpush1.bf16.msra.mxu0 %v188
  %254 = vmatprep.subr.bf16.mxu0 %v191
  %255 = vmatpush1.bf16.msra.mxu0 %v190
  %256 = vmatprep.subr.bf16.mxu0 %v193
  %257 = vmatpush1.bf16.msra.mxu0 %v192
  %258 = vmatprep.subr.bf16.mxu0 %v195
  %259 = vmatpush1.bf16.msra.mxu0 %v194
  %260 = vmatprep.subr.bf16.mxu0 %v197
  %261 = vmatpush1.bf16.msra.mxu0 %v196
  %262 = vmatprep.mubr.bf16.mxu0 %v67
  %263 = vmatmul.mubr.bf16.gmra.mrb[0].mxu0 %v66
  %v264 = vpop.f32.mrb[0].mxu0
  %v265 = vadd.f32 0.0, %v264
  %v266 = vpop.f32.mrb[0].mxu0
  %v267 = vadd.f32 0.0, %v266
  %v268 = vpop.f32.mrb[0].mxu0
  %v269 = vadd.f32 0.0, %v268
  %v270 = vpop.f32.mrb[0].mxu0
  %v271 = vadd.f32 0.0, %v270
  %272 = vdwg.mxu0
  %v273 = vadd.f32 %v22, %v265
  %v274 = vadd.f32 %v23, %v267
  %v275 = vadd.f32 %v24, %v269
  %v276 = vadd.f32 %v25, %v271
  %277 = vst [vmem:[#allocation2] sm:$0xff] %v273
  %278 = vst [vmem:[#allocation2 + $0x8] sm:$0xff] %v274
  %279 = vst [vmem:[#allocation2 + $0x10] sm:$0xff] %v275
  %280 = vst [vmem:[#allocation2 + $0x18] sm:$0xff] %v276
  // Predicated region
  $region18: #{dip_forward.82} parent=0 // pred_check
    %p281 = pneg %p14
  $region19: #{dip_forward.82} parent=0 // pred_check_branch
    %283 = sbr.rel (%p281) target = $region21
  $region20: #{dip_forward.82} parent=0 // pred_region
    %v284 = vld [vmem:[#allocation2] sm:$0xff]
    %v285 = vld [vmem:[#allocation2 + $0x8] sm:$0xff]
    %v286 = vld [vmem:[#allocation2 + $0x10] sm:$0xff]
    %v287 = vld [vmem:[#allocation2 + $0x18] sm:$0xff]
    %v288 = vld [vmem:[%s2] sm:$0x3]
    %v290 = vlaneseq
    %v291 = vshrl.u32 %v290, 7
    %v292 = vsub.s32 0, %v291
    %v293 = vrot.slane %v288, %v292
    %v294 = vlaneseq
    %v295 = vshrl.u32 %v294, 7
    %v296 = vsub.s32 1, %v295
    %v297 = vrot.slane %v288, %v296
    %v300 = vadd.f32 %v284, %v293
    %v301 = vadd.f32 %v285, %v297
    %v302 = vadd.f32 %v286, %v293
    %v303 = vadd.f32 %v287, %v297
    %304 = vst [vmem:[%s3] sm:$0xff] %v300
    %305 = vst [vmem:[%s3 + $0x8] sm:$0xff] %v301
    %306 = vst [vmem:[%s3 + $0x10] sm:$0xff] %v302
    %307 = vst [vmem:[%s3 + $0x18] sm:$0xff] %v303
  $region21: #{dip_forward.82} parent=0 // pred_fallthru
    _
  // Predicated region
  $region22: #{dip_forward.82} parent=0 // pred_check
    _
  $region23: #{dip_forward.82} parent=0 // pred_check_branch
    %309 = sbr.rel (0) target = $region25
  $region24: #{dip_forward.82} parent=0 // pred_region
    _
  $region25: #{dip_forward.82} parent=0 // pred_fallthru
    _
  // Predicated region
  $region26: #{dip_forward.82} parent=0 // pred_check
    _
  $region27: #{dip_forward.82} parent=0 // pred_check_branch
    %311 = sbr.rel (0) target = $region29
  $region28: #{dip_forward.82} parent=0 // pred_region
    _
  $region29: #{dip_forward.82} parent=0 // pred_fallthru
    _

// kernel: dip_forward.107
$region0: #{dip_forward.107}
  #allocation0 [shape = 'u32[]', space=smem, size = 0x4, offset = 0x4, fixed_abs, tag = 'smem constant byte address 0x4 - core index']
  #allocation1 [shape = 'u32[144,128]{1,0:T(1,128)}', space=vmem, size = 0x12000, scoped, tag = 'internal scratch']
  %s0 = inlined_call_operand.vmem [shape: f32[1,9,16,4], index: 0, kind: input, shape index: {}]
  %s1 = inlined_call_operand.vmem [shape: f32[1,2,9,4], index: 1, kind: input, shape index: {}]
  %s2 = inlined_call_operand.vmem [shape: f32[1,2,16,4], index: 2, kind: output, shape index: {}]
  %s3 = sld [smem:[#allocation0]]
  $region18: #{dip_forward.107} parent=0
    _
  %s5 = ssub.s32 1, %s3
  %s6 = scalar_select 0, %s5, %s3
  // Predicated region
  $region2: #{dip_forward.107} parent=0 // pred_check
    _
  $region3: #{dip_forward.107} parent=0 // pred_check_branch
    %8 = sbr.rel (0) target = $region5
  $region4: #{dip_forward.107} parent=0 // pred_region
    _
  $region5: #{dip_forward.107} parent=0 // pred_fallthru
    _
  // Predicated region
  $region6: #{dip_forward.107} parent=0 // pred_check
    _
  $region7: #{dip_forward.107} parent=0 // pred_check_branch
    %10 = sbr.rel (0) target = $region9
  $region8: #{dip_forward.107} parent=0 // pred_region
    _
  $region9: #{dip_forward.107} parent=0 // pred_fallthru
    _
  %v11 = vld [vmem:[%s0] sm:$0xff]
  %v12 = vld [vmem:[%s0 + $0x8] sm:$0xff]
  %v13 = vld [vmem:[%s0 + $0x10] sm:$0xff]
  %v14 = vld [vmem:[%s0 + $0x18] sm:$0xff]
  %v15 = vld [vmem:[%s0 + $0x20] sm:$0xff]
  %v16 = vld [vmem:[%s0 + $0x28] sm:$0xff]
  %v17 = vld [vmem:[%s0 + $0x30] sm:$0xff]
  %v18 = vld [vmem:[%s0 + $0x38] sm:$0xff]
  %v19 = vld [vmem:[%s0 + $0x40] sm:$0xff]
  %v20 = vld [vmem:[%s0 + $0x48] sm:$0xff]
  %v21 = vld [vmem:[%s0 + $0x50] sm:$0xff]
  %v22 = vld [vmem:[%s0 + $0x58] sm:$0xff]
  %v23 = vld [vmem:[%s0 + $0x60] sm:$0xff]
  %v24 = vld [vmem:[%s0 + $0x68] sm:$0xff]
  %v25 = vld [vmem:[%s0 + $0x70] sm:$0xff]
  %v26 = vld [vmem:[%s0 + $0x78] sm:$0xff]
  %v27 = vld [vmem:[%s0 + $0x80] sm:$0xff]
  %v28 = vld [vmem:[%s0 + $0x88] sm:$0xff]
  %v29 = vmax.f32 %v11, %v13
  %v30 = vmax.f32 %v12, %v14
  %v31 = vmax.f32 %v29, %v15
  %v32 = vmax.f32 %v30, %v16
  %v33 = vmax.f32 %v31, %v17
  %v34 = vmax.f32 %v32, %v18
  %v35 = vmax.f32 %v33, %v19
  %v36 = vmax.f32 %v34, %v20
  %v37 = vmax.f32 %v35, %v21
  %v38 = vmax.f32 %v36, %v22
  %v39 = vmax.f32 %v37, %v23
  %v40 = vmax.f32 %v38, %v24
  %v41 = vmax.f32 %v39, %v25
  %v42 = vmax.f32 %v40, %v26
  %v43 = vmax.f32 %v41, %v27
  %v44 = vmax.f32 %v42, %v28
  %v45 = vsub.f32 %v11, %v43
  %v46 = vsub.f32 %v12, %v44
  %v47 = vmul.f32 %v45, 1.442695
  %v48 = vpow.pop %v47
  %v49 = vmul.f32 %v46, 1.442695
  %v50 = vpow.pop %v49
  %v51 = vsub.f32 %v13, %v43
  %v52 = vsub.f32 %v14, %v44
  %v53 = vmul.f32 %v51, 1.442695
  %v54 = vpow.pop %v53
  %v55 = vmul.f32 %v52, 1.442695
  %v56 = vpow.pop %v55
  %v57 = vsub.f32 %v15, %v43
  %v58 = vsub.f32 %v16, %v44
  %v59 = vmul.f32 %v57, 1.442695
  %v60 = vpow.pop %v59
  %v61 = vmul.f32 %v58, 1.442695
  %v62 = vpow.pop %v61
  %v63 = vsub.f32 %v17, %v43
  %v64 = vsub.f32 %v18, %v44
  %v65 = vmul.f32 %v63, 1.442695
  %v66 = vpow.pop %v65
  %v67 = vmul.f32 %v64, 1.442695
  %v68 = vpow.pop %v67
  %v69 = vsub.f32 %v19, %v43
  %v70 = vsub.f32 %v20, %v44
  %v71 = vmul.f32 %v69, 1.442695
  %v72 = vpow.pop %v71
  %v73 = vmul.f32 %v70, 1.442695
  %v74 = vpow.pop %v73
  %v75 = vsub.f32 %v21, %v43
  %v76 = vsub.f32 %v22, %v44
  %v77 = vmul.f32 %v75, 1.442695
  %v78 = vpow.pop %v77
  %v79 = vmul.f32 %v76, 1.442695
  %v80 = vpow.pop %v79
  %v81 = vsub.f32 %v23, %v43
  %v82 = vsub.f32 %v24, %v44
  %v83 = vmul.f32 %v81, 1.442695
  %v84 = vpow.pop %v83
  %v85 = vmul.f32 %v82, 1.442695
  %v86 = vpow.pop %v85
  %v87 = vsub.f32 %v25, %v43
  %v88 = vsub.f32 %v26, %v44
  %v89 = vmul.f32 %v87, 1.442695
  %v90 = vpow.pop %v89
  %v91 = vmul.f32 %v88, 1.442695
  %v92 = vpow.pop %v91
  %v93 = vsub.f32 %v27, %v43
  %v94 = vsub.f32 %v28, %v44
  %v95 = vmul.f32 %v93, 1.442695
  %v96 = vpow.pop %v95
  %v97 = vmul.f32 %v94, 1.442695
  %v98 = vpow.pop %v97
  %v99 = vadd.f32 %v48, %v54
  %v100 = vadd.f32 %v50, %v56
  %v101 = vadd.f32 %v99, %v60
  %v102 = vadd.f32 %v100, %v62
  %v103 = vadd.f32 %v101, %v66
  %v104 = vadd.f32 %v102, %v68
  %v105 = vadd.f32 %v103, %v72
  %v106 = vadd.f32 %v104, %v74
  %v107 = vadd.f32 %v105, %v78
  %v108 = vadd.f32 %v106, %v80
  %v109 = vadd.f32 %v107, %v84
  %v110 = vadd.f32 %v108, %v86
  %v111 = vadd.f32 %v109, %v90
  %v112 = vadd.f32 %v110, %v92
  %v113 = vadd.f32 %v111, %v96
  %v114 = vadd.f32 %v112, %v98
  %v115 = vrcp.pop %v113
  %v116 = vrcp.pop %v114
  %v117 = vld [vmem:[%s1] sm:$0xff]
  %v118 = vld [vmem:[%s1 + $0x8] sm:$0x1]
  %v119 = vld [vmem:[%s1 + $0x10] sm:$0xff]
  %v120 = vld [vmem:[%s1 + $0x18] sm:$0x1]
  %v121 = vmul.f32 %v48, %v115
  %v122 = vmul.f32 %v50, %v116
  %v123 = vlaneseq
  %v124 = vshrl.u32 %v123, 7
  %v125 = vsub.s32 0, %v124
  %v126 = vrot.slane %v117, %v125
  %v127 = vlaneseq
  %v128 = vshrl.u32 %v127, 7
  %v129 = vsub.s32 0, %v128
  %v130 = vrot.slane %v119, %v129
  %v131 = vmul.f32 %v121, %v126
  %v132 = vmul.f32 %v122, %v126
  %v133 = vmul.f32 %v121, %v130
  %v134 = vmul.f32 %v122, %v130
  %v135 = vadd.f32 %v131, 0.0
  %v136 = vadd.f32 %v132, 0.0
  %v137 = vadd.f32 %v133, 0.0
  %v138 = vadd.f32 %v134, 0.0
  %v139 = vmul.f32 %v54, %v115
  %v140 = vmul.f32 %v56, %v116
  %v141 = vlaneseq
  %v142 = vshrl.u32 %v141, 7
  %v143 = vsub.s32 1, %v142
  %v144 = vrot.slane %v117, %v143
  %v145 = vlaneseq
  %v146 = vshrl.u32 %v145, 7
  %v147 = vsub.s32 1, %v146
  %v148 = vrot.slane %v119, %v147
  %v149 = vmul.f32 %v139, %v144
  %v150 = vmul.f32 %v140, %v144
  %v151 = vmul.f32 %v139, %v148
  %v152 = vmul.f32 %v140, %v148
  %v153 = vadd.f32 %v135, %v149
  %v154 = vadd.f32 %v136, %v150
  %v155 = vadd.f32 %v137, %v151
  %v156 = vadd.f32 %v138, %v152
  %v157 = vmul.f32 %v60, %v115
  %v158 = vmul.f32 %v62, %v116
  %v159 = vlaneseq
  %v160 = vshrl.u32 %v159, 7
  %v161 = vsub.s32 2, %v160
  %v162 = vrot.slane %v117, %v161
  %v163 = vlaneseq
  %v164 = vshrl.u32 %v163, 7
  %v165 = vsub.s32 2, %v164
  %v166 = vrot.slane %v119, %v165
  %v167 = vmul.f32 %v157, %v162
  %v168 = vmul.f32 %v158, %v162
  %v169 = vmul.f32 %v157, %v166
  %v170 = vmul.f32 %v158, %v166
  %v171 = vadd.f32 %v153, %v167
  %v172 = vadd.f32 %v154, %v168
  %v173 = vadd.f32 %v155, %v169
  %v174 = vadd.f32 %v156, %v170
  %v175 = vmul.f32 %v66, %v115
  %v176 = vmul.f32 %v68, %v116
  %v177 = vlaneseq
  %v178 = vshrl.u32 %v177, 7
  %v179 = vsub.s32 3, %v178
  %v180 = vrot.slane %v117, %v179
  %v181 = vlaneseq
  %v182 = vshrl.u32 %v181, 7
  %v183 = vsub.s32 3, %v182
  %v184 = vrot.slane %v119, %v183
  %v185 = vmul.f32 %v175, %v180
  %v186 = vmul.f32 %v176, %v180
  %v187 = vmul.f32 %v175, %v184
  %v188 = vmul.f32 %v176, %v184
  %v189 = vadd.f32 %v171, %v185
  %v190 = vadd.f32 %v172, %v186
  %v191 = vadd.f32 %v173, %v187
  %v192 = vadd.f32 %v174, %v188
  %v193 = vmul.f32 %v72, %v115
  %v194 = vmul.f32 %v74, %v116
  %v195 = vlaneseq
  %v196 = vshrl.u32 %v195, 7
  %v197 = vsub.s32 4, %v196
  %v198 = vrot.slane %v117, %v197
  %v199 = vlaneseq
  %v200 = vshrl.u32 %v199, 7
  %v201 = vsub.s32 4, %v200
  %v202 = vrot.slane %v119, %v201
  %v203 = vmul.f32 %v193, %v198
  %v204 = vmul.f32 %v194, %v198
  %v205 = vmul.f32 %v193, %v202
  %v206 = vmul.f32 %v194, %v202
  %v207 = vadd.f32 %v189, %v203
  %v208 = vadd.f32 %v190, %v204
  %v209 = vadd.f32 %v191, %v205
  %v210 = vadd.f32 %v192, %v206
  %v211 = vmul.f32 %v78, %v115
  %v212 = vmul.f32 %v80, %v116
  %v213 = vlaneseq
  %v214 = vshrl.u32 %v213, 7
  %v215 = vsub.s32 5, %v214
  %v216 = vrot.slane %v117, %v215
  %v217 = vlaneseq
  %v218 = vshrl.u32 %v217, 7
  %v219 = vsub.s32 5, %v218
  %v220 = vrot.slane %v119, %v219
  %v221 = vmul.f32 %v211, %v216
  %v222 = vmul.f32 %v212, %v216
  %v223 = vmul.f32 %v211, %v220
  %v224 = vmul.f32 %v212, %v220
  %v225 = vadd.f32 %v207, %v221
  %v226 = vadd.f32 %v208, %v222
  %v227 = vadd.f32 %v209, %v223
  %v228 = vadd.f32 %v210, %v224
  %v229 = vmul.f32 %v84, %v115
  %v230 = vmul.f32 %v86, %v116
  %v231 = vlaneseq
  %v232 = vshrl.u32 %v231, 7
  %v233 = vsub.s32 6, %v232
  %v234 = vrot.slane %v117, %v233
  %v235 = vlaneseq
  %v236 = vshrl.u32 %v235, 7
  %v237 = vsub.s32 6, %v236
  %v238 = vrot.slane %v119, %v237
  %v239 = vmul.f32 %v229, %v234
  %v240 = vmul.f32 %v230, %v234
  %v241 = vmul.f32 %v229, %v238
  %v242 = vmul.f32 %v230, %v238
  %v243 = vadd.f32 %v225, %v239
  %v244 = vadd.f32 %v226, %v240
  %v245 = vadd.f32 %v227, %v241
  %v246 = vadd.f32 %v228, %v242
  %v247 = vmul.f32 %v90, %v115
  %v248 = vmul.f32 %v92, %v116
  %v249 = vlaneseq
  %v250 = vshrl.u32 %v249, 7
  %v251 = vsub.s32 7, %v250
  %v252 = vrot.slane %v117, %v251
  %v253 = vlaneseq
  %v254 = vshrl.u32 %v253, 7
  %v255 = vsub.s32 7, %v254
  %v256 = vrot.slane %v119, %v255
  %v257 = vmul.f32 %v247, %v252
  %v258 = vmul.f32 %v248, %v252
  %v259 = vmul.f32 %v247, %v256
  %v260 = vmul.f32 %v248, %v256
  %v261 = vadd.f32 %v243, %v257
  %v262 = vadd.f32 %v244, %v258
  %v263 = vadd.f32 %v245, %v259
  %v264 = vadd.f32 %v246, %v260
  %v265 = vmul.f32 %v96, %v115
  %v266 = vmul.f32 %v98, %v116
  %v267 = vlaneseq
  %v268 = vshrl.u32 %v267, 7
  %v269 = vsub.s32 0, %v268
  %v270 = vrot.slane %v118, %v269
  %v271 = vlaneseq
  %v272 = vshrl.u32 %v271, 7
  %v273 = vsub.s32 0, %v272
  %v274 = vrot.slane %v120, %v273
  %v275 = vmul.f32 %v265, %v270
  %v276 = vmul.f32 %v266, %v270
  %v277 = vmul.f32 %v265, %v274
  %v278 = vmul.f32 %v266, %v274
  %v279 = vadd.f32 %v261, %v275
  %v280 = vadd.f32 %v262, %v276
  %v281 = vadd.f32 %v263, %v277
  %v282 = vadd.f32 %v264, %v278
  %vm283 = vcmask 31744
  %284 = vst.msk [vmem:[%s2] sm:$0xff] %vm283, %v279
  %285 = vst.msk [vmem:[%s2 + $0x8] sm:$0xff] %vm283, %v280
  %286 = vst.msk [vmem:[%s2 + $0x10] sm:$0xff] %vm283, %v281
  %287 = vst.msk [vmem:[%s2 + $0x18] sm:$0xff] %vm283, %v282
  // Predicated region
  $region10: #{dip_forward.107} parent=0 // pred_check
    _
  $region11: #{dip_forward.107} parent=0 // pred_check_branch
    %289 = sbr.rel (0) target = $region13
  $region12: #{dip_forward.107} parent=0 // pred_region
    _
  $region13: #{dip_forward.107} parent=0 // pred_fallthru
    _
  // Predicated region
  $region14: #{dip_forward.107} parent=0 // pred_check
    _
  $region15: #{dip_forward.107} parent=0 // pred_check_branch
    %291 = sbr.rel (0) target = $region17
  $region16: #{dip_forward.107} parent=0 // pred_region
    _
  $region17: #{dip_forward.107} parent=0 // pred_fallthru
    _

// kernel: dip_forward.108
$region0: #{dip_forward.108}
  #allocation0 [shape = 'u32[]', space=smem, size = 0x4, offset = 0x4, fixed_abs, tag = 'smem constant byte address 0x4 - core index']
  #allocation1 [shape = 'u32[144,128]{1,0:T(1,128)}', space=vmem, size = 0x12000, scoped, tag = 'internal scratch']
  %s0 = inlined_call_operand.vmem [shape: f32[1,256,64], index: 0, kind: input, shape index: {}]
  %s1 = inlined_call_operand.vmem [shape: f32[1,9,256,64], index: 1, kind: input, shape index: {}]
  %s2 = inlined_call_operand.vmem [shape: f32[1,9,64], index: 2, kind: output, shape index: {}]
  %s3 = sld [smem:[#allocation0]]
  $region18: #{dip_forward.108} parent=0
    _
  %s5 = ssub.s32 1, %s3
  %s6 = scalar_select 0, %s5, %s3
  // Predicated region
  $region2: #{dip_forward.108} parent=0 // pred_check
    _
  $region3: #{dip_forward.108} parent=0 // pred_check_branch
    %8 = sbr.rel (0) target = $region5
  $region4: #{dip_forward.108} parent=0 // pred_region
    _
  $region5: #{dip_forward.108} parent=0 // pred_fallthru
    _
  // Predicated region
  $region6: #{dip_forward.108} parent=0 // pred_check
    _
  $region7: #{dip_forward.108} parent=0 // pred_check_branch
    %10 = sbr.rel (0) target = $region9
  $region8: #{dip_forward.108} parent=0 // pred_region
    _
  $region9: #{dip_forward.108} parent=0 // pred_fallthru
    _
  %v11 = vld [vmem:[%s0] sm:$0xff]
  %v12 = vld [vmem:[%s0 + $0x8] sm:$0xff]
  %v13 = vld [vmem:[%s0 + $0x10] sm:$0xff]
  %v14 = vld [vmem:[%s0 + $0x18] sm:$0xff]
  %v15 = vld [vmem:[%s0 + $0x20] sm:$0xff]
  %v16 = vld [vmem:[%s0 + $0x28] sm:$0xff]
  %v17 = vld [vmem:[%s0 + $0x30] sm:$0xff]
  %v18 = vld [vmem:[%s0 + $0x38] sm:$0xff]
  %v19 = vld [vmem:[%s0 + $0x40] sm:$0xff]
  %v20 = vld [vmem:[%s0 + $0x48] sm:$0xff]
  %v21 = vld [vmem:[%s0 + $0x50] sm:$0xff]
  %v22 = vld [vmem:[%s0 + $0x58] sm:$0xff]
  %v23 = vld [vmem:[%s0 + $0x60] sm:$0xff]
  %v24 = vld [vmem:[%s0 + $0x68] sm:$0xff]
  %v25 = vld [vmem:[%s0 + $0x70] sm:$0xff]
  %v26 = vld [vmem:[%s0 + $0x78] sm:$0xff]
  %v27 = vld [vmem:[%s0 + $0x80] sm:$0xff]
  %v28 = vld [vmem:[%s0 + $0x88] sm:$0xff]
  %v29 = vld [vmem:[%s0 + $0x90] sm:$0xff]
  %v30 = vld [vmem:[%s0 + $0x98] sm:$0xff]
  %v31 = vld [vmem:[%s0 + $0xa0] sm:$0xff]
  %v32 = vld [vmem:[%s0 + $0xa8] sm:$0xff]
  %v33 = vld [vmem:[%s0 + $0xb0] sm:$0xff]
  %v34 = vld [vmem:[%s0 + $0xb8] sm:$0xff]
  %v35 = vld [vmem:[%s0 + $0xc0] sm:$0xff]
  %v36 = vld [vmem:[%s0 + $0xc8] sm:$0xff]
  %v37 = vld [vmem:[%s0 + $0xd0] sm:$0xff]
  %v38 = vld [vmem:[%s0 + $0xd8] sm:$0xff]
  %v39 = vld [vmem:[%s0 + $0xe0] sm:$0xff]
  %v40 = vld [vmem:[%s0 + $0xe8] sm:$0xff]
  %v41 = vld [vmem:[%s0 + $0xf0] sm:$0xff]
  %v42 = vld [vmem:[%s0 + $0xf8] sm:$0xff]
  %v43 = vmul.f32 %v11, 0.0625
  %v44 = vmul.f32 %v12, 0.0625
  %v45 = vmul.f32 %v13, 0.0625
  %v46 = vmul.f32 %v14, 0.0625
  %v47 = vmul.f32 %v15, 0.0625
  %v48 = vmul.f32 %v16, 0.0625
  %v49 = vmul.f32 %v17, 0.0625
  %v50 = vmul.f32 %v18, 0.0625
  %v51 = vmul.f32 %v19, 0.0625
  %v52 = vmul.f32 %v20, 0.0625
  %v53 = vmul.f32 %v21, 0.0625
  %v54 = vmul.f32 %v22, 0.0625
  %v55 = vmul.f32 %v23, 0.0625
  %v56 = vmul.f32 %v24, 0.0625
  %v57 = vmul.f32 %v25, 0.0625
  %v58 = vmul.f32 %v26, 0.0625
  %v59 = vmul.f32 %v27, 0.0625
  %v60 = vmul.f32 %v28, 0.0625
  %v61 = vmul.f32 %v29, 0.0625
  %v62 = vmul.f32 %v30, 0.0625
  %v63 = vmul.f32 %v31, 0.0625
  %v64 = vmul.f32 %v32, 0.0625
  %v65 = vmul.f32 %v33, 0.0625
  %v66 = vmul.f32 %v34, 0.0625
  %v67 = vmul.f32 %v35, 0.0625
  %v68 = vmul.f32 %v36, 0.0625
  %v69 = vmul.f32 %v37, 0.0625
  %v70 = vmul.f32 %v38, 0.0625
  %v71 = vmul.f32 %v39, 0.0625
  %v72 = vmul.f32 %v40, 0.0625
  %v73 = vmul.f32 %v41, 0.0625
  %v74 = vmul.f32 %v42, 0.0625
  %v75 = vld [vmem:[%s1] sm:$0xff]
  %v76 = vld [vmem:[%s1 + $0x8] sm:$0xff]
  %v77 = vld [vmem:[%s1 + $0x10] sm:$0xff]
  %v78 = vld [vmem:[%s1 + $0x18] sm:$0xff]
  %v79 = vld [vmem:[%s1 + $0x20] sm:$0xff]
  %v80 = vld [vmem:[%s1 + $0x28] sm:$0xff]
  %v81 = vld [vmem:[%s1 + $0x30] sm:$0xff]
  %v82 = vld [vmem:[%s1 + $0x38] sm:$0xff]
  %v83 = vld [vmem:[%s1 + $0x40] sm:$0xff]
  %v84 = vld [vmem:[%s1 + $0x48] sm:$0xff]
  %v85 = vld [vmem:[%s1 + $0x50] sm:$0xff]
  %v86 = vld [vmem:[%s1 + $0x58] sm:$0xff]
  %v87 = vld [vmem:[%s1 + $0x60] sm:$0xff]
  %v88 = vld [vmem:[%s1 + $0x68] sm:$0xff]
  %v89 = vld [vmem:[%s1 + $0x70] sm:$0xff]
  %v90 = vld [vmem:[%s1 + $0x78] sm:$0xff]
  %v91 = vld [vmem:[%s1 + $0x80] sm:$0xff]
  %v92 = vld [vmem:[%s1 + $0x88] sm:$0xff]
  %v93 = vld [vmem:[%s1 + $0x90] sm:$0xff]
  %v94 = vld [vmem:[%s1 + $0x98] sm:$0xff]
  %v95 = vld [vmem:[%s1 + $0xa0] sm:$0xff]
  %v96 = vld [vmem:[%s1 + $0xa8] sm:$0xff]
  %v97 = vld [vmem:[%s1 + $0xb0] sm:$0xff]
  %v98 = vld [vmem:[%s1 + $0xb8] sm:$0xff]
  %v99 = vld [vmem:[%s1 + $0xc0] sm:$0xff]
  %v100 = vld [vmem:[%s1 + $0xc8] sm:$0xff]
  %v101 = vld [vmem:[%s1 + $0xd0] sm:$0xff]
  %v102 = vld [vmem:[%s1 + $0xd8] sm:$0xff]
  %v103 = vld [vmem:[%s1 + $0xe0] sm:$0xff]
  %v104 = vld [vmem:[%s1 + $0xe8] sm:$0xff]
  %v105 = vld [vmem:[%s1 + $0xf0] sm:$0xff]
  %v106 = vld [vmem:[%s1 + $0xf8] sm:$0xff]
  %v107 = vmul.f32 %v75, %v43
  %v108 = vmul.f32 %v76, %v44
  %v109 = vmul.f32 %v77, %v45
  %v110 = vmul.f32 %v78, %v46
  %v111 = vmul.f32 %v79, %v47
  %v112 = vmul.f32 %v80, %v48
  %v113 = vmul.f32 %v81, %v49
  %v114 = vmul.f32 %v82, %v50
  %v115 = vmul.f32 %v83, %v51
  %v116 = vmul.f32 %v84, %v52
  %v117 = vmul.f32 %v85, %v53
  %v118 = vmul.f32 %v86, %v54
  %v119 = vmul.f32 %v87, %v55
  %v120 = vmul.f32 %v88, %v56
  %v121 = vmul.f32 %v89, %v57
  %v122 = vmul.f32 %v90, %v58
  %v123 = vmul.f32 %v91, %v59
  %v124 = vmul.f32 %v92, %v60
  %v125 = vmul.f32 %v93, %v61
  %v126 = vmul.f32 %v94, %v62
  %v127 = vmul.f32 %v95, %v63
  %v128 = vmul.f32 %v96, %v64
  %v129 = vmul.f32 %v97, %v65
  %v130 = vmul.f32 %v98, %v66
  %v131 = vmul.f32 %v99, %v67
  %v132 = vmul.f32 %v100, %v68
  %v133 = vmul.f32 %v101, %v69
  %v134 = vmul.f32 %v102, %v70
  %v135 = vmul.f32 %v103, %v71
  %v136 = vmul.f32 %v104, %v72
  %v137 = vmul.f32 %v105, %v73
  %v138 = vmul.f32 %v106, %v74
  %vm139 = vcmask 523264
  %v140 = vsel %vm139, %v107, 0.0
  %v141 = vsel %vm139, %v108, 0.0
  %v142 = vadd.f32 %v140, %v141
  %v143 = vsel %vm139, %v109, 0.0
  %v144 = vadd.f32 %v142, %v143
  %v145 = vsel %vm139, %v110, 0.0
  %v146 = vadd.f32 %v144, %v145
  %v147 = vsel %vm139, %v111, 0.0
  %v148 = vadd.f32 %v146, %v147
  %v149 = vsel %vm139, %v112, 0.0
  %v150 = vadd.f32 %v148, %v149
  %v151 = vsel %vm139, %v113, 0.0
  %v152 = vadd.f32 %v150, %v151
  %v153 = vsel %vm139, %v114, 0.0
  %v154 = vadd.f32 %v152, %v153
  %v155 = vsel %vm139, %v115, 0.0
  %v156 = vadd.f32 %v154, %v155
  %v157 = vsel %vm139, %v116, 0.0
  %v158 = vadd.f32 %v156, %v157
  %v159 = vsel %vm139, %v117, 0.0
  %v160 = vadd.f32 %v158, %v159
  %v161 = vsel %vm139, %v118, 0.0
  %v162 = vadd.f32 %v160, %v161
  %v163 = vsel %vm139, %v119, 0.0
  %v164 = vadd.f32 %v162, %v163
  %v165 = vsel %vm139, %v120, 0.0
  %v166 = vadd.f32 %v164, %v165
  %v167 = vsel %vm139, %v121, 0.0
  %v168 = vadd.f32 %v166, %v167
  %v169 = vsel %vm139, %v122, 0.0
  %v170 = vadd.f32 %v168, %v169
  %v171 = vsel %vm139, %v123, 0.0
  %v172 = vadd.f32 %v170, %v171
  %v173 = vsel %vm139, %v124, 0.0
  %v174 = vadd.f32 %v172, %v173
  %v175 = vsel %vm139, %v125, 0.0
  %v176 = vadd.f32 %v174, %v175
  %v177 = vsel %vm139, %v126, 0.0
  %v178 = vadd.f32 %v176, %v177
  %v179 = vsel %vm139, %v127, 0.0
  %v180 = vadd.f32 %v178, %v179
  %v181 = vsel %vm139, %v128, 0.0
  %v182 = vadd.f32 %v180, %v181
  %v183 = vsel %vm139, %v129, 0.0
  %v184 = vadd.f32 %v182, %v183
  %v185 = vsel %vm139, %v130, 0.0
  %v186 = vadd.f32 %v184, %v185
  %v187 = vsel %vm139, %v131, 0.0
  %v188 = vadd.f32 %v186, %v187
  %v189 = vsel %vm139, %v132, 0.0
  %v190 = vadd.f32 %v188, %v189
  %v191 = vsel %vm139, %v133, 0.0
  %v192 = vadd.f32 %v190, %v191
  %v193 = vsel %vm139, %v134, 0.0
  %v194 = vadd.f32 %v192, %v193
  %v195 = vsel %vm139, %v135, 0.0
  %v196 = vadd.f32 %v194, %v195
  %v197 = vsel %vm139, %v136, 0.0
  %v198 = vadd.f32 %v196, %v197
  %v199 = vsel %vm139, %v137, 0.0
  %v200 = vadd.f32 %v198, %v199
  %v201 = vsel %vm139, %v138, 0.0
  %v202 = vadd.f32 %v200, %v201
  %v203 = vrot.slane %v202, 4
  %v204 = vadd.f32 %v202, %v203
  %v205 = vrot.slane %v204, 2
  %v206 = vadd.f32 %v204, %v205
  %v207 = vrot.slane %v206, 1
  %v208 = vadd.f32 %v206, %v207
  %vm209 = vcmask 516096
  %210 = vst.msk [vmem:[%s2] sm:$0x1] %vm209, %v208
  %s211 = scalar_lea.vmem %s1, 256
  %v212 = vld [vmem:[%s211] sm:$0xff]
  %v213 = vld [vmem:[%s211 + $0x8] sm:$0xff]
  %v214 = vld [vmem:[%s211 + $0x10] sm:$0xff]
  %v215 = vld [vmem:[%s211 + $0x18] sm:$0xff]
  %v216 = vld [vmem:[%s211 + $0x20] sm:$0xff]
  %v217 = vld [vmem:[%s211 + $0x28] sm:$0xff]
  %v218 = vld [vmem:[%s211 + $0x30] sm:$0xff]
  %v219 = vld [vmem:[%s211 + $0x38] sm:$0xff]
  %v220 = vld [vmem:[%s211 + $0x40] sm:$0xff]
  %v221 = vld [vmem:[%s211 + $0x48] sm:$0xff]
  %v222 = vld [vmem:[%s211 + $0x50] sm:$0xff]
  %v223 = vld [vmem:[%s211 + $0x58] sm:$0xff]
  %v224 = vld [vmem:[%s211 + $0x60] sm:$0xff]
  %v225 = vld [vmem:[%s211 + $0x68] sm:$0xff]
  %v226 = vld [vmem:[%s211 + $0x70] sm:$0xff]
  %v227 = vld [vmem:[%s211 + $0x78] sm:$0xff]
  %v228 = vld [vmem:[%s211 + $0x80] sm:$0xff]
  %v229 = vld [vmem:[%s211 + $0x88] sm:$0xff]
  %v230 = vld [vmem:[%s211 + $0x90] sm:$0xff]
  %v231 = vld [vmem:[%s211 + $0x98] sm:$0xff]
  %v232 = vld [vmem:[%s211 + $0xa0] sm:$0xff]
  %v233 = vld [vmem:[%s211 + $0xa8] sm:$0xff]
  %v234 = vld [vmem:[%s211 + $0xb0] sm:$0xff]
  %v235 = vld [vmem:[%s211 + $0xb8] sm:$0xff]
  %v236 = vld [vmem:[%s211 + $0xc0] sm:$0xff]
  %v237 = vld [vmem:[%s211 + $0xc8] sm:$0xff]
  %v238 = vld [vmem:[%s211 + $0xd0] sm:$0xff]
  %v239 = vld [vmem:[%s211 + $0xd8] sm:$0xff]
  %v240 = vld [vmem:[%s211 + $0xe0] sm:$0xff]
  %v241 = vld [vmem:[%s211 + $0xe8] sm:$0xff]
  %v242 = vld [vmem:[%s211 + $0xf0] sm:$0xff]
  %v243 = vld [vmem:[%s211 + $0xf8] sm:$0xff]
  %v244 = vmul.f32 %v212, %v43
  %v245 = vmul.f32 %v213, %v44
  %v246 = vmul.f32 %v214, %v45
  %v247 = vmul.f32 %v215, %v46
  %v248 = vmul.f32 %v216, %v47
  %v249 = vmul.f32 %v217, %v48
  %v250 = vmul.f32 %v218, %v49
  %v251 = vmul.f32 %v219, %v50
  %v252 = vmul.f32 %v220, %v51
  %v253 = vmul.f32 %v221, %v52
  %v254 = vmul.f32 %v222, %v53
  %v255 = vmul.f32 %v223, %v54
  %v256 = vmul.f32 %v224, %v55
  %v257 = vmul.f32 %v225, %v56
  %v258 = vmul.f32 %v226, %v57
  %v259 = vmul.f32 %v227, %v58
  %v260 = vmul.f32 %v228, %v59
  %v261 = vmul.f32 %v229, %v60
  %v262 = vmul.f32 %v230, %v61
  %v263 = vmul.f32 %v231, %v62
  %v264 = vmul.f32 %v232, %v63
  %v265 = vmul.f32 %v233, %v64
  %v266 = vmul.f32 %v234, %v65
  %v267 = vmul.f32 %v235, %v66
  %v268 = vmul.f32 %v236, %v67
  %v269 = vmul.f32 %v237, %v68
  %v270 = vmul.f32 %v238, %v69
  %v271 = vmul.f32 %v239, %v70
  %v272 = vmul.f32 %v240, %v71
  %v273 = vmul.f32 %v241, %v72
  %v274 = vmul.f32 %v242, %v73
  %v275 = vmul.f32 %v243, %v74
  %v276 = vsel %vm139, %v244, 0.0
  %v277 = vsel %vm139, %v245, 0.0
  %v278 = vadd.f32 %v276, %v277
  %v279 = vsel %vm139, %v246, 0.0
  %v280 = vadd.f32 %v278, %v279
  %v281 = vsel %vm139, %v247, 0.0
  %v282 = vadd.f32 %v280, %v281
  %v283 = vsel %vm139, %v248, 0.0
  %v284 = vadd.f32 %v282, %v283
  %v285 = vsel %vm139, %v249, 0.0
  %v286 = vadd.f32 %v284, %v285
  %v287 = vsel %vm139, %v250, 0.0
  %v288 = vadd.f32 %v286, %v287
  %v289 = vsel %vm139, %v251, 0.0
  %v290 = vadd.f32 %v288, %v289
  %v291 = vsel %vm139, %v252, 0.0
  %v292 = vadd.f32 %v290, %v291
  %v293 = vsel %vm139, %v253, 0.0
  %v294 = vadd.f32 %v292, %v293
  %v295 = vsel %vm139, %v254, 0.0
  %v296 = vadd.f32 %v294, %v295
  %v297 = vsel %vm139, %v255, 0.0
  %v298 = vadd.f32 %v296, %v297
  %v299 = vsel %vm139, %v256, 0.0
  %v300 = vadd.f32 %v298, %v299
  %v301 = vsel %vm139, %v257, 0.0
  %v302 = vadd.f32 %v300, %v301
  %v303 = vsel %vm139, %v258, 0.0
  %v304 = vadd.f32 %v302, %v303
  %v305 = vsel %vm139, %v259, 0.0
  %v306 = vadd.f32 %v304, %v305
  %v307 = vsel %vm139, %v260, 0.0
  %v308 = vadd.f32 %v306, %v307
  %v309 = vsel %vm139, %v261, 0.0
  %v310 = vadd.f32 %v308, %v309
  %v311 = vsel %vm139, %v262, 0.0
  %v312 = vadd.f32 %v310, %v311
  %v313 = vsel %vm139, %v263, 0.0
  %v314 = vadd.f32 %v312, %v313
  %v315 = vsel %vm139, %v264, 0.0
  %v316 = vadd.f32 %v314, %v315
  %v317 = vsel %vm139, %v265, 0.0
  %v318 = vadd.f32 %v316, %v317
  %v319 = vsel %vm139, %v266, 0.0
  %v320 = vadd.f32 %v318, %v319
  %v321 = vsel %vm139, %v267, 0.0
  %v322 = vadd.f32 %v320, %v321
  %v323 = vsel %vm139, %v268, 0.0
  %v324 = vadd.f32 %v322, %v323
  %v325 = vsel %vm139, %v269, 0.0
  %v326 = vadd.f32 %v324, %v325
  %v327 = vsel %vm139, %v270, 0.0
  %v328 = vadd.f32 %v326, %v327
  %v329 = vsel %vm139, %v271, 0.0
  %v330 = vadd.f32 %v328, %v329
  %v331 = vsel %vm139, %v272, 0.0
  %v332 = vadd.f32 %v330, %v331
  %v333 = vsel %vm139, %v273, 0.0
  %v334 = vadd.f32 %v332, %v333
  %v335 = vsel %vm139, %v274, 0.0
  %v336 = vadd.f32 %v334, %v335
  %v337 = vsel %vm139, %v275, 0.0
  %v338 = vadd.f32 %v336, %v337
  %v339 = vrot.slane %v338, 4
  %v340 = vadd.f32 %v338, %v339
  %v341 = vrot.slane %v340, 2
  %v342 = vadd.f32 %v340, %v341
  %v343 = vrot.slane %v342, 1
  %v344 = vadd.f32 %v342, %v343
  %345 = vst.msk [vmem:[%s2 + $0x1] sm:$0x1] %vm209, %v344
  %s346 = scalar_lea.vmem %s1, 512
  %v347 = vld [vmem:[%s346] sm:$0xff]
  %v348 = vld [vmem:[%s346 + $0x8] sm:$0xff]
  %v349 = vld [vmem:[%s346 + $0x10] sm:$0xff]
  %v350 = vld [vmem:[%s346 + $0x18] sm:$0xff]
  %v351 = vld [vmem:[%s346 + $0x20] sm:$0xff]
  %v352 = vld [vmem:[%s346 + $0x28] sm:$0xff]
  %v353 = vld [vmem:[%s346 + $0x30] sm:$0xff]
  %v354 = vld [vmem:[%s346 + $0x38] sm:$0xff]
  %v355 = vld [vmem:[%s346 + $0x40] sm:$0xff]
  %v356 = vld [vmem:[%s346 + $0x48] sm:$0xff]
  %v357 = vld [vmem:[%s346 + $0x50] sm:$0xff]
  %v358 = vld [vmem:[%s346 + $0x58] sm:$0xff]
  %v359 = vld [vmem:[%s346 + $0x60] sm:$0xff]
  %v360 = vld [vmem:[%s346 + $0x68] sm:$0xff]
  %v361 = vld [vmem:[%s346 + $0x70] sm:$0xff]
  %v362 = vld [vmem:[%s346 + $0x78] sm:$0xff]
  %v363 = vld [vmem:[%s346 + $0x80] sm:$0xff]
  %v364 = vld [vmem:[%s346 + $0x88] sm:$0xff]
  %v365 = vld [vmem:[%s346 + $0x90] sm:$0xff]
  %v366 = vld [vmem:[%s346 + $0x98] sm:$0xff]
  %v367 = vld [vmem:[%s346 + $0xa0] sm:$0xff]
  %v368 = vld [vmem:[%s346 + $0xa8] sm:$0xff]
  %v369 = vld [vmem:[%s346 + $0xb0] sm:$0xff]
  %v370 = vld [vmem:[%s346 + $0xb8] sm:$0xff]
  %v371 = vld [vmem:[%s346 + $0xc0] sm:$0xff]
  %v372 = vld [vmem:[%s346 + $0xc8] sm:$0xff]
  %v373 = vld [vmem:[%s346 + $0xd0] sm:$0xff]
  %v374 = vld [vmem:[%s346 + $0xd8] sm:$0xff]
  %v375 = vld [vmem:[%s346 + $0xe0] sm:$0xff]
  %v376 = vld [vmem:[%s346 + $0xe8] sm:$0xff]
  %v377 = vld [vmem:[%s346 + $0xf0] sm:$0xff]
  %v378 = vld [vmem:[%s346 + $0xf8] sm:$0xff]
  %v379 = vmul.f32 %v347, %v43
  %v380 = vmul.f32 %v348, %v44
  %v381 = vmul.f32 %v349, %v45
  %v382 = vmul.f32 %v350, %v46
  %v383 = vmul.f32 %v351, %v47
  %v384 = vmul.f32 %v352, %v48
  %v385 = vmul.f32 %v353, %v49
  %v386 = vmul.f32 %v354, %v50
  %v387 = vmul.f32 %v355, %v51
  %v388 = vmul.f32 %v356, %v52
  %v389 = vmul.f32 %v357, %v53
  %v390 = vmul.f32 %v358, %v54
  %v391 = vmul.f32 %v359, %v55
  %v392 = vmul.f32 %v360, %v56
  %v393 = vmul.f32 %v361, %v57
  %v394 = vmul.f32 %v362, %v58
  %v395 = vmul.f32 %v363, %v59
  %v396 = vmul.f32 %v364, %v60
  %v397 = vmul.f32 %v365, %v61
  %v398 = vmul.f32 %v366, %v62
  %v399 = vmul.f32 %v367, %v63
  %v400 = vmul.f32 %v368, %v64
  %v401 = vmul.f32 %v369, %v65
  %v402 = vmul.f32 %v370, %v66
  %v403 = vmul.f32 %v371, %v67
  %v404 = vmul.f32 %v372, %v68
  %v405 = vmul.f32 %v373, %v69
  %v406 = vmul.f32 %v374, %v70
  %v407 = vmul.f32 %v375, %v71
  %v408 = vmul.f32 %v376, %v72
  %v409 = vmul.f32 %v377, %v73
  %v410 = vmul.f32 %v378, %v74
  %v411 = vsel %vm139, %v379, 0.0
  %v412 = vsel %vm139, %v380, 0.0
  %v413 = vadd.f32 %v411, %v412
  %v414 = vsel %vm139, %v381, 0.0
  %v415 = vadd.f32 %v413, %v414
  %v416 = vsel %vm139, %v382, 0.0
  %v417 = vadd.f32 %v415, %v416
  %v418 = vsel %vm139, %v383, 0.0
  %v419 = vadd.f32 %v417, %v418
  %v420 = vsel %vm139, %v384, 0.0
  %v421 = vadd.f32 %v419, %v420
  %v422 = vsel %vm139, %v385, 0.0
  %v423 = vadd.f32 %v421, %v422
  %v424 = vsel %vm139, %v386, 0.0
  %v425 = vadd.f32 %v423, %v424
  %v426 = vsel %vm139, %v387, 0.0
  %v427 = vadd.f32 %v425, %v426
  %v428 = vsel %vm139, %v388, 0.0
  %v429 = vadd.f32 %v427, %v428
  %v430 = vsel %vm139, %v389, 0.0
  %v431 = vadd.f32 %v429, %v430
  %v432 = vsel %vm139, %v390, 0.0
  %v433 = vadd.f32 %v431, %v432
  %v434 = vsel %vm139, %v391, 0.0
  %v435 = vadd.f32 %v433, %v434
  %v436 = vsel %vm139, %v392, 0.0
  %v437 = vadd.f32 %v435, %v436
  %v438 = vsel %vm139, %v393, 0.0
  %v439 = vadd.f32 %v437, %v438
  %v440 = vsel %vm139, %v394, 0.0
  %v441 = vadd.f32 %v439, %v440
  %v442 = vsel %vm139, %v395, 0.0
  %v443 = vadd.f32 %v441, %v442
  %v444 = vsel %vm139, %v396, 0.0
  %v445 = vadd.f32 %v443, %v444
  %v446 = vsel %vm139, %v397, 0.0
  %v447 = vadd.f32 %v445, %v446
  %v448 = vsel %vm139, %v398, 0.0
  %v449 = vadd.f32 %v447, %v448
  %v450 = vsel %vm139, %v399, 0.0
  %v451 = vadd.f32 %v449, %v450
  %v452 = vsel %vm139, %v400, 0.0
  %v453 = vadd.f32 %v451, %v452
  %v454 = vsel %vm139, %v401, 0.0
  %v455 = vadd.f32 %v453, %v454
  %v456 = vsel %vm139, %v402, 0.0
  %v457 = vadd.f32 %v455, %v456
  %v458 = vsel %vm139, %v403, 0.0
  %v459 = vadd.f32 %v457, %v458
  %v460 = vsel %vm139, %v404, 0.0
  %v461 = vadd.f32 %v459, %v460
  %v462 = vsel %vm139, %v405, 0.0
  %v463 = vadd.f32 %v461, %v462
  %v464 = vsel %vm139, %v406, 0.0
  %v465 = vadd.f32 %v463, %v464
  %v466 = vsel %vm139, %v407, 0.0
  %v467 = vadd.f32 %v465, %v466
  %v468 = vsel %vm139, %v408, 0.0
  %v469 = vadd.f32 %v467, %v468
  %v470 = vsel %vm139, %v409, 0.0
  %v471 = vadd.f32 %v469, %v470
  %v472 = vsel %vm139, %v410, 0.0
  %v473 = vadd.f32 %v471, %v472
  %v474 = vrot.slane %v473, 4
  %v475 = vadd.f32 %v473, %v474
  %v476 = vrot.slane %v475, 2
  %v477 = vadd.f32 %v475, %v476
  %v478 = vrot.slane %v477, 1
  %v479 = vadd.f32 %v477, %v478
  %480 = vst.msk [vmem:[%s2 + $0x2] sm:$0x1] %vm209, %v479
  %s481 = scalar_lea.vmem %s1, 768
  %v482 = vld [vmem:[%s481] sm:$0xff]
  %v483 = vld [vmem:[%s481 + $0x8] sm:$0xff]
  %v484 = vld [vmem:[%s481 + $0x10] sm:$0xff]
  %v485 = vld [vmem:[%s481 + $0x18] sm:$0xff]
  %v486 = vld [vmem:[%s481 + $0x20] sm:$0xff]
  %v487 = vld [vmem:[%s481 + $0x28] sm:$0xff]
  %v488 = vld [vmem:[%s481 + $0x30] sm:$0xff]
  %v489 = vld [vmem:[%s481 + $0x38] sm:$0xff]
  %v490 = vld [vmem:[%s481 + $0x40] sm:$0xff]
  %v491 = vld [vmem:[%s481 + $0x48] sm:$0xff]
  %v492 = vld [vmem:[%s481 + $0x50] sm:$0xff]
  %v493 = vld [vmem:[%s481 + $0x58] sm:$0xff]
  %v494 = vld [vmem:[%s481 + $0x60] sm:$0xff]
  %v495 = vld [vmem:[%s481 + $0x68] sm:$0xff]
  %v496 = vld [vmem:[%s481 + $0x70] sm:$0xff]
  %v497 = vld [vmem:[%s481 + $0x78] sm:$0xff]
  %v498 = vld [vmem:[%s481 + $0x80] sm:$0xff]
  %v499 = vld [vmem:[%s481 + $0x88] sm:$0xff]
  %v500 = vld [vmem:[%s481 + $0x90] sm:$0xff]
  %v501 = vld [vmem:[%s481 + $0x98] sm:$0xff]
  %v502 = vld [vmem:[%s481 + $0xa0] sm:$0xff]
  %v503 = vld [vmem:[%s481 + $0xa8] sm:$0xff]
  %v504 = vld [vmem:[%s481 + $0xb0] sm:$0xff]
  %v505 = vld [vmem:[%s481 + $0xb8] sm:$0xff]
  %v506 = vld [vmem:[%s481 + $0xc0] sm:$0xff]
  %v507 = vld [vmem:[%s481 + $0xc8] sm:$0xff]
  %v508 = vld [vmem:[%s481 + $0xd0] sm:$0xff]
  %v509 = vld [vmem:[%s481 + $0xd8] sm:$0xff]
  %v510 = vld [vmem:[%s481 + $0xe0] sm:$0xff]
  %v511 = vld [vmem:[%s481 + $0xe8] sm:$0xff]
  %v512 = vld [vmem:[%s481 + $0xf0] sm:$0xff]
  %v513 = vld [vmem:[%s481 + $0xf8] sm:$0xff]
  %v514 = vmul.f32 %v482, %v43
  %v515 = vmul.f32 %v483, %v44
  %v516 = vmul.f32 %v484, %v45
  %v517 = vmul.f32 %v485, %v46
  %v518 = vmul.f32 %v486, %v47
  %v519 = vmul.f32 %v487, %v48
  %v520 = vmul.f32 %v488, %v49
  %v521 = vmul.f32 %v489, %v50
  %v522 = vmul.f32 %v490, %v51
  %v523 = vmul.f32 %v491, %v52
  %v524 = vmul.f32 %v492, %v53
  %v525 = vmul.f32 %v493, %v54
  %v526 = vmul.f32 %v494, %v55
  %v527 = vmul.f32 %v495, %v56
  %v528 = vmul.f32 %v496, %v57
  %v529 = vmul.f32 %v497, %v58
  %v530 = vmul.f32 %v498, %v59
  %v531 = vmul.f32 %v499, %v60
  %v532 = vmul.f32 %v500, %v61
  %v533 = vmul.f32 %v501, %v62
  %v534 = vmul.f32 %v502, %v63
  %v535 = vmul.f32 %v503, %v64
  %v536 = vmul.f32 %v504, %v65
  %v537 = vmul.f32 %v505, %v66
  %v538 = vmul.f32 %v506, %v67
  %v539 = vmul.f32 %v507, %v68
  %v540 = vmul.f32 %v508, %v69
  %v541 = vmul.f32 %v509, %v70
  %v542 = vmul.f32 %v510, %v71
  %v543 = vmul.f32 %v511, %v72
  %v544 = vmul.f32 %v512, %v73
  %v545 = vmul.f32 %v513, %v74
  %v546 = vsel %vm139, %v514, 0.0
  %v547 = vsel %vm139, %v515, 0.0
  %v548 = vadd.f32 %v546, %v547
  %v549 = vsel %vm139, %v516, 0.0
  %v550 = vadd.f32 %v548, %v549
  %v551 = vsel %vm139, %v517, 0.0
  %v552 = vadd.f32 %v550, %v551
  %v553 = vsel %vm139, %v518, 0.0
  %v554 = vadd.f32 %v552, %v553
  %v555 = vsel %vm139, %v519, 0.0
  %v556 = vadd.f32 %v554, %v555
  %v557 = vsel %vm139, %v520, 0.0
  %v558 = vadd.f32 %v556, %v557
  %v559 = vsel %vm139, %v521, 0.0
  %v560 = vadd.f32 %v558, %v559
  %v561 = vsel %vm139, %v522, 0.0
  %v562 = vadd.f32 %v560, %v561
  %v563 = vsel %vm139, %v523, 0.0
  %v564 = vadd.f32 %v562, %v563
  %v565 = vsel %vm139, %v524, 0.0
  %v566 = vadd.f32 %v564, %v565
  %v567 = vsel %vm139, %v525, 0.0
  %v568 = vadd.f32 %v566, %v567
  %v569 = vsel %vm139, %v526, 0.0
  %v570 = vadd.f32 %v568, %v569
  %v571 = vsel %vm139, %v527, 0.0
  %v572 = vadd.f32 %v570, %v571
  %v573 = vsel %vm139, %v528, 0.0
  %v574 = vadd.f32 %v572, %v573
  %v575 = vsel %vm139, %v529, 0.0
  %v576 = vadd.f32 %v574, %v575
  %v577 = vsel %vm139, %v530, 0.0
  %v578 = vadd.f32 %v576, %v577
  %v579 = vsel %vm139, %v531, 0.0
  %v580 = vadd.f32 %v578, %v579
  %v581 = vsel %vm139, %v532, 0.0
  %v582 = vadd.f32 %v580, %v581
  %v583 = vsel %vm139, %v533, 0.0
  %v584 = vadd.f32 %v582, %v583
  %v585 = vsel %vm139, %v534, 0.0
  %v586 = vadd.f32 %v584, %v585
  %v587 = vsel %vm139, %v535, 0.0
  %v588 = vadd.f32 %v586, %v587
  %v589 = vsel %vm139, %v536, 0.0
  %v590 = vadd.f32 %v588, %v589
  %v591 = vsel %vm139, %v537, 0.0
  %v592 = vadd.f32 %v590, %v591
  %v593 = vsel %vm139, %v538, 0.0
  %v594 = vadd.f32 %v592, %v593
  %v595 = vsel %vm139, %v539, 0.0
  %v596 = vadd.f32 %v594, %v595
  %v597 = vsel %vm139, %v540, 0.0
  %v598 = vadd.f32 %v596, %v597
  %v599 = vsel %vm139, %v541, 0.0
  %v600 = vadd.f32 %v598, %v599
  %v601 = vsel %vm139, %v542, 0.0
  %v602 = vadd.f32 %v600, %v601
  %v603 = vsel %vm139, %v543, 0.0
  %v604 = vadd.f32 %v602, %v603
  %v605 = vsel %vm139, %v544, 0.0
  %v606 = vadd.f32 %v604, %v605
  %v607 = vsel %vm139, %v545, 0.0
  %v608 = vadd.f32 %v606, %v607
  %v609 = vrot.slane %v608, 4
  %v610 = vadd.f32 %v608, %v609
  %v611 = vrot.slane %v610, 2
  %v612 = vadd.f32 %v610, %v611
  %v613 = vrot.slane %v612, 1
  %v614 = vadd.f32 %v612, %v613
  %615 = vst.msk [vmem:[%s2 + $0x3] sm:$0x1] %vm209, %v614
  %s616 = scalar_lea.vmem %s1, 1024
  %v617 = vld [vmem:[%s616] sm:$0xff]
  %v618 = vld [vmem:[%s616 + $0x8] sm:$0xff]
  %v619 = vld [vmem:[%s616 + $0x10] sm:$0xff]
  %v620 = vld [vmem:[%s616 + $0x18] sm:$0xff]
  %v621 = vld [vmem:[%s616 + $0x20] sm:$0xff]
  %v622 = vld [vmem:[%s616 + $0x28] sm:$0xff]
  %v623 = vld [vmem:[%s616 + $0x30] sm:$0xff]
  %v624 = vld [vmem:[%s616 + $0x38] sm:$0xff]
  %v625 = vld [vmem:[%s616 + $0x40] sm:$0xff]
  %v626 = vld [vmem:[%s616 + $0x48] sm:$0xff]
  %v627 = vld [vmem:[%s616 + $0x50] sm:$0xff]
  %v628 = vld [vmem:[%s616 + $0x58] sm:$0xff]
  %v629 = vld [vmem:[%s616 + $0x60] sm:$0xff]
  %v630 = vld [vmem:[%s616 + $0x68] sm:$0xff]
  %v631 = vld [vmem:[%s616 + $0x70] sm:$0xff]
  %v632 = vld [vmem:[%s616 + $0x78] sm:$0xff]
  %v633 = vld [vmem:[%s616 + $0x80] sm:$0xff]
  %v634 = vld [vmem:[%s616 + $0x88] sm:$0xff]
  %v635 = vld [vmem:[%s616 + $0x90] sm:$0xff]
  %v636 = vld [vmem:[%s616 + $0x98] sm:$0xff]
  %v637 = vld [vmem:[%s616 + $0xa0] sm:$0xff]
  %v638 = vld [vmem:[%s616 + $0xa8] sm:$0xff]
  %v639 = vld [vmem:[%s616 + $0xb0] sm:$0xff]
  %v640 = vld [vmem:[%s616 + $0xb8] sm:$0xff]
  %v641 = vld [vmem:[%s616 + $0xc0] sm:$0xff]
  %v642 = vld [vmem:[%s616 + $0xc8] sm:$0xff]
  %v643 = vld [vmem:[%s616 + $0xd0] sm:$0xff]
  %v644 = vld [vmem:[%s616 + $0xd8] sm:$0xff]
  %v645 = vld [vmem:[%s616 + $0xe0] sm:$0xff]
  %v646 = vld [vmem:[%s616 + $0xe8] sm:$0xff]
  %v647 = vld [vmem:[%s616 + $0xf0] sm:$0xff]
  %v648 = vld [vmem:[%s616 + $0xf8] sm:$0xff]
  %v649 = vmul.f32 %v617, %v43
  %v650 = vmul.f32 %v618, %v44
  %v651 = vmul.f32 %v619, %v45
  %v652 = vmul.f32 %v620, %v46
  %v653 = vmul.f32 %v621, %v47
  %v654 = vmul.f32 %v622, %v48
  %v655 = vmul.f32 %v623, %v49
  %v656 = vmul.f32 %v624, %v50
  %v657 = vmul.f32 %v625, %v51
  %v658 = vmul.f32 %v626, %v52
  %v659 = vmul.f32 %v627, %v53
  %v660 = vmul.f32 %v628, %v54
  %v661 = vmul.f32 %v629, %v55
  %v662 = vmul.f32 %v630, %v56
  %v663 = vmul.f32 %v631, %v57
  %v664 = vmul.f32 %v632, %v58
  %v665 = vmul.f32 %v633, %v59
  %v666 = vmul.f32 %v634, %v60
  %v667 = vmul.f32 %v635, %v61
  %v668 = vmul.f32 %v636, %v62
  %v669 = vmul.f32 %v637, %v63
  %v670 = vmul.f32 %v638, %v64
  %v671 = vmul.f32 %v639, %v65
  %v672 = vmul.f32 %v640, %v66
  %v673 = vmul.f32 %v641, %v67
  %v674 = vmul.f32 %v642, %v68
  %v675 = vmul.f32 %v643, %v69
  %v676 = vmul.f32 %v644, %v70
  %v677 = vmul.f32 %v645, %v71
  %v678 = vmul.f32 %v646, %v72
  %v679 = vmul.f32 %v647, %v73
  %v680 = vmul.f32 %v648, %v74
  %v681 = vsel %vm139, %v649, 0.0
  %v682 = vsel %vm139, %v650, 0.0
  %v683 = vadd.f32 %v681, %v682
  %v684 = vsel %vm139, %v651, 0.0
  %v685 = vadd.f32 %v683, %v684
  %v686 = vsel %vm139, %v652, 0.0
  %v687 = vadd.f32 %v685, %v686
  %v688 = vsel %vm139, %v653, 0.0
  %v689 = vadd.f32 %v687, %v688
  %v690 = vsel %vm139, %v654, 0.0
  %v691 = vadd.f32 %v689, %v690
  %v692 = vsel %vm139, %v655, 0.0
  %v693 = vadd.f32 %v691, %v692
  %v694 = vsel %vm139, %v656, 0.0
  %v695 = vadd.f32 %v693, %v694
  %v696 = vsel %vm139, %v657, 0.0
  %v697 = vadd.f32 %v695, %v696
  %v698 = vsel %vm139, %v658, 0.0
  %v699 = vadd.f32 %v697, %v698
  %v700 = vsel %vm139, %v659, 0.0
  %v701 = vadd.f32 %v699, %v700
  %v702 = vsel %vm139, %v660, 0.0
  %v703 = vadd.f32 %v701, %v702
  %v704 = vsel %vm139, %v661, 0.0
  %v705 = vadd.f32 %v703, %v704
  %v706 = vsel %vm139, %v662, 0.0
  %v707 = vadd.f32 %v705, %v706
  %v708 = vsel %vm139, %v663, 0.0
  %v709 = vadd.f32 %v707, %v708
  %v710 = vsel %vm139, %v664, 0.0
  %v711 = vadd.f32 %v709, %v710
  %v712 = vsel %vm139, %v665, 0.0
  %v713 = vadd.f32 %v711, %v712
  %v714 = vsel %vm139, %v666, 0.0
  %v715 = vadd.f32 %v713, %v714
  %v716 = vsel %vm139, %v667, 0.0
  %v717 = vadd.f32 %v715, %v716
  %v718 = vsel %vm139, %v668, 0.0
  %v719 = vadd.f32 %v717, %v718
  %v720 = vsel %vm139, %v669, 0.0
  %v721 = vadd.f32 %v719, %v720
  %v722 = vsel %vm139, %v670, 0.0
  %v723 = vadd.f32 %v721, %v722
  %v724 = vsel %vm139, %v671, 0.0
  %v725 = vadd.f32 %v723, %v724
  %v726 = vsel %vm139, %v672, 0.0
  %v727 = vadd.f32 %v725, %v726
  %v728 = vsel %vm139, %v673, 0.0
  %v729 = vadd.f32 %v727, %v728
  %v730 = vsel %vm139, %v674, 0.0
  %v731 = vadd.f32 %v729, %v730
  %v732 = vsel %vm139, %v675, 0.0
  %v733 = vadd.f32 %v731, %v732
  %v734 = vsel %vm139, %v676, 0.0
  %v735 = vadd.f32 %v733, %v734
  %v736 = vsel %vm139, %v677, 0.0
  %v737 = vadd.f32 %v735, %v736
  %v738 = vsel %vm139, %v678, 0.0
  %v739 = vadd.f32 %v737, %v738
  %v740 = vsel %vm139, %v679, 0.0
  %v741 = vadd.f32 %v739, %v740
  %v742 = vsel %vm139, %v680, 0.0
  %v743 = vadd.f32 %v741, %v742
  %v744 = vrot.slane %v743, 4
  %v745 = vadd.f32 %v743, %v744
  %v746 = vrot.slane %v745, 2
  %v747 = vadd.f32 %v745, %v746
  %v748 = vrot.slane %v747, 1
  %v749 = vadd.f32 %v747, %v748
  %750 = vst.msk [vmem:[%s2 + $0x4] sm:$0x1] %vm209, %v749
  %s751 = scalar_lea.vmem %s1, 1280
  %v752 = vld [vmem:[%s751] sm:$0xff]
  %v753 = vld [vmem:[%s751 + $0x8] sm:$0xff]
  %v754 = vld [vmem:[%s751 + $0x10] sm:$0xff]
  %v755 = vld [vmem:[%s751 + $0x18] sm:$0xff]
  %v756 = vld [vmem:[%s751 + $0x20] sm:$0xff]
  %v757 = vld [vmem:[%s751 + $0x28] sm:$0xff]
  %v758 = vld [vmem:[%s751 + $0x30] sm:$0xff]
  %v759 = vld [vmem:[%s751 + $0x38] sm:$0xff]
  %v760 = vld [vmem:[%s751 + $0x40] sm:$0xff]
  %v761 = vld [vmem:[%s751 + $0x48] sm:$0xff]
  %v762 = vld [vmem:[%s751 + $0x50] sm:$0xff]
  %v763 = vld [vmem:[%s751 + $0x58] sm:$0xff]
  %v764 = vld [vmem:[%s751 + $0x60] sm:$0xff]
  %v765 = vld [vmem:[%s751 + $0x68] sm:$0xff]
  %v766 = vld [vmem:[%s751 + $0x70] sm:$0xff]
  %v767 = vld [vmem:[%s751 + $0x78] sm:$0xff]
  %v768 = vld [vmem:[%s751 + $0x80] sm:$0xff]
  %v769 = vld [vmem:[%s751 + $0x88] sm:$0xff]
  %v770 = vld [vmem:[%s751 + $0x90] sm:$0xff]
  %v771 = vld [vmem:[%s751 + $0x98] sm:$0xff]
  %v772 = vld [vmem:[%s751 + $0xa0] sm:$0xff]
  %v773 = vld [vmem:[%s751 + $0xa8] sm:$0xff]
  %v774 = vld [vmem:[%s751 + $0xb0] sm:$0xff]
  %v775 = vld [vmem:[%s751 + $0xb8] sm:$0xff]
  %v776 = vld [vmem:[%s751 + $0xc0] sm:$0xff]
  %v777 = vld [vmem:[%s751 + $0xc8] sm:$0xff]
  %v778 = vld [vmem:[%s751 + $0xd0] sm:$0xff]
  %v779 = vld [vmem:[%s751 + $0xd8] sm:$0xff]
  %v780 = vld [vmem:[%s751 + $0xe0] sm:$0xff]
  %v781 = vld [vmem:[%s751 + $0xe8] sm:$0xff]
  %v782 = vld [vmem:[%s751 + $0xf0] sm:$0xff]
  %v783 = vld [vmem:[%s751 + $0xf8] sm:$0xff]
  %v784 = vmul.f32 %v752, %v43
  %v785 = vmul.f32 %v753, %v44
  %v786 = vmul.f32 %v754, %v45
  %v787 = vmul.f32 %v755, %v46
  %v788 = vmul.f32 %v756, %v47
  %v789 = vmul.f32 %v757, %v48
  %v790 = vmul.f32 %v758, %v49
  %v791 = vmul.f32 %v759, %v50
  %v792 = vmul.f32 %v760, %v51
  %v793 = vmul.f32 %v761, %v52
  %v794 = vmul.f32 %v762, %v53
  %v795 = vmul.f32 %v763, %v54
  %v796 = vmul.f32 %v764, %v55
  %v797 = vmul.f32 %v765, %v56
  %v798 = vmul.f32 %v766, %v57
  %v799 = vmul.f32 %v767, %v58
  %v800 = vmul.f32 %v768, %v59
  %v801 = vmul.f32 %v769, %v60
  %v802 = vmul.f32 %v770, %v61
  %v803 = vmul.f32 %v771, %v62
  %v804 = vmul.f32 %v772, %v63
  %v805 = vmul.f32 %v773, %v64
  %v806 = vmul.f32 %v774, %v65
  %v807 = vmul.f32 %v775, %v66
  %v808 = vmul.f32 %v776, %v67
  %v809 = vmul.f32 %v777, %v68
  %v810 = vmul.f32 %v778, %v69
  %v811 = vmul.f32 %v779, %v70
  %v812 = vmul.f32 %v780, %v71
  %v813 = vmul.f32 %v781, %v72
  %v814 = vmul.f32 %v782, %v73
  %v815 = vmul.f32 %v783, %v74
  %v816 = vsel %vm139, %v784, 0.0
  %v817 = vsel %vm139, %v785, 0.0
  %v818 = vadd.f32 %v816, %v817
  %v819 = vsel %vm139, %v786, 0.0
  %v820 = vadd.f32 %v818, %v819
  %v821 = vsel %vm139, %v787, 0.0
  %v822 = vadd.f32 %v820, %v821
  %v823 = vsel %vm139, %v788, 0.0
  %v824 = vadd.f32 %v822, %v823
  %v825 = vsel %vm139, %v789, 0.0
  %v826 = vadd.f32 %v824, %v825
  %v827 = vsel %vm139, %v790, 0.0
  %v828 = vadd.f32 %v826, %v827
  %v829 = vsel %vm139, %v791, 0.0
  %v830 = vadd.f32 %v828, %v829
  %v831 = vsel %vm139, %v792, 0.0
  %v832 = vadd.f32 %v830, %v831
  %v833 = vsel %vm139, %v793, 0.0
  %v834 = vadd.f32 %v832, %v833
  %v835 = vsel %vm139, %v794, 0.0
  %v836 = vadd.f32 %v834, %v835
  %v837 = vsel %vm139, %v795, 0.0
  %v838 = vadd.f32 %v836, %v837
  %v839 = vsel %vm139, %v796, 0.0
  %v840 = vadd.f32 %v838, %v839
  %v841 = vsel %vm139, %v797, 0.0
  %v842 = vadd.f32 %v840, %v841
  %v843 = vsel %vm139, %v798, 0.0
  %v844 = vadd.f32 %v842, %v843
  %v845 = vsel %vm139, %v799, 0.0
  %v846 = vadd.f32 %v844, %v845
  %v847 = vsel %vm139, %v800, 0.0
  %v848 = vadd.f32 %v846, %v847
  %v849 = vsel %vm139, %v801, 0.0
  %v850 = vadd.f32 %v848, %v849
  %v851 = vsel %vm139, %v802, 0.0
  %v852 = vadd.f32 %v850, %v851
  %v853 = vsel %vm139, %v803, 0.0
  %v854 = vadd.f32 %v852, %v853
  %v855 = vsel %vm139, %v804, 0.0
  %v856 = vadd.f32 %v854, %v855
  %v857 = vsel %vm139, %v805, 0.0
  %v858 = vadd.f32 %v856, %v857
  %v859 = vsel %vm139, %v806, 0.0
  %v860 = vadd.f32 %v858, %v859
  %v861 = vsel %vm139, %v807, 0.0
  %v862 = vadd.f32 %v860, %v861
  %v863 = vsel %vm139, %v808, 0.0
  %v864 = vadd.f32 %v862, %v863
  %v865 = vsel %vm139, %v809, 0.0
  %v866 = vadd.f32 %v864, %v865
  %v867 = vsel %vm139, %v810, 0.0
  %v868 = vadd.f32 %v866, %v867
  %v869 = vsel %vm139, %v811, 0.0
  %v870 = vadd.f32 %v868, %v869
  %v871 = vsel %vm139, %v812, 0.0
  %v872 = vadd.f32 %v870, %v871
  %v873 = vsel %vm139, %v813, 0.0
  %v874 = vadd.f32 %v872, %v873
  %v875 = vsel %vm139, %v814, 0.0
  %v876 = vadd.f32 %v874, %v875
  %v877 = vsel %vm139, %v815, 0.0
  %v878 = vadd.f32 %v876, %v877
  %v879 = vrot.slane %v878, 4
  %v880 = vadd.f32 %v878, %v879
  %v881 = vrot.slane %v880, 2
  %v882 = vadd.f32 %v880, %v881
  %v883 = vrot.slane %v882, 1
  %v884 = vadd.f32 %v882, %v883
  %885 = vst.msk [vmem:[%s2 + $0x5] sm:$0x1] %vm209, %v884
  %s886 = scalar_lea.vmem %s1, 1536
  %v887 = vld [vmem:[%s886] sm:$0xff]
  %v888 = vld [vmem:[%s886 + $0x8] sm:$0xff]
  %v889 = vld [vmem:[%s886 + $0x10] sm:$0xff]
  %v890 = vld [vmem:[%s886 + $0x18] sm:$0xff]
  %v891 = vld [vmem:[%s886 + $0x20] sm:$0xff]
  %v892 = vld [vmem:[%s886 + $0x28] sm:$0xff]
  %v893 = vld [vmem:[%s886 + $0x30] sm:$0xff]
  %v894 = vld [vmem:[%s886 + $0x38] sm:$0xff]
  %v895 = vld [vmem:[%s886 + $0x40] sm:$0xff]
  %v896 = vld [vmem:[%s886 + $0x48] sm:$0xff]
  %v897 = vld [vmem:[%s886 + $0x50] sm:$0xff]
  %v898 = vld [vmem:[%s886 + $0x58] sm:$0xff]
  %v899 = vld [vmem:[%s886 + $0x60] sm:$0xff]
  %v900 = vld [vmem:[%s886 + $0x68] sm:$0xff]
  %v901 = vld [vmem:[%s886 + $0x70] sm:$0xff]
  %v902 = vld [vmem:[%s886 + $0x78] sm:$0xff]
  %v903 = vld [vmem:[%s886 + $0x80] sm:$0xff]
  %v904 = vld [vmem:[%s886 + $0x88] sm:$0xff]
  %v905 = vld [vmem:[%s886 + $0x90] sm:$0xff]
  %v906 = vld [vmem:[%s886 + $0x98] sm:$0xff]
  %v907 = vld [vmem:[%s886 + $0xa0] sm:$0xff]
  %v908 = vld [vmem:[%s886 + $0xa8] sm:$0xff]
  %v909 = vld [vmem:[%s886 + $0xb0] sm:$0xff]
  %v910 = vld [vmem:[%s886 + $0xb8] sm:$0xff]
  %v911 = vld [vmem:[%s886 + $0xc0] sm:$0xff]
  %v912 = vld [vmem:[%s886 + $0xc8] sm:$0xff]
  %v913 = vld [vmem:[%s886 + $0xd0] sm:$0xff]
  %v914 = vld [vmem:[%s886 + $0xd8] sm:$0xff]
  %v915 = vld [vmem:[%s886 + $0xe0] sm:$0xff]
  %v916 = vld [vmem:[%s886 + $0xe8] sm:$0xff]
  %v917 = vld [vmem:[%s886 + $0xf0] sm:$0xff]
  %v918 = vld [vmem:[%s886 + $0xf8] sm:$0xff]
  %v919 = vmul.f32 %v887, %v43
  %v920 = vmul.f32 %v888, %v44
  %v921 = vmul.f32 %v889, %v45
  %v922 = vmul.f32 %v890, %v46
  %v923 = vmul.f32 %v891, %v47
  %v924 = vmul.f32 %v892, %v48
  %v925 = vmul.f32 %v893, %v49
  %v926 = vmul.f32 %v894, %v50
  %v927 = vmul.f32 %v895, %v51
  %v928 = vmul.f32 %v896, %v52
  %v929 = vmul.f32 %v897, %v53
  %v930 = vmul.f32 %v898, %v54
  %v931 = vmul.f32 %v899, %v55
  %v932 = vmul.f32 %v900, %v56
  %v933 = vmul.f32 %v901, %v57
  %v934 = vmul.f32 %v902, %v58
  %v935 = vmul.f32 %v903, %v59
  %v936 = vmul.f32 %v904, %v60
  %v937 = vmul.f32 %v905, %v61
  %v938 = vmul.f32 %v906, %v62
  %v939 = vmul.f32 %v907, %v63
  %v940 = vmul.f32 %v908, %v64
  %v941 = vmul.f32 %v909, %v65
  %v942 = vmul.f32 %v910, %v66
  %v943 = vmul.f32 %v911, %v67
  %v944 = vmul.f32 %v912, %v68
  %v945 = vmul.f32 %v913, %v69
  %v946 = vmul.f32 %v914, %v70
  %v947 = vmul.f32 %v915, %v71
  %v948 = vmul.f32 %v916, %v72
  %v949 = vmul.f32 %v917, %v73
  %v950 = vmul.f32 %v918, %v74
  %v951 = vsel %vm139, %v919, 0.0
  %v952 = vsel %vm139, %v920, 0.0
  %v953 = vadd.f32 %v951, %v952
  %v954 = vsel %vm139, %v921, 0.0
  %v955 = vadd.f32 %v953, %v954
  %v956 = vsel %vm139, %v922, 0.0
  %v957 = vadd.f32 %v955, %v956
  %v958 = vsel %vm139, %v923, 0.0
  %v959 = vadd.f32 %v957, %v958
  %v960 = vsel %vm139, %v924, 0.0
  %v961 = vadd.f32 %v959, %v960
  %v962 = vsel %vm139, %v925, 0.0
  %v963 = vadd.f32 %v961, %v962
  %v964 = vsel %vm139, %v926, 0.0
  %v965 = vadd.f32 %v963, %v964
  %v966 = vsel %vm139, %v927, 0.0
  %v967 = vadd.f32 %v965, %v966
  %v968 = vsel %vm139, %v928, 0.0
  %v969 = vadd.f32 %v967, %v968
  %v970 = vsel %vm139, %v929, 0.0
  %v971 = vadd.f32 %v969, %v970
  %v972 = vsel %vm139, %v930, 0.0
  %v973 = vadd.f32 %v971, %v972
  %v974 = vsel %vm139, %v931, 0.0
  %v975 = vadd.f32 %v973, %v974
  %v976 = vsel %vm139, %v932, 0.0
  %v977 = vadd.f32 %v975, %v976
  %v978 = vsel %vm139, %v933, 0.0
  %v979 = vadd.f32 %v977, %v978
  %v980 = vsel %vm139, %v934, 0.0
  %v981 = vadd.f32 %v979, %v980
  %v982 = vsel %vm139, %v935, 0.0
  %v983 = vadd.f32 %v981, %v982
  %v984 = vsel %vm139, %v936, 0.0
  %v985 = vadd.f32 %v983, %v984
  %v986 = vsel %vm139, %v937, 0.0
  %v987 = vadd.f32 %v985, %v986
  %v988 = vsel %vm139, %v938, 0.0
  %v989 = vadd.f32 %v987, %v988
  %v990 = vsel %vm139, %v939, 0.0
  %v991 = vadd.f32 %v989, %v990
  %v992 = vsel %vm139, %v940, 0.0
  %v993 = vadd.f32 %v991, %v992
  %v994 = vsel %vm139, %v941, 0.0
  %v995 = vadd.f32 %v993, %v994
  %v996 = vsel %vm139, %v942, 0.0
  %v997 = vadd.f32 %v995, %v996
  %v998 = vsel %vm139, %v943, 0.0
  %v999 = vadd.f32 %v997, %v998
  %v1000 = vsel %vm139, %v944, 0.0
  %v1001 = vadd.f32 %v999, %v1000
  %v1002 = vsel %vm139, %v945, 0.0
  %v1003 = vadd.f32 %v1001, %v1002
  %v1004 = vsel %vm139, %v946, 0.0
  %v1005 = vadd.f32 %v1003, %v1004
  %v1006 = vsel %vm139, %v947, 0.0
  %v1007 = vadd.f32 %v1005, %v1006
  %v1008 = vsel %vm139, %v948, 0.0
  %v1009 = vadd.f32 %v1007, %v1008
  %v1010 = vsel %vm139, %v949, 0.0
  %v1011 = vadd.f32 %v1009, %v1010
  %v1012 = vsel %vm139, %v950, 0.0
  %v1013 = vadd.f32 %v1011, %v1012
  %v1014 = vrot.slane %v1013, 4
  %v1015 = vadd.f32 %v1013, %v1014
  %v1016 = vrot.slane %v1015, 2
  %v1017 = vadd.f32 %v1015, %v1016
  %v1018 = vrot.slane %v1017, 1
  %v1019 = vadd.f32 %v1017, %v1018
  %1020 = vst.msk [vmem:[%s2 + $0x6] sm:$0x1] %vm209, %v1019
  %s1021 = scalar_lea.vmem %s1, 1792
  %v1022 = vld [vmem:[%s1021] sm:$0xff]
  %v1023 = vld [vmem:[%s1021 + $0x8] sm:$0xff]
  %v1024 = vld [vmem:[%s1021 + $0x10] sm:$0xff]
  %v1025 = vld [vmem:[%s1021 + $0x18] sm:$0xff]
  %v1026 = vld [vmem:[%s1021 + $0x20] sm:$0xff]
  %v1027 = vld [vmem:[%s1021 + $0x28] sm:$0xff]
  %v1028 = vld [vmem:[%s1021 + $0x30] sm:$0xff]
  %v1029 = vld [vmem:[%s1021 + $0x38] sm:$0xff]
  %v1030 = vld [vmem:[%s1021 + $0x40] sm:$0xff]
  %v1031 = vld [vmem:[%s1021 + $0x48] sm:$0xff]
  %v1032 = vld [vmem:[%s1021 + $0x50] sm:$0xff]
  %v1033 = vld [vmem:[%s1021 + $0x58] sm:$0xff]
  %v1034 = vld [vmem:[%s1021 + $0x60] sm:$0xff]
  %v1035 = vld [vmem:[%s1021 + $0x68] sm:$0xff]
  %v1036 = vld [vmem:[%s1021 + $0x70] sm:$0xff]
  %v1037 = vld [vmem:[%s1021 + $0x78] sm:$0xff]
  %v1038 = vld [vmem:[%s1021 + $0x80] sm:$0xff]
  %v1039 = vld [vmem:[%s1021 + $0x88] sm:$0xff]
  %v1040 = vld [vmem:[%s1021 + $0x90] sm:$0xff]
  %v1041 = vld [vmem:[%s1021 + $0x98] sm:$0xff]
  %v1042 = vld [vmem:[%s1021 + $0xa0] sm:$0xff]
  %v1043 = vld [vmem:[%s1021 + $0xa8] sm:$0xff]
  %v1044 = vld [vmem:[%s1021 + $0xb0] sm:$0xff]
  %v1045 = vld [vmem:[%s1021 + $0xb8] sm:$0xff]
  %v1046 = vld [vmem:[%s1021 + $0xc0] sm:$0xff]
  %v1047 = vld [vmem:[%s1021 + $0xc8] sm:$0xff]
  %v1048 = vld [vmem:[%s1021 + $0xd0] sm:$0xff]
  %v1049 = vld [vmem:[%s1021 + $0xd8] sm:$0xff]
  %v1050 = vld [vmem:[%s1021 + $0xe0] sm:$0xff]
  %v1051 = vld [vmem:[%s1021 + $0xe8] sm:$0xff]
  %v1052 = vld [vmem:[%s1021 + $0xf0] sm:$0xff]
  %v1053 = vld [vmem:[%s1021 + $0xf8] sm:$0xff]
  %v1054 = vmul.f32 %v1022, %v43
  %v1055 = vmul.f32 %v1023, %v44
  %v1056 = vmul.f32 %v1024, %v45
  %v1057 = vmul.f32 %v1025, %v46
  %v1058 = vmul.f32 %v1026, %v47
  %v1059 = vmul.f32 %v1027, %v48
  %v1060 = vmul.f32 %v1028, %v49
  %v1061 = vmul.f32 %v1029, %v50
  %v1062 = vmul.f32 %v1030, %v51
  %v1063 = vmul.f32 %v1031, %v52
  %v1064 = vmul.f32 %v1032, %v53
  %v1065 = vmul.f32 %v1033, %v54
  %v1066 = vmul.f32 %v1034, %v55
  %v1067 = vmul.f32 %v1035, %v56
  %v1068 = vmul.f32 %v1036, %v57
  %v1069 = vmul.f32 %v1037, %v58
  %v1070 = vmul.f32 %v1038, %v59
  %v1071 = vmul.f32 %v1039, %v60
  %v1072 = vmul.f32 %v1040, %v61
  %v1073 = vmul.f32 %v1041, %v62
  %v1074 = vmul.f32 %v1042, %v63
  %v1075 = vmul.f32 %v1043, %v64
  %v1076 = vmul.f32 %v1044, %v65
  %v1077 = vmul.f32 %v1045, %v66
  %v1078 = vmul.f32 %v1046, %v67
  %v1079 = vmul.f32 %v1047, %v68
  %v1080 = vmul.f32 %v1048, %v69
  %v1081 = vmul.f32 %v1049, %v70
  %v1082 = vmul.f32 %v1050, %v71
  %v1083 = vmul.f32 %v1051, %v72
  %v1084 = vmul.f32 %v1052, %v73
  %v1085 = vmul.f32 %v1053, %v74
  %v1086 = vsel %vm139, %v1054, 0.0
  %v1087 = vsel %vm139, %v1055, 0.0
  %v1088 = vadd.f32 %v1086, %v1087
  %v1089 = vsel %vm139, %v1056, 0.0
  %v1090 = vadd.f32 %v1088, %v1089
  %v1091 = vsel %vm139, %v1057, 0.0
  %v1092 = vadd.f32 %v1090, %v1091
  %v1093 = vsel %vm139, %v1058, 0.0
  %v1094 = vadd.f32 %v1092, %v1093
  %v1095 = vsel %vm139, %v1059, 0.0
  %v1096 = vadd.f32 %v1094, %v1095
  %v1097 = vsel %vm139, %v1060, 0.0
  %v1098 = vadd.f32 %v1096, %v1097
  %v1099 = vsel %vm139, %v1061, 0.0
  %v1100 = vadd.f32 %v1098, %v1099
  %v1101 = vsel %vm139, %v1062, 0.0
  %v1102 = vadd.f32 %v1100, %v1101
  %v1103 = vsel %vm139, %v1063, 0.0
  %v1104 = vadd.f32 %v1102, %v1103
  %v1105 = vsel %vm139, %v1064, 0.0
  %v1106 = vadd.f32 %v1104, %v1105
  %v1107 = vsel %vm139, %v1065, 0.0
  %v1108 = vadd.f32 %v1106, %v1107
  %v1109 = vsel %vm139, %v1066, 0.0
  %v1110 = vadd.f32 %v1108, %v1109
  %v1111 = vsel %vm139, %v1067, 0.0
  %v1112 = vadd.f32 %v1110, %v1111
  %v1113 = vsel %vm139, %v1068, 0.0
  %v1114 = vadd.f32 %v1112, %v1113
  %v1115 = vsel %vm139, %v1069, 0.0
  %v1116 = vadd.f32 %v1114, %v1115
  %v1117 = vsel %vm139, %v1070, 0.0
  %v1118 = vadd.f32 %v1116, %v1117
  %v1119 = vsel %vm139, %v1071, 0.0
  %v1120 = vadd.f32 %v1118, %v1119
  %v1121 = vsel %vm139, %v1072, 0.0
  %v1122 = vadd.f32 %v1120, %v1121
  %v1123 = vsel %vm139, %v1073, 0.0
  %v1124 = vadd.f32 %v1122, %v1123
  %v1125 = vsel %vm139, %v1074, 0.0
  %v1126 = vadd.f32 %v1124, %v1125
  %v1127 = vsel %vm139, %v1075, 0.0
  %v1128 = vadd.f32 %v1126, %v1127
  %v1129 = vsel %vm139, %v1076, 0.0
  %v1130 = vadd.f32 %v1128, %v1129
  %v1131 = vsel %vm139, %v1077, 0.0
  %v1132 = vadd.f32 %v1130, %v1131
  %v1133 = vsel %vm139, %v1078, 0.0
  %v1134 = vadd.f32 %v1132, %v1133
  %v1135 = vsel %vm139, %v1079, 0.0
  %v1136 = vadd.f32 %v1134, %v1135
  %v1137 = vsel %vm139, %v1080, 0.0
  %v1138 = vadd.f32 %v1136, %v1137
  %v1139 = vsel %vm139, %v1081, 0.0
  %v1140 = vadd.f32 %v1138, %v1139
  %v1141 = vsel %vm139, %v1082, 0.0
  %v1142 = vadd.f32 %v1140, %v1141
  %v1143 = vsel %vm139, %v1083, 0.0
  %v1144 = vadd.f32 %v1142, %v1143
  %v1145 = vsel %vm139, %v1084, 0.0
  %v1146 = vadd.f32 %v1144, %v1145
  %v1147 = vsel %vm139, %v1085, 0.0
  %v1148 = vadd.f32 %v1146, %v1147
  %v1149 = vrot.slane %v1148, 4
  %v1150 = vadd.f32 %v1148, %v1149
  %v1151 = vrot.slane %v1150, 2
  %v1152 = vadd.f32 %v1150, %v1151
  %v1153 = vrot.slane %v1152, 1
  %v1154 = vadd.f32 %v1152, %v1153
  %1155 = vst.msk [vmem:[%s2 + $0x7] sm:$0x1] %vm209, %v1154
  %s1156 = scalar_lea.vmem %s1, 2048
  %v1157 = vld [vmem:[%s1156] sm:$0xff]
  %v1158 = vld [vmem:[%s1156 + $0x8] sm:$0xff]
  %v1159 = vld [vmem:[%s1156 + $0x10] sm:$0xff]
  %v1160 = vld [vmem:[%s1156 + $0x18] sm:$0xff]
  %v1161 = vld [vmem:[%s1156 + $0x20] sm:$0xff]
  %v1162 = vld [vmem:[%s1156 + $0x28] sm:$0xff]
  %v1163 = vld [vmem:[%s1156 + $0x30] sm:$0xff]
  %v1164 = vld [vmem:[%s1156 + $0x38] sm:$0xff]
  %v1165 = vld [vmem:[%s1156 + $0x40] sm:$0xff]
  %v1166 = vld [vmem:[%s1156 + $0x48] sm:$0xff]
  %v1167 = vld [vmem:[%s1156 + $0x50] sm:$0xff]
  %v1168 = vld [vmem:[%s1156 + $0x58] sm:$0xff]
  %v1169 = vld [vmem:[%s1156 + $0x60] sm:$0xff]
  %v1170 = vld [vmem:[%s1156 + $0x68] sm:$0xff]
  %v1171 = vld [vmem:[%s1156 + $0x70] sm:$0xff]
  %v1172 = vld [vmem:[%s1156 + $0x78] sm:$0xff]
  %v1173 = vld [vmem:[%s1156 + $0x80] sm:$0xff]
  %v1174 = vld [vmem:[%s1156 + $0x88] sm:$0xff]
  %v1175 = vld [vmem:[%s1156 + $0x90] sm:$0xff]
  %v1176 = vld [vmem:[%s1156 + $0x98] sm:$0xff]
  %v1177 = vld [vmem:[%s1156 + $0xa0] sm:$0xff]
  %v1178 = vld [vmem:[%s1156 + $0xa8] sm:$0xff]
  %v1179 = vld [vmem:[%s1156 + $0xb0] sm:$0xff]
  %v1180 = vld [vmem:[%s1156 + $0xb8] sm:$0xff]
  %v1181 = vld [vmem:[%s1156 + $0xc0] sm:$0xff]
  %v1182 = vld [vmem:[%s1156 + $0xc8] sm:$0xff]
  %v1183 = vld [vmem:[%s1156 + $0xd0] sm:$0xff]
  %v1184 = vld [vmem:[%s1156 + $0xd8] sm:$0xff]
  %v1185 = vld [vmem:[%s1156 + $0xe0] sm:$0xff]
  %v1186 = vld [vmem:[%s1156 + $0xe8] sm:$0xff]
  %v1187 = vld [vmem:[%s1156 + $0xf0] sm:$0xff]
  %v1188 = vld [vmem:[%s1156 + $0xf8] sm:$0xff]
  %v1189 = vmul.f32 %v1157, %v43
  %v1190 = vmul.f32 %v1158, %v44
  %v1191 = vmul.f32 %v1159, %v45
  %v1192 = vmul.f32 %v1160, %v46
  %v1193 = vmul.f32 %v1161, %v47
  %v1194 = vmul.f32 %v1162, %v48
  %v1195 = vmul.f32 %v1163, %v49
  %v1196 = vmul.f32 %v1164, %v50
  %v1197 = vmul.f32 %v1165, %v51
  %v1198 = vmul.f32 %v1166, %v52
  %v1199 = vmul.f32 %v1167, %v53
  %v1200 = vmul.f32 %v1168, %v54
  %v1201 = vmul.f32 %v1169, %v55
  %v1202 = vmul.f32 %v1170, %v56
  %v1203 = vmul.f32 %v1171, %v57
  %v1204 = vmul.f32 %v1172, %v58
  %v1205 = vmul.f32 %v1173, %v59
  %v1206 = vmul.f32 %v1174, %v60
  %v1207 = vmul.f32 %v1175, %v61
  %v1208 = vmul.f32 %v1176, %v62
  %v1209 = vmul.f32 %v1177, %v63
  %v1210 = vmul.f32 %v1178, %v64
  %v1211 = vmul.f32 %v1179, %v65
  %v1212 = vmul.f32 %v1180, %v66
  %v1213 = vmul.f32 %v1181, %v67
  %v1214 = vmul.f32 %v1182, %v68
  %v1215 = vmul.f32 %v1183, %v69
  %v1216 = vmul.f32 %v1184, %v70
  %v1217 = vmul.f32 %v1185, %v71
  %v1218 = vmul.f32 %v1186, %v72
  %v1219 = vmul.f32 %v1187, %v73
  %v1220 = vmul.f32 %v1188, %v74
  %v1221 = vsel %vm139, %v1189, 0.0
  %v1222 = vsel %vm139, %v1190, 0.0
  %v1223 = vadd.f32 %v1221, %v1222
  %v1224 = vsel %vm139, %v1191, 0.0
  %v1225 = vadd.f32 %v1223, %v1224
  %v1226 = vsel %vm139, %v1192, 0.0
  %v1227 = vadd.f32 %v1225, %v1226
  %v1228 = vsel %vm139, %v1193, 0.0
  %v1229 = vadd.f32 %v1227, %v1228
  %v1230 = vsel %vm139, %v1194, 0.0
  %v1231 = vadd.f32 %v1229, %v1230
  %v1232 = vsel %vm139, %v1195, 0.0
  %v1233 = vadd.f32 %v1231, %v1232
  %v1234 = vsel %vm139, %v1196, 0.0
  %v1235 = vadd.f32 %v1233, %v1234
  %v1236 = vsel %vm139, %v1197, 0.0
  %v1237 = vadd.f32 %v1235, %v1236
  %v1238 = vsel %vm139, %v1198, 0.0
  %v1239 = vadd.f32 %v1237, %v1238
  %v1240 = vsel %vm139, %v1199, 0.0
  %v1241 = vadd.f32 %v1239, %v1240
  %v1242 = vsel %vm139, %v1200, 0.0
  %v1243 = vadd.f32 %v1241, %v1242
  %v1244 = vsel %vm139, %v1201, 0.0
  %v1245 = vadd.f32 %v1243, %v1244
  %v1246 = vsel %vm139, %v1202, 0.0
  %v1247 = vadd.f32 %v1245, %v1246
  %v1248 = vsel %vm139, %v1203, 0.0
  %v1249 = vadd.f32 %v1247, %v1248
  %v1250 = vsel %vm139, %v1204, 0.0
  %v1251 = vadd.f32 %v1249, %v1250
  %v1252 = vsel %vm139, %v1205, 0.0
  %v1253 = vadd.f32 %v1251, %v1252
  %v1254 = vsel %vm139, %v1206, 0.0
  %v1255 = vadd.f32 %v1253, %v1254
  %v1256 = vsel %vm139, %v1207, 0.0
  %v1257 = vadd.f32 %v1255, %v1256
  %v1258 = vsel %vm139, %v1208, 0.0
  %v1259 = vadd.f32 %v1257, %v1258
  %v1260 = vsel %vm139, %v1209, 0.0
  %v1261 = vadd.f32 %v1259, %v1260
  %v1262 = vsel %vm139, %v1210, 0.0
  %v1263 = vadd.f32 %v1261, %v1262
  %v1264 = vsel %vm139, %v1211, 0.0
  %v1265 = vadd.f32 %v1263, %v1264
  %v1266 = vsel %vm139, %v1212, 0.0
  %v1267 = vadd.f32 %v1265, %v1266
  %v1268 = vsel %vm139, %v1213, 0.0
  %v1269 = vadd.f32 %v1267, %v1268
  %v1270 = vsel %vm139, %v1214, 0.0
  %v1271 = vadd.f32 %v1269, %v1270
  %v1272 = vsel %vm139, %v1215, 0.0
  %v1273 = vadd.f32 %v1271, %v1272
  %v1274 = vsel %vm139, %v1216, 0.0
  %v1275 = vadd.f32 %v1273, %v1274
  %v1276 = vsel %vm139, %v1217, 0.0
  %v1277 = vadd.f32 %v1275, %v1276
  %v1278 = vsel %vm139, %v1218, 0.0
  %v1279 = vadd.f32 %v1277, %v1278
  %v1280 = vsel %vm139, %v1219, 0.0
  %v1281 = vadd.f32 %v1279, %v1280
  %v1282 = vsel %vm139, %v1220, 0.0
  %v1283 = vadd.f32 %v1281, %v1282
  %v1284 = vrot.slane %v1283, 4
  %v1285 = vadd.f32 %v1283, %v1284
  %v1286 = vrot.slane %v1285, 2
  %v1287 = vadd.f32 %v1285, %v1286
  %v1288 = vrot.slane %v1287, 1
  %v1289 = vadd.f32 %v1287, %v1288
  %1290 = vst.msk [vmem:[%s2 + $0x8] sm:$0x1] %vm209, %v1289
  // Predicated region
  $region10: #{dip_forward.108} parent=0 // pred_check
    _
  $region11: #{dip_forward.108} parent=0 // pred_check_branch
    %1292 = sbr.rel (0) target = $region13
  $region12: #{dip_forward.108} parent=0 // pred_region
    _
  $region13: #{dip_forward.108} parent=0 // pred_fallthru
    _
  // Predicated region
  $region14: #{dip_forward.108} parent=0 // pred_check
    _
  $region15: #{dip_forward.108} parent=0 // pred_check_branch
    %1294 = sbr.rel (0) target = $region17
  $region16: #{dip_forward.108} parent=0 // pred_region
    _
  $region17: #{dip_forward.108} parent=0 // pred_fallthru
    _

// kernel: dip_forward.109
$region0: #{dip_forward.109}
  #allocation0 [shape = 'u32[]', space=smem, size = 0x4, offset = 0x4, fixed_abs, tag = 'smem constant byte address 0x4 - core index']
  #allocation1 [shape = 'u32[144,128]{1,0:T(1,128)}', space=vmem, size = 0x12000, scoped, tag = 'internal scratch']
  #allocation2 [shape = 'f32[64,128]{1,0:T(8,128)}', space=vmem, size = 0x8000, scoped, tag = 'scratch operand']
  %s0 = inlined_call_operand.vmem [shape: bf16[64,128], index: 0, kind: input, shape index: {}]
  %s1 = inlined_call_operand.vmem [shape: bf16[128,128], index: 1, kind: input, shape index: {}]
  %s2 = inlined_call_operand.vmem [shape: f32[1,128], index: 2, kind: input, shape index: {}]
  %s3 = inlined_call_operand.vmem [shape: f32[64,128], index: 3, kind: output, shape index: {}]
  %s4 = sld [smem:[#allocation0]]
  $region30: #{dip_forward.109} parent=0
    _
  %s6 = ssub.s32 1, %s4
  %s7 = scalar_select 0, %s6, %s4
  // Predicated region
  $region2: #{dip_forward.109} parent=0 // pred_check
    _
  $region3: #{dip_forward.109} parent=0 // pred_check_branch
    %9 = sbr.rel (0) target = $region5
  $region4: #{dip_forward.109} parent=0 // pred_region
    _
  $region5: #{dip_forward.109} parent=0 // pred_fallthru
    _
  // Predicated region
  $region6: #{dip_forward.109} parent=0 // pred_check
    _
  $region7: #{dip_forward.109} parent=0 // pred_check_branch
    %11 = sbr.rel (0) target = $region9
  $region8: #{dip_forward.109} parent=0 // pred_region
    _
  $region9: #{dip_forward.109} parent=0 // pred_fallthru
    _
  // Predicated region
  $region10: #{dip_forward.109} parent=0 // pred_check
    _
  $region11: #{dip_forward.109} parent=0 // pred_check_branch
    %13 = sbr.rel (0) target = $region13
  $region12: #{dip_forward.109} parent=0 // pred_region
    _
  $region13: #{dip_forward.109} parent=0 // pred_fallthru
    _
  %p15 = scmp.eq.s32.totalorder 0, 0
  // Predicated region
  $region14: #{dip_forward.109} parent=0 // pred_check
    %p16 = pneg %p15
  $region15: #{dip_forward.109} parent=0 // pred_check_branch
    %18 = sbr.rel (%p16) target = $region17
  $region16: #{dip_forward.109} parent=0 // pred_region
    %19 = vst [vmem:[#allocation2] sm:$0xff] 0.0
    %20 = vst [vmem:[#allocation2 + $0x8] sm:$0xff] 0.0
    %21 = vst [vmem:[#allocation2 + $0x10] sm:$0xff] 0.0
    %22 = vst [vmem:[#allocation2 + $0x18] sm:$0xff] 0.0
    %23 = vst [vmem:[#allocation2 + $0x20] sm:$0xff] 0.0
    %24 = vst [vmem:[#allocation2 + $0x28] sm:$0xff] 0.0
    %25 = vst [vmem:[#allocation2 + $0x30] sm:$0xff] 0.0
    %26 = vst [vmem:[#allocation2 + $0x38] sm:$0xff] 0.0
  $region17: #{dip_forward.109} parent=0 // pred_fallthru
    _
  %v27 = vld [vmem:[#allocation2] sm:$0xff]
  %v28 = vld [vmem:[#allocation2 + $0x8] sm:$0xff]
  %v29 = vld [vmem:[#allocation2 + $0x10] sm:$0xff]
  %v30 = vld [vmem:[#allocation2 + $0x18] sm:$0xff]
  %v31 = vld [vmem:[#allocation2 + $0x20] sm:$0xff]
  %v32 = vld [vmem:[#allocation2 + $0x28] sm:$0xff]
  %v33 = vld [vmem:[#allocation2 + $0x30] sm:$0xff]
  %v34 = vld [vmem:[#allocation2 + $0x38] sm:$0xff]
  %v35 = vld [vmem:[%s0] sm:$0xf]
  %v36 = vld [vmem:[%s0 + $0x4] sm:$0xf]
  %v37 = vld [vmem:[%s0 + $0x8] sm:$0xf]
  %v38 = vld [vmem:[%s0 + $0xc] sm:$0xf]
  %v39 = vld [vmem:[%s0 + $0x10] sm:$0xf]
  %v40 = vld [vmem:[%s0 + $0x14] sm:$0xf]
  %v41 = vld [vmem:[%s0 + $0x18] sm:$0xf]
  %v42 = vld [vmem:[%s0 + $0x1c] sm:$0xf]
  %v43 = vld [vmem:[%s1] sm:$0xf]
  %v44 = vld [vmem:[%s1 + $0x4] sm:$0xf]
  %v45 = vld [vmem:[%s1 + $0x8] sm:$0xf]
  %v46 = vld [vmem:[%s1 + $0xc] sm:$0xf]
  %v47 = vld [vmem:[%s1 + $0x10] sm:$0xf]
  %v48 = vld [vmem:[%s1 + $0x14] sm:$0xf]
  %v49 = vld [vmem:[%s1 + $0x18] sm:$0xf]
  %v50 = vld [vmem:[%s1 + $0x1c] sm:$0xf]
  %v51 = vld [vmem:[%s1 + $0x20] sm:$0xf]
  %v52 = vld [vmem:[%s1 + $0x24] sm:$0xf]
  %v53 = vld [vmem:[%s1 + $0x28] sm:$0xf]
  %v54 = vld [vmem:[%s1 + $0x2c] sm:$0xf]
  %v55 = vld [vmem:[%s1 + $0x30] sm:$0xf]
  %v56 = vld [vmem:[%s1 + $0x34] sm:$0xf]
  %v57 = vld [vmem:[%s1 + $0x38] sm:$0xf]
  %v58 = vld [vmem:[%s1 + $0x3c] sm:$0xf]
  %v67 = vunpack.c.l.b16 %v35
  %v68 = vunpack.c.l.b16 %v36
  %v69 = vunpack.c.l.b16 %v37
  %v70 = vunpack.c.l.b16 %v38
  %v71 = vunpack.c.l.b16 %v39
  %v72 = vunpack.c.l.b16 %v40
  %v73 = vunpack.c.l.b16 %v41
  %v74 = vunpack.c.l.b16 %v42
  %v75 = vpack.c.b16 %v68, %v67
  %v76 = vpack.c.b16 %v70, %v69
  %v77 = vpack.c.b16 %v72, %v71
  %v78 = vpack.c.b16 %v74, %v73
  %v99 = vunpack.c.l.b16 %v43
  %v100 = vunpack.c.l.b16 %v44
  %v101 = vunpack.c.l.b16 %v45
  %v102 = vunpack.c.l.b16 %v46
  %v103 = vunpack.c.l.b16 %v47
  %v104 = vunpack.c.l.b16 %v48
  %v105 = vunpack.c.l.b16 %v49
  %v106 = vunpack.c.l.b16 %v50
  %v107 = vunpack.c.l.b16 %v51
  %v108 = vunpack.c.l.b16 %v52
  %v109 = vunpack.c.l.b16 %v53
  %v110 = vunpack.c.l.b16 %v54
  %v111 = vunpack.c.l.b16 %v55
  %v112 = vunpack.c.l.b16 %v56
  %v113 = vunpack.c.l.b16 %v57
  %v114 = vunpack.c.l.b16 %v58
  %v115 = vpack.c.b16 %v100, %v99
  %v116 = vpack.c.b16 %v102, %v101
  %v117 = vpack.c.b16 %v104, %v103
  %v118 = vpack.c.b16 %v106, %v105
  %v119 = vpack.c.b16 %v108, %v107
  %v120 = vpack.c.b16 %v110, %v109
  %v121 = vpack.c.b16 %v112, %v111
  %v122 = vpack.c.b16 %v114, %v113
  %131 = vmatprep.subr.bf16.mxu0 0
  %132 = vmatpush1.bf16.msra.mxu0 %v115
  %133 = vmatprep.subr.bf16.mxu0 0
  %134 = vmatpush1.bf16.msra.mxu0 %v116
  %135 = vmatprep.subr.bf16.mxu0 0
  %136 = vmatpush1.bf16.msra.mxu0 %v117
  %137 = vmatprep.subr.bf16.mxu0 0
  %138 = vmatpush1.bf16.msra.mxu0 %v118
  %139 = vmatprep.subr.bf16.mxu0 0
  %140 = vmatpush1.bf16.msra.mxu0 %v119
  %141 = vmatprep.subr.bf16.mxu0 0
  %142 = vmatpush1.bf16.msra.mxu0 %v120
  %143 = vmatprep.subr.bf16.mxu0 0
  %144 = vmatpush1.bf16.msra.mxu0 %v121
  %145 = vmatprep.subr.bf16.mxu0 0
  %146 = vmatpush1.bf16.msra.mxu0 %v122
  %147 = vmatprep.subr.bf16.mxu0 0
  %148 = vmatpush1.bf16.msra.mxu0 0
  %149 = vmatprep.subr.bf16.mxu0 0
  %150 = vmatpush1.bf16.msra.mxu0 0
  %151 = vmatprep.subr.bf16.mxu0 0
  %152 = vmatpush1.bf16.msra.mxu0 0
  %153 = vmatprep.subr.bf16.mxu0 0
  %154 = vmatpush1.bf16.msra.mxu0 0
  %155 = vmatprep.subr.bf16.mxu0 0
  %156 = vmatpush1.bf16.msra.mxu0 0
  %157 = vmatprep.subr.bf16.mxu0 0
  %158 = vmatpush1.bf16.msra.mxu0 0
  %159 = vmatprep.subr.bf16.mxu0 0
  %160 = vmatpush1.bf16.msra.mxu0 0
  %161 = vmatprep.subr.bf16.mxu0 0
  %162 = vmatpush1.bf16.msra.mxu0 0
  %163 = vmatprep.mubr.bf16.mxu0 0
  %164 = vmatmul.mubr.bf16.gmra.mrb[0].mxu0 %v75
  %v165 = vpop.f32.mrb[0].mxu0
  %v166 = vadd.f32 0.0, %v165
  %v167 = vpop.f32.mrb[0].mxu0
  %v168 = vpop.f32.mrb[0].mxu0
  %v169 = vadd.f32 0.0, %v168
  %v170 = vpop.f32.mrb[0].mxu0
  %171 = vmatprep.mubr.bf16.mxu0 0
  %172 = vmatmul.mubr.bf16.gmra.mrb[0].mxu0 %v76
  %v173 = vpop.f32.mrb[0].mxu0
  %v174 = vadd.f32 0.0, %v173
  %v175 = vpop.f32.mrb[0].mxu0
  %v176 = vpop.f32.mrb[0].mxu0
  %v177 = vadd.f32 0.0, %v176
  %v178 = vpop.f32.mrb[0].mxu0
  %179 = vmatprep.mubr.bf16.mxu0 0
  %180 = vmatmul.mubr.bf16.gmra.mrb[0].mxu0 %v77
  %v181 = vpop.f32.mrb[0].mxu0
  %v182 = vadd.f32 0.0, %v181
  %v183 = vpop.f32.mrb[0].mxu0
  %v184 = vpop.f32.mrb[0].mxu0
  %v185 = vadd.f32 0.0, %v184
  %v186 = vpop.f32.mrb[0].mxu0
  %187 = vmatprep.mubr.bf16.mxu0 0
  %188 = vmatmul.mubr.bf16.gmra.mrb[0].mxu0 %v78
  %v189 = vpop.f32.mrb[0].mxu0
  %v190 = vadd.f32 0.0, %v189
  %v191 = vpop.f32.mrb[0].mxu0
  %v192 = vpop.f32.mrb[0].mxu0
  %v193 = vadd.f32 0.0, %v192
  %v194 = vpop.f32.mrb[0].mxu0
  %195 = vdwg.mxu0
  %v196 = vadd.f32 %v27, %v166
  %v197 = vadd.f32 %v28, %v169
  %v198 = vadd.f32 %v29, %v174
  %v199 = vadd.f32 %v30, %v177
  %v200 = vadd.f32 %v31, %v182
  %v201 = vadd.f32 %v32, %v185
  %v202 = vadd.f32 %v33, %v190
  %v203 = vadd.f32 %v34, %v193
  %204 = vst [vmem:[#allocation2] sm:$0xff] %v196
  %205 = vst [vmem:[#allocation2 + $0x8] sm:$0xff] %v197
  %206 = vst [vmem:[#allocation2 + $0x10] sm:$0xff] %v198
  %207 = vst [vmem:[#allocation2 + $0x18] sm:$0xff] %v199
  %208 = vst [vmem:[#allocation2 + $0x20] sm:$0xff] %v200
  %209 = vst [vmem:[#allocation2 + $0x28] sm:$0xff] %v201
  %210 = vst [vmem:[#allocation2 + $0x30] sm:$0xff] %v202
  %211 = vst [vmem:[#allocation2 + $0x38] sm:$0xff] %v203
  // Predicated region
  $region18: #{dip_forward.109} parent=0 // pred_check
    %p212 = pneg %p15
  $region19: #{dip_forward.109} parent=0 // pred_check_branch
    %214 = sbr.rel (%p212) target = $region21
  $region20: #{dip_forward.109} parent=0 // pred_region
    %v215 = vld [vmem:[#allocation2] sm:$0xff]
    %v216 = vld [vmem:[#allocation2 + $0x8] sm:$0xff]
    %v217 = vld [vmem:[#allocation2 + $0x10] sm:$0xff]
    %v218 = vld [vmem:[#allocation2 + $0x18] sm:$0xff]
    %v219 = vld [vmem:[#allocation2 + $0x20] sm:$0xff]
    %v220 = vld [vmem:[#allocation2 + $0x28] sm:$0xff]
    %v221 = vld [vmem:[#allocation2 + $0x30] sm:$0xff]
    %v222 = vld [vmem:[#allocation2 + $0x38] sm:$0xff]
    %v223 = vld [vmem:[%s2] sm:$0x1]
    %v225 = vlaneseq
    %v226 = vshrl.u32 %v225, 7
    %v227 = vsub.s32 0, %v226
    %v228 = vrot.slane %v223, %v227
    %v230 = vadd.f32 %v215, %v228
    %v231 = vadd.f32 %v216, %v228
    %v232 = vadd.f32 %v217, %v228
    %v233 = vadd.f32 %v218, %v228
    %v234 = vadd.f32 %v219, %v228
    %v235 = vadd.f32 %v220, %v228
    %v236 = vadd.f32 %v221, %v228
    %v237 = vadd.f32 %v222, %v228
    %v238 = vmax.f32 %v230, 0.0
    %v239 = vmax.f32 %v231, 0.0
    %v240 = vmax.f32 %v232, 0.0
    %v241 = vmax.f32 %v233, 0.0
    %v242 = vmax.f32 %v234, 0.0
    %v243 = vmax.f32 %v235, 0.0
    %v244 = vmax.f32 %v236, 0.0
    %v245 = vmax.f32 %v237, 0.0
    %246 = vst [vmem:[%s3] sm:$0xff] %v238
    %247 = vst [vmem:[%s3 + $0x8] sm:$0xff] %v239
    %248 = vst [vmem:[%s3 + $0x10] sm:$0xff] %v240
    %249 = vst [vmem:[%s3 + $0x18] sm:$0xff] %v241
    %250 = vst [vmem:[%s3 + $0x20] sm:$0xff] %v242
    %251 = vst [vmem:[%s3 + $0x28] sm:$0xff] %v243
    %252 = vst [vmem:[%s3 + $0x30] sm:$0xff] %v244
    %253 = vst [vmem:[%s3 + $0x38] sm:$0xff] %v245
  $region21: #{dip_forward.109} parent=0 // pred_fallthru
    _
  // Predicated region
  $region22: #{dip_forward.109} parent=0 // pred_check
    _
  $region23: #{dip_forward.109} parent=0 // pred_check_branch
    %255 = sbr.rel (0) target = $region25
  $region24: #{dip_forward.109} parent=0 // pred_region
    _
  $region25: #{dip_forward.109} parent=0 // pred_fallthru
    _
  // Predicated region
  $region26: #{dip_forward.109} parent=0 // pred_check
    _
  $region27: #{dip_forward.109} parent=0 // pred_check_branch
    %257 = sbr.rel (0) target = $region29
  $region28: #{dip_forward.109} parent=0 // pred_region
    _
  $region29: #{dip_forward.109} parent=0 // pred_fallthru
    _

// kernel: dip_forward.111
$region0: #{dip_forward.111}
  #allocation0 [shape = 'u32[]', space=smem, size = 0x4, offset = 0x4, fixed_abs, tag = 'smem constant byte address 0x4 - core index']
  #allocation1 [shape = 'u32[144,128]{1,0:T(1,128)}', space=vmem, size = 0x12000, scoped, tag = 'internal scratch']
  #allocation2 [shape = 'f32[64,256]{1,0:T(8,128)}', space=vmem, size = 0x10000, scoped, tag = 'scratch operand']
  %s0 = inlined_call_operand.vmem [shape: bf16[64,384], index: 0, kind: input, shape index: {}]
  %s1 = inlined_call_operand.vmem [shape: bf16[384,256], index: 1, kind: input, shape index: {}]
  %s2 = inlined_call_operand.vmem [shape: f32[1,256], index: 2, kind: input, shape index: {}]
  %s3 = inlined_call_operand.vmem [shape: f32[64,256], index: 3, kind: output, shape index: {}]
  %s4 = sld [smem:[#allocation0]]
  $region30: #{dip_forward.111} parent=0
    _
  %s6 = ssub.s32 1, %s4
  %s7 = scalar_select 0, %s6, %s4
  // Predicated region
  $region2: #{dip_forward.111} parent=0 // pred_check
    _
  $region3: #{dip_forward.111} parent=0 // pred_check_branch
    %9 = sbr.rel (0) target = $region5
  $region4: #{dip_forward.111} parent=0 // pred_region
    _
  $region5: #{dip_forward.111} parent=0 // pred_fallthru
    _
  // Predicated region
  $region6: #{dip_forward.111} parent=0 // pred_check
    _
  $region7: #{dip_forward.111} parent=0 // pred_check_branch
    %11 = sbr.rel (0) target = $region9
  $region8: #{dip_forward.111} parent=0 // pred_region
    _
  $region9: #{dip_forward.111} parent=0 // pred_fallthru
    _
  // Predicated region
  $region10: #{dip_forward.111} parent=0 // pred_check
    _
  $region11: #{dip_forward.111} parent=0 // pred_check_branch
    %13 = sbr.rel (0) target = $region13
  $region12: #{dip_forward.111} parent=0 // pred_region
    _
  $region13: #{dip_forward.111} parent=0 // pred_fallthru
    _
  %p15 = scmp.eq.s32.totalorder 0, 0
  // Predicated region
  $region14: #{dip_forward.111} parent=0 // pred_check
    %p16 = pneg %p15
  $region15: #{dip_forward.111} parent=0 // pred_check_branch
    %18 = sbr.rel (%p16) target = $region17
  $region16: #{dip_forward.111} parent=0 // pred_region
    %19 = vst [vmem:[#allocation2] sm:$0xff] 0.0
    %20 = vst [vmem:[#allocation2 + $0x8] sm:$0xff] 0.0
    %21 = vst [vmem:[#allocation2 + $0x10] sm:$0xff] 0.0
    %22 = vst [vmem:[#allocation2 + $0x18] sm:$0xff] 0.0
    %23 = vst [vmem:[#allocation2 + $0x20] sm:$0xff] 0.0
    %24 = vst [vmem:[#allocation2 + $0x28] sm:$0xff] 0.0
    %25 = vst [vmem:[#allocation2 + $0x30] sm:$0xff] 0.0
    %26 = vst [vmem:[#allocation2 + $0x38] sm:$0xff] 0.0
    %27 = vst [vmem:[#allocation2 + $0x40] sm:$0xff] 0.0
    %28 = vst [vmem:[#allocation2 + $0x48] sm:$0xff] 0.0
    %29 = vst [vmem:[#allocation2 + $0x50] sm:$0xff] 0.0
    %30 = vst [vmem:[#allocation2 + $0x58] sm:$0xff] 0.0
    %31 = vst [vmem:[#allocation2 + $0x60] sm:$0xff] 0.0
    %32 = vst [vmem:[#allocation2 + $0x68] sm:$0xff] 0.0
    %33 = vst [vmem:[#allocation2 + $0x70] sm:$0xff] 0.0
    %34 = vst [vmem:[#allocation2 + $0x78] sm:$0xff] 0.0
  $region17: #{dip_forward.111} parent=0 // pred_fallthru
    _
  %v35 = vld [vmem:[#allocation2] sm:$0xff]
  %v36 = vld [vmem:[#allocation2 + $0x8] sm:$0xff]
  %v37 = vld [vmem:[#allocation2 + $0x10] sm:$0xff]
  %v38 = vld [vmem:[#allocation2 + $0x18] sm:$0xff]
  %v39 = vld [vmem:[#allocation2 + $0x20] sm:$0xff]
  %v40 = vld [vmem:[#allocation2 + $0x28] sm:$0xff]
  %v41 = vld [vmem:[#allocation2 + $0x30] sm:$0xff]
  %v42 = vld [vmem:[#allocation2 + $0x38] sm:$0xff]
  %v43 = vld [vmem:[#allocation2 + $0x40] sm:$0xff]
  %v44 = vld [vmem:[#allocation2 + $0x48] sm:$0xff]
  %v45 = vld [vmem:[#allocation2 + $0x50] sm:$0xff]
  %v46 = vld [vmem:[#allocation2 + $0x58] sm:$0xff]
  %v47 = vld [vmem:[#allocation2 + $0x60] sm:$0xff]
  %v48 = vld [vmem:[#allocation2 + $0x68] sm:$0xff]
  %v49 = vld [vmem:[#allocation2 + $0x70] sm:$0xff]
  %v50 = vld [vmem:[#allocation2 + $0x78] sm:$0xff]
  %v51 = vld [vmem:[%s0] sm:$0xff]
  %v52 = vld [vmem:[%s0 + $0x8] sm:$0xf]
  %v53 = vld [vmem:[%s0 + $0xc] sm:$0xff]
  %v54 = vld [vmem:[%s0 + $0x14] sm:$0xf]
  %v55 = vld [vmem:[%s0 + $0x18] sm:$0xff]
  %v56 = vld [vmem:[%s0 + $0x20] sm:$0xf]
  %v57 = vld [vmem:[%s0 + $0x24] sm:$0xff]
  %v58 = vld [vmem:[%s0 + $0x2c] sm:$0xf]
  %v59 = vld [vmem:[%s0 + $0x30] sm:$0xff]
  %v60 = vld [vmem:[%s0 + $0x38] sm:$0xf]
  %v61 = vld [vmem:[%s0 + $0x3c] sm:$0xff]
  %v62 = vld [vmem:[%s0 + $0x44] sm:$0xf]
  %v63 = vld [vmem:[%s0 + $0x48] sm:$0xff]
  %v64 = vld [vmem:[%s0 + $0x50] sm:$0xf]
  %v65 = vld [vmem:[%s0 + $0x54] sm:$0xff]
  %v66 = vld [vmem:[%s0 + $0x5c] sm:$0xf]
  %v67 = vld [vmem:[%s1] sm:$0xff]
  %v68 = vld [vmem:[%s1 + $0x8] sm:$0xff]
  %v69 = vld [vmem:[%s1 + $0x10] sm:$0xff]
  %v70 = vld [vmem:[%s1 + $0x18] sm:$0xff]
  %v71 = vld [vmem:[%s1 + $0x20] sm:$0xff]
  %v72 = vld [vmem:[%s1 + $0x28] sm:$0xff]
  %v73 = vld [vmem:[%s1 + $0x30] sm:$0xff]
  %v74 = vld [vmem:[%s1 + $0x38] sm:$0xff]
  %v75 = vld [vmem:[%s1 + $0x40] sm:$0xff]
  %v76 = vld [vmem:[%s1 + $0x48] sm:$0xff]
  %v77 = vld [vmem:[%s1 + $0x50] sm:$0xff]
  %v78 = vld [vmem:[%s1 + $0x58] sm:$0xff]
  %v79 = vld [vmem:[%s1 + $0x60] sm:$0xff]
  %v80 = vld [vmem:[%s1 + $0x68] sm:$0xff]
  %v81 = vld [vmem:[%s1 + $0x70] sm:$0xff]
  %v82 = vld [vmem:[%s1 + $0x78] sm:$0xff]
  %v83 = vld [vmem:[%s1 + $0x80] sm:$0xff]
  %v84 = vld [vmem:[%s1 + $0x88] sm:$0xff]
  %v85 = vld [vmem:[%s1 + $0x90] sm:$0xff]
  %v86 = vld [vmem:[%s1 + $0x98] sm:$0xff]
  %v87 = vld [vmem:[%s1 + $0xa0] sm:$0xff]
  %v88 = vld [vmem:[%s1 + $0xa8] sm:$0xff]
  %v89 = vld [vmem:[%s1 + $0xb0] sm:$0xff]
  %v90 = vld [vmem:[%s1 + $0xb8] sm:$0xff]
  %v91 = vld [vmem:[%s1 + $0xc0] sm:$0xff]
  %v92 = vld [vmem:[%s1 + $0xc8] sm:$0xff]
  %v93 = vld [vmem:[%s1 + $0xd0] sm:$0xff]
  %v94 = vld [vmem:[%s1 + $0xd8] sm:$0xff]
  %v95 = vld [vmem:[%s1 + $0xe0] sm:$0xff]
  %v96 = vld [vmem:[%s1 + $0xe8] sm:$0xff]
  %v97 = vld [vmem:[%s1 + $0xf0] sm:$0xff]
  %v98 = vld [vmem:[%s1 + $0xf8] sm:$0xff]
  %v99 = vld [vmem:[%s1 + $0x100] sm:$0xff]
  %v100 = vld [vmem:[%s1 + $0x108] sm:$0xff]
  %v101 = vld [vmem:[%s1 + $0x110] sm:$0xff]
  %v102 = vld [vmem:[%s1 + $0x118] sm:$0xff]
  %v103 = vld [vmem:[%s1 + $0x120] sm:$0xff]
  %v104 = vld [vmem:[%s1 + $0x128] sm:$0xff]
  %v105 = vld [vmem:[%s1 + $0x130] sm:$0xff]
  %v106 = vld [vmem:[%s1 + $0x138] sm:$0xff]
  %v107 = vld [vmem:[%s1 + $0x140] sm:$0xff]
  %v108 = vld [vmem:[%s1 + $0x148] sm:$0xff]
  %v109 = vld [vmem:[%s1 + $0x150] sm:$0xff]
  %v110 = vld [vmem:[%s1 + $0x158] sm:$0xff]
  %v111 = vld [vmem:[%s1 + $0x160] sm:$0xff]
  %v112 = vld [vmem:[%s1 + $0x168] sm:$0xff]
  %v113 = vld [vmem:[%s1 + $0x170] sm:$0xff]
  %v114 = vld [vmem:[%s1 + $0x178] sm:$0xff]
  %v131 = vunpack.c.l.b16 %v51
  %v132 = vunpack.c.h.b16 %v51
  %v133 = vunpack.c.l.b16 %v52
  %v134 = vunpack.c.l.b16 %v53
  %v135 = vunpack.c.h.b16 %v53
  %v136 = vunpack.c.l.b16 %v54
  %v137 = vunpack.c.l.b16 %v55
  %v138 = vunpack.c.h.b16 %v55
  %v139 = vunpack.c.l.b16 %v56
  %v140 = vunpack.c.l.b16 %v57
  %v141 = vunpack.c.h.b16 %v57
  %v142 = vunpack.c.l.b16 %v58
  %v143 = vunpack.c.l.b16 %v59
  %v144 = vunpack.c.h.b16 %v59
  %v145 = vunpack.c.l.b16 %v60
  %v146 = vunpack.c.l.b16 %v61
  %v147 = vunpack.c.h.b16 %v61
  %v148 = vunpack.c.l.b16 %v62
  %v149 = vunpack.c.l.b16 %v63
  %v150 = vunpack.c.h.b16 %v63
  %v151 = vunpack.c.l.b16 %v64
  %v152 = vunpack.c.l.b16 %v65
  %v153 = vunpack.c.h.b16 %v65
  %v154 = vunpack.c.l.b16 %v66
  %v155 = vpack.c.b16 %v134, %v131
  %v156 = vpack.c.b16 %v135, %v132
  %v157 = vpack.c.b16 %v136, %v133
  %v158 = vpack.c.b16 %v140, %v137
  %v159 = vpack.c.b16 %v141, %v138
  %v160 = vpack.c.b16 %v142, %v139
  %v161 = vpack.c.b16 %v146, %v143
  %v162 = vpack.c.b16 %v147, %v144
  %v163 = vpack.c.b16 %v148, %v145
  %v164 = vpack.c.b16 %v152, %v149
  %v165 = vpack.c.b16 %v153, %v150
  %v166 = vpack.c.b16 %v154, %v151
  %v227 = vunpack.c.l.b16 %v67
  %v228 = vunpack.c.h.b16 %v67
  %v229 = vunpack.c.l.b16 %v68
  %v230 = vunpack.c.h.b16 %v68
  %v231 = vunpack.c.l.b16 %v69
  %v232 = vunpack.c.h.b16 %v69
  %v233 = vunpack.c.l.b16 %v70
  %v234 = vunpack.c.h.b16 %v70
  %v235 = vunpack.c.l.b16 %v71
  %v236 = vunpack.c.h.b16 %v71
  %v237 = vunpack.c.l.b16 %v72
  %v238 = vunpack.c.h.b16 %v72
  %v239 = vunpack.c.l.b16 %v73
  %v240 = vunpack.c.h.b16 %v73
  %v241 = vunpack.c.l.b16 %v74
  %v242 = vunpack.c.h.b16 %v74
  %v243 = vunpack.c.l.b16 %v75
  %v244 = vunpack.c.h.b16 %v75
  %v245 = vunpack.c.l.b16 %v76
  %v246 = vunpack.c.h.b16 %v76
  %v247 = vunpack.c.l.b16 %v77
  %v248 = vunpack.c.h.b16 %v77
  %v249 = vunpack.c.l.b16 %v78
  %v250 = vunpack.c.h.b16 %v78
  %v251 = vunpack.c.l.b16 %v79
  %v252 = vunpack.c.h.b16 %v79
  %v253 = vunpack.c.l.b16 %v80
  %v254 = vunpack.c.h.b16 %v80
  %v255 = vunpack.c.l.b16 %v81
  %v256 = vunpack.c.h.b16 %v81
  %v257 = vunpack.c.l.b16 %v82
  %v258 = vunpack.c.h.b16 %v82
  %v259 = vunpack.c.l.b16 %v83
  %v260 = vunpack.c.h.b16 %v83
  %v261 = vunpack.c.l.b16 %v84
  %v262 = vunpack.c.h.b16 %v84
  %v263 = vunpack.c.l.b16 %v85
  %v264 = vunpack.c.h.b16 %v85
  %v265 = vunpack.c.l.b16 %v86
  %v266 = vunpack.c.h.b16 %v86
  %v267 = vunpack.c.l.b16 %v87
  %v268 = vunpack.c.h.b16 %v87
  %v269 = vunpack.c.l.b16 %v88
  %v270 = vunpack.c.h.b16 %v88
  %v271 = vunpack.c.l.b16 %v89
  %v272 = vunpack.c.h.b16 %v89
  %v273 = vunpack.c.l.b16 %v90
  %v274 = vunpack.c.h.b16 %v90
  %v275 = vunpack.c.l.b16 %v91
  %v276 = vunpack.c.h.b16 %v91
  %v277 = vunpack.c.l.b16 %v92
  %v278 = vunpack.c.h.b16 %v92
  %v279 = vunpack.c.l.b16 %v93
  %v280 = vunpack.c.h.b16 %v93
  %v281 = vunpack.c.l.b16 %v94
  %v282 = vunpack.c.h.b16 %v94
  %v283 = vunpack.c.l.b16 %v95
  %v284 = vunpack.c.h.b16 %v95
  %v285 = vunpack.c.l.b16 %v96
  %v286 = vunpack.c.h.b16 %v96
  %v287 = vunpack.c.l.b16 %v97
  %v288 = vunpack.c.h.b16 %v97
  %v289 = vunpack.c.l.b16 %v98
  %v290 = vunpack.c.h.b16 %v98
  %v291 = vunpack.c.l.b16 %v99
  %v292 = vunpack.c.h.b16 %v99
  %v293 = vunpack.c.l.b16 %v100
  %v294 = vunpack.c.h.b16 %v100
  %v295 = vunpack.c.l.b16 %v101
  %v296 = vunpack.c.h.b16 %v101
  %v297 = vunpack.c.l.b16 %v102
  %v298 = vunpack.c.h.b16 %v102
  %v299 = vunpack.c.l.b16 %v103
  %v300 = vunpack.c.h.b16 %v103
  %v301 = vunpack.c.l.b16 %v104
  %v302 = vunpack.c.h.b16 %v104
  %v303 = vunpack.c.l.b16 %v105
  %v304 = vunpack.c.h.b16 %v105
  %v305 = vunpack.c.l.b16 %v106
  %v306 = vunpack.c.h.b16 %v106
  %v307 = vunpack.c.l.b16 %v107
  %v308 = vunpack.c.h.b16 %v107
  %v309 = vunpack.c.l.b16 %v108
  %v310 = vunpack.c.h.b16 %v108
  %v311 = vunpack.c.l.b16 %v109
  %v312 = vunpack.c.h.b16 %v109
  %v313 = vunpack.c.l.b16 %v110
  %v314 = vunpack.c.h.b16 %v110
  %v315 = vunpack.c.l.b16 %v111
  %v316 = vunpack.c.h.b16 %v111
  %v317 = vunpack.c.l.b16 %v112
  %v318 = vunpack.c.h.b16 %v112
  %v319 = vunpack.c.l.b16 %v113
  %v320 = vunpack.c.h.b16 %v113
  %v321 = vunpack.c.l.b16 %v114
  %v322 = vunpack.c.h.b16 %v114
  %v323 = vpack.c.b16 %v229, %v227
  %v324 = vpack.c.b16 %v230, %v228
  %v325 = vpack.c.b16 %v233, %v231
  %v326 = vpack.c.b16 %v234, %v232
  %v327 = vpack.c.b16 %v237, %v235
  %v328 = vpack.c.b16 %v238, %v236
  %v329 = vpack.c.b16 %v241, %v239
  %v330 = vpack.c.b16 %v242, %v240
  %v331 = vpack.c.b16 %v245, %v243
  %v332 = vpack.c.b16 %v246, %v244
  %v333 = vpack.c.b16 %v249, %v247
  %v334 = vpack.c.b16 %v250, %v248
  %v335 = vpack.c.b16 %v253, %v251
  %v336 = vpack.c.b16 %v254, %v252
  %v337 = vpack.c.b16 %v257, %v255
  %v338 = vpack.c.b16 %v258, %v256
  %v339 = vpack.c.b16 %v261, %v259
  %v340 = vpack.c.b16 %v262, %v260
  %v341 = vpack.c.b16 %v265, %v263
  %v342 = vpack.c.b16 %v266, %v264
  %v343 = vpack.c.b16 %v269, %v267
  %v344 = vpack.c.b16 %v270, %v268
  %v345 = vpack.c.b16 %v273, %v271
  %v346 = vpack.c.b16 %v274, %v272
  %v347 = vpack.c.b16 %v277, %v275
  %v348 = vpack.c.b16 %v278, %v276
  %v349 = vpack.c.b16 %v281, %v279
  %v350 = vpack.c.b16 %v282, %v280
  %v351 = vpack.c.b16 %v285, %v283
  %v352 = vpack.c.b16 %v286, %v284
  %v353 = vpack.c.b16 %v289, %v287
  %v354 = vpack.c.b16 %v290, %v288
  %v355 = vpack.c.b16 %v293, %v291
  %v356 = vpack.c.b16 %v294, %v292
  %v357 = vpack.c.b16 %v297, %v295
  %v358 = vpack.c.b16 %v298, %v296
  %v359 = vpack.c.b16 %v301, %v299
  %v360 = vpack.c.b16 %v302, %v300
  %v361 = vpack.c.b16 %v305, %v303
  %v362 = vpack.c.b16 %v306, %v304
  %v363 = vpack.c.b16 %v309, %v307
  %v364 = vpack.c.b16 %v310, %v308
  %v365 = vpack.c.b16 %v313, %v311
  %v366 = vpack.c.b16 %v314, %v312
  %v367 = vpack.c.b16 %v317, %v315
  %v368 = vpack.c.b16 %v318, %v316
  %v369 = vpack.c.b16 %v321, %v319
  %v370 = vpack.c.b16 %v322, %v320
  %419 = vmatprep.subr.bf16.mxu0 %v324
  %420 = vmatpush1.bf16.msra.mxu0 %v323
  %421 = vmatprep.subr.bf16.mxu0 %v326
  %422 = vmatpush1.bf16.msra.mxu0 %v325
  %423 = vmatprep.subr.bf16.mxu0 %v328
  %424 = vmatpush1.bf16.msra.mxu0 %v327
  %425 = vmatprep.subr.bf16.mxu0 %v330
  %426 = vmatpush1.bf16.msra.mxu0 %v329
  %427 = vmatprep.subr.bf16.mxu0 %v332
  %428 = vmatpush1.bf16.msra.mxu0 %v331
  %429 = vmatprep.subr.bf16.mxu0 %v334
  %430 = vmatpush1.bf16.msra.mxu0 %v333
  %431 = vmatprep.subr.bf16.mxu0 %v336
  %432 = vmatpush1.bf16.msra.mxu0 %v335
  %433 = vmatprep.subr.bf16.mxu0 %v338
  %434 = vmatpush1.bf16.msra.mxu0 %v337
  %435 = vmatprep.subr.bf16.mxu0 %v340
  %436 = vmatpush1.bf16.msra.mxu0 %v339
  %437 = vmatprep.subr.bf16.mxu0 %v342
  %438 = vmatpush1.bf16.msra.mxu0 %v341
  %439 = vmatprep.subr.bf16.mxu0 %v344
  %440 = vmatpush1.bf16.msra.mxu0 %v343
  %441 = vmatprep.subr.bf16.mxu0 %v346
  %442 = vmatpush1.bf16.msra.mxu0 %v345
  %443 = vmatprep.subr.bf16.mxu0 %v348
  %444 = vmatpush1.bf16.msra.mxu0 %v347
  %445 = vmatprep.subr.bf16.mxu0 %v350
  %446 = vmatpush1.bf16.msra.mxu0 %v349
  %447 = vmatprep.subr.bf16.mxu0 %v352
  %448 = vmatpush1.bf16.msra.mxu0 %v351
  %449 = vmatprep.subr.bf16.mxu0 %v354
  %450 = vmatpush1.bf16.msra.mxu0 %v353
  %451 = vmatprep.mubr.bf16.mxu0 %v156
  %452 = vmatmul.mubr.bf16.gmra.mrb[0].mxu0 %v155
  %v453 = vpop.f32.mrb[0].mxu0
  %v454 = vadd.f32 0.0, %v453
  %v455 = vpop.f32.mrb[0].mxu0
  %v456 = vadd.f32 0.0, %v455
  %v457 = vpop.f32.mrb[0].mxu0
  %v458 = vadd.f32 0.0, %v457
  %v459 = vpop.f32.mrb[0].mxu0
  %v460 = vadd.f32 0.0, %v459
  %461 = vmatprep.mubr.bf16.mxu0 %v159
  %462 = vmatmul.mubr.bf16.gmra.mrb[0].mxu0 %v158
  %v463 = vpop.f32.mrb[0].mxu0
  %v464 = vadd.f32 0.0, %v463
  %v465 = vpop.f32.mrb[0].mxu0
  %v466 = vadd.f32 0.0, %v465
  %v467 = vpop.f32.mrb[0].mxu0
  %v468 = vadd.f32 0.0, %v467
  %v469 = vpop.f32.mrb[0].mxu0
  %v470 = vadd.f32 0.0, %v469
  %471 = vmatprep.mubr.bf16.mxu0 %v162
  %472 = vmatmul.mubr.bf16.gmra.mrb[0].mxu0 %v161
  %v473 = vpop.f32.mrb[0].mxu0
  %v474 = vadd.f32 0.0, %v473
  %v475 = vpop.f32.mrb[0].mxu0
  %v476 = vadd.f32 0.0, %v475
  %v477 = vpop.f32.mrb[0].mxu0
  %v478 = vadd.f32 0.0, %v477
  %v479 = vpop.f32.mrb[0].mxu0
  %v480 = vadd.f32 0.0, %v479
  %481 = vmatprep.mubr.bf16.mxu0 %v165
  %482 = vmatmul.mubr.bf16.gmra.mrb[0].mxu0 %v164
  %v483 = vpop.f32.mrb[0].mxu0
  %v484 = vadd.f32 0.0, %v483
  %v485 = vpop.f32.mrb[0].mxu0
  %v486 = vadd.f32 0.0, %v485
  %v487 = vpop.f32.mrb[0].mxu0
  %v488 = vadd.f32 0.0, %v487
  %v489 = vpop.f32.mrb[0].mxu0
  %v490 = vadd.f32 0.0, %v489
  %491 = vdwg.mxu0
  %492 = vmatprep.subr.bf16.mxu0 %v356
  %493 = vmatpush1.bf16.msra.mxu0 %v355
  %494 = vmatprep.subr.bf16.mxu0 %v358
  %495 = vmatpush1.bf16.msra.mxu0 %v357
  %496 = vmatprep.subr.bf16.mxu0 %v360
  %497 = vmatpush1.bf16.msra.mxu0 %v359
  %498 = vmatprep.subr.bf16.mxu0 %v362
  %499 = vmatpush1.bf16.msra.mxu0 %v361
  %500 = vmatprep.subr.bf16.mxu0 %v364
  %501 = vmatpush1.bf16.msra.mxu0 %v363
  %502 = vmatprep.subr.bf16.mxu0 %v366
  %503 = vmatpush1.bf16.msra.mxu0 %v365
  %504 = vmatprep.subr.bf16.mxu0 %v368
  %505 = vmatpush1.bf16.msra.mxu0 %v367
  %506 = vmatprep.subr.bf16.mxu0 %v370
  %507 = vmatpush1.bf16.msra.mxu0 %v369
  %508 = vmatprep.subr.bf16.mxu0 0
  %509 = vmatpush1.bf16.msra.mxu0 0
  %510 = vmatprep.subr.bf16.mxu0 0
  %511 = vmatpush1.bf16.msra.mxu0 0
  %512 = vmatprep.subr.bf16.mxu0 0
  %513 = vmatpush1.bf16.msra.mxu0 0
  %514 = vmatprep.subr.bf16.mxu0 0
  %515 = vmatpush1.bf16.msra.mxu0 0
  %516 = vmatprep.subr.bf16.mxu0 0
  %517 = vmatpush1.bf16.msra.mxu0 0
  %518 = vmatprep.subr.bf16.mxu0 0
  %519 = vmatpush1.bf16.msra.mxu0 0
  %520 = vmatprep.subr.bf16.mxu0 0
  %521 = vmatpush1.bf16.msra.mxu0 0
  %522 = vmatprep.subr.bf16.mxu0 0
  %523 = vmatpush1.bf16.msra.mxu0 0
  %524 = vmatprep.mubr.bf16.mxu0 0
  %525 = vmatmul.mubr.bf16.gmra.mrb[0].mxu0 %v157
  %v526 = vpop.f32.mrb[0].mxu0
  %v527 = vadd.f32 %v454, %v526
  %v528 = vpop.f32.mrb[0].mxu0
  %v529 = vadd.f32 %v456, %v528
  %v530 = vpop.f32.mrb[0].mxu0
  %v531 = vadd.f32 %v458, %v530
  %v532 = vpop.f32.mrb[0].mxu0
  %v533 = vadd.f32 %v460, %v532
  %534 = vmatprep.mubr.bf16.mxu0 0
  %535 = vmatmul.mubr.bf16.gmra.mrb[0].mxu0 %v160
  %v536 = vpop.f32.mrb[0].mxu0
  %v537 = vadd.f32 %v464, %v536
  %v538 = vpop.f32.mrb[0].mxu0
  %v539 = vadd.f32 %v466, %v538
  %v540 = vpop.f32.mrb[0].mxu0
  %v541 = vadd.f32 %v468, %v540
  %v542 = vpop.f32.mrb[0].mxu0
  %v543 = vadd.f32 %v470, %v542
  %544 = vmatprep.mubr.bf16.mxu0 0
  %545 = vmatmul.mubr.bf16.gmra.mrb[0].mxu0 %v163
  %v546 = vpop.f32.mrb[0].mxu0
  %v547 = vadd.f32 %v474, %v546
  %v548 = vpop.f32.mrb[0].mxu0
  %v549 = vadd.f32 %v476, %v548
  %v550 = vpop.f32.mrb[0].mxu0
  %v551 = vadd.f32 %v478, %v550
  %v552 = vpop.f32.mrb[0].mxu0
  %v553 = vadd.f32 %v480, %v552
  %554 = vmatprep.mubr.bf16.mxu0 0
  %555 = vmatmul.mubr.bf16.gmra.mrb[0].mxu0 %v166
  %v556 = vpop.f32.mrb[0].mxu0
  %v557 = vadd.f32 %v484, %v556
  %v558 = vpop.f32.mrb[0].mxu0
  %v559 = vadd.f32 %v486, %v558
  %v560 = vpop.f32.mrb[0].mxu0
  %v561 = vadd.f32 %v488, %v560
  %v562 = vpop.f32.mrb[0].mxu0
  %v563 = vadd.f32 %v490, %v562
  %564 = vdwg.mxu0
  %v565 = vadd.f32 %v35, %v527
  %v566 = vadd.f32 %v36, %v529
  %v567 = vadd.f32 %v37, %v531
  %v568 = vadd.f32 %v38, %v533
  %v569 = vadd.f32 %v39, %v537
  %v570 = vadd.f32 %v40, %v539
  %v571 = vadd.f32 %v41, %v541
  %v572 = vadd.f32 %v42, %v543
  %v573 = vadd.f32 %v43, %v547
  %v574 = vadd.f32 %v44, %v549
  %v575 = vadd.f32 %v45, %v551
  %v576 = vadd.f32 %v46, %v553
  %v577 = vadd.f32 %v47, %v557
  %v578 = vadd.f32 %v48, %v559
  %v579 = vadd.f32 %v49, %v561
  %v580 = vadd.f32 %v50, %v563
  %581 = vst [vmem:[#allocation2] sm:$0xff] %v565
  %582 = vst [vmem:[#allocation2 + $0x8] sm:$0xff] %v566
  %583 = vst [vmem:[#allocation2 + $0x10] sm:$0xff] %v567
  %584 = vst [vmem:[#allocation2 + $0x18] sm:$0xff] %v568
  %585 = vst [vmem:[#allocation2 + $0x20] sm:$0xff] %v569
  %586 = vst [vmem:[#allocation2 + $0x28] sm:$0xff] %v570
  %587 = vst [vmem:[#allocation2 + $0x30] sm:$0xff] %v571
  %588 = vst [vmem:[#allocation2 + $0x38] sm:$0xff] %v572
  %589 = vst [vmem:[#allocation2 + $0x40] sm:$0xff] %v573
  %590 = vst [vmem:[#allocation2 + $0x48] sm:$0xff] %v574
  %591 = vst [vmem:[#allocation2 + $0x50] sm:$0xff] %v575
  %592 = vst [vmem:[#allocation2 + $0x58] sm:$0xff] %v576
  %593 = vst [vmem:[#allocation2 + $0x60] sm:$0xff] %v577
  %594 = vst [vmem:[#allocation2 + $0x68] sm:$0xff] %v578
  %595 = vst [vmem:[#allocation2 + $0x70] sm:$0xff] %v579
  %596 = vst [vmem:[#allocation2 + $0x78] sm:$0xff] %v580
  // Predicated region
  $region18: #{dip_forward.111} parent=0 // pred_check
    %p597 = pneg %p15
  $region19: #{dip_forward.111} parent=0 // pred_check_branch
    %599 = sbr.rel (%p597) target = $region21
  $region20: #{dip_forward.111} parent=0 // pred_region
    %v600 = vld [vmem:[#allocation2] sm:$0xff]
    %v601 = vld [vmem:[#allocation2 + $0x8] sm:$0xff]
    %v602 = vld [vmem:[#allocation2 + $0x10] sm:$0xff]
    %v603 = vld [vmem:[#allocation2 + $0x18] sm:$0xff]
    %v604 = vld [vmem:[#allocation2 + $0x20] sm:$0xff]
    %v605 = vld [vmem:[#allocation2 + $0x28] sm:$0xff]
    %v606 = vld [vmem:[#allocation2 + $0x30] sm:$0xff]
    %v607 = vld [vmem:[#allocation2 + $0x38] sm:$0xff]
    %v608 = vld [vmem:[#allocation2 + $0x40] sm:$0xff]
    %v609 = vld [vmem:[#allocation2 + $0x48] sm:$0xff]
    %v610 = vld [vmem:[#allocation2 + $0x50] sm:$0xff]
    %v611 = vld [vmem:[#allocation2 + $0x58] sm:$0xff]
    %v612 = vld [vmem:[#allocation2 + $0x60] sm:$0xff]
    %v613 = vld [vmem:[#allocation2 + $0x68] sm:$0xff]
    %v614 = vld [vmem:[#allocation2 + $0x70] sm:$0xff]
    %v615 = vld [vmem:[#allocation2 + $0x78] sm:$0xff]
    %v616 = vld [vmem:[%s2] sm:$0x3]
    %v618 = vlaneseq
    %v619 = vshrl.u32 %v618, 7
    %v620 = vsub.s32 0, %v619
    %v621 = vrot.slane %v616, %v620
    %v622 = vlaneseq
    %v623 = vshrl.u32 %v622, 7
    %v624 = vsub.s32 1, %v623
    %v625 = vrot.slane %v616, %v624
    %v628 = vadd.f32 %v600, %v621
    %v629 = vadd.f32 %v601, %v625
    %v630 = vadd.f32 %v602, %v621
    %v631 = vadd.f32 %v603, %v625
    %v632 = vadd.f32 %v604, %v621
    %v633 = vadd.f32 %v605, %v625
    %v634 = vadd.f32 %v606, %v621
    %v635 = vadd.f32 %v607, %v625
    %v636 = vadd.f32 %v608, %v621
    %v637 = vadd.f32 %v609, %v625
    %v638 = vadd.f32 %v610, %v621
    %v639 = vadd.f32 %v611, %v625
    %v640 = vadd.f32 %v612, %v621
    %v641 = vadd.f32 %v613, %v625
    %v642 = vadd.f32 %v614, %v621
    %v643 = vadd.f32 %v615, %v625
    %v644 = vxor.u32 %v628, 2147483648
    %v645 = vxor.u32 %v629, 2147483648
    %v646 = vxor.u32 %v630, 2147483648
    %v647 = vxor.u32 %v631, 2147483648
    %v648 = vxor.u32 %v632, 2147483648
    %v649 = vxor.u32 %v633, 2147483648
    %v650 = vxor.u32 %v634, 2147483648
    %v651 = vxor.u32 %v635, 2147483648
    %v652 = vxor.u32 %v636, 2147483648
    %v653 = vxor.u32 %v637, 2147483648
    %v654 = vxor.u32 %v638, 2147483648
    %v655 = vxor.u32 %v639, 2147483648
    %v656 = vxor.u32 %v640, 2147483648
    %v657 = vxor.u32 %v641, 2147483648
    %v658 = vxor.u32 %v642, 2147483648
    %v659 = vxor.u32 %v643, 2147483648
    %v660 = vmul.f32 %v644, 1.442695
    %v661 = vpow.pop %v660
    %v662 = vmul.f32 %v645, 1.442695
    %v663 = vpow.pop %v662
    %v664 = vmul.f32 %v646, 1.442695
    %v665 = vpow.pop %v664
    %v666 = vmul.f32 %v647, 1.442695
    %v667 = vpow.pop %v666
    %v668 = vmul.f32 %v648, 1.442695
    %v669 = vpow.pop %v668
    %v670 = vmul.f32 %v649, 1.442695
    %v671 = vpow.pop %v670
    %v672 = vmul.f32 %v650, 1.442695
    %v673 = vpow.pop %v672
    %v674 = vmul.f32 %v651, 1.442695
    %v675 = vpow.pop %v674
    %v676 = vmul.f32 %v652, 1.442695
    %v677 = vpow.pop %v676
    %v678 = vmul.f32 %v653, 1.442695
    %v679 = vpow.pop %v678
    %v680 = vmul.f32 %v654, 1.442695
    %v681 = vpow.pop %v680
    %v682 = vmul.f32 %v655, 1.442695
    %v683 = vpow.pop %v682
    %v684 = vmul.f32 %v656, 1.442695
    %v685 = vpow.pop %v684
    %v686 = vmul.f32 %v657, 1.442695
    %v687 = vpow.pop %v686
    %v688 = vmul.f32 %v658, 1.442695
    %v689 = vpow.pop %v688
    %v690 = vmul.f32 %v659, 1.442695
    %v691 = vpow.pop %v690
    %v692 = vadd.f32 %v661, 1.0
    %v693 = vadd.f32 %v663, 1.0
    %v694 = vadd.f32 %v665, 1.0
    %v695 = vadd.f32 %v667, 1.0
    %v696 = vadd.f32 %v669, 1.0
    %v697 = vadd.f32 %v671, 1.0
    %v698 = vadd.f32 %v673, 1.0
    %v699 = vadd.f32 %v675, 1.0
    %v700 = vadd.f32 %v677, 1.0
    %v701 = vadd.f32 %v679, 1.0
    %v702 = vadd.f32 %v681, 1.0
    %v703 = vadd.f32 %v683, 1.0
    %v704 = vadd.f32 %v685, 1.0
    %v705 = vadd.f32 %v687, 1.0
    %v706 = vadd.f32 %v689, 1.0
    %v707 = vadd.f32 %v691, 1.0
    %v708 = vrcp.pop %v692
    %v709 = vmul.f32 1.0, %v708
    %v710 = vrcp.pop %v693
    %v711 = vmul.f32 1.0, %v710
    %v712 = vrcp.pop %v694
    %v713 = vmul.f32 1.0, %v712
    %v714 = vrcp.pop %v695
    %v715 = vmul.f32 1.0, %v714
    %v716 = vrcp.pop %v696
    %v717 = vmul.f32 1.0, %v716
    %v718 = vrcp.pop %v697
    %v719 = vmul.f32 1.0, %v718
    %v720 = vrcp.pop %v698
    %v721 = vmul.f32 1.0, %v720
    %v722 = vrcp.pop %v699
    %v723 = vmul.f32 1.0, %v722
    %v724 = vrcp.pop %v700
    %v725 = vmul.f32 1.0, %v724
    %v726 = vrcp.pop %v701
    %v727 = vmul.f32 1.0, %v726
    %v728 = vrcp.pop %v702
    %v729 = vmul.f32 1.0, %v728
    %v730 = vrcp.pop %v703
    %v731 = vmul.f32 1.0, %v730
    %v732 = vrcp.pop %v704
    %v733 = vmul.f32 1.0, %v732
    %v734 = vrcp.pop %v705
    %v735 = vmul.f32 1.0, %v734
    %v736 = vrcp.pop %v706
    %v737 = vmul.f32 1.0, %v736
    %v738 = vrcp.pop %v707
    %v739 = vmul.f32 1.0, %v738
    %740 = vst [vmem:[%s3] sm:$0xff] %v709
    %741 = vst [vmem:[%s3 + $0x8] sm:$0xff] %v711
    %742 = vst [vmem:[%s3 + $0x10] sm:$0xff] %v713
    %743 = vst [vmem:[%s3 + $0x18] sm:$0xff] %v715
    %744 = vst [vmem:[%s3 + $0x20] sm:$0xff] %v717
    %745 = vst [vmem:[%s3 + $0x28] sm:$0xff] %v719
    %746 = vst [vmem:[%s3 + $0x30] sm:$0xff] %v721
    %747 = vst [vmem:[%s3 + $0x38] sm:$0xff] %v723
    %748 = vst [vmem:[%s3 + $0x40] sm:$0xff] %v725
    %749 = vst [vmem:[%s3 + $0x48] sm:$0xff] %v727
    %750 = vst [vmem:[%s3 + $0x50] sm:$0xff] %v729
    %751 = vst [vmem:[%s3 + $0x58] sm:$0xff] %v731
    %752 = vst [vmem:[%s3 + $0x60] sm:$0xff] %v733
    %753 = vst [vmem:[%s3 + $0x68] sm:$0xff] %v735
    %754 = vst [vmem:[%s3 + $0x70] sm:$0xff] %v737
    %755 = vst [vmem:[%s3 + $0x78] sm:$0xff] %v739
  $region21: #{dip_forward.111} parent=0 // pred_fallthru
    _
  // Predicated region
  $region22: #{dip_forward.111} parent=0 // pred_check
    _
  $region23: #{dip_forward.111} parent=0 // pred_check_branch
    %757 = sbr.rel (0) target = $region25
  $region24: #{dip_forward.111} parent=0 // pred_region
    _
  $region25: #{dip_forward.111} parent=0 // pred_fallthru
    _
  // Predicated region
  $region26: #{dip_forward.111} parent=0 // pred_check
    _
  $region27: #{dip_forward.111} parent=0 // pred_check_branch
    %759 = sbr.rel (0) target = $region29
  $region28: #{dip_forward.111} parent=0 // pred_region
    _
  $region29: #{dip_forward.111} parent=0 // pred_fallthru
    _

// kernel: dip_forward.112
$region0: #{dip_forward.112}
  #allocation0 [shape = 'u32[]', space=smem, size = 0x4, offset = 0x4, fixed_abs, tag = 'smem constant byte address 0x4 - core index']
  #allocation1 [shape = 'u32[144,128]{1,0:T(1,128)}', space=vmem, size = 0x12000, scoped, tag = 'internal scratch']
  #allocation2 [shape = 'f32[64,128]{1,0:T(8,128)}', space=vmem, size = 0x8000, scoped, tag = 'scratch operand']
  %s0 = inlined_call_operand.vmem [shape: bf16[64,384], index: 0, kind: input, shape index: {}]
  %s1 = inlined_call_operand.vmem [shape: bf16[384,128], index: 1, kind: input, shape index: {}]
  %s2 = inlined_call_operand.vmem [shape: f32[1,128], index: 2, kind: input, shape index: {}]
  %s3 = inlined_call_operand.vmem [shape: f32[64,128], index: 3, kind: output, shape index: {}]
  %s4 = sld [smem:[#allocation0]]
  $region30: #{dip_forward.112} parent=0
    _
  %s6 = ssub.s32 1, %s4
  %s7 = scalar_select 0, %s6, %s4
  // Predicated region
  $region2: #{dip_forward.112} parent=0 // pred_check
    _
  $region3: #{dip_forward.112} parent=0 // pred_check_branch
    %9 = sbr.rel (0) target = $region5
  $region4: #{dip_forward.112} parent=0 // pred_region
    _
  $region5: #{dip_forward.112} parent=0 // pred_fallthru
    _
  // Predicated region
  $region6: #{dip_forward.112} parent=0 // pred_check
    _
  $region7: #{dip_forward.112} parent=0 // pred_check_branch
    %11 = sbr.rel (0) target = $region9
  $region8: #{dip_forward.112} parent=0 // pred_region
    _
  $region9: #{dip_forward.112} parent=0 // pred_fallthru
    _
  // Predicated region
  $region10: #{dip_forward.112} parent=0 // pred_check
    _
  $region11: #{dip_forward.112} parent=0 // pred_check_branch
    %13 = sbr.rel (0) target = $region13
  $region12: #{dip_forward.112} parent=0 // pred_region
    _
  $region13: #{dip_forward.112} parent=0 // pred_fallthru
    _
  %p15 = scmp.eq.s32.totalorder 0, 0
  // Predicated region
  $region14: #{dip_forward.112} parent=0 // pred_check
    %p16 = pneg %p15
  $region15: #{dip_forward.112} parent=0 // pred_check_branch
    %18 = sbr.rel (%p16) target = $region17
  $region16: #{dip_forward.112} parent=0 // pred_region
    %19 = vst [vmem:[#allocation2] sm:$0xff] 0.0
    %20 = vst [vmem:[#allocation2 + $0x8] sm:$0xff] 0.0
    %21 = vst [vmem:[#allocation2 + $0x10] sm:$0xff] 0.0
    %22 = vst [vmem:[#allocation2 + $0x18] sm:$0xff] 0.0
    %23 = vst [vmem:[#allocation2 + $0x20] sm:$0xff] 0.0
    %24 = vst [vmem:[#allocation2 + $0x28] sm:$0xff] 0.0
    %25 = vst [vmem:[#allocation2 + $0x30] sm:$0xff] 0.0
    %26 = vst [vmem:[#allocation2 + $0x38] sm:$0xff] 0.0
  $region17: #{dip_forward.112} parent=0 // pred_fallthru
    _
  %v27 = vld [vmem:[#allocation2] sm:$0xff]
  %v28 = vld [vmem:[#allocation2 + $0x8] sm:$0xff]
  %v29 = vld [vmem:[#allocation2 + $0x10] sm:$0xff]
  %v30 = vld [vmem:[#allocation2 + $0x18] sm:$0xff]
  %v31 = vld [vmem:[#allocation2 + $0x20] sm:$0xff]
  %v32 = vld [vmem:[#allocation2 + $0x28] sm:$0xff]
  %v33 = vld [vmem:[#allocation2 + $0x30] sm:$0xff]
  %v34 = vld [vmem:[#allocation2 + $0x38] sm:$0xff]
  %v35 = vld [vmem:[%s0] sm:$0xff]
  %v36 = vld [vmem:[%s0 + $0x8] sm:$0xf]
  %v37 = vld [vmem:[%s0 + $0xc] sm:$0xff]
  %v38 = vld [vmem:[%s0 + $0x14] sm:$0xf]
  %v39 = vld [vmem:[%s0 + $0x18] sm:$0xff]
  %v40 = vld [vmem:[%s0 + $0x20] sm:$0xf]
  %v41 = vld [vmem:[%s0 + $0x24] sm:$0xff]
  %v42 = vld [vmem:[%s0 + $0x2c] sm:$0xf]
  %v43 = vld [vmem:[%s0 + $0x30] sm:$0xff]
  %v44 = vld [vmem:[%s0 + $0x38] sm:$0xf]
  %v45 = vld [vmem:[%s0 + $0x3c] sm:$0xff]
  %v46 = vld [vmem:[%s0 + $0x44] sm:$0xf]
  %v47 = vld [vmem:[%s0 + $0x48] sm:$0xff]
  %v48 = vld [vmem:[%s0 + $0x50] sm:$0xf]
  %v49 = vld [vmem:[%s0 + $0x54] sm:$0xff]
  %v50 = vld [vmem:[%s0 + $0x5c] sm:$0xf]
  %v51 = vld [vmem:[%s1] sm:$0xf]
  %v52 = vld [vmem:[%s1 + $0x4] sm:$0xf]
  %v53 = vld [vmem:[%s1 + $0x8] sm:$0xf]
  %v54 = vld [vmem:[%s1 + $0xc] sm:$0xf]
  %v55 = vld [vmem:[%s1 + $0x10] sm:$0xf]
  %v56 = vld [vmem:[%s1 + $0x14] sm:$0xf]
  %v57 = vld [vmem:[%s1 + $0x18] sm:$0xf]
  %v58 = vld [vmem:[%s1 + $0x1c] sm:$0xf]
  %v59 = vld [vmem:[%s1 + $0x20] sm:$0xf]
  %v60 = vld [vmem:[%s1 + $0x24] sm:$0xf]
  %v61 = vld [vmem:[%s1 + $0x28] sm:$0xf]
  %v62 = vld [vmem:[%s1 + $0x2c] sm:$0xf]
  %v63 = vld [vmem:[%s1 + $0x30] sm:$0xf]
  %v64 = vld [vmem:[%s1 + $0x34] sm:$0xf]
  %v65 = vld [vmem:[%s1 + $0x38] sm:$0xf]
  %v66 = vld [vmem:[%s1 + $0x3c] sm:$0xf]
  %v67 = vld [vmem:[%s1 + $0x40] sm:$0xf]
  %v68 = vld [vmem:[%s1 + $0x44] sm:$0xf]
  %v69 = vld [vmem:[%s1 + $0x48] sm:$0xf]
  %v70 = vld [vmem:[%s1 + $0x4c] sm:$0xf]
  %v71 = vld [vmem:[%s1 + $0x50] sm:$0xf]
  %v72 = vld [vmem:[%s1 + $0x54] sm:$0xf]
  %v73 = vld [vmem:[%s1 + $0x58] sm:$0xf]
  %v74 = vld [vmem:[%s1 + $0x5c] sm:$0xf]
  %v75 = vld [vmem:[%s1 + $0x60] sm:$0xf]
  %v76 = vld [vmem:[%s1 + $0x64] sm:$0xf]
  %v77 = vld [vmem:[%s1 + $0x68] sm:$0xf]
  %v78 = vld [vmem:[%s1 + $0x6c] sm:$0xf]
  %v79 = vld [vmem:[%s1 + $0x70] sm:$0xf]
  %v80 = vld [vmem:[%s1 + $0x74] sm:$0xf]
  %v81 = vld [vmem:[%s1 + $0x78] sm:$0xf]
  %v82 = vld [vmem:[%s1 + $0x7c] sm:$0xf]
  %v83 = vld [vmem:[%s1 + $0x80] sm:$0xf]
  %v84 = vld [vmem:[%s1 + $0x84] sm:$0xf]
  %v85 = vld [vmem:[%s1 + $0x88] sm:$0xf]
  %v86 = vld [vmem:[%s1 + $0x8c] sm:$0xf]
  %v87 = vld [vmem:[%s1 + $0x90] sm:$0xf]
  %v88 = vld [vmem:[%s1 + $0x94] sm:$0xf]
  %v89 = vld [vmem:[%s1 + $0x98] sm:$0xf]
  %v90 = vld [vmem:[%s1 + $0x9c] sm:$0xf]
  %v91 = vld [vmem:[%s1 + $0xa0] sm:$0xf]
  %v92 = vld [vmem:[%s1 + $0xa4] sm:$0xf]
  %v93 = vld [vmem:[%s1 + $0xa8] sm:$0xf]
  %v94 = vld [vmem:[%s1 + $0xac] sm:$0xf]
  %v95 = vld [vmem:[%s1 + $0xb0] sm:$0xf]
  %v96 = vld [vmem:[%s1 + $0xb4] sm:$0xf]
  %v97 = vld [vmem:[%s1 + $0xb8] sm:$0xf]
  %v98 = vld [vmem:[%s1 + $0xbc] sm:$0xf]
  %v115 = vunpack.c.l.b16 %v35
  %v116 = vunpack.c.h.b16 %v35
  %v117 = vunpack.c.l.b16 %v36
  %v118 = vunpack.c.l.b16 %v37
  %v119 = vunpack.c.h.b16 %v37
  %v120 = vunpack.c.l.b16 %v38
  %v121 = vunpack.c.l.b16 %v39
  %v122 = vunpack.c.h.b16 %v39
  %v123 = vunpack.c.l.b16 %v40
  %v124 = vunpack.c.l.b16 %v41
  %v125 = vunpack.c.h.b16 %v41
  %v126 = vunpack.c.l.b16 %v42
  %v127 = vunpack.c.l.b16 %v43
  %v128 = vunpack.c.h.b16 %v43
  %v129 = vunpack.c.l.b16 %v44
  %v130 = vunpack.c.l.b16 %v45
  %v131 = vunpack.c.h.b16 %v45
  %v132 = vunpack.c.l.b16 %v46
  %v133 = vunpack.c.l.b16 %v47
  %v134 = vunpack.c.h.b16 %v47
  %v135 = vunpack.c.l.b16 %v48
  %v136 = vunpack.c.l.b16 %v49
  %v137 = vunpack.c.h.b16 %v49
  %v138 = vunpack.c.l.b16 %v50
  %v139 = vpack.c.b16 %v118, %v115
  %v140 = vpack.c.b16 %v119, %v116
  %v141 = vpack.c.b16 %v120, %v117
  %v142 = vpack.c.b16 %v124, %v121
  %v143 = vpack.c.b16 %v125, %v122
  %v144 = vpack.c.b16 %v126, %v123
  %v145 = vpack.c.b16 %v130, %v127
  %v146 = vpack.c.b16 %v131, %v128
  %v147 = vpack.c.b16 %v132, %v129
  %v148 = vpack.c.b16 %v136, %v133
  %v149 = vpack.c.b16 %v137, %v134
  %v150 = vpack.c.b16 %v138, %v135
  %v211 = vunpack.c.l.b16 %v51
  %v212 = vunpack.c.l.b16 %v52
  %v213 = vunpack.c.l.b16 %v53
  %v214 = vunpack.c.l.b16 %v54
  %v215 = vunpack.c.l.b16 %v55
  %v216 = vunpack.c.l.b16 %v56
  %v217 = vunpack.c.l.b16 %v57
  %v218 = vunpack.c.l.b16 %v58
  %v219 = vunpack.c.l.b16 %v59
  %v220 = vunpack.c.l.b16 %v60
  %v221 = vunpack.c.l.b16 %v61
  %v222 = vunpack.c.l.b16 %v62
  %v223 = vunpack.c.l.b16 %v63
  %v224 = vunpack.c.l.b16 %v64
  %v225 = vunpack.c.l.b16 %v65
  %v226 = vunpack.c.l.b16 %v66
  %v227 = vunpack.c.l.b16 %v67
  %v228 = vunpack.c.l.b16 %v68
  %v229 = vunpack.c.l.b16 %v69
  %v230 = vunpack.c.l.b16 %v70
  %v231 = vunpack.c.l.b16 %v71
  %v232 = vunpack.c.l.b16 %v72
  %v233 = vunpack.c.l.b16 %v73
  %v234 = vunpack.c.l.b16 %v74
  %v235 = vunpack.c.l.b16 %v75
  %v236 = vunpack.c.l.b16 %v76
  %v237 = vunpack.c.l.b16 %v77
  %v238 = vunpack.c.l.b16 %v78
  %v239 = vunpack.c.l.b16 %v79
  %v240 = vunpack.c.l.b16 %v80
  %v241 = vunpack.c.l.b16 %v81
  %v242 = vunpack.c.l.b16 %v82
  %v243 = vunpack.c.l.b16 %v83
  %v244 = vunpack.c.l.b16 %v84
  %v245 = vunpack.c.l.b16 %v85
  %v246 = vunpack.c.l.b16 %v86
  %v247 = vunpack.c.l.b16 %v87
  %v248 = vunpack.c.l.b16 %v88
  %v249 = vunpack.c.l.b16 %v89
  %v250 = vunpack.c.l.b16 %v90
  %v251 = vunpack.c.l.b16 %v91
  %v252 = vunpack.c.l.b16 %v92
  %v253 = vunpack.c.l.b16 %v93
  %v254 = vunpack.c.l.b16 %v94
  %v255 = vunpack.c.l.b16 %v95
  %v256 = vunpack.c.l.b16 %v96
  %v257 = vunpack.c.l.b16 %v97
  %v258 = vunpack.c.l.b16 %v98
  %v259 = vpack.c.b16 %v212, %v211
  %v260 = vpack.c.b16 %v214, %v213
  %v261 = vpack.c.b16 %v216, %v215
  %v262 = vpack.c.b16 %v218, %v217
  %v263 = vpack.c.b16 %v220, %v219
  %v264 = vpack.c.b16 %v222, %v221
  %v265 = vpack.c.b16 %v224, %v223
  %v266 = vpack.c.b16 %v226, %v225
  %v267 = vpack.c.b16 %v228, %v227
  %v268 = vpack.c.b16 %v230, %v229
  %v269 = vpack.c.b16 %v232, %v231
  %v270 = vpack.c.b16 %v234, %v233
  %v271 = vpack.c.b16 %v236, %v235
  %v272 = vpack.c.b16 %v238, %v237
  %v273 = vpack.c.b16 %v240, %v239
  %v274 = vpack.c.b16 %v242, %v241
  %v275 = vpack.c.b16 %v244, %v243
  %v276 = vpack.c.b16 %v246, %v245
  %v277 = vpack.c.b16 %v248, %v247
  %v278 = vpack.c.b16 %v250, %v249
  %v279 = vpack.c.b16 %v252, %v251
  %v280 = vpack.c.b16 %v254, %v253
  %v281 = vpack.c.b16 %v256, %v255
  %v282 = vpack.c.b16 %v258, %v257
  %307 = vmatprep.subr.bf16.mxu0 0
  %308 = vmatpush1.bf16.msra.mxu0 %v259
  %309 = vmatprep.subr.bf16.mxu0 0
  %310 = vmatpush1.bf16.msra.mxu0 %v260
  %311 = vmatprep.subr.bf16.mxu0 0
  %312 = vmatpush1.bf16.msra.mxu0 %v261
  %313 = vmatprep.subr.bf16.mxu0 0
  %314 = vmatpush1.bf16.msra.mxu0 %v262
  %315 = vmatprep.subr.bf16.mxu0 0
  %316 = vmatpush1.bf16.msra.mxu0 %v263
  %317 = vmatprep.subr.bf16.mxu0 0
  %318 = vmatpush1.bf16.msra.mxu0 %v264
  %319 = vmatprep.subr.bf16.mxu0 0
  %320 = vmatpush1.bf16.msra.mxu0 %v265
  %321 = vmatprep.subr.bf16.mxu0 0
  %322 = vmatpush1.bf16.msra.mxu0 %v266
  %323 = vmatprep.subr.bf16.mxu0 0
  %324 = vmatpush1.bf16.msra.mxu0 %v267
  %325 = vmatprep.subr.bf16.mxu0 0
  %326 = vmatpush1.bf16.msra.mxu0 %v268
  %327 = vmatprep.subr.bf16.mxu0 0
  %328 = vmatpush1.bf16.msra.mxu0 %v269
  %329 = vmatprep.subr.bf16.mxu0 0
  %330 = vmatpush1.bf16.msra.mxu0 %v270
  %331 = vmatprep.subr.bf16.mxu0 0
  %332 = vmatpush1.bf16.msra.mxu0 %v271
  %333 = vmatprep.subr.bf16.mxu0 0
  %334 = vmatpush1.bf16.msra.mxu0 %v272
  %335 = vmatprep.subr.bf16.mxu0 0
  %336 = vmatpush1.bf16.msra.mxu0 %v273
  %337 = vmatprep.subr.bf16.mxu0 0
  %338 = vmatpush1.bf16.msra.mxu0 %v274
  %339 = vmatprep.mubr.bf16.mxu0 %v140
  %340 = vmatmul.mubr.bf16.gmra.mrb[0].mxu0 %v139
  %v341 = vpop.f32.mrb[0].mxu0
  %v342 = vadd.f32 0.0, %v341
  %v343 = vpop.f32.mrb[0].mxu0
  %v344 = vpop.f32.mrb[0].mxu0
  %v345 = vadd.f32 0.0, %v344
  %v346 = vpop.f32.mrb[0].mxu0
  %347 = vmatprep.mubr.bf16.mxu0 %v143
  %348 = vmatmul.mubr.bf16.gmra.mrb[0].mxu0 %v142
  %v349 = vpop.f32.mrb[0].mxu0
  %v350 = vadd.f32 0.0, %v349
  %v351 = vpop.f32.mrb[0].mxu0
  %v352 = vpop.f32.mrb[0].mxu0
  %v353 = vadd.f32 0.0, %v352
  %v354 = vpop.f32.mrb[0].mxu0
  %355 = vmatprep.mubr.bf16.mxu0 %v146
  %356 = vmatmul.mubr.bf16.gmra.mrb[0].mxu0 %v145
  %v357 = vpop.f32.mrb[0].mxu0
  %v358 = vadd.f32 0.0, %v357
  %v359 = vpop.f32.mrb[0].mxu0
  %v360 = vpop.f32.mrb[0].mxu0
  %v361 = vadd.f32 0.0, %v360
  %v362 = vpop.f32.mrb[0].mxu0
  %363 = vmatprep.mubr.bf16.mxu0 %v149
  %364 = vmatmul.mubr.bf16.gmra.mrb[0].mxu0 %v148
  %v365 = vpop.f32.mrb[0].mxu0
  %v366 = vadd.f32 0.0, %v365
  %v367 = vpop.f32.mrb[0].mxu0
  %v368 = vpop.f32.mrb[0].mxu0
  %v369 = vadd.f32 0.0, %v368
  %v370 = vpop.f32.mrb[0].mxu0
  %371 = vdwg.mxu0
  %372 = vmatprep.subr.bf16.mxu0 0
  %373 = vmatpush1.bf16.msra.mxu0 %v275
  %374 = vmatprep.subr.bf16.mxu0 0
  %375 = vmatpush1.bf16.msra.mxu0 %v276
  %376 = vmatprep.subr.bf16.mxu0 0
  %377 = vmatpush1.bf16.msra.mxu0 %v277
  %378 = vmatprep.subr.bf16.mxu0 0
  %379 = vmatpush1.bf16.msra.mxu0 %v278
  %380 = vmatprep.subr.bf16.mxu0 0
  %381 = vmatpush1.bf16.msra.mxu0 %v279
  %382 = vmatprep.subr.bf16.mxu0 0
  %383 = vmatpush1.bf16.msra.mxu0 %v280
  %384 = vmatprep.subr.bf16.mxu0 0
  %385 = vmatpush1.bf16.msra.mxu0 %v281
  %386 = vmatprep.subr.bf16.mxu0 0
  %387 = vmatpush1.bf16.msra.mxu0 %v282
  %388 = vmatprep.subr.bf16.mxu0 0
  %389 = vmatpush1.bf16.msra.mxu0 0
  %390 = vmatprep.subr.bf16.mxu0 0
  %391 = vmatpush1.bf16.msra.mxu0 0
  %392 = vmatprep.subr.bf16.mxu0 0
  %393 = vmatpush1.bf16.msra.mxu0 0
  %394 = vmatprep.subr.bf16.mxu0 0
  %395 = vmatpush1.bf16.msra.mxu0 0
  %396 = vmatprep.subr.bf16.mxu0 0
  %397 = vmatpush1.bf16.msra.mxu0 0
  %398 = vmatprep.subr.bf16.mxu0 0
  %399 = vmatpush1.bf16.msra.mxu0 0
  %400 = vmatprep.subr.bf16.mxu0 0
  %401 = vmatpush1.bf16.msra.mxu0 0
  %402 = vmatprep.subr.bf16.mxu0 0
  %403 = vmatpush1.bf16.msra.mxu0 0
  %404 = vmatprep.mubr.bf16.mxu0 0
  %405 = vmatmul.mubr.bf16.gmra.mrb[0].mxu0 %v141
  %v406 = vpop.f32.mrb[0].mxu0
  %v407 = vadd.f32 %v342, %v406
  %v408 = vpop.f32.mrb[0].mxu0
  %v409 = vpop.f32.mrb[0].mxu0
  %v410 = vadd.f32 %v345, %v409
  %v411 = vpop.f32.mrb[0].mxu0
  %412 = vmatprep.mubr.bf16.mxu0 0
  %413 = vmatmul.mubr.bf16.gmra.mrb[0].mxu0 %v144
  %v414 = vpop.f32.mrb[0].mxu0
  %v415 = vadd.f32 %v350, %v414
  %v416 = vpop.f32.mrb[0].mxu0
  %v417 = vpop.f32.mrb[0].mxu0
  %v418 = vadd.f32 %v353, %v417
  %v419 = vpop.f32.mrb[0].mxu0
  %420 = vmatprep.mubr.bf16.mxu0 0
  %421 = vmatmul.mubr.bf16.gmra.mrb[0].mxu0 %v147
  %v422 = vpop.f32.mrb[0].mxu0
  %v423 = vadd.f32 %v358, %v422
  %v424 = vpop.f32.mrb[0].mxu0
  %v425 = vpop.f32.mrb[0].mxu0
  %v426 = vadd.f32 %v361, %v425
  %v427 = vpop.f32.mrb[0].mxu0
  %428 = vmatprep.mubr.bf16.mxu0 0
  %429 = vmatmul.mubr.bf16.gmra.mrb[0].mxu0 %v150
  %v430 = vpop.f32.mrb[0].mxu0
  %v431 = vadd.f32 %v366, %v430
  %v432 = vpop.f32.mrb[0].mxu0
  %v433 = vpop.f32.mrb[0].mxu0
  %v434 = vadd.f32 %v369, %v433
  %v435 = vpop.f32.mrb[0].mxu0
  %436 = vdwg.mxu0
  %v437 = vadd.f32 %v27, %v407
  %v438 = vadd.f32 %v28, %v410
  %v439 = vadd.f32 %v29, %v415
  %v440 = vadd.f32 %v30, %v418
  %v441 = vadd.f32 %v31, %v423
  %v442 = vadd.f32 %v32, %v426
  %v443 = vadd.f32 %v33, %v431
  %v444 = vadd.f32 %v34, %v434
  %445 = vst [vmem:[#allocation2] sm:$0xff] %v437
  %446 = vst [vmem:[#allocation2 + $0x8] sm:$0xff] %v438
  %447 = vst [vmem:[#allocation2 + $0x10] sm:$0xff] %v439
  %448 = vst [vmem:[#allocation2 + $0x18] sm:$0xff] %v440
  %449 = vst [vmem:[#allocation2 + $0x20] sm:$0xff] %v441
  %450 = vst [vmem:[#allocation2 + $0x28] sm:$0xff] %v442
  %451 = vst [vmem:[#allocation2 + $0x30] sm:$0xff] %v443
  %452 = vst [vmem:[#allocation2 + $0x38] sm:$0xff] %v444
  // Predicated region
  $region18: #{dip_forward.112} parent=0 // pred_check
    %p453 = pneg %p15
  $region19: #{dip_forward.112} parent=0 // pred_check_branch
    %455 = sbr.rel (%p453) target = $region21
  $region20: #{dip_forward.112} parent=0 // pred_region
    %v456 = vld [vmem:[#allocation2] sm:$0xff]
    %v457 = vld [vmem:[#allocation2 + $0x8] sm:$0xff]
    %v458 = vld [vmem:[#allocation2 + $0x10] sm:$0xff]
    %v459 = vld [vmem:[#allocation2 + $0x18] sm:$0xff]
    %v460 = vld [vmem:[#allocation2 + $0x20] sm:$0xff]
    %v461 = vld [vmem:[#allocation2 + $0x28] sm:$0xff]
    %v462 = vld [vmem:[#allocation2 + $0x30] sm:$0xff]
    %v463 = vld [vmem:[#allocation2 + $0x38] sm:$0xff]
    %v464 = vld [vmem:[%s2] sm:$0x1]
    %v466 = vlaneseq
    %v467 = vshrl.u32 %v466, 7
    %v468 = vsub.s32 0, %v467
    %v469 = vrot.slane %v464, %v468
    %v471 = vadd.f32 %v456, %v469
    %v472 = vadd.f32 %v457, %v469
    %v473 = vadd.f32 %v458, %v469
    %v474 = vadd.f32 %v459, %v469
    %v475 = vadd.f32 %v460, %v469
    %v476 = vadd.f32 %v461, %v469
    %v477 = vadd.f32 %v462, %v469
    %v478 = vadd.f32 %v463, %v469
    %v479 = vtanh.pop %v471
    %v480 = vtanh.pop %v472
    %v481 = vtanh.pop %v473
    %v482 = vtanh.pop %v474
    %v483 = vtanh.pop %v475
    %v484 = vtanh.pop %v476
    %v485 = vtanh.pop %v477
    %v486 = vtanh.pop %v478
    %487 = vst [vmem:[%s3] sm:$0xff] %v479
    %488 = vst [vmem:[%s3 + $0x8] sm:$0xff] %v480
    %489 = vst [vmem:[%s3 + $0x10] sm:$0xff] %v481
    %490 = vst [vmem:[%s3 + $0x18] sm:$0xff] %v482
    %491 = vst [vmem:[%s3 + $0x20] sm:$0xff] %v483
    %492 = vst [vmem:[%s3 + $0x28] sm:$0xff] %v484
    %493 = vst [vmem:[%s3 + $0x30] sm:$0xff] %v485
    %494 = vst [vmem:[%s3 + $0x38] sm:$0xff] %v486
  $region21: #{dip_forward.112} parent=0 // pred_fallthru
    _
  // Predicated region
  $region22: #{dip_forward.112} parent=0 // pred_check
    _
  $region23: #{dip_forward.112} parent=0 // pred_check_branch
    %496 = sbr.rel (0) target = $region25
  $region24: #{dip_forward.112} parent=0 // pred_region
    _
  $region25: #{dip_forward.112} parent=0 // pred_fallthru
    _
  // Predicated region
  $region26: #{dip_forward.112} parent=0 // pred_check
    _
  $region27: #{dip_forward.112} parent=0 // pred_check_branch
    %498 = sbr.rel (0) target = $region29
  $region28: #{dip_forward.112} parent=0 // pred_region
    _
  $region29: #{dip_forward.112} parent=0 // pred_fallthru
    _

// kernel: dip_forward.113
$region0: #{dip_forward.113}
  #allocation0 [shape = 'u32[]', space=smem, size = 0x4, offset = 0x4, fixed_abs, tag = 'smem constant byte address 0x4 - core index']
  #allocation1 [shape = 'u32[144,128]{1,0:T(1,128)}', space=vmem, size = 0x12000, scoped, tag = 'internal scratch']
  #allocation2 [shape = 'f32[64,256]{1,0:T(8,128)}', space=vmem, size = 0x10000, scoped, tag = 'scratch operand']
  %s0 = inlined_call_operand.vmem [shape: bf16[64,128], index: 0, kind: input, shape index: {}]
  %s1 = inlined_call_operand.vmem [shape: bf16[128,256], index: 1, kind: input, shape index: {}]
  %s2 = inlined_call_operand.vmem [shape: f32[1,256], index: 2, kind: input, shape index: {}]
  %s3 = inlined_call_operand.vmem [shape: f32[64,256], index: 3, kind: output, shape index: {}]
  %s4 = sld [smem:[#allocation0]]
  $region30: #{dip_forward.113} parent=0
    _
  %s6 = ssub.s32 1, %s4
  %s7 = scalar_select 0, %s6, %s4
  // Predicated region
  $region2: #{dip_forward.113} parent=0 // pred_check
    _
  $region3: #{dip_forward.113} parent=0 // pred_check_branch
    %9 = sbr.rel (0) target = $region5
  $region4: #{dip_forward.113} parent=0 // pred_region
    _
  $region5: #{dip_forward.113} parent=0 // pred_fallthru
    _
  // Predicated region
  $region6: #{dip_forward.113} parent=0 // pred_check
    _
  $region7: #{dip_forward.113} parent=0 // pred_check_branch
    %11 = sbr.rel (0) target = $region9
  $region8: #{dip_forward.113} parent=0 // pred_region
    _
  $region9: #{dip_forward.113} parent=0 // pred_fallthru
    _
  // Predicated region
  $region10: #{dip_forward.113} parent=0 // pred_check
    _
  $region11: #{dip_forward.113} parent=0 // pred_check_branch
    %13 = sbr.rel (0) target = $region13
  $region12: #{dip_forward.113} parent=0 // pred_region
    _
  $region13: #{dip_forward.113} parent=0 // pred_fallthru
    _
  %p15 = scmp.eq.s32.totalorder 0, 0
  // Predicated region
  $region14: #{dip_forward.113} parent=0 // pred_check
    %p16 = pneg %p15
  $region15: #{dip_forward.113} parent=0 // pred_check_branch
    %18 = sbr.rel (%p16) target = $region17
  $region16: #{dip_forward.113} parent=0 // pred_region
    %19 = vst [vmem:[#allocation2] sm:$0xff] 0.0
    %20 = vst [vmem:[#allocation2 + $0x8] sm:$0xff] 0.0
    %21 = vst [vmem:[#allocation2 + $0x10] sm:$0xff] 0.0
    %22 = vst [vmem:[#allocation2 + $0x18] sm:$0xff] 0.0
    %23 = vst [vmem:[#allocation2 + $0x20] sm:$0xff] 0.0
    %24 = vst [vmem:[#allocation2 + $0x28] sm:$0xff] 0.0
    %25 = vst [vmem:[#allocation2 + $0x30] sm:$0xff] 0.0
    %26 = vst [vmem:[#allocation2 + $0x38] sm:$0xff] 0.0
    %27 = vst [vmem:[#allocation2 + $0x40] sm:$0xff] 0.0
    %28 = vst [vmem:[#allocation2 + $0x48] sm:$0xff] 0.0
    %29 = vst [vmem:[#allocation2 + $0x50] sm:$0xff] 0.0
    %30 = vst [vmem:[#allocation2 + $0x58] sm:$0xff] 0.0
    %31 = vst [vmem:[#allocation2 + $0x60] sm:$0xff] 0.0
    %32 = vst [vmem:[#allocation2 + $0x68] sm:$0xff] 0.0
    %33 = vst [vmem:[#allocation2 + $0x70] sm:$0xff] 0.0
    %34 = vst [vmem:[#allocation2 + $0x78] sm:$0xff] 0.0
  $region17: #{dip_forward.113} parent=0 // pred_fallthru
    _
  %v35 = vld [vmem:[#allocation2] sm:$0xff]
  %v36 = vld [vmem:[#allocation2 + $0x8] sm:$0xff]
  %v37 = vld [vmem:[#allocation2 + $0x10] sm:$0xff]
  %v38 = vld [vmem:[#allocation2 + $0x18] sm:$0xff]
  %v39 = vld [vmem:[#allocation2 + $0x20] sm:$0xff]
  %v40 = vld [vmem:[#allocation2 + $0x28] sm:$0xff]
  %v41 = vld [vmem:[#allocation2 + $0x30] sm:$0xff]
  %v42 = vld [vmem:[#allocation2 + $0x38] sm:$0xff]
  %v43 = vld [vmem:[#allocation2 + $0x40] sm:$0xff]
  %v44 = vld [vmem:[#allocation2 + $0x48] sm:$0xff]
  %v45 = vld [vmem:[#allocation2 + $0x50] sm:$0xff]
  %v46 = vld [vmem:[#allocation2 + $0x58] sm:$0xff]
  %v47 = vld [vmem:[#allocation2 + $0x60] sm:$0xff]
  %v48 = vld [vmem:[#allocation2 + $0x68] sm:$0xff]
  %v49 = vld [vmem:[#allocation2 + $0x70] sm:$0xff]
  %v50 = vld [vmem:[#allocation2 + $0x78] sm:$0xff]
  %v51 = vld [vmem:[%s0] sm:$0xf]
  %v52 = vld [vmem:[%s0 + $0x4] sm:$0xf]
  %v53 = vld [vmem:[%s0 + $0x8] sm:$0xf]
  %v54 = vld [vmem:[%s0 + $0xc] sm:$0xf]
  %v55 = vld [vmem:[%s0 + $0x10] sm:$0xf]
  %v56 = vld [vmem:[%s0 + $0x14] sm:$0xf]
  %v57 = vld [vmem:[%s0 + $0x18] sm:$0xf]
  %v58 = vld [vmem:[%s0 + $0x1c] sm:$0xf]
  %v59 = vld [vmem:[%s1] sm:$0xff]
  %v60 = vld [vmem:[%s1 + $0x8] sm:$0xff]
  %v61 = vld [vmem:[%s1 + $0x10] sm:$0xff]
  %v62 = vld [vmem:[%s1 + $0x18] sm:$0xff]
  %v63 = vld [vmem:[%s1 + $0x20] sm:$0xff]
  %v64 = vld [vmem:[%s1 + $0x28] sm:$0xff]
  %v65 = vld [vmem:[%s1 + $0x30] sm:$0xff]
  %v66 = vld [vmem:[%s1 + $0x38] sm:$0xff]
  %v67 = vld [vmem:[%s1 + $0x40] sm:$0xff]
  %v68 = vld [vmem:[%s1 + $0x48] sm:$0xff]
  %v69 = vld [vmem:[%s1 + $0x50] sm:$0xff]
  %v70 = vld [vmem:[%s1 + $0x58] sm:$0xff]
  %v71 = vld [vmem:[%s1 + $0x60] sm:$0xff]
  %v72 = vld [vmem:[%s1 + $0x68] sm:$0xff]
  %v73 = vld [vmem:[%s1 + $0x70] sm:$0xff]
  %v74 = vld [vmem:[%s1 + $0x78] sm:$0xff]
  %v83 = vunpack.c.l.b16 %v51
  %v84 = vunpack.c.l.b16 %v52
  %v85 = vunpack.c.l.b16 %v53
  %v86 = vunpack.c.l.b16 %v54
  %v87 = vunpack.c.l.b16 %v55
  %v88 = vunpack.c.l.b16 %v56
  %v89 = vunpack.c.l.b16 %v57
  %v90 = vunpack.c.l.b16 %v58
  %v91 = vpack.c.b16 %v84, %v83
  %v92 = vpack.c.b16 %v86, %v85
  %v93 = vpack.c.b16 %v88, %v87
  %v94 = vpack.c.b16 %v90, %v89
  %v115 = vunpack.c.l.b16 %v59
  %v116 = vunpack.c.h.b16 %v59
  %v117 = vunpack.c.l.b16 %v60
  %v118 = vunpack.c.h.b16 %v60
  %v119 = vunpack.c.l.b16 %v61
  %v120 = vunpack.c.h.b16 %v61
  %v121 = vunpack.c.l.b16 %v62
  %v122 = vunpack.c.h.b16 %v62
  %v123 = vunpack.c.l.b16 %v63
  %v124 = vunpack.c.h.b16 %v63
  %v125 = vunpack.c.l.b16 %v64
  %v126 = vunpack.c.h.b16 %v64
  %v127 = vunpack.c.l.b16 %v65
  %v128 = vunpack.c.h.b16 %v65
  %v129 = vunpack.c.l.b16 %v66
  %v130 = vunpack.c.h.b16 %v66
  %v131 = vunpack.c.l.b16 %v67
  %v132 = vunpack.c.h.b16 %v67
  %v133 = vunpack.c.l.b16 %v68
  %v134 = vunpack.c.h.b16 %v68
  %v135 = vunpack.c.l.b16 %v69
  %v136 = vunpack.c.h.b16 %v69
  %v137 = vunpack.c.l.b16 %v70
  %v138 = vunpack.c.h.b16 %v70
  %v139 = vunpack.c.l.b16 %v71
  %v140 = vunpack.c.h.b16 %v71
  %v141 = vunpack.c.l.b16 %v72
  %v142 = vunpack.c.h.b16 %v72
  %v143 = vunpack.c.l.b16 %v73
  %v144 = vunpack.c.h.b16 %v73
  %v145 = vunpack.c.l.b16 %v74
  %v146 = vunpack.c.h.b16 %v74
  %v147 = vpack.c.b16 %v117, %v115
  %v148 = vpack.c.b16 %v118, %v116
  %v149 = vpack.c.b16 %v121, %v119
  %v150 = vpack.c.b16 %v122, %v120
  %v151 = vpack.c.b16 %v125, %v123
  %v152 = vpack.c.b16 %v126, %v124
  %v153 = vpack.c.b16 %v129, %v127
  %v154 = vpack.c.b16 %v130, %v128
  %v155 = vpack.c.b16 %v133, %v131
  %v156 = vpack.c.b16 %v134, %v132
  %v157 = vpack.c.b16 %v137, %v135
  %v158 = vpack.c.b16 %v138, %v136
  %v159 = vpack.c.b16 %v141, %v139
  %v160 = vpack.c.b16 %v142, %v140
  %v161 = vpack.c.b16 %v145, %v143
  %v162 = vpack.c.b16 %v146, %v144
  %179 = vmatprep.subr.bf16.mxu0 %v148
  %180 = vmatpush1.bf16.msra.mxu0 %v147
  %181 = vmatprep.subr.bf16.mxu0 %v150
  %182 = vmatpush1.bf16.msra.mxu0 %v149
  %183 = vmatprep.subr.bf16.mxu0 %v152
  %184 = vmatpush1.bf16.msra.mxu0 %v151
  %185 = vmatprep.subr.bf16.mxu0 %v154
  %186 = vmatpush1.bf16.msra.mxu0 %v153
  %187 = vmatprep.subr.bf16.mxu0 %v156
  %188 = vmatpush1.bf16.msra.mxu0 %v155
  %189 = vmatprep.subr.bf16.mxu0 %v158
  %190 = vmatpush1.bf16.msra.mxu0 %v157
  %191 = vmatprep.subr.bf16.mxu0 %v160
  %192 = vmatpush1.bf16.msra.mxu0 %v159
  %193 = vmatprep.subr.bf16.mxu0 %v162
  %194 = vmatpush1.bf16.msra.mxu0 %v161
  %195 = vmatprep.subr.bf16.mxu0 0
  %196 = vmatpush1.bf16.msra.mxu0 0
  %197 = vmatprep.subr.bf16.mxu0 0
  %198 = vmatpush1.bf16.msra.mxu0 0
  %199 = vmatprep.subr.bf16.mxu0 0
  %200 = vmatpush1.bf16.msra.mxu0 0
  %201 = vmatprep.subr.bf16.mxu0 0
  %202 = vmatpush1.bf16.msra.mxu0 0
  %203 = vmatprep.subr.bf16.mxu0 0
  %204 = vmatpush1.bf16.msra.mxu0 0
  %205 = vmatprep.subr.bf16.mxu0 0
  %206 = vmatpush1.bf16.msra.mxu0 0
  %207 = vmatprep.subr.bf16.mxu0 0
  %208 = vmatpush1.bf16.msra.mxu0 0
  %209 = vmatprep.subr.bf16.mxu0 0
  %210 = vmatpush1.bf16.msra.mxu0 0
  %211 = vmatprep.mubr.bf16.mxu0 0
  %212 = vmatmul.mubr.bf16.gmra.mrb[0].mxu0 %v91
  %v213 = vpop.f32.mrb[0].mxu0
  %v214 = vadd.f32 0.0, %v213
  %v215 = vpop.f32.mrb[0].mxu0
  %v216 = vadd.f32 0.0, %v215
  %v217 = vpop.f32.mrb[0].mxu0
  %v218 = vadd.f32 0.0, %v217
  %v219 = vpop.f32.mrb[0].mxu0
  %v220 = vadd.f32 0.0, %v219
  %221 = vmatprep.mubr.bf16.mxu0 0
  %222 = vmatmul.mubr.bf16.gmra.mrb[0].mxu0 %v92
  %v223 = vpop.f32.mrb[0].mxu0
  %v224 = vadd.f32 0.0, %v223
  %v225 = vpop.f32.mrb[0].mxu0
  %v226 = vadd.f32 0.0, %v225
  %v227 = vpop.f32.mrb[0].mxu0
  %v228 = vadd.f32 0.0, %v227
  %v229 = vpop.f32.mrb[0].mxu0
  %v230 = vadd.f32 0.0, %v229
  %231 = vmatprep.mubr.bf16.mxu0 0
  %232 = vmatmul.mubr.bf16.gmra.mrb[0].mxu0 %v93
  %v233 = vpop.f32.mrb[0].mxu0
  %v234 = vadd.f32 0.0, %v233
  %v235 = vpop.f32.mrb[0].mxu0
  %v236 = vadd.f32 0.0, %v235
  %v237 = vpop.f32.mrb[0].mxu0
  %v238 = vadd.f32 0.0, %v237
  %v239 = vpop.f32.mrb[0].mxu0
  %v240 = vadd.f32 0.0, %v239
  %241 = vmatprep.mubr.bf16.mxu0 0
  %242 = vmatmul.mubr.bf16.gmra.mrb[0].mxu0 %v94
  %v243 = vpop.f32.mrb[0].mxu0
  %v244 = vadd.f32 0.0, %v243
  %v245 = vpop.f32.mrb[0].mxu0
  %v246 = vadd.f32 0.0, %v245
  %v247 = vpop.f32.mrb[0].mxu0
  %v248 = vadd.f32 0.0, %v247
  %v249 = vpop.f32.mrb[0].mxu0
  %v250 = vadd.f32 0.0, %v249
  %251 = vdwg.mxu0
  %v252 = vadd.f32 %v35, %v214
  %v253 = vadd.f32 %v36, %v216
  %v254 = vadd.f32 %v37, %v218
  %v255 = vadd.f32 %v38, %v220
  %v256 = vadd.f32 %v39, %v224
  %v257 = vadd.f32 %v40, %v226
  %v258 = vadd.f32 %v41, %v228
  %v259 = vadd.f32 %v42, %v230
  %v260 = vadd.f32 %v43, %v234
  %v261 = vadd.f32 %v44, %v236
  %v262 = vadd.f32 %v45, %v238
  %v263 = vadd.f32 %v46, %v240
  %v264 = vadd.f32 %v47, %v244
  %v265 = vadd.f32 %v48, %v246
  %v266 = vadd.f32 %v49, %v248
  %v267 = vadd.f32 %v50, %v250
  %268 = vst [vmem:[#allocation2] sm:$0xff] %v252
  %269 = vst [vmem:[#allocation2 + $0x8] sm:$0xff] %v253
  %270 = vst [vmem:[#allocation2 + $0x10] sm:$0xff] %v254
  %271 = vst [vmem:[#allocation2 + $0x18] sm:$0xff] %v255
  %272 = vst [vmem:[#allocation2 + $0x20] sm:$0xff] %v256
  %273 = vst [vmem:[#allocation2 + $0x28] sm:$0xff] %v257
  %274 = vst [vmem:[#allocation2 + $0x30] sm:$0xff] %v258
  %275 = vst [vmem:[#allocation2 + $0x38] sm:$0xff] %v259
  %276 = vst [vmem:[#allocation2 + $0x40] sm:$0xff] %v260
  %277 = vst [vmem:[#allocation2 + $0x48] sm:$0xff] %v261
  %278 = vst [vmem:[#allocation2 + $0x50] sm:$0xff] %v262
  %279 = vst [vmem:[#allocation2 + $0x58] sm:$0xff] %v263
  %280 = vst [vmem:[#allocation2 + $0x60] sm:$0xff] %v264
  %281 = vst [vmem:[#allocation2 + $0x68] sm:$0xff] %v265
  %282 = vst [vmem:[#allocation2 + $0x70] sm:$0xff] %v266
  %283 = vst [vmem:[#allocation2 + $0x78] sm:$0xff] %v267
  // Predicated region
  $region18: #{dip_forward.113} parent=0 // pred_check
    %p284 = pneg %p15
  $region19: #{dip_forward.113} parent=0 // pred_check_branch
    %286 = sbr.rel (%p284) target = $region21
  $region20: #{dip_forward.113} parent=0 // pred_region
    %v287 = vld [vmem:[#allocation2] sm:$0xff]
    %v288 = vld [vmem:[#allocation2 + $0x8] sm:$0xff]
    %v289 = vld [vmem:[#allocation2 + $0x10] sm:$0xff]
    %v290 = vld [vmem:[#allocation2 + $0x18] sm:$0xff]
    %v291 = vld [vmem:[#allocation2 + $0x20] sm:$0xff]
    %v292 = vld [vmem:[#allocation2 + $0x28] sm:$0xff]
    %v293 = vld [vmem:[#allocation2 + $0x30] sm:$0xff]
    %v294 = vld [vmem:[#allocation2 + $0x38] sm:$0xff]
    %v295 = vld [vmem:[#allocation2 + $0x40] sm:$0xff]
    %v296 = vld [vmem:[#allocation2 + $0x48] sm:$0xff]
    %v297 = vld [vmem:[#allocation2 + $0x50] sm:$0xff]
    %v298 = vld [vmem:[#allocation2 + $0x58] sm:$0xff]
    %v299 = vld [vmem:[#allocation2 + $0x60] sm:$0xff]
    %v300 = vld [vmem:[#allocation2 + $0x68] sm:$0xff]
    %v301 = vld [vmem:[#allocation2 + $0x70] sm:$0xff]
    %v302 = vld [vmem:[#allocation2 + $0x78] sm:$0xff]
    %v303 = vld [vmem:[%s2] sm:$0x3]
    %v305 = vlaneseq
    %v306 = vshrl.u32 %v305, 7
    %v307 = vsub.s32 0, %v306
    %v308 = vrot.slane %v303, %v307
    %v309 = vlaneseq
    %v310 = vshrl.u32 %v309, 7
    %v311 = vsub.s32 1, %v310
    %v312 = vrot.slane %v303, %v311
    %v315 = vadd.f32 %v287, %v308
    %v316 = vadd.f32 %v288, %v312
    %v317 = vadd.f32 %v289, %v308
    %v318 = vadd.f32 %v290, %v312
    %v319 = vadd.f32 %v291, %v308
    %v320 = vadd.f32 %v292, %v312
    %v321 = vadd.f32 %v293, %v308
    %v322 = vadd.f32 %v294, %v312
    %v323 = vadd.f32 %v295, %v308
    %v324 = vadd.f32 %v296, %v312
    %v325 = vadd.f32 %v297, %v308
    %v326 = vadd.f32 %v298, %v312
    %v327 = vadd.f32 %v299, %v308
    %v328 = vadd.f32 %v300, %v312
    %v329 = vadd.f32 %v301, %v308
    %v330 = vadd.f32 %v302, %v312
    %v331 = vmax.f32 %v315, 0.0
    %v332 = vmax.f32 %v316, 0.0
    %v333 = vmax.f32 %v317, 0.0
    %v334 = vmax.f32 %v318, 0.0
    %v335 = vmax.f32 %v319, 0.0
    %v336 = vmax.f32 %v320, 0.0
    %v337 = vmax.f32 %v321, 0.0
    %v338 = vmax.f32 %v322, 0.0
    %v339 = vmax.f32 %v323, 0.0
    %v340 = vmax.f32 %v324, 0.0
    %v341 = vmax.f32 %v325, 0.0
    %v342 = vmax.f32 %v326, 0.0
    %v343 = vmax.f32 %v327, 0.0
    %v344 = vmax.f32 %v328, 0.0
    %v345 = vmax.f32 %v329, 0.0
    %v346 = vmax.f32 %v330, 0.0
    %347 = vst [vmem:[%s3] sm:$0xff] %v331
    %348 = vst [vmem:[%s3 + $0x8] sm:$0xff] %v332
    %349 = vst [vmem:[%s3 + $0x10] sm:$0xff] %v333
    %350 = vst [vmem:[%s3 + $0x18] sm:$0xff] %v334
    %351 = vst [vmem:[%s3 + $0x20] sm:$0xff] %v335
    %352 = vst [vmem:[%s3 + $0x28] sm:$0xff] %v336
    %353 = vst [vmem:[%s3 + $0x30] sm:$0xff] %v337
    %354 = vst [vmem:[%s3 + $0x38] sm:$0xff] %v338
    %355 = vst [vmem:[%s3 + $0x40] sm:$0xff] %v339
    %356 = vst [vmem:[%s3 + $0x48] sm:$0xff] %v340
    %357 = vst [vmem:[%s3 + $0x50] sm:$0xff] %v341
    %358 = vst [vmem:[%s3 + $0x58] sm:$0xff] %v342
    %359 = vst [vmem:[%s3 + $0x60] sm:$0xff] %v343
    %360 = vst [vmem:[%s3 + $0x68] sm:$0xff] %v344
    %361 = vst [vmem:[%s3 + $0x70] sm:$0xff] %v345
    %362 = vst [vmem:[%s3 + $0x78] sm:$0xff] %v346
  $region21: #{dip_forward.113} parent=0 // pred_fallthru
    _
  // Predicated region
  $region22: #{dip_forward.113} parent=0 // pred_check
    _
  $region23: #{dip_forward.113} parent=0 // pred_check_branch
    %364 = sbr.rel (0) target = $region25
  $region24: #{dip_forward.113} parent=0 // pred_region
    _
  $region25: #{dip_forward.113} parent=0 // pred_fallthru
    _
  // Predicated region
  $region26: #{dip_forward.113} parent=0 // pred_check
    _
  $region27: #{dip_forward.113} parent=0 // pred_check_branch
    %366 = sbr.rel (0) target = $region29
  $region28: #{dip_forward.113} parent=0 // pred_region
    _
  $region29: #{dip_forward.113} parent=0 // pred_fallthru
    _

// kernel: dip_forward.114
$region0: #{dip_forward.114}
  #allocation0 [shape = 'u32[]', space=smem, size = 0x4, offset = 0x4, fixed_abs, tag = 'smem constant byte address 0x4 - core index']
  #allocation1 [shape = 'u32[144,128]{1,0:T(1,128)}', space=vmem, size = 0x12000, scoped, tag = 'internal scratch']
  #allocation2 [shape = 'f32[64,256]{1,0:T(8,128)}', space=vmem, size = 0x10000, scoped, tag = 'scratch operand']
  %s0 = inlined_call_operand.vmem [shape: bf16[64,256], index: 0, kind: input, shape index: {}]
  %s1 = inlined_call_operand.vmem [shape: bf16[256,256], index: 1, kind: input, shape index: {}]
  %s2 = inlined_call_operand.vmem [shape: f32[1,256], index: 2, kind: input, shape index: {}]
  %s3 = inlined_call_operand.vmem [shape: f32[64,256], index: 3, kind: output, shape index: {}]
  %s4 = sld [smem:[#allocation0]]
  $region30: #{dip_forward.114} parent=0
    _
  %s6 = ssub.s32 1, %s4
  %s7 = scalar_select 0, %s6, %s4
  // Predicated region
  $region2: #{dip_forward.114} parent=0 // pred_check
    _
  $region3: #{dip_forward.114} parent=0 // pred_check_branch
    %9 = sbr.rel (0) target = $region5
  $region4: #{dip_forward.114} parent=0 // pred_region
    _
  $region5: #{dip_forward.114} parent=0 // pred_fallthru
    _
  // Predicated region
  $region6: #{dip_forward.114} parent=0 // pred_check
    _
  $region7: #{dip_forward.114} parent=0 // pred_check_branch
    %11 = sbr.rel (0) target = $region9
  $region8: #{dip_forward.114} parent=0 // pred_region
    _
  $region9: #{dip_forward.114} parent=0 // pred_fallthru
    _
  // Predicated region
  $region10: #{dip_forward.114} parent=0 // pred_check
    _
  $region11: #{dip_forward.114} parent=0 // pred_check_branch
    %13 = sbr.rel (0) target = $region13
  $region12: #{dip_forward.114} parent=0 // pred_region
    _
  $region13: #{dip_forward.114} parent=0 // pred_fallthru
    _
  %p14 = scmp.eq.s32.totalorder 0, 0
  // Predicated region
  $region14: #{dip_forward.114} parent=0 // pred_check
    %p15 = pneg %p14
  $region15: #{dip_forward.114} parent=0 // pred_check_branch
    %17 = sbr.rel (%p15) target = $region17
  $region16: #{dip_forward.114} parent=0 // pred_region
    %18 = vst [vmem:[#allocation2] sm:$0xff] 0.0
    %19 = vst [vmem:[#allocation2 + $0x8] sm:$0xff] 0.0
    %20 = vst [vmem:[#allocation2 + $0x10] sm:$0xff] 0.0
    %21 = vst [vmem:[#allocation2 + $0x18] sm:$0xff] 0.0
    %22 = vst [vmem:[#allocation2 + $0x20] sm:$0xff] 0.0
    %23 = vst [vmem:[#allocation2 + $0x28] sm:$0xff] 0.0
    %24 = vst [vmem:[#allocation2 + $0x30] sm:$0xff] 0.0
    %25 = vst [vmem:[#allocation2 + $0x38] sm:$0xff] 0.0
    %26 = vst [vmem:[#allocation2 + $0x40] sm:$0xff] 0.0
    %27 = vst [vmem:[#allocation2 + $0x48] sm:$0xff] 0.0
    %28 = vst [vmem:[#allocation2 + $0x50] sm:$0xff] 0.0
    %29 = vst [vmem:[#allocation2 + $0x58] sm:$0xff] 0.0
    %30 = vst [vmem:[#allocation2 + $0x60] sm:$0xff] 0.0
    %31 = vst [vmem:[#allocation2 + $0x68] sm:$0xff] 0.0
    %32 = vst [vmem:[#allocation2 + $0x70] sm:$0xff] 0.0
    %33 = vst [vmem:[#allocation2 + $0x78] sm:$0xff] 0.0
  $region17: #{dip_forward.114} parent=0 // pred_fallthru
    _
  %v34 = vld [vmem:[#allocation2] sm:$0xff]
  %v35 = vld [vmem:[#allocation2 + $0x8] sm:$0xff]
  %v36 = vld [vmem:[#allocation2 + $0x10] sm:$0xff]
  %v37 = vld [vmem:[#allocation2 + $0x18] sm:$0xff]
  %v38 = vld [vmem:[#allocation2 + $0x20] sm:$0xff]
  %v39 = vld [vmem:[#allocation2 + $0x28] sm:$0xff]
  %v40 = vld [vmem:[#allocation2 + $0x30] sm:$0xff]
  %v41 = vld [vmem:[#allocation2 + $0x38] sm:$0xff]
  %v42 = vld [vmem:[#allocation2 + $0x40] sm:$0xff]
  %v43 = vld [vmem:[#allocation2 + $0x48] sm:$0xff]
  %v44 = vld [vmem:[#allocation2 + $0x50] sm:$0xff]
  %v45 = vld [vmem:[#allocation2 + $0x58] sm:$0xff]
  %v46 = vld [vmem:[#allocation2 + $0x60] sm:$0xff]
  %v47 = vld [vmem:[#allocation2 + $0x68] sm:$0xff]
  %v48 = vld [vmem:[#allocation2 + $0x70] sm:$0xff]
  %v49 = vld [vmem:[#allocation2 + $0x78] sm:$0xff]
  %v50 = vld [vmem:[%s0] sm:$0xff]
  %v51 = vld [vmem:[%s0 + $0x8] sm:$0xff]
  %v52 = vld [vmem:[%s0 + $0x10] sm:$0xff]
  %v53 = vld [vmem:[%s0 + $0x18] sm:$0xff]
  %v54 = vld [vmem:[%s0 + $0x20] sm:$0xff]
  %v55 = vld [vmem:[%s0 + $0x28] sm:$0xff]
  %v56 = vld [vmem:[%s0 + $0x30] sm:$0xff]
  %v57 = vld [vmem:[%s0 + $0x38] sm:$0xff]
  %v58 = vld [vmem:[%s1] sm:$0xff]
  %v59 = vld [vmem:[%s1 + $0x8] sm:$0xff]
  %v60 = vld [vmem:[%s1 + $0x10] sm:$0xff]
  %v61 = vld [vmem:[%s1 + $0x18] sm:$0xff]
  %v62 = vld [vmem:[%s1 + $0x20] sm:$0xff]
  %v63 = vld [vmem:[%s1 + $0x28] sm:$0xff]
  %v64 = vld [vmem:[%s1 + $0x30] sm:$0xff]
  %v65 = vld [vmem:[%s1 + $0x38] sm:$0xff]
  %v66 = vld [vmem:[%s1 + $0x40] sm:$0xff]
  %v67 = vld [vmem:[%s1 + $0x48] sm:$0xff]
  %v68 = vld [vmem:[%s1 + $0x50] sm:$0xff]
  %v69 = vld [vmem:[%s1 + $0x58] sm:$0xff]
  %v70 = vld [vmem:[%s1 + $0x60] sm:$0xff]
  %v71 = vld [vmem:[%s1 + $0x68] sm:$0xff]
  %v72 = vld [vmem:[%s1 + $0x70] sm:$0xff]
  %v73 = vld [vmem:[%s1 + $0x78] sm:$0xff]
  %v74 = vld [vmem:[%s1 + $0x80] sm:$0xff]
  %v75 = vld [vmem:[%s1 + $0x88] sm:$0xff]
  %v76 = vld [vmem:[%s1 + $0x90] sm:$0xff]
  %v77 = vld [vmem:[%s1 + $0x98] sm:$0xff]
  %v78 = vld [vmem:[%s1 + $0xa0] sm:$0xff]
  %v79 = vld [vmem:[%s1 + $0xa8] sm:$0xff]
  %v80 = vld [vmem:[%s1 + $0xb0] sm:$0xff]
  %v81 = vld [vmem:[%s1 + $0xb8] sm:$0xff]
  %v82 = vld [vmem:[%s1 + $0xc0] sm:$0xff]
  %v83 = vld [vmem:[%s1 + $0xc8] sm:$0xff]
  %v84 = vld [vmem:[%s1 + $0xd0] sm:$0xff]
  %v85 = vld [vmem:[%s1 + $0xd8] sm:$0xff]
  %v86 = vld [vmem:[%s1 + $0xe0] sm:$0xff]
  %v87 = vld [vmem:[%s1 + $0xe8] sm:$0xff]
  %v88 = vld [vmem:[%s1 + $0xf0] sm:$0xff]
  %v89 = vld [vmem:[%s1 + $0xf8] sm:$0xff]
  %v98 = vunpack.c.l.b16 %v50
  %v99 = vunpack.c.h.b16 %v50
  %v100 = vunpack.c.l.b16 %v51
  %v101 = vunpack.c.h.b16 %v51
  %v102 = vunpack.c.l.b16 %v52
  %v103 = vunpack.c.h.b16 %v52
  %v104 = vunpack.c.l.b16 %v53
  %v105 = vunpack.c.h.b16 %v53
  %v106 = vunpack.c.l.b16 %v54
  %v107 = vunpack.c.h.b16 %v54
  %v108 = vunpack.c.l.b16 %v55
  %v109 = vunpack.c.h.b16 %v55
  %v110 = vunpack.c.l.b16 %v56
  %v111 = vunpack.c.h.b16 %v56
  %v112 = vunpack.c.l.b16 %v57
  %v113 = vunpack.c.h.b16 %v57
  %v114 = vpack.c.b16 %v100, %v98
  %v115 = vpack.c.b16 %v101, %v99
  %v116 = vpack.c.b16 %v104, %v102
  %v117 = vpack.c.b16 %v105, %v103
  %v118 = vpack.c.b16 %v108, %v106
  %v119 = vpack.c.b16 %v109, %v107
  %v120 = vpack.c.b16 %v112, %v110
  %v121 = vpack.c.b16 %v113, %v111
  %v162 = vunpack.c.l.b16 %v58
  %v163 = vunpack.c.h.b16 %v58
  %v164 = vunpack.c.l.b16 %v59
  %v165 = vunpack.c.h.b16 %v59
  %v166 = vunpack.c.l.b16 %v60
  %v167 = vunpack.c.h.b16 %v60
  %v168 = vunpack.c.l.b16 %v61
  %v169 = vunpack.c.h.b16 %v61
  %v170 = vunpack.c.l.b16 %v62
  %v171 = vunpack.c.h.b16 %v62
  %v172 = vunpack.c.l.b16 %v63
  %v173 = vunpack.c.h.b16 %v63
  %v174 = vunpack.c.l.b16 %v64
  %v175 = vunpack.c.h.b16 %v64
  %v176 = vunpack.c.l.b16 %v65
  %v177 = vunpack.c.h.b16 %v65
  %v178 = vunpack.c.l.b16 %v66
  %v179 = vunpack.c.h.b16 %v66
  %v180 = vunpack.c.l.b16 %v67
  %v181 = vunpack.c.h.b16 %v67
  %v182 = vunpack.c.l.b16 %v68
  %v183 = vunpack.c.h.b16 %v68
  %v184 = vunpack.c.l.b16 %v69
  %v185 = vunpack.c.h.b16 %v69
  %v186 = vunpack.c.l.b16 %v70
  %v187 = vunpack.c.h.b16 %v70
  %v188 = vunpack.c.l.b16 %v71
  %v189 = vunpack.c.h.b16 %v71
  %v190 = vunpack.c.l.b16 %v72
  %v191 = vunpack.c.h.b16 %v72
  %v192 = vunpack.c.l.b16 %v73
  %v193 = vunpack.c.h.b16 %v73
  %v194 = vunpack.c.l.b16 %v74
  %v195 = vunpack.c.h.b16 %v74
  %v196 = vunpack.c.l.b16 %v75
  %v197 = vunpack.c.h.b16 %v75
  %v198 = vunpack.c.l.b16 %v76
  %v199 = vunpack.c.h.b16 %v76
  %v200 = vunpack.c.l.b16 %v77
  %v201 = vunpack.c.h.b16 %v77
  %v202 = vunpack.c.l.b16 %v78
  %v203 = vunpack.c.h.b16 %v78
  %v204 = vunpack.c.l.b16 %v79
  %v205 = vunpack.c.h.b16 %v79
  %v206 = vunpack.c.l.b16 %v80
  %v207 = vunpack.c.h.b16 %v80
  %v208 = vunpack.c.l.b16 %v81
  %v209 = vunpack.c.h.b16 %v81
  %v210 = vunpack.c.l.b16 %v82
  %v211 = vunpack.c.h.b16 %v82
  %v212 = vunpack.c.l.b16 %v83
  %v213 = vunpack.c.h.b16 %v83
  %v214 = vunpack.c.l.b16 %v84
  %v215 = vunpack.c.h.b16 %v84
  %v216 = vunpack.c.l.b16 %v85
  %v217 = vunpack.c.h.b16 %v85
  %v218 = vunpack.c.l.b16 %v86
  %v219 = vunpack.c.h.b16 %v86
  %v220 = vunpack.c.l.b16 %v87
  %v221 = vunpack.c.h.b16 %v87
  %v222 = vunpack.c.l.b16 %v88
  %v223 = vunpack.c.h.b16 %v88
  %v224 = vunpack.c.l.b16 %v89
  %v225 = vunpack.c.h.b16 %v89
  %v226 = vpack.c.b16 %v164, %v162
  %v227 = vpack.c.b16 %v165, %v163
  %v228 = vpack.c.b16 %v168, %v166
  %v229 = vpack.c.b16 %v169, %v167
  %v230 = vpack.c.b16 %v172, %v170
  %v231 = vpack.c.b16 %v173, %v171
  %v232 = vpack.c.b16 %v176, %v174
  %v233 = vpack.c.b16 %v177, %v175
  %v234 = vpack.c.b16 %v180, %v178
  %v235 = vpack.c.b16 %v181, %v179
  %v236 = vpack.c.b16 %v184, %v182
  %v237 = vpack.c.b16 %v185, %v183
  %v238 = vpack.c.b16 %v188, %v186
  %v239 = vpack.c.b16 %v189, %v187
  %v240 = vpack.c.b16 %v192, %v190
  %v241 = vpack.c.b16 %v193, %v191
  %v242 = vpack.c.b16 %v196, %v194
  %v243 = vpack.c.b16 %v197, %v195
  %v244 = vpack.c.b16 %v200, %v198
  %v245 = vpack.c.b16 %v201, %v199
  %v246 = vpack.c.b16 %v204, %v202
  %v247 = vpack.c.b16 %v205, %v203
  %v248 = vpack.c.b16 %v208, %v206
  %v249 = vpack.c.b16 %v209, %v207
  %v250 = vpack.c.b16 %v212, %v210
  %v251 = vpack.c.b16 %v213, %v211
  %v252 = vpack.c.b16 %v216, %v214
  %v253 = vpack.c.b16 %v217, %v215
  %v254 = vpack.c.b16 %v220, %v218
  %v255 = vpack.c.b16 %v221, %v219
  %v256 = vpack.c.b16 %v224, %v222
  %v257 = vpack.c.b16 %v225, %v223
  %290 = vmatprep.subr.bf16.mxu0 %v227
  %291 = vmatpush1.bf16.msra.mxu0 %v226
  %292 = vmatprep.subr.bf16.mxu0 %v229
  %293 = vmatpush1.bf16.msra.mxu0 %v228
  %294 = vmatprep.subr.bf16.mxu0 %v231
  %295 = vmatpush1.bf16.msra.mxu0 %v230
  %296 = vmatprep.subr.bf16.mxu0 %v233
  %297 = vmatpush1.bf16.msra.mxu0 %v232
  %298 = vmatprep.subr.bf16.mxu0 %v235
  %299 = vmatpush1.bf16.msra.mxu0 %v234
  %300 = vmatprep.subr.bf16.mxu0 %v237
  %301 = vmatpush1.bf16.msra.mxu0 %v236
  %302 = vmatprep.subr.bf16.mxu0 %v239
  %303 = vmatpush1.bf16.msra.mxu0 %v238
  %304 = vmatprep.subr.bf16.mxu0 %v241
  %305 = vmatpush1.bf16.msra.mxu0 %v240
  %306 = vmatprep.subr.bf16.mxu0 %v243
  %307 = vmatpush1.bf16.msra.mxu0 %v242
  %308 = vmatprep.subr.bf16.mxu0 %v245
  %309 = vmatpush1.bf16.msra.mxu0 %v244
  %310 = vmatprep.subr.bf16.mxu0 %v247
  %311 = vmatpush1.bf16.msra.mxu0 %v246
  %312 = vmatprep.subr.bf16.mxu0 %v249
  %313 = vmatpush1.bf16.msra.mxu0 %v248
  %314 = vmatprep.subr.bf16.mxu0 %v251
  %315 = vmatpush1.bf16.msra.mxu0 %v250
  %316 = vmatprep.subr.bf16.mxu0 %v253
  %317 = vmatpush1.bf16.msra.mxu0 %v252
  %318 = vmatprep.subr.bf16.mxu0 %v255
  %319 = vmatpush1.bf16.msra.mxu0 %v254
  %320 = vmatprep.subr.bf16.mxu0 %v257
  %321 = vmatpush1.bf16.msra.mxu0 %v256
  %322 = vmatprep.mubr.bf16.mxu0 %v115
  %323 = vmatmul.mubr.bf16.gmra.mrb[0].mxu0 %v114
  %v324 = vpop.f32.mrb[0].mxu0
  %v325 = vadd.f32 0.0, %v324
  %v326 = vpop.f32.mrb[0].mxu0
  %v327 = vadd.f32 0.0, %v326
  %v328 = vpop.f32.mrb[0].mxu0
  %v329 = vadd.f32 0.0, %v328
  %v330 = vpop.f32.mrb[0].mxu0
  %v331 = vadd.f32 0.0, %v330
  %332 = vmatprep.mubr.bf16.mxu0 %v117
  %333 = vmatmul.mubr.bf16.gmra.mrb[0].mxu0 %v116
  %v334 = vpop.f32.mrb[0].mxu0
  %v335 = vadd.f32 0.0, %v334
  %v336 = vpop.f32.mrb[0].mxu0
  %v337 = vadd.f32 0.0, %v336
  %v338 = vpop.f32.mrb[0].mxu0
  %v339 = vadd.f32 0.0, %v338
  %v340 = vpop.f32.mrb[0].mxu0
  %v341 = vadd.f32 0.0, %v340
  %342 = vmatprep.mubr.bf16.mxu0 %v119
  %343 = vmatmul.mubr.bf16.gmra.mrb[0].mxu0 %v118
  %v344 = vpop.f32.mrb[0].mxu0
  %v345 = vadd.f32 0.0, %v344
  %v346 = vpop.f32.mrb[0].mxu0
  %v347 = vadd.f32 0.0, %v346
  %v348 = vpop.f32.mrb[0].mxu0
  %v349 = vadd.f32 0.0, %v348
  %v350 = vpop.f32.mrb[0].mxu0
  %v351 = vadd.f32 0.0, %v350
  %352 = vmatprep.mubr.bf16.mxu0 %v121
  %353 = vmatmul.mubr.bf16.gmra.mrb[0].mxu0 %v120
  %v354 = vpop.f32.mrb[0].mxu0
  %v355 = vadd.f32 0.0, %v354
  %v356 = vpop.f32.mrb[0].mxu0
  %v357 = vadd.f32 0.0, %v356
  %v358 = vpop.f32.mrb[0].mxu0
  %v359 = vadd.f32 0.0, %v358
  %v360 = vpop.f32.mrb[0].mxu0
  %v361 = vadd.f32 0.0, %v360
  %362 = vdwg.mxu0
  %v363 = vadd.f32 %v34, %v325
  %v364 = vadd.f32 %v35, %v327
  %v365 = vadd.f32 %v36, %v329
  %v366 = vadd.f32 %v37, %v331
  %v367 = vadd.f32 %v38, %v335
  %v368 = vadd.f32 %v39, %v337
  %v369 = vadd.f32 %v40, %v339
  %v370 = vadd.f32 %v41, %v341
  %v371 = vadd.f32 %v42, %v345
  %v372 = vadd.f32 %v43, %v347
  %v373 = vadd.f32 %v44, %v349
  %v374 = vadd.f32 %v45, %v351
  %v375 = vadd.f32 %v46, %v355
  %v376 = vadd.f32 %v47, %v357
  %v377 = vadd.f32 %v48, %v359
  %v378 = vadd.f32 %v49, %v361
  %379 = vst [vmem:[#allocation2] sm:$0xff] %v363
  %380 = vst [vmem:[#allocation2 + $0x8] sm:$0xff] %v364
  %381 = vst [vmem:[#allocation2 + $0x10] sm:$0xff] %v365
  %382 = vst [vmem:[#allocation2 + $0x18] sm:$0xff] %v366
  %383 = vst [vmem:[#allocation2 + $0x20] sm:$0xff] %v367
  %384 = vst [vmem:[#allocation2 + $0x28] sm:$0xff] %v368
  %385 = vst [vmem:[#allocation2 + $0x30] sm:$0xff] %v369
  %386 = vst [vmem:[#allocation2 + $0x38] sm:$0xff] %v370
  %387 = vst [vmem:[#allocation2 + $0x40] sm:$0xff] %v371
  %388 = vst [vmem:[#allocation2 + $0x48] sm:$0xff] %v372
  %389 = vst [vmem:[#allocation2 + $0x50] sm:$0xff] %v373
  %390 = vst [vmem:[#allocation2 + $0x58] sm:$0xff] %v374
  %391 = vst [vmem:[#allocation2 + $0x60] sm:$0xff] %v375
  %392 = vst [vmem:[#allocation2 + $0x68] sm:$0xff] %v376
  %393 = vst [vmem:[#allocation2 + $0x70] sm:$0xff] %v377
  %394 = vst [vmem:[#allocation2 + $0x78] sm:$0xff] %v378
  // Predicated region
  $region18: #{dip_forward.114} parent=0 // pred_check
    %p395 = pneg %p14
  $region19: #{dip_forward.114} parent=0 // pred_check_branch
    %397 = sbr.rel (%p395) target = $region21
  $region20: #{dip_forward.114} parent=0 // pred_region
    %v398 = vld [vmem:[#allocation2] sm:$0xff]
    %v399 = vld [vmem:[#allocation2 + $0x8] sm:$0xff]
    %v400 = vld [vmem:[#allocation2 + $0x10] sm:$0xff]
    %v401 = vld [vmem:[#allocation2 + $0x18] sm:$0xff]
    %v402 = vld [vmem:[#allocation2 + $0x20] sm:$0xff]
    %v403 = vld [vmem:[#allocation2 + $0x28] sm:$0xff]
    %v404 = vld [vmem:[#allocation2 + $0x30] sm:$0xff]
    %v405 = vld [vmem:[#allocation2 + $0x38] sm:$0xff]
    %v406 = vld [vmem:[#allocation2 + $0x40] sm:$0xff]
    %v407 = vld [vmem:[#allocation2 + $0x48] sm:$0xff]
    %v408 = vld [vmem:[#allocation2 + $0x50] sm:$0xff]
    %v409 = vld [vmem:[#allocation2 + $0x58] sm:$0xff]
    %v410 = vld [vmem:[#allocation2 + $0x60] sm:$0xff]
    %v411 = vld [vmem:[#allocation2 + $0x68] sm:$0xff]
    %v412 = vld [vmem:[#allocation2 + $0x70] sm:$0xff]
    %v413 = vld [vmem:[#allocation2 + $0x78] sm:$0xff]
    %v414 = vld [vmem:[%s2] sm:$0x3]
    %v416 = vlaneseq
    %v417 = vshrl.u32 %v416, 7
    %v418 = vsub.s32 0, %v417
    %v419 = vrot.slane %v414, %v418
    %v420 = vlaneseq
    %v421 = vshrl.u32 %v420, 7
    %v422 = vsub.s32 1, %v421
    %v423 = vrot.slane %v414, %v422
    %v426 = vadd.f32 %v398, %v419
    %v427 = vadd.f32 %v399, %v423
    %v428 = vadd.f32 %v400, %v419
    %v429 = vadd.f32 %v401, %v423
    %v430 = vadd.f32 %v402, %v419
    %v431 = vadd.f32 %v403, %v423
    %v432 = vadd.f32 %v404, %v419
    %v433 = vadd.f32 %v405, %v423
    %v434 = vadd.f32 %v406, %v419
    %v435 = vadd.f32 %v407, %v423
    %v436 = vadd.f32 %v408, %v419
    %v437 = vadd.f32 %v409, %v423
    %v438 = vadd.f32 %v410, %v419
    %v439 = vadd.f32 %v411, %v423
    %v440 = vadd.f32 %v412, %v419
    %v441 = vadd.f32 %v413, %v423
    %442 = vst [vmem:[%s3] sm:$0xff] %v426
    %443 = vst [vmem:[%s3 + $0x8] sm:$0xff] %v427
    %444 = vst [vmem:[%s3 + $0x10] sm:$0xff] %v428
    %445 = vst [vmem:[%s3 + $0x18] sm:$0xff] %v429
    %446 = vst [vmem:[%s3 + $0x20] sm:$0xff] %v430
    %447 = vst [vmem:[%s3 + $0x28] sm:$0xff] %v431
    %448 = vst [vmem:[%s3 + $0x30] sm:$0xff] %v432
    %449 = vst [vmem:[%s3 + $0x38] sm:$0xff] %v433
    %450 = vst [vmem:[%s3 + $0x40] sm:$0xff] %v434
    %451 = vst [vmem:[%s3 + $0x48] sm:$0xff] %v435
    %452 = vst [vmem:[%s3 + $0x50] sm:$0xff] %v436
    %453 = vst [vmem:[%s3 + $0x58] sm:$0xff] %v437
    %454 = vst [vmem:[%s3 + $0x60] sm:$0xff] %v438
    %455 = vst [vmem:[%s3 + $0x68] sm:$0xff] %v439
    %456 = vst [vmem:[%s3 + $0x70] sm:$0xff] %v440
    %457 = vst [vmem:[%s3 + $0x78] sm:$0xff] %v441
  $region21: #{dip_forward.114} parent=0 // pred_fallthru
    _
  // Predicated region
  $region22: #{dip_forward.114} parent=0 // pred_check
    _
  $region23: #{dip_forward.114} parent=0 // pred_check_branch
    %459 = sbr.rel (0) target = $region25
  $region24: #{dip_forward.114} parent=0 // pred_region
    _
  $region25: #{dip_forward.114} parent=0 // pred_fallthru
    _
  // Predicated region
  $region26: #{dip_forward.114} parent=0 // pred_check
    _
  $region27: #{dip_forward.114} parent=0 // pred_check_branch
    %461 = sbr.rel (0) target = $region29
  $region28: #{dip_forward.114} parent=0 // pred_region
    _
  $region29: #{dip_forward.114} parent=0 // pred_fallthru
    _

// kernel: dip_forward.115
$region0: #{dip_forward.115}
  #allocation0 [shape = 'u32[]', space=smem, size = 0x4, offset = 0x4, fixed_abs, tag = 'smem constant byte address 0x4 - core index']
  #allocation1 [shape = 'u32[144,128]{1,0:T(1,128)}', space=vmem, size = 0x12000, scoped, tag = 'internal scratch']
  %s0 = inlined_call_operand.vmem [shape: f32[1,9,16,64], index: 0, kind: input, shape index: {}]
  %s1 = inlined_call_operand.vmem [shape: f32[1,2,9,64], index: 1, kind: input, shape index: {}]
  %s2 = inlined_call_operand.vmem [shape: f32[1,2,16,64], index: 2, kind: output, shape index: {}]
  %s3 = sld [smem:[#allocation0]]
  $region18: #{dip_forward.115} parent=0
    _
  %s5 = ssub.s32 1, %s3
  %s6 = scalar_select 0, %s5, %s3
  // Predicated region
  $region2: #{dip_forward.115} parent=0 // pred_check
    _
  $region3: #{dip_forward.115} parent=0 // pred_check_branch
    %8 = sbr.rel (0) target = $region5
  $region4: #{dip_forward.115} parent=0 // pred_region
    _
  $region5: #{dip_forward.115} parent=0 // pred_fallthru
    _
  // Predicated region
  $region6: #{dip_forward.115} parent=0 // pred_check
    _
  $region7: #{dip_forward.115} parent=0 // pred_check_branch
    %10 = sbr.rel (0) target = $region9
  $region8: #{dip_forward.115} parent=0 // pred_region
    _
  $region9: #{dip_forward.115} parent=0 // pred_fallthru
    _
  %v11 = vld [vmem:[%s0] sm:$0xff]
  %v12 = vld [vmem:[%s0 + $0x8] sm:$0xff]
  %v13 = vld [vmem:[%s0 + $0x10] sm:$0xff]
  %v14 = vld [vmem:[%s0 + $0x18] sm:$0xff]
  %v15 = vld [vmem:[%s0 + $0x20] sm:$0xff]
  %v16 = vld [vmem:[%s0 + $0x28] sm:$0xff]
  %v17 = vld [vmem:[%s0 + $0x30] sm:$0xff]
  %v18 = vld [vmem:[%s0 + $0x38] sm:$0xff]
  %v19 = vld [vmem:[%s0 + $0x40] sm:$0xff]
  %v20 = vld [vmem:[%s0 + $0x48] sm:$0xff]
  %v21 = vld [vmem:[%s0 + $0x50] sm:$0xff]
  %v22 = vld [vmem:[%s0 + $0x58] sm:$0xff]
  %v23 = vld [vmem:[%s0 + $0x60] sm:$0xff]
  %v24 = vld [vmem:[%s0 + $0x68] sm:$0xff]
  %v25 = vld [vmem:[%s0 + $0x70] sm:$0xff]
  %v26 = vld [vmem:[%s0 + $0x78] sm:$0xff]
  %v27 = vld [vmem:[%s0 + $0x80] sm:$0xff]
  %v28 = vld [vmem:[%s0 + $0x88] sm:$0xff]
  %v29 = vmax.f32 %v11, %v13
  %v30 = vmax.f32 %v12, %v14
  %v31 = vmax.f32 %v29, %v15
  %v32 = vmax.f32 %v30, %v16
  %v33 = vmax.f32 %v31, %v17
  %v34 = vmax.f32 %v32, %v18
  %v35 = vmax.f32 %v33, %v19
  %v36 = vmax.f32 %v34, %v20
  %v37 = vmax.f32 %v35, %v21
  %v38 = vmax.f32 %v36, %v22
  %v39 = vmax.f32 %v37, %v23
  %v40 = vmax.f32 %v38, %v24
  %v41 = vmax.f32 %v39, %v25
  %v42 = vmax.f32 %v40, %v26
  %v43 = vmax.f32 %v41, %v27
  %v44 = vmax.f32 %v42, %v28
  %v45 = vsub.f32 %v11, %v43
  %v46 = vsub.f32 %v12, %v44
  %v47 = vmul.f32 %v45, 1.442695
  %v48 = vpow.pop %v47
  %v49 = vmul.f32 %v46, 1.442695
  %v50 = vpow.pop %v49
  %v51 = vsub.f32 %v13, %v43
  %v52 = vsub.f32 %v14, %v44
  %v53 = vmul.f32 %v51, 1.442695
  %v54 = vpow.pop %v53
  %v55 = vmul.f32 %v52, 1.442695
  %v56 = vpow.pop %v55
  %v57 = vsub.f32 %v15, %v43
  %v58 = vsub.f32 %v16, %v44
  %v59 = vmul.f32 %v57, 1.442695
  %v60 = vpow.pop %v59
  %v61 = vmul.f32 %v58, 1.442695
  %v62 = vpow.pop %v61
  %v63 = vsub.f32 %v17, %v43
  %v64 = vsub.f32 %v18, %v44
  %v65 = vmul.f32 %v63, 1.442695
  %v66 = vpow.pop %v65
  %v67 = vmul.f32 %v64, 1.442695
  %v68 = vpow.pop %v67
  %v69 = vsub.f32 %v19, %v43
  %v70 = vsub.f32 %v20, %v44
  %v71 = vmul.f32 %v69, 1.442695
  %v72 = vpow.pop %v71
  %v73 = vmul.f32 %v70, 1.442695
  %v74 = vpow.pop %v73
  %v75 = vsub.f32 %v21, %v43
  %v76 = vsub.f32 %v22, %v44
  %v77 = vmul.f32 %v75, 1.442695
  %v78 = vpow.pop %v77
  %v79 = vmul.f32 %v76, 1.442695
  %v80 = vpow.pop %v79
  %v81 = vsub.f32 %v23, %v43
  %v82 = vsub.f32 %v24, %v44
  %v83 = vmul.f32 %v81, 1.442695
  %v84 = vpow.pop %v83
  %v85 = vmul.f32 %v82, 1.442695
  %v86 = vpow.pop %v85
  %v87 = vsub.f32 %v25, %v43
  %v88 = vsub.f32 %v26, %v44
  %v89 = vmul.f32 %v87, 1.442695
  %v90 = vpow.pop %v89
  %v91 = vmul.f32 %v88, 1.442695
  %v92 = vpow.pop %v91
  %v93 = vsub.f32 %v27, %v43
  %v94 = vsub.f32 %v28, %v44
  %v95 = vmul.f32 %v93, 1.442695
  %v96 = vpow.pop %v95
  %v97 = vmul.f32 %v94, 1.442695
  %v98 = vpow.pop %v97
  %v99 = vadd.f32 %v48, %v54
  %v100 = vadd.f32 %v50, %v56
  %v101 = vadd.f32 %v99, %v60
  %v102 = vadd.f32 %v100, %v62
  %v103 = vadd.f32 %v101, %v66
  %v104 = vadd.f32 %v102, %v68
  %v105 = vadd.f32 %v103, %v72
  %v106 = vadd.f32 %v104, %v74
  %v107 = vadd.f32 %v105, %v78
  %v108 = vadd.f32 %v106, %v80
  %v109 = vadd.f32 %v107, %v84
  %v110 = vadd.f32 %v108, %v86
  %v111 = vadd.f32 %v109, %v90
  %v112 = vadd.f32 %v110, %v92
  %v113 = vadd.f32 %v111, %v96
  %v114 = vadd.f32 %v112, %v98
  %v115 = vrcp.pop %v113
  %v116 = vrcp.pop %v114
  %v117 = vld [vmem:[%s1] sm:$0xff]
  %v118 = vld [vmem:[%s1 + $0x8] sm:$0x1]
  %v119 = vld [vmem:[%s1 + $0x10] sm:$0xff]
  %v120 = vld [vmem:[%s1 + $0x18] sm:$0x1]
  %v121 = vmul.f32 %v48, %v115
  %v122 = vmul.f32 %v50, %v116
  %v123 = vlaneseq
  %v124 = vshrl.u32 %v123, 7
  %v125 = vsub.s32 0, %v124
  %v126 = vrot.slane %v117, %v125
  %v127 = vlaneseq
  %v128 = vshrl.u32 %v127, 7
  %v129 = vsub.s32 0, %v128
  %v130 = vrot.slane %v119, %v129
  %v131 = vmul.f32 %v121, %v126
  %v132 = vmul.f32 %v122, %v126
  %v133 = vmul.f32 %v121, %v130
  %v134 = vmul.f32 %v122, %v130
  %v135 = vadd.f32 %v131, 0.0
  %v136 = vadd.f32 %v132, 0.0
  %v137 = vadd.f32 %v133, 0.0
  %v138 = vadd.f32 %v134, 0.0
  %v139 = vmul.f32 %v54, %v115
  %v140 = vmul.f32 %v56, %v116
  %v141 = vlaneseq
  %v142 = vshrl.u32 %v141, 7
  %v143 = vsub.s32 1, %v142
  %v144 = vrot.slane %v117, %v143
  %v145 = vlaneseq
  %v146 = vshrl.u32 %v145, 7
  %v147 = vsub.s32 1, %v146
  %v148 = vrot.slane %v119, %v147
  %v149 = vmul.f32 %v139, %v144
  %v150 = vmul.f32 %v140, %v144
  %v151 = vmul.f32 %v139, %v148
  %v152 = vmul.f32 %v140, %v148
  %v153 = vadd.f32 %v135, %v149
  %v154 = vadd.f32 %v136, %v150
  %v155 = vadd.f32 %v137, %v151
  %v156 = vadd.f32 %v138, %v152
  %v157 = vmul.f32 %v60, %v115
  %v158 = vmul.f32 %v62, %v116
  %v159 = vlaneseq
  %v160 = vshrl.u32 %v159, 7
  %v161 = vsub.s32 2, %v160
  %v162 = vrot.slane %v117, %v161
  %v163 = vlaneseq
  %v164 = vshrl.u32 %v163, 7
  %v165 = vsub.s32 2, %v164
  %v166 = vrot.slane %v119, %v165
  %v167 = vmul.f32 %v157, %v162
  %v168 = vmul.f32 %v158, %v162
  %v169 = vmul.f32 %v157, %v166
  %v170 = vmul.f32 %v158, %v166
  %v171 = vadd.f32 %v153, %v167
  %v172 = vadd.f32 %v154, %v168
  %v173 = vadd.f32 %v155, %v169
  %v174 = vadd.f32 %v156, %v170
  %v175 = vmul.f32 %v66, %v115
  %v176 = vmul.f32 %v68, %v116
  %v177 = vlaneseq
  %v178 = vshrl.u32 %v177, 7
  %v179 = vsub.s32 3, %v178
  %v180 = vrot.slane %v117, %v179
  %v181 = vlaneseq
  %v182 = vshrl.u32 %v181, 7
  %v183 = vsub.s32 3, %v182
  %v184 = vrot.slane %v119, %v183
  %v185 = vmul.f32 %v175, %v180
  %v186 = vmul.f32 %v176, %v180
  %v187 = vmul.f32 %v175, %v184
  %v188 = vmul.f32 %v176, %v184
  %v189 = vadd.f32 %v171, %v185
  %v190 = vadd.f32 %v172, %v186
  %v191 = vadd.f32 %v173, %v187
  %v192 = vadd.f32 %v174, %v188
  %v193 = vmul.f32 %v72, %v115
  %v194 = vmul.f32 %v74, %v116
  %v195 = vlaneseq
  %v196 = vshrl.u32 %v195, 7
  %v197 = vsub.s32 4, %v196
  %v198 = vrot.slane %v117, %v197
  %v199 = vlaneseq
  %v200 = vshrl.u32 %v199, 7
  %v201 = vsub.s32 4, %v200
  %v202 = vrot.slane %v119, %v201
  %v203 = vmul.f32 %v193, %v198
  %v204 = vmul.f32 %v194, %v198
  %v205 = vmul.f32 %v193, %v202
  %v206 = vmul.f32 %v194, %v202
  %v207 = vadd.f32 %v189, %v203
  %v208 = vadd.f32 %v190, %v204
  %v209 = vadd.f32 %v191, %v205
  %v210 = vadd.f32 %v192, %v206
  %v211 = vmul.f32 %v78, %v115
  %v212 = vmul.f32 %v80, %v116
  %v213 = vlaneseq
  %v214 = vshrl.u32 %v213, 7
  %v215 = vsub.s32 5, %v214
  %v216 = vrot.slane %v117, %v215
  %v217 = vlaneseq
  %v218 = vshrl.u32 %v217, 7
  %v219 = vsub.s32 5, %v218
  %v220 = vrot.slane %v119, %v219
  %v221 = vmul.f32 %v211, %v216
  %v222 = vmul.f32 %v212, %v216
  %v223 = vmul.f32 %v211, %v220
  %v224 = vmul.f32 %v212, %v220
  %v225 = vadd.f32 %v207, %v221
  %v226 = vadd.f32 %v208, %v222
  %v227 = vadd.f32 %v209, %v223
  %v228 = vadd.f32 %v210, %v224
  %v229 = vmul.f32 %v84, %v115
  %v230 = vmul.f32 %v86, %v116
  %v231 = vlaneseq
  %v232 = vshrl.u32 %v231, 7
  %v233 = vsub.s32 6, %v232
  %v234 = vrot.slane %v117, %v233
  %v235 = vlaneseq
  %v236 = vshrl.u32 %v235, 7
  %v237 = vsub.s32 6, %v236
  %v238 = vrot.slane %v119, %v237
  %v239 = vmul.f32 %v229, %v234
  %v240 = vmul.f32 %v230, %v234
  %v241 = vmul.f32 %v229, %v238
  %v242 = vmul.f32 %v230, %v238
  %v243 = vadd.f32 %v225, %v239
  %v244 = vadd.f32 %v226, %v240
  %v245 = vadd.f32 %v227, %v241
  %v246 = vadd.f32 %v228, %v242
  %v247 = vmul.f32 %v90, %v115
  %v248 = vmul.f32 %v92, %v116
  %v249 = vlaneseq
  %v250 = vshrl.u32 %v249, 7
  %v251 = vsub.s32 7, %v250
  %v252 = vrot.slane %v117, %v251
  %v253 = vlaneseq
  %v254 = vshrl.u32 %v253, 7
  %v255 = vsub.s32 7, %v254
  %v256 = vrot.slane %v119, %v255
  %v257 = vmul.f32 %v247, %v252
  %v258 = vmul.f32 %v248, %v252
  %v259 = vmul.f32 %v247, %v256
  %v260 = vmul.f32 %v248, %v256
  %v261 = vadd.f32 %v243, %v257
  %v262 = vadd.f32 %v244, %v258
  %v263 = vadd.f32 %v245, %v259
  %v264 = vadd.f32 %v246, %v260
  %v265 = vmul.f32 %v96, %v115
  %v266 = vmul.f32 %v98, %v116
  %v267 = vlaneseq
  %v268 = vshrl.u32 %v267, 7
  %v269 = vsub.s32 0, %v268
  %v270 = vrot.slane %v118, %v269
  %v271 = vlaneseq
  %v272 = vshrl.u32 %v271, 7
  %v273 = vsub.s32 0, %v272
  %v274 = vrot.slane %v120, %v273
  %v275 = vmul.f32 %v265, %v270
  %v276 = vmul.f32 %v266, %v270
  %v277 = vmul.f32 %v265, %v274
  %v278 = vmul.f32 %v266, %v274
  %v279 = vadd.f32 %v261, %v275
  %v280 = vadd.f32 %v262, %v276
  %v281 = vadd.f32 %v263, %v277
  %v282 = vadd.f32 %v264, %v278
  %vm283 = vcmask 523264
  %284 = vst.msk [vmem:[%s2] sm:$0xff] %vm283, %v279
  %285 = vst.msk [vmem:[%s2 + $0x8] sm:$0xff] %vm283, %v280
  %286 = vst.msk [vmem:[%s2 + $0x10] sm:$0xff] %vm283, %v281
  %287 = vst.msk [vmem:[%s2 + $0x18] sm:$0xff] %vm283, %v282
  // Predicated region
  $region10: #{dip_forward.115} parent=0 // pred_check
    _
  $region11: #{dip_forward.115} parent=0 // pred_check_branch
    %289 = sbr.rel (0) target = $region13
  $region12: #{dip_forward.115} parent=0 // pred_region
    _
  $region13: #{dip_forward.115} parent=0 // pred_fallthru
    _
  // Predicated region
  $region14: #{dip_forward.115} parent=0 // pred_check
    _
  $region15: #{dip_forward.115} parent=0 // pred_check_branch
    %291 = sbr.rel (0) target = $region17
  $region16: #{dip_forward.115} parent=0 // pred_region
    _
  $region17: #{dip_forward.115} parent=0 // pred_fallthru
    _

</llo_original>
